<compile_context>
chip_gen: v6e
topology: v6e:2x2x1
jax: 0.10.0
libtpu: 0.0.40
codegen_flags: <defaults>
</compile_context>

<pallas_src>
import functools
import math

import jax
import jax.numpy as jnp
from jax.experimental import pallas as pl
from jax.experimental.pallas import tpu as pltpu

_K = 3  # Conv1d kernel_size in the spec


# ----------------------------- fused kernel --------------------------------

def _cnn_fused_kernel(
        x_ref,
        w0, b0, w1, b1, w2, b2, w3, b3, w4, b4, w5, b5, w6, b6,
        s1, s2, s3, s4,
        wfc0, bfc0, wout, bout,
        o_ref,
        *, batch, avg_take, avg_inv):
    """Whole CNN forward for one block of `batch` samples.  Per-sample
    activations are (C, L): channels on sublanes, length on lanes."""

    def conv_vpu(x, w_ref, b_ref):
        # Small-contraction conv + folded BN + ReLU as VPU broadcast MACs.
        # x: (cin, L); w_ref: (K, cout, cin); b_ref: (cout, 1).
        cin, l = x.shape
        cout = w_ref.shape[1]
        lout = l - _K + 1
        acc = jnp.zeros((cout, lout), jnp.float32)
        for k in range(_K):
            wk = w_ref[k]                                   # (cout, cin)
            for ci in range(cin):
                acc = acc + wk[:, ci:ci + 1] * x[ci:ci + 1, k:k + lout]
        return jnp.maximum(acc + b_ref[...], 0.0)

    def conv_mxu(x, w_ref, b_ref):
        # conv + folded BN + ReLU as three accumulating MXU dots (no im2col).
        # x: (cin, L); w_ref: (K, cout, cin); b_ref: (cout, 1).
        cin, l = x.shape
        cout = w_ref.shape[1]
        lout = l - _K + 1
        acc = jnp.zeros((cout, lout), jnp.float32)
        for k in range(_K):
            acc = acc + jnp.dot(w_ref[k], x[:, k:k + lout],
                                preferred_element_type=jnp.float32)
        return jnp.maximum(acc + b_ref[...], 0.0)

    def pool_batched(a, s_ref, left_pad):
        # MaxPool1d(2, 2) along lanes for all B samples at once (rows =
        # (sample, channel)), optionally with ConstantPad1d((1, 0), 0) folded
        # in.  Pair-max on the VPU, then ONE even-column one-hot selector
        # matmul (exact: each output column copies exactly one f32 value).
        m = jnp.maximum(a[:, 1:], a[:, :-1])                # pair max
        if left_pad:
            # padded window 0 is max(0, x[0]); windows j>=1 are max(x[2j-1], x[2j])
            q = jnp.concatenate([jnp.maximum(a[:, 0:1], 0.0), m], axis=1)
        else:
            q = m
        return jnp.dot(q, s_ref[...], preferred_element_type=jnp.float32)

    B = batch

    # Block 1: conv, conv (VPU, per sample), maxpool(2,2) batched.
    a1 = []
    for b in range(B):
        xb = x_ref[b].astype(jnp.float32)                   # (1, 600)
        t = conv_vpu(xb, w0, b0)                            # (4, 598)
        a1.append(conv_vpu(t, w1, b1))                      # (4, 596)
    A = jnp.concatenate(a1, axis=0)                         # (4B, 596)
    P = pool_batched(A, s1, left_pad=False)                 # (4B, 298)

    # Block 2: conv, conv (VPU), maxpool(2,2) batched.
    a3 = []
    for b in range(B):
        t = conv_vpu(P[4 * b:4 * b + 4, :], w2, b2)         # (8, 296)
        a3.append(conv_vpu(t, w3, b3))                      # (8, 294)
    A = jnp.concatenate(a3, axis=0)                         # (8B, 294)
    P = pool_batched(A, s2, left_pad=False)                 # (8B, 147)

    # Block 3: conv (VPU), ConstantPad1d((1,0)) + maxpool(2,2) batched.
    a4 = [conv_vpu(P[8 * b:8 * b + 8, :], w4, b4)           # (16, 145)
          for b in range(B)]
    A = jnp.concatenate(a4, axis=0)                         # (16B, 145)
    P = pool_batched(A, s3, left_pad=True)                  # (16B, 73)

    # Block 4: conv (MXU), ConstantPad1d((1,0)) + maxpool(2,2) batched.
    a5 = [conv_mxu(P[16 * b:16 * b + 16, :], w5, b5)        # (32, 71)
          for b in range(B)]
    A = jnp.concatenate(a5, axis=0)                         # (32B, 71)
    P = pool_batched(A, s4, left_pad=True)                  # (32B, 36)

    # Block 5: conv (MXU), ConstantPad1d((1,0)) + AvgPool1d(30,30): a single
    # floor-mode window = (one pad zero + first 29 samples) / 30 -> lane reduce.
    cols = []
    for b in range(B):
        y = conv_mxu(P[32 * b:32 * b + 32, :], w6, b6)      # (64, 34)
        cols.append(jnp.sum(y[:, 0:avg_take], axis=1, keepdims=True) * avg_inv)
    Pcols = jnp.concatenate(cols, axis=1)                   # (64, B)

    # FC head, batched over samples in column orientation (flatten of (64,1)
    # is just the channel axis).
    H = jnp.maximum(
        jnp.dot(wfc0[...], Pcols, preferred_element_type=jnp.float32)
        + bfc0[...], 0.0)                                   # (32, B)
    # TODO(synk): nn.Dropout is identity in inference mode; no stochastic mask.
    OUT = jnp.dot(wout[...], H, preferred_element_type=jnp.float32) + bout[...]
    o_ref[...] = OUT.astype(o_ref.dtype)                    # (class_num, B)


# ----------------------------- parameter prep ------------------------------

def bn_fold(gamma, beta, mean, var, eps=1e-5):
    scale = gamma / jnp.sqrt(var + eps)
    shift = beta - mean * scale
    return scale, shift


def _even_selector(length, out_len):
    """One-hot (length, out_len) matrix selecting columns 0, 2, 4, ..."""
    i = jnp.arange(length)[:, None]
    j = jnp.arange(out_len)[None, :]
    return (i == 2 * j).astype(jnp.float32)


def preprocess_params(params):
    """One-time folding of BatchNorm/bias into the conv & fc weights plus layout
    prep for the fused kernel.  Returns the flat tuple of kernel inputs."""
    flat = []
    for i in range(7):
        w, b, scale, shift = params[f"conv{i}"]              # w: (cout, cin, K)
        cout = w.shape[0]
        w_eff = w * scale[:, None, None]
        b_eff = (b * scale + shift).reshape(cout, 1)
        # Per-k slabs (K, cout, cin): used by both the VPU and MXU conv paths.
        flat += [jnp.transpose(w_eff, (2, 0, 1)), b_eff]

    # Pool even-column selectors.  Length trace: 600 -c> 598 -c> 596 |pool| 298
    # -c> 296 -c> 294 |pool| 147 -c> 145 |pad+pool| 73 -c> 71 |pad+pool| 36.
    # Non-padded pools select from the pair-max vector (len L-1); padded pools
    # select from [max(x0,0), pairmax...] (len L).
    flat += [_even_selector(595, 298), _even_selector(293, 147),
             _even_selector(145, 73), _even_selector(71, 36)]

    # FC head: fold BN of fc0; biases as column vectors.
    w, b, scale, shift = params["fc0"]
    flat += [w * scale[:, None], (b * scale + shift).reshape(-1, 1)]
    w, b = params["fc_out"]
    flat += [w, b.reshape(-1, 1)]
    return tuple(flat)


# ----------------------------- forward wrapper -----------------------------

def forward(x, flat_params):
    n, cin, l = x.shape
    assert (cin, l) == (1, 600), (cin, l)
    class_num = flat_params[-1].shape[0]                    # bout: (class_num, 1)

    # Batch-block the grid: whole batch per step when small, else 8 samples per
    # step (multiple of 8 keeps the output block sublane-legal; on v7x the
    # resulting multi-step grid is shared by the two TensorCores).
    B = n if n <= 8 else 8
    n_pad = -(-n // B) * B
    if n_pad != n:
        x = jnp.pad(x, ((0, n_pad - n), (0, 0), (0, 0)))
    grid = n_pad // B

    # TODO(synk): avg_take/selector lengths are hard-wired to the length-600
    # config; other example_duration*fs values need regenerated constants.
    kernel = functools.partial(_cnn_fused_kernel, batch=B,
                               avg_take=29, avg_inv=1.0 / 30.0)

    in_specs = [pl.BlockSpec((B, cin, l), lambda i: (i, 0, 0))]
    for a in flat_params:
        in_specs.append(pl.BlockSpec(a.shape, lambda i, _nd=a.ndim: (0,) * _nd))

    out = pl.pallas_call(
        kernel,
        out_shape=jax.ShapeDtypeStruct((grid, class_num, B), x.dtype),
        grid=(grid,),
        in_specs=in_specs,
        out_specs=pl.BlockSpec((None, class_num, B), lambda i: (i, 0, 0)),
        compiler_params=pltpu.CompilerParams(
            dimension_semantics=("parallel",)),
    )(x, *flat_params)
    # (grid, class, B) -> (n, class); tiny host-side transpose outside the kernel.
    return out.transpose(0, 2, 1).reshape(n_pad, class_num)[:n]


# ----------------------------- reference (pure JAX) ------------------------

def reference_forward(x, params):
    def conv_bn_relu(x, w, b, scale, shift):
        lout = x.shape[-1] - _K + 1
        y = sum(jnp.einsum("oc,ncl->nol", w[:, :, k], x[:, :, k:k + lout])
                for k in range(_K))
        y = (y + b[None, :, None]) * scale[None, :, None] + shift[None, :, None]
        return jnp.maximum(y, 0.0)

    def maxpool2(x):
        n, c, l = x.shape
        lo = l // 2
        return jnp.max(x[:, :, :2 * lo].reshape(n, c, lo, 2), axis=-1)

    def left_pad(x):
        return jnp.pad(x, ((0, 0), (0, 0), (1, 0)))

    x = conv_bn_relu(x, *params["conv0"])
    x = conv_bn_relu(x, *params["conv1"])
    x = maxpool2(x)
    x = conv_bn_relu(x, *params["conv2"])
    x = conv_bn_relu(x, *params["conv3"])
    x = maxpool2(x)
    x = conv_bn_relu(x, *params["conv4"])
    x = maxpool2(left_pad(x))
    x = conv_bn_relu(x, *params["conv5"])
    x = maxpool2(left_pad(x))
    x = conv_bn_relu(x, *params["conv6"])
    x = left_pad(x)
    x = jnp.mean(x[:, :, 0:30], axis=-1)                    # AvgPool1d(30,30), floor
    x = x.reshape(x.shape[0], -1)
    w, b, sc, sh = params["fc0"]
    x = jnp.maximum((x @ w.T + b) * sc + sh, 0.0)
    w, b = params["fc_out"]
    return x @ w.T + b


# ----------------------------- init ----------------------------------------

def init_params(key):
    params = {}
    # (Cin, Cout) for the 7 conv layers; filters_num=4, doubled per block.
    conv_dims = [(1, 4), (4, 4), (4, 8), (8, 8), (8, 16), (16, 32), (32, 64)]
    keys = jax.random.split(key, len(conv_dims) + 2)

    def bn_params(k, c):
        k3, k4, k5, k6 = jax.random.split(k, 4)
        gamma = 1.0 + 0.1 * jax.random.normal(k3, (c,), jnp.float32)
        beta = 0.05 * jax.random.normal(k4, (c,), jnp.float32)
        mean = 0.02 * jax.random.normal(k5, (c,), jnp.float32)
        var = 0.9 + 0.2 * jax.random.uniform(k6, (c,), jnp.float32)
        return bn_fold(gamma, beta, mean, var)

    for i, (cin, cout) in enumerate(conv_dims):
        k1, k2, kbn = jax.random.split(keys[i], 3)
        bound = 1.0 / math.sqrt(cin * 3)
        w = jax.random.uniform(k1, (cout, cin, 3), jnp.float32, -bound, bound)
        b = jax.random.uniform(k2, (cout,), jnp.float32, -bound, bound)
        scale, shift = bn_params(kbn, cout)
        params[f"conv{i}"] = (w, b, scale, shift)

    # fc0: Linear(flatten_size=64, fc_units=32) + BN + ReLU (+ Dropout)
    k1, k2, kbn = jax.random.split(keys[-2], 3)
    bound = 1.0 / math.sqrt(64)
    w = jax.random.uniform(k1, (32, 64), jnp.float32, -bound, bound)
    b = jax.random.uniform(k2, (32,), jnp.float32, -bound, bound)
    scale, shift = bn_params(kbn, 32)
    params["fc0"] = (w, b, scale, shift)

    # fc_out: Linear(fc_units=32, class_num=3)
    k1, k2 = jax.random.split(keys[-1])
    bound = 1.0 / math.sqrt(32)
    w = jax.random.uniform(k1, (3, 32), jnp.float32, -bound, bound)
    b = jax.random.uniform(k2, (3,), jnp.float32, -bound, bound)
    params["fc_out"] = (w, b)
    return params


if __name__ == "__main__":
    key = jax.random.PRNGKey(0)
    pkey, xkey = jax.random.split(key)
    params = init_params(pkey)
    flat_params = preprocess_params(params)      # one-time prep, outside the jit'd fwd

    # Input: (batch=2, channels=1, length=600)  ->  output (2, class_num=3)
    x = jax.random.normal(xkey, (2, 1, 600), jnp.float32)

    fwd = jax.jit(forward)
    out = jax.block_until_ready(fwd(x, flat_params))
    assert out.shape == (2, 3), out.shape
    assert bool(jnp.all(jnp.isfinite(out)))

    # Parity with the un-fused pure-JAX reference.  Tolerance allows for the
    # different f32 matmul pass configurations XLA / Mosaic may pick on the MXU.
    ref = jax.block_until_ready(reference_forward(x, params))
    assert bool(jnp.allclose(out, ref, rtol=2e-2, atol=2e-3)), \
        float(jnp.max(jnp.abs(out - ref)))

    print("KERNEL_OK")
</pallas_src>

<mosaic_0001>
module attributes {stable_mosaic.version = 11 : i64} {
  func.func @_cnn_fused_kernel(%arg0: i32, %arg1: memref<2x1x600xf32, #tpu.memory_space<vmem>>, %arg2: memref<3x4x1xf32, #tpu.memory_space<vmem>>, %arg3: memref<4x1xf32, #tpu.memory_space<vmem>>, %arg4: memref<3x4x4xf32, #tpu.memory_space<vmem>>, %arg5: memref<4x1xf32, #tpu.memory_space<vmem>>, %arg6: memref<3x8x4xf32, #tpu.memory_space<vmem>>, %arg7: memref<8x1xf32, #tpu.memory_space<vmem>>, %arg8: memref<3x8x8xf32, #tpu.memory_space<vmem>>, %arg9: memref<8x1xf32, #tpu.memory_space<vmem>>, %arg10: memref<3x16x8xf32, #tpu.memory_space<vmem>>, %arg11: memref<16x1xf32, #tpu.memory_space<vmem>>, %arg12: memref<3x32x16xf32, #tpu.memory_space<vmem>>, %arg13: memref<32x1xf32, #tpu.memory_space<vmem>>, %arg14: memref<3x64x32xf32, #tpu.memory_space<vmem>>, %arg15: memref<64x1xf32, #tpu.memory_space<vmem>>, %arg16: memref<595x298xf32, #tpu.memory_space<vmem>>, %arg17: memref<293x147xf32, #tpu.memory_space<vmem>>, %arg18: memref<145x73xf32, #tpu.memory_space<vmem>>, %arg19: memref<71x36xf32, #tpu.memory_space<vmem>>, %arg20: memref<32x64xf32, #tpu.memory_space<vmem>>, %arg21: memref<32x1xf32, #tpu.memory_space<vmem>>, %arg22: memref<3x32xf32, #tpu.memory_space<vmem>>, %arg23: memref<3x1xf32, #tpu.memory_space<vmem>>, %arg24: memref<1x3x2xf32, #tpu.memory_space<vmem>>) attributes {dimension_semantics = [#tpu.dimension_semantics<parallel>], iteration_bounds = array<i64: 1>, scalar_prefetch = 0 : i64, scratch_operands = 0 : i64, tpu.core_type = #tpu.core_type<tc>, window_params = [{transform_indices = @transform_0, window_bounds = array<i64: 2, 1, 600>}, {pipeline_mode = #tpu.pipeline_mode<synchronous>, transform_indices = @transform_1, window_bounds = array<i64: 3, 4, 1>}, {pipeline_mode = #tpu.pipeline_mode<synchronous>, transform_indices = @transform_2, window_bounds = array<i64: 4, 1>}, {pipeline_mode = #tpu.pipeline_mode<synchronous>, transform_indices = @transform_3, window_bounds = array<i64: 3, 4, 4>}, {pipeline_mode = #tpu.pipeline_mode<synchronous>, transform_indices = @transform_4, window_bounds = array<i64: 4, 1>}, {pipeline_mode = #tpu.pipeline_mode<synchronous>, transform_indices = @transform_5, window_bounds = array<i64: 3, 8, 4>}, {pipeline_mode = #tpu.pipeline_mode<synchronous>, transform_indices = @transform_6, window_bounds = array<i64: 8, 1>}, {pipeline_mode = #tpu.pipeline_mode<synchronous>, transform_indices = @transform_7, window_bounds = array<i64: 3, 8, 8>}, {pipeline_mode = #tpu.pipeline_mode<synchronous>, transform_indices = @transform_8, window_bounds = array<i64: 8, 1>}, {pipeline_mode = #tpu.pipeline_mode<synchronous>, transform_indices = @transform_9, window_bounds = array<i64: 3, 16, 8>}, {pipeline_mode = #tpu.pipeline_mode<synchronous>, transform_indices = @transform_10, window_bounds = array<i64: 16, 1>}, {pipeline_mode = #tpu.pipeline_mode<synchronous>, transform_indices = @transform_11, window_bounds = array<i64: 3, 32, 16>}, {pipeline_mode = #tpu.pipeline_mode<synchronous>, transform_indices = @transform_12, window_bounds = array<i64: 32, 1>}, {pipeline_mode = #tpu.pipeline_mode<synchronous>, transform_indices = @transform_13, window_bounds = array<i64: 3, 64, 32>}, {pipeline_mode = #tpu.pipeline_mode<synchronous>, transform_indices = @transform_14, window_bounds = array<i64: 64, 1>}, {pipeline_mode = #tpu.pipeline_mode<synchronous>, transform_indices = @transform_15, window_bounds = array<i64: 595, 298>}, {pipeline_mode = #tpu.pipeline_mode<synchronous>, transform_indices = @transform_16, window_bounds = array<i64: 293, 147>}, {pipeline_mode = #tpu.pipeline_mode<synchronous>, transform_indices = @transform_17, window_bounds = array<i64: 145, 73>}, {pipeline_mode = #tpu.pipeline_mode<synchronous>, transform_indices = @transform_18, window_bounds = array<i64: 71, 36>}, {pipeline_mode = #tpu.pipeline_mode<synchronous>, transform_indices = @transform_19, window_bounds = array<i64: 32, 64>}, {pipeline_mode = #tpu.pipeline_mode<synchronous>, transform_indices = @transform_20, window_bounds = array<i64: 32, 1>}, {pipeline_mode = #tpu.pipeline_mode<synchronous>, transform_indices = @transform_21, window_bounds = array<i64: 3, 32>}, {pipeline_mode = #tpu.pipeline_mode<synchronous>, transform_indices = @transform_22, window_bounds = array<i64: 3, 1>}, {transform_indices = @transform_23, window_bounds = array<i64: 1, 3, 2>}]} {
    %c0 = arith.constant 0 : index
    %c0_0 = arith.constant 0 : index
    %c0_1 = arith.constant 0 : index
    %0 = vector.load %arg1[%c0, %c0_0, %c0_1] : memref<2x1x600xf32, #tpu.memory_space<vmem>>, vector<1x1x600xf32>
    %1 = vector.shape_cast %0 : vector<1x1x600xf32> to vector<1x600xf32>
    %cst = arith.constant 0.000000e+00 : f32
    %2 = vector.broadcast %cst : f32 to vector<4x598xf32>
    %c0_2 = arith.constant 0 : index
    %c0_3 = arith.constant 0 : index
    %c0_4 = arith.constant 0 : index
    %3 = vector.load %arg2[%c0_2, %c0_3, %c0_4] : memref<3x4x1xf32, #tpu.memory_space<vmem>>, vector<1x4x1xf32>
    %4 = vector.shape_cast %3 : vector<1x4x1xf32> to vector<4x1xf32>
    %5 = vector.extract_strided_slice %1 {offsets = [0, 0], sizes = [1, 598], strides = [1, 1]} : vector<1x600xf32> to vector<1x598xf32>
    %6 = vector.broadcast %4 : vector<4x1xf32> to vector<4x598xf32>
    %7 = vector.broadcast %5 : vector<1x598xf32> to vector<4x598xf32>
    %8 = arith.mulf %6, %7 : vector<4x598xf32>
    %9 = arith.addf %2, %8 : vector<4x598xf32>
    %c1 = arith.constant 1 : index
    %c0_5 = arith.constant 0 : index
    %c0_6 = arith.constant 0 : index
    %10 = vector.load %arg2[%c1, %c0_5, %c0_6] : memref<3x4x1xf32, #tpu.memory_space<vmem>>, vector<1x4x1xf32>
    %11 = vector.shape_cast %10 : vector<1x4x1xf32> to vector<4x1xf32>
    %12 = vector.extract_strided_slice %1 {offsets = [0, 1], sizes = [1, 598], strides = [1, 1]} : vector<1x600xf32> to vector<1x598xf32>
    %13 = vector.broadcast %11 : vector<4x1xf32> to vector<4x598xf32>
    %14 = vector.broadcast %12 : vector<1x598xf32> to vector<4x598xf32>
    %15 = arith.mulf %13, %14 : vector<4x598xf32>
    %16 = arith.addf %9, %15 : vector<4x598xf32>
    %c2 = arith.constant 2 : index
    %c0_7 = arith.constant 0 : index
    %c0_8 = arith.constant 0 : index
    %17 = vector.load %arg2[%c2, %c0_7, %c0_8] : memref<3x4x1xf32, #tpu.memory_space<vmem>>, vector<1x4x1xf32>
    %18 = vector.shape_cast %17 : vector<1x4x1xf32> to vector<4x1xf32>
    %19 = vector.extract_strided_slice %1 {offsets = [0, 2], sizes = [1, 598], strides = [1, 1]} : vector<1x600xf32> to vector<1x598xf32>
    %20 = vector.broadcast %18 : vector<4x1xf32> to vector<4x598xf32>
    %21 = vector.broadcast %19 : vector<1x598xf32> to vector<4x598xf32>
    %22 = arith.mulf %20, %21 : vector<4x598xf32>
    %23 = arith.addf %16, %22 : vector<4x598xf32>
    %c0_9 = arith.constant 0 : index
    %c0_10 = arith.constant 0 : index
    %24 = vector.load %arg3[%c0_9, %c0_10] : memref<4x1xf32, #tpu.memory_space<vmem>>, vector<4x1xf32>
    %25 = vector.broadcast %24 : vector<4x1xf32> to vector<4x598xf32>
    %26 = arith.addf %23, %25 : vector<4x598xf32>
    %cst_11 = arith.constant 0.000000e+00 : f32
    %27 = vector.broadcast %cst_11 : f32 to vector<4x598xf32>
    %28 = arith.maximumf %26, %27 : vector<4x598xf32>
    %cst_12 = arith.constant 0.000000e+00 : f32
    %29 = vector.broadcast %cst_12 : f32 to vector<4x596xf32>
    %c0_13 = arith.constant 0 : index
    %c0_14 = arith.constant 0 : index
    %c0_15 = arith.constant 0 : index
    %30 = vector.load %arg4[%c0_13, %c0_14, %c0_15] : memref<3x4x4xf32, #tpu.memory_space<vmem>>, vector<1x4x4xf32>
    %31 = vector.shape_cast %30 : vector<1x4x4xf32> to vector<4x4xf32>
    %32 = vector.extract_strided_slice %31 {offsets = [0, 0], sizes = [4, 1], strides = [1, 1]} : vector<4x4xf32> to vector<4x1xf32>
    %33 = vector.extract_strided_slice %28 {offsets = [0, 0], sizes = [1, 596], strides = [1, 1]} : vector<4x598xf32> to vector<1x596xf32>
    %34 = vector.broadcast %32 : vector<4x1xf32> to vector<4x596xf32>
    %35 = vector.broadcast %33 : vector<1x596xf32> to vector<4x596xf32>
    %36 = arith.mulf %34, %35 : vector<4x596xf32>
    %37 = arith.addf %29, %36 : vector<4x596xf32>
    %38 = vector.extract_strided_slice %31 {offsets = [0, 1], sizes = [4, 1], strides = [1, 1]} : vector<4x4xf32> to vector<4x1xf32>
    %39 = vector.extract_strided_slice %28 {offsets = [1, 0], sizes = [1, 596], strides = [1, 1]} : vector<4x598xf32> to vector<1x596xf32>
    %40 = vector.broadcast %38 : vector<4x1xf32> to vector<4x596xf32>
    %41 = vector.broadcast %39 : vector<1x596xf32> to vector<4x596xf32>
    %42 = arith.mulf %40, %41 : vector<4x596xf32>
    %43 = arith.addf %37, %42 : vector<4x596xf32>
    %44 = vector.extract_strided_slice %31 {offsets = [0, 2], sizes = [4, 1], strides = [1, 1]} : vector<4x4xf32> to vector<4x1xf32>
    %45 = vector.extract_strided_slice %28 {offsets = [2, 0], sizes = [1, 596], strides = [1, 1]} : vector<4x598xf32> to vector<1x596xf32>
    %46 = vector.broadcast %44 : vector<4x1xf32> to vector<4x596xf32>
    %47 = vector.broadcast %45 : vector<1x596xf32> to vector<4x596xf32>
    %48 = arith.mulf %46, %47 : vector<4x596xf32>
    %49 = arith.addf %43, %48 : vector<4x596xf32>
    %50 = vector.extract_strided_slice %31 {offsets = [0, 3], sizes = [4, 1], strides = [1, 1]} : vector<4x4xf32> to vector<4x1xf32>
    %51 = vector.extract_strided_slice %28 {offsets = [3, 0], sizes = [1, 596], strides = [1, 1]} : vector<4x598xf32> to vector<1x596xf32>
    %52 = vector.broadcast %50 : vector<4x1xf32> to vector<4x596xf32>
    %53 = vector.broadcast %51 : vector<1x596xf32> to vector<4x596xf32>
    %54 = arith.mulf %52, %53 : vector<4x596xf32>
    %55 = arith.addf %49, %54 : vector<4x596xf32>
    %c1_16 = arith.constant 1 : index
    %c0_17 = arith.constant 0 : index
    %c0_18 = arith.constant 0 : index
    %56 = vector.load %arg4[%c1_16, %c0_17, %c0_18] : memref<3x4x4xf32, #tpu.memory_space<vmem>>, vector<1x4x4xf32>
    %57 = vector.shape_cast %56 : vector<1x4x4xf32> to vector<4x4xf32>
    %58 = vector.extract_strided_slice %57 {offsets = [0, 0], sizes = [4, 1], strides = [1, 1]} : vector<4x4xf32> to vector<4x1xf32>
    %59 = vector.extract_strided_slice %28 {offsets = [0, 1], sizes = [1, 596], strides = [1, 1]} : vector<4x598xf32> to vector<1x596xf32>
    %60 = vector.broadcast %58 : vector<4x1xf32> to vector<4x596xf32>
    %61 = vector.broadcast %59 : vector<1x596xf32> to vector<4x596xf32>
    %62 = arith.mulf %60, %61 : vector<4x596xf32>
    %63 = arith.addf %55, %62 : vector<4x596xf32>
    %64 = vector.extract_strided_slice %57 {offsets = [0, 1], sizes = [4, 1], strides = [1, 1]} : vector<4x4xf32> to vector<4x1xf32>
    %65 = vector.extract_strided_slice %28 {offsets = [1, 1], sizes = [1, 596], strides = [1, 1]} : vector<4x598xf32> to vector<1x596xf32>
    %66 = vector.broadcast %64 : vector<4x1xf32> to vector<4x596xf32>
    %67 = vector.broadcast %65 : vector<1x596xf32> to vector<4x596xf32>
    %68 = arith.mulf %66, %67 : vector<4x596xf32>
    %69 = arith.addf %63, %68 : vector<4x596xf32>
    %70 = vector.extract_strided_slice %57 {offsets = [0, 2], sizes = [4, 1], strides = [1, 1]} : vector<4x4xf32> to vector<4x1xf32>
    %71 = vector.extract_strided_slice %28 {offsets = [2, 1], sizes = [1, 596], strides = [1, 1]} : vector<4x598xf32> to vector<1x596xf32>
    %72 = vector.broadcast %70 : vector<4x1xf32> to vector<4x596xf32>
    %73 = vector.broadcast %71 : vector<1x596xf32> to vector<4x596xf32>
    %74 = arith.mulf %72, %73 : vector<4x596xf32>
    %75 = arith.addf %69, %74 : vector<4x596xf32>
    %76 = vector.extract_strided_slice %57 {offsets = [0, 3], sizes = [4, 1], strides = [1, 1]} : vector<4x4xf32> to vector<4x1xf32>
    %77 = vector.extract_strided_slice %28 {offsets = [3, 1], sizes = [1, 596], strides = [1, 1]} : vector<4x598xf32> to vector<1x596xf32>
    %78 = vector.broadcast %76 : vector<4x1xf32> to vector<4x596xf32>
    %79 = vector.broadcast %77 : vector<1x596xf32> to vector<4x596xf32>
    %80 = arith.mulf %78, %79 : vector<4x596xf32>
    %81 = arith.addf %75, %80 : vector<4x596xf32>
    %c2_19 = arith.constant 2 : index
    %c0_20 = arith.constant 0 : index
    %c0_21 = arith.constant 0 : index
    %82 = vector.load %arg4[%c2_19, %c0_20, %c0_21] : memref<3x4x4xf32, #tpu.memory_space<vmem>>, vector<1x4x4xf32>
    %83 = vector.shape_cast %82 : vector<1x4x4xf32> to vector<4x4xf32>
    %84 = vector.extract_strided_slice %83 {offsets = [0, 0], sizes = [4, 1], strides = [1, 1]} : vector<4x4xf32> to vector<4x1xf32>
    %85 = vector.extract_strided_slice %28 {offsets = [0, 2], sizes = [1, 596], strides = [1, 1]} : vector<4x598xf32> to vector<1x596xf32>
    %86 = vector.broadcast %84 : vector<4x1xf32> to vector<4x596xf32>
    %87 = vector.broadcast %85 : vector<1x596xf32> to vector<4x596xf32>
    %88 = arith.mulf %86, %87 : vector<4x596xf32>
    %89 = arith.addf %81, %88 : vector<4x596xf32>
    %90 = vector.extract_strided_slice %83 {offsets = [0, 1], sizes = [4, 1], strides = [1, 1]} : vector<4x4xf32> to vector<4x1xf32>
    %91 = vector.extract_strided_slice %28 {offsets = [1, 2], sizes = [1, 596], strides = [1, 1]} : vector<4x598xf32> to vector<1x596xf32>
    %92 = vector.broadcast %90 : vector<4x1xf32> to vector<4x596xf32>
    %93 = vector.broadcast %91 : vector<1x596xf32> to vector<4x596xf32>
    %94 = arith.mulf %92, %93 : vector<4x596xf32>
    %95 = arith.addf %89, %94 : vector<4x596xf32>
    %96 = vector.extract_strided_slice %83 {offsets = [0, 2], sizes = [4, 1], strides = [1, 1]} : vector<4x4xf32> to vector<4x1xf32>
    %97 = vector.extract_strided_slice %28 {offsets = [2, 2], sizes = [1, 596], strides = [1, 1]} : vector<4x598xf32> to vector<1x596xf32>
    %98 = vector.broadcast %96 : vector<4x1xf32> to vector<4x596xf32>
    %99 = vector.broadcast %97 : vector<1x596xf32> to vector<4x596xf32>
    %100 = arith.mulf %98, %99 : vector<4x596xf32>
    %101 = arith.addf %95, %100 : vector<4x596xf32>
    %102 = vector.extract_strided_slice %83 {offsets = [0, 3], sizes = [4, 1], strides = [1, 1]} : vector<4x4xf32> to vector<4x1xf32>
    %103 = vector.extract_strided_slice %28 {offsets = [3, 2], sizes = [1, 596], strides = [1, 1]} : vector<4x598xf32> to vector<1x596xf32>
    %104 = vector.broadcast %102 : vector<4x1xf32> to vector<4x596xf32>
    %105 = vector.broadcast %103 : vector<1x596xf32> to vector<4x596xf32>
    %106 = arith.mulf %104, %105 : vector<4x596xf32>
    %107 = arith.addf %101, %106 : vector<4x596xf32>
    %c0_22 = arith.constant 0 : index
    %c0_23 = arith.constant 0 : index
    %108 = vector.load %arg5[%c0_22, %c0_23] : memref<4x1xf32, #tpu.memory_space<vmem>>, vector<4x1xf32>
    %109 = vector.broadcast %108 : vector<4x1xf32> to vector<4x596xf32>
    %110 = arith.addf %107, %109 : vector<4x596xf32>
    %cst_24 = arith.constant 0.000000e+00 : f32
    %111 = vector.broadcast %cst_24 : f32 to vector<4x596xf32>
    %112 = arith.maximumf %110, %111 : vector<4x596xf32>
    %c1_25 = arith.constant 1 : index
    %c0_26 = arith.constant 0 : index
    %c0_27 = arith.constant 0 : index
    %113 = vector.load %arg1[%c1_25, %c0_26, %c0_27] : memref<2x1x600xf32, #tpu.memory_space<vmem>>, vector<1x1x600xf32>
    %114 = vector.shape_cast %113 : vector<1x1x600xf32> to vector<1x600xf32>
    %cst_28 = arith.constant 0.000000e+00 : f32
    %115 = vector.broadcast %cst_28 : f32 to vector<4x598xf32>
    %c0_29 = arith.constant 0 : index
    %c0_30 = arith.constant 0 : index
    %c0_31 = arith.constant 0 : index
    %116 = vector.load %arg2[%c0_29, %c0_30, %c0_31] : memref<3x4x1xf32, #tpu.memory_space<vmem>>, vector<1x4x1xf32>
    %117 = vector.shape_cast %116 : vector<1x4x1xf32> to vector<4x1xf32>
    %118 = vector.extract_strided_slice %114 {offsets = [0, 0], sizes = [1, 598], strides = [1, 1]} : vector<1x600xf32> to vector<1x598xf32>
    %119 = vector.broadcast %117 : vector<4x1xf32> to vector<4x598xf32>
    %120 = vector.broadcast %118 : vector<1x598xf32> to vector<4x598xf32>
    %121 = arith.mulf %119, %120 : vector<4x598xf32>
    %122 = arith.addf %115, %121 : vector<4x598xf32>
    %c1_32 = arith.constant 1 : index
    %c0_33 = arith.constant 0 : index
    %c0_34 = arith.constant 0 : index
    %123 = vector.load %arg2[%c1_32, %c0_33, %c0_34] : memref<3x4x1xf32, #tpu.memory_space<vmem>>, vector<1x4x1xf32>
    %124 = vector.shape_cast %123 : vector<1x4x1xf32> to vector<4x1xf32>
    %125 = vector.extract_strided_slice %114 {offsets = [0, 1], sizes = [1, 598], strides = [1, 1]} : vector<1x600xf32> to vector<1x598xf32>
    %126 = vector.broadcast %124 : vector<4x1xf32> to vector<4x598xf32>
    %127 = vector.broadcast %125 : vector<1x598xf32> to vector<4x598xf32>
    %128 = arith.mulf %126, %127 : vector<4x598xf32>
    %129 = arith.addf %122, %128 : vector<4x598xf32>
    %c2_35 = arith.constant 2 : index
    %c0_36 = arith.constant 0 : index
    %c0_37 = arith.constant 0 : index
    %130 = vector.load %arg2[%c2_35, %c0_36, %c0_37] : memref<3x4x1xf32, #tpu.memory_space<vmem>>, vector<1x4x1xf32>
    %131 = vector.shape_cast %130 : vector<1x4x1xf32> to vector<4x1xf32>
    %132 = vector.extract_strided_slice %114 {offsets = [0, 2], sizes = [1, 598], strides = [1, 1]} : vector<1x600xf32> to vector<1x598xf32>
    %133 = vector.broadcast %131 : vector<4x1xf32> to vector<4x598xf32>
    %134 = vector.broadcast %132 : vector<1x598xf32> to vector<4x598xf32>
    %135 = arith.mulf %133, %134 : vector<4x598xf32>
    %136 = arith.addf %129, %135 : vector<4x598xf32>
    %c0_38 = arith.constant 0 : index
    %c0_39 = arith.constant 0 : index
    %137 = vector.load %arg3[%c0_38, %c0_39] : memref<4x1xf32, #tpu.memory_space<vmem>>, vector<4x1xf32>
    %138 = vector.broadcast %137 : vector<4x1xf32> to vector<4x598xf32>
    %139 = arith.addf %136, %138 : vector<4x598xf32>
    %cst_40 = arith.constant 0.000000e+00 : f32
    %140 = vector.broadcast %cst_40 : f32 to vector<4x598xf32>
    %141 = arith.maximumf %139, %140 : vector<4x598xf32>
    %cst_41 = arith.constant 0.000000e+00 : f32
    %142 = vector.broadcast %cst_41 : f32 to vector<4x596xf32>
    %c0_42 = arith.constant 0 : index
    %c0_43 = arith.constant 0 : index
    %c0_44 = arith.constant 0 : index
    %143 = vector.load %arg4[%c0_42, %c0_43, %c0_44] : memref<3x4x4xf32, #tpu.memory_space<vmem>>, vector<1x4x4xf32>
    %144 = vector.shape_cast %143 : vector<1x4x4xf32> to vector<4x4xf32>
    %145 = vector.extract_strided_slice %144 {offsets = [0, 0], sizes = [4, 1], strides = [1, 1]} : vector<4x4xf32> to vector<4x1xf32>
    %146 = vector.extract_strided_slice %141 {offsets = [0, 0], sizes = [1, 596], strides = [1, 1]} : vector<4x598xf32> to vector<1x596xf32>
    %147 = vector.broadcast %145 : vector<4x1xf32> to vector<4x596xf32>
    %148 = vector.broadcast %146 : vector<1x596xf32> to vector<4x596xf32>
    %149 = arith.mulf %147, %148 : vector<4x596xf32>
    %150 = arith.addf %142, %149 : vector<4x596xf32>
    %151 = vector.extract_strided_slice %144 {offsets = [0, 1], sizes = [4, 1], strides = [1, 1]} : vector<4x4xf32> to vector<4x1xf32>
    %152 = vector.extract_strided_slice %141 {offsets = [1, 0], sizes = [1, 596], strides = [1, 1]} : vector<4x598xf32> to vector<1x596xf32>
    %153 = vector.broadcast %151 : vector<4x1xf32> to vector<4x596xf32>
    %154 = vector.broadcast %152 : vector<1x596xf32> to vector<4x596xf32>
    %155 = arith.mulf %153, %154 : vector<4x596xf32>
    %156 = arith.addf %150, %155 : vector<4x596xf32>
    %157 = vector.extract_strided_slice %144 {offsets = [0, 2], sizes = [4, 1], strides = [1, 1]} : vector<4x4xf32> to vector<4x1xf32>
    %158 = vector.extract_strided_slice %141 {offsets = [2, 0], sizes = [1, 596], strides = [1, 1]} : vector<4x598xf32> to vector<1x596xf32>
    %159 = vector.broadcast %157 : vector<4x1xf32> to vector<4x596xf32>
    %160 = vector.broadcast %158 : vector<1x596xf32> to vector<4x596xf32>
    %161 = arith.mulf %159, %160 : vector<4x596xf32>
    %162 = arith.addf %156, %161 : vector<4x596xf32>
    %163 = vector.extract_strided_slice %144 {offsets = [0, 3], sizes = [4, 1], strides = [1, 1]} : vector<4x4xf32> to vector<4x1xf32>
    %164 = vector.extract_strided_slice %141 {offsets = [3, 0], sizes = [1, 596], strides = [1, 1]} : vector<4x598xf32> to vector<1x596xf32>
    %165 = vector.broadcast %163 : vector<4x1xf32> to vector<4x596xf32>
    %166 = vector.broadcast %164 : vector<1x596xf32> to vector<4x596xf32>
    %167 = arith.mulf %165, %166 : vector<4x596xf32>
    %168 = arith.addf %162, %167 : vector<4x596xf32>
    %c1_45 = arith.constant 1 : index
    %c0_46 = arith.constant 0 : index
    %c0_47 = arith.constant 0 : index
    %169 = vector.load %arg4[%c1_45, %c0_46, %c0_47] : memref<3x4x4xf32, #tpu.memory_space<vmem>>, vector<1x4x4xf32>
    %170 = vector.shape_cast %169 : vector<1x4x4xf32> to vector<4x4xf32>
    %171 = vector.extract_strided_slice %170 {offsets = [0, 0], sizes = [4, 1], strides = [1, 1]} : vector<4x4xf32> to vector<4x1xf32>
    %172 = vector.extract_strided_slice %141 {offsets = [0, 1], sizes = [1, 596], strides = [1, 1]} : vector<4x598xf32> to vector<1x596xf32>
    %173 = vector.broadcast %171 : vector<4x1xf32> to vector<4x596xf32>
    %174 = vector.broadcast %172 : vector<1x596xf32> to vector<4x596xf32>
    %175 = arith.mulf %173, %174 : vector<4x596xf32>
    %176 = arith.addf %168, %175 : vector<4x596xf32>
    %177 = vector.extract_strided_slice %170 {offsets = [0, 1], sizes = [4, 1], strides = [1, 1]} : vector<4x4xf32> to vector<4x1xf32>
    %178 = vector.extract_strided_slice %141 {offsets = [1, 1], sizes = [1, 596], strides = [1, 1]} : vector<4x598xf32> to vector<1x596xf32>
    %179 = vector.broadcast %177 : vector<4x1xf32> to vector<4x596xf32>
    %180 = vector.broadcast %178 : vector<1x596xf32> to vector<4x596xf32>
    %181 = arith.mulf %179, %180 : vector<4x596xf32>
    %182 = arith.addf %176, %181 : vector<4x596xf32>
    %183 = vector.extract_strided_slice %170 {offsets = [0, 2], sizes = [4, 1], strides = [1, 1]} : vector<4x4xf32> to vector<4x1xf32>
    %184 = vector.extract_strided_slice %141 {offsets = [2, 1], sizes = [1, 596], strides = [1, 1]} : vector<4x598xf32> to vector<1x596xf32>
    %185 = vector.broadcast %183 : vector<4x1xf32> to vector<4x596xf32>
    %186 = vector.broadcast %184 : vector<1x596xf32> to vector<4x596xf32>
    %187 = arith.mulf %185, %186 : vector<4x596xf32>
    %188 = arith.addf %182, %187 : vector<4x596xf32>
    %189 = vector.extract_strided_slice %170 {offsets = [0, 3], sizes = [4, 1], strides = [1, 1]} : vector<4x4xf32> to vector<4x1xf32>
    %190 = vector.extract_strided_slice %141 {offsets = [3, 1], sizes = [1, 596], strides = [1, 1]} : vector<4x598xf32> to vector<1x596xf32>
    %191 = vector.broadcast %189 : vector<4x1xf32> to vector<4x596xf32>
    %192 = vector.broadcast %190 : vector<1x596xf32> to vector<4x596xf32>
    %193 = arith.mulf %191, %192 : vector<4x596xf32>
    %194 = arith.addf %188, %193 : vector<4x596xf32>
    %c2_48 = arith.constant 2 : index
    %c0_49 = arith.constant 0 : index
    %c0_50 = arith.constant 0 : index
    %195 = vector.load %arg4[%c2_48, %c0_49, %c0_50] : memref<3x4x4xf32, #tpu.memory_space<vmem>>, vector<1x4x4xf32>
    %196 = vector.shape_cast %195 : vector<1x4x4xf32> to vector<4x4xf32>
    %197 = vector.extract_strided_slice %196 {offsets = [0, 0], sizes = [4, 1], strides = [1, 1]} : vector<4x4xf32> to vector<4x1xf32>
    %198 = vector.extract_strided_slice %141 {offsets = [0, 2], sizes = [1, 596], strides = [1, 1]} : vector<4x598xf32> to vector<1x596xf32>
    %199 = vector.broadcast %197 : vector<4x1xf32> to vector<4x596xf32>
    %200 = vector.broadcast %198 : vector<1x596xf32> to vector<4x596xf32>
    %201 = arith.mulf %199, %200 : vector<4x596xf32>
    %202 = arith.addf %194, %201 : vector<4x596xf32>
    %203 = vector.extract_strided_slice %196 {offsets = [0, 1], sizes = [4, 1], strides = [1, 1]} : vector<4x4xf32> to vector<4x1xf32>
    %204 = vector.extract_strided_slice %141 {offsets = [1, 2], sizes = [1, 596], strides = [1, 1]} : vector<4x598xf32> to vector<1x596xf32>
    %205 = vector.broadcast %203 : vector<4x1xf32> to vector<4x596xf32>
    %206 = vector.broadcast %204 : vector<1x596xf32> to vector<4x596xf32>
    %207 = arith.mulf %205, %206 : vector<4x596xf32>
    %208 = arith.addf %202, %207 : vector<4x596xf32>
    %209 = vector.extract_strided_slice %196 {offsets = [0, 2], sizes = [4, 1], strides = [1, 1]} : vector<4x4xf32> to vector<4x1xf32>
    %210 = vector.extract_strided_slice %141 {offsets = [2, 2], sizes = [1, 596], strides = [1, 1]} : vector<4x598xf32> to vector<1x596xf32>
    %211 = vector.broadcast %209 : vector<4x1xf32> to vector<4x596xf32>
    %212 = vector.broadcast %210 : vector<1x596xf32> to vector<4x596xf32>
    %213 = arith.mulf %211, %212 : vector<4x596xf32>
    %214 = arith.addf %208, %213 : vector<4x596xf32>
    %215 = vector.extract_strided_slice %196 {offsets = [0, 3], sizes = [4, 1], strides = [1, 1]} : vector<4x4xf32> to vector<4x1xf32>
    %216 = vector.extract_strided_slice %141 {offsets = [3, 2], sizes = [1, 596], strides = [1, 1]} : vector<4x598xf32> to vector<1x596xf32>
    %217 = vector.broadcast %215 : vector<4x1xf32> to vector<4x596xf32>
    %218 = vector.broadcast %216 : vector<1x596xf32> to vector<4x596xf32>
    %219 = arith.mulf %217, %218 : vector<4x596xf32>
    %220 = arith.addf %214, %219 : vector<4x596xf32>
    %c0_51 = arith.constant 0 : index
    %c0_52 = arith.constant 0 : index
    %221 = vector.load %arg5[%c0_51, %c0_52] : memref<4x1xf32, #tpu.memory_space<vmem>>, vector<4x1xf32>
    %222 = vector.broadcast %221 : vector<4x1xf32> to vector<4x596xf32>
    %223 = arith.addf %220, %222 : vector<4x596xf32>
    %cst_53 = arith.constant 0.000000e+00 : f32
    %224 = vector.broadcast %cst_53 : f32 to vector<4x596xf32>
    %225 = arith.maximumf %223, %224 : vector<4x596xf32>
    %226 = tpu.concatenate %112, %225 in 0 : vector<4x596xf32>, vector<4x596xf32> -> vector<8x596xf32>
    %227 = vector.extract_strided_slice %226 {offsets = [0, 1], sizes = [8, 595], strides = [1, 1]} : vector<8x596xf32> to vector<8x595xf32>
    %228 = vector.extract_strided_slice %226 {offsets = [0, 0], sizes = [8, 595], strides = [1, 1]} : vector<8x596xf32> to vector<8x595xf32>
    %229 = arith.maximumf %227, %228 : vector<8x595xf32>
    %c0_54 = arith.constant 0 : index
    %c0_55 = arith.constant 0 : index
    %230 = vector.load %arg16[%c0_54, %c0_55] : memref<595x298xf32, #tpu.memory_space<vmem>>, vector<595x298xf32>
    %cst_56 = arith.constant dense<0.000000e+00> : vector<8x298xf32>
    %231 = tpu.matmul %229, %230, %cst_56 {dimension_numbers = #tpu.dot_dimension_numbers<[1], [0], [0], [1], [0, 0, 1, 1], [], []>} : vector<8x595xf32>, vector<595x298xf32>, vector<8x298xf32> -> vector<8x298xf32>
    %232 = vector.extract_strided_slice %231 {offsets = [0, 0], sizes = [4, 298], strides = [1, 1]} : vector<8x298xf32> to vector<4x298xf32>
    %cst_57 = arith.constant 0.000000e+00 : f32
    %233 = vector.broadcast %cst_57 : f32 to vector<8x296xf32>
    %c0_58 = arith.constant 0 : index
    %c0_59 = arith.constant 0 : index
    %c0_60 = arith.constant 0 : index
    %234 = vector.load %arg6[%c0_58, %c0_59, %c0_60] : memref<3x8x4xf32, #tpu.memory_space<vmem>>, vector<1x8x4xf32>
    %235 = vector.shape_cast %234 : vector<1x8x4xf32> to vector<8x4xf32>
    %236 = vector.extract_strided_slice %235 {offsets = [0, 0], sizes = [8, 1], strides = [1, 1]} : vector<8x4xf32> to vector<8x1xf32>
    %237 = vector.extract_strided_slice %232 {offsets = [0, 0], sizes = [1, 296], strides = [1, 1]} : vector<4x298xf32> to vector<1x296xf32>
    %238 = vector.broadcast %236 : vector<8x1xf32> to vector<8x296xf32>
    %239 = vector.broadcast %237 : vector<1x296xf32> to vector<8x296xf32>
    %240 = arith.mulf %238, %239 : vector<8x296xf32>
    %241 = arith.addf %233, %240 : vector<8x296xf32>
    %242 = vector.extract_strided_slice %235 {offsets = [0, 1], sizes = [8, 1], strides = [1, 1]} : vector<8x4xf32> to vector<8x1xf32>
    %243 = vector.extract_strided_slice %232 {offsets = [1, 0], sizes = [1, 296], strides = [1, 1]} : vector<4x298xf32> to vector<1x296xf32>
    %244 = vector.broadcast %242 : vector<8x1xf32> to vector<8x296xf32>
    %245 = vector.broadcast %243 : vector<1x296xf32> to vector<8x296xf32>
    %246 = arith.mulf %244, %245 : vector<8x296xf32>
    %247 = arith.addf %241, %246 : vector<8x296xf32>
    %248 = vector.extract_strided_slice %235 {offsets = [0, 2], sizes = [8, 1], strides = [1, 1]} : vector<8x4xf32> to vector<8x1xf32>
    %249 = vector.extract_strided_slice %232 {offsets = [2, 0], sizes = [1, 296], strides = [1, 1]} : vector<4x298xf32> to vector<1x296xf32>
    %250 = vector.broadcast %248 : vector<8x1xf32> to vector<8x296xf32>
    %251 = vector.broadcast %249 : vector<1x296xf32> to vector<8x296xf32>
    %252 = arith.mulf %250, %251 : vector<8x296xf32>
    %253 = arith.addf %247, %252 : vector<8x296xf32>
    %254 = vector.extract_strided_slice %235 {offsets = [0, 3], sizes = [8, 1], strides = [1, 1]} : vector<8x4xf32> to vector<8x1xf32>
    %255 = vector.extract_strided_slice %232 {offsets = [3, 0], sizes = [1, 296], strides = [1, 1]} : vector<4x298xf32> to vector<1x296xf32>
    %256 = vector.broadcast %254 : vector<8x1xf32> to vector<8x296xf32>
    %257 = vector.broadcast %255 : vector<1x296xf32> to vector<8x296xf32>
    %258 = arith.mulf %256, %257 : vector<8x296xf32>
    %259 = arith.addf %253, %258 : vector<8x296xf32>
    %c1_61 = arith.constant 1 : index
    %c0_62 = arith.constant 0 : index
    %c0_63 = arith.constant 0 : index
    %260 = vector.load %arg6[%c1_61, %c0_62, %c0_63] : memref<3x8x4xf32, #tpu.memory_space<vmem>>, vector<1x8x4xf32>
    %261 = vector.shape_cast %260 : vector<1x8x4xf32> to vector<8x4xf32>
    %262 = vector.extract_strided_slice %261 {offsets = [0, 0], sizes = [8, 1], strides = [1, 1]} : vector<8x4xf32> to vector<8x1xf32>
    %263 = vector.extract_strided_slice %232 {offsets = [0, 1], sizes = [1, 296], strides = [1, 1]} : vector<4x298xf32> to vector<1x296xf32>
    %264 = vector.broadcast %262 : vector<8x1xf32> to vector<8x296xf32>
    %265 = vector.broadcast %263 : vector<1x296xf32> to vector<8x296xf32>
    %266 = arith.mulf %264, %265 : vector<8x296xf32>
    %267 = arith.addf %259, %266 : vector<8x296xf32>
    %268 = vector.extract_strided_slice %261 {offsets = [0, 1], sizes = [8, 1], strides = [1, 1]} : vector<8x4xf32> to vector<8x1xf32>
    %269 = vector.extract_strided_slice %232 {offsets = [1, 1], sizes = [1, 296], strides = [1, 1]} : vector<4x298xf32> to vector<1x296xf32>
    %270 = vector.broadcast %268 : vector<8x1xf32> to vector<8x296xf32>
    %271 = vector.broadcast %269 : vector<1x296xf32> to vector<8x296xf32>
    %272 = arith.mulf %270, %271 : vector<8x296xf32>
    %273 = arith.addf %267, %272 : vector<8x296xf32>
    %274 = vector.extract_strided_slice %261 {offsets = [0, 2], sizes = [8, 1], strides = [1, 1]} : vector<8x4xf32> to vector<8x1xf32>
    %275 = vector.extract_strided_slice %232 {offsets = [2, 1], sizes = [1, 296], strides = [1, 1]} : vector<4x298xf32> to vector<1x296xf32>
    %276 = vector.broadcast %274 : vector<8x1xf32> to vector<8x296xf32>
    %277 = vector.broadcast %275 : vector<1x296xf32> to vector<8x296xf32>
    %278 = arith.mulf %276, %277 : vector<8x296xf32>
    %279 = arith.addf %273, %278 : vector<8x296xf32>
    %280 = vector.extract_strided_slice %261 {offsets = [0, 3], sizes = [8, 1], strides = [1, 1]} : vector<8x4xf32> to vector<8x1xf32>
    %281 = vector.extract_strided_slice %232 {offsets = [3, 1], sizes = [1, 296], strides = [1, 1]} : vector<4x298xf32> to vector<1x296xf32>
    %282 = vector.broadcast %280 : vector<8x1xf32> to vector<8x296xf32>
    %283 = vector.broadcast %281 : vector<1x296xf32> to vector<8x296xf32>
    %284 = arith.mulf %282, %283 : vector<8x296xf32>
    %285 = arith.addf %279, %284 : vector<8x296xf32>
    %c2_64 = arith.constant 2 : index
    %c0_65 = arith.constant 0 : index
    %c0_66 = arith.constant 0 : index
    %286 = vector.load %arg6[%c2_64, %c0_65, %c0_66] : memref<3x8x4xf32, #tpu.memory_space<vmem>>, vector<1x8x4xf32>
    %287 = vector.shape_cast %286 : vector<1x8x4xf32> to vector<8x4xf32>
    %288 = vector.extract_strided_slice %287 {offsets = [0, 0], sizes = [8, 1], strides = [1, 1]} : vector<8x4xf32> to vector<8x1xf32>
    %289 = vector.extract_strided_slice %232 {offsets = [0, 2], sizes = [1, 296], strides = [1, 1]} : vector<4x298xf32> to vector<1x296xf32>
    %290 = vector.broadcast %288 : vector<8x1xf32> to vector<8x296xf32>
    %291 = vector.broadcast %289 : vector<1x296xf32> to vector<8x296xf32>
    %292 = arith.mulf %290, %291 : vector<8x296xf32>
    %293 = arith.addf %285, %292 : vector<8x296xf32>
    %294 = vector.extract_strided_slice %287 {offsets = [0, 1], sizes = [8, 1], strides = [1, 1]} : vector<8x4xf32> to vector<8x1xf32>
    %295 = vector.extract_strided_slice %232 {offsets = [1, 2], sizes = [1, 296], strides = [1, 1]} : vector<4x298xf32> to vector<1x296xf32>
    %296 = vector.broadcast %294 : vector<8x1xf32> to vector<8x296xf32>
    %297 = vector.broadcast %295 : vector<1x296xf32> to vector<8x296xf32>
    %298 = arith.mulf %296, %297 : vector<8x296xf32>
    %299 = arith.addf %293, %298 : vector<8x296xf32>
    %300 = vector.extract_strided_slice %287 {offsets = [0, 2], sizes = [8, 1], strides = [1, 1]} : vector<8x4xf32> to vector<8x1xf32>
    %301 = vector.extract_strided_slice %232 {offsets = [2, 2], sizes = [1, 296], strides = [1, 1]} : vector<4x298xf32> to vector<1x296xf32>
    %302 = vector.broadcast %300 : vector<8x1xf32> to vector<8x296xf32>
    %303 = vector.broadcast %301 : vector<1x296xf32> to vector<8x296xf32>
    %304 = arith.mulf %302, %303 : vector<8x296xf32>
    %305 = arith.addf %299, %304 : vector<8x296xf32>
    %306 = vector.extract_strided_slice %287 {offsets = [0, 3], sizes = [8, 1], strides = [1, 1]} : vector<8x4xf32> to vector<8x1xf32>
    %307 = vector.extract_strided_slice %232 {offsets = [3, 2], sizes = [1, 296], strides = [1, 1]} : vector<4x298xf32> to vector<1x296xf32>
    %308 = vector.broadcast %306 : vector<8x1xf32> to vector<8x296xf32>
    %309 = vector.broadcast %307 : vector<1x296xf32> to vector<8x296xf32>
    %310 = arith.mulf %308, %309 : vector<8x296xf32>
    %311 = arith.addf %305, %310 : vector<8x296xf32>
    %c0_67 = arith.constant 0 : index
    %c0_68 = arith.constant 0 : index
    %312 = vector.load %arg7[%c0_67, %c0_68] : memref<8x1xf32, #tpu.memory_space<vmem>>, vector<8x1xf32>
    %313 = vector.broadcast %312 : vector<8x1xf32> to vector<8x296xf32>
    %314 = arith.addf %311, %313 : vector<8x296xf32>
    %cst_69 = arith.constant 0.000000e+00 : f32
    %315 = vector.broadcast %cst_69 : f32 to vector<8x296xf32>
    %316 = arith.maximumf %314, %315 : vector<8x296xf32>
    %cst_70 = arith.constant 0.000000e+00 : f32
    %317 = vector.broadcast %cst_70 : f32 to vector<8x294xf32>
    %c0_71 = arith.constant 0 : index
    %c0_72 = arith.constant 0 : index
    %c0_73 = arith.constant 0 : index
    %318 = vector.load %arg8[%c0_71, %c0_72, %c0_73] : memref<3x8x8xf32, #tpu.memory_space<vmem>>, vector<1x8x8xf32>
    %319 = vector.shape_cast %318 : vector<1x8x8xf32> to vector<8x8xf32>
    %320 = vector.extract_strided_slice %319 {offsets = [0, 0], sizes = [8, 1], strides = [1, 1]} : vector<8x8xf32> to vector<8x1xf32>
    %321 = vector.extract_strided_slice %316 {offsets = [0, 0], sizes = [1, 294], strides = [1, 1]} : vector<8x296xf32> to vector<1x294xf32>
    %322 = vector.broadcast %320 : vector<8x1xf32> to vector<8x294xf32>
    %323 = vector.broadcast %321 : vector<1x294xf32> to vector<8x294xf32>
    %324 = arith.mulf %322, %323 : vector<8x294xf32>
    %325 = arith.addf %317, %324 : vector<8x294xf32>
    %326 = vector.extract_strided_slice %319 {offsets = [0, 1], sizes = [8, 1], strides = [1, 1]} : vector<8x8xf32> to vector<8x1xf32>
    %327 = vector.extract_strided_slice %316 {offsets = [1, 0], sizes = [1, 294], strides = [1, 1]} : vector<8x296xf32> to vector<1x294xf32>
    %328 = vector.broadcast %326 : vector<8x1xf32> to vector<8x294xf32>
    %329 = vector.broadcast %327 : vector<1x294xf32> to vector<8x294xf32>
    %330 = arith.mulf %328, %329 : vector<8x294xf32>
    %331 = arith.addf %325, %330 : vector<8x294xf32>
    %332 = vector.extract_strided_slice %319 {offsets = [0, 2], sizes = [8, 1], strides = [1, 1]} : vector<8x8xf32> to vector<8x1xf32>
    %333 = vector.extract_strided_slice %316 {offsets = [2, 0], sizes = [1, 294], strides = [1, 1]} : vector<8x296xf32> to vector<1x294xf32>
    %334 = vector.broadcast %332 : vector<8x1xf32> to vector<8x294xf32>
    %335 = vector.broadcast %333 : vector<1x294xf32> to vector<8x294xf32>
    %336 = arith.mulf %334, %335 : vector<8x294xf32>
    %337 = arith.addf %331, %336 : vector<8x294xf32>
    %338 = vector.extract_strided_slice %319 {offsets = [0, 3], sizes = [8, 1], strides = [1, 1]} : vector<8x8xf32> to vector<8x1xf32>
    %339 = vector.extract_strided_slice %316 {offsets = [3, 0], sizes = [1, 294], strides = [1, 1]} : vector<8x296xf32> to vector<1x294xf32>
    %340 = vector.broadcast %338 : vector<8x1xf32> to vector<8x294xf32>
    %341 = vector.broadcast %339 : vector<1x294xf32> to vector<8x294xf32>
    %342 = arith.mulf %340, %341 : vector<8x294xf32>
    %343 = arith.addf %337, %342 : vector<8x294xf32>
    %344 = vector.extract_strided_slice %319 {offsets = [0, 4], sizes = [8, 1], strides = [1, 1]} : vector<8x8xf32> to vector<8x1xf32>
    %345 = vector.extract_strided_slice %316 {offsets = [4, 0], sizes = [1, 294], strides = [1, 1]} : vector<8x296xf32> to vector<1x294xf32>
    %346 = vector.broadcast %344 : vector<8x1xf32> to vector<8x294xf32>
    %347 = vector.broadcast %345 : vector<1x294xf32> to vector<8x294xf32>
    %348 = arith.mulf %346, %347 : vector<8x294xf32>
    %349 = arith.addf %343, %348 : vector<8x294xf32>
    %350 = vector.extract_strided_slice %319 {offsets = [0, 5], sizes = [8, 1], strides = [1, 1]} : vector<8x8xf32> to vector<8x1xf32>
    %351 = vector.extract_strided_slice %316 {offsets = [5, 0], sizes = [1, 294], strides = [1, 1]} : vector<8x296xf32> to vector<1x294xf32>
    %352 = vector.broadcast %350 : vector<8x1xf32> to vector<8x294xf32>
    %353 = vector.broadcast %351 : vector<1x294xf32> to vector<8x294xf32>
    %354 = arith.mulf %352, %353 : vector<8x294xf32>
    %355 = arith.addf %349, %354 : vector<8x294xf32>
    %356 = vector.extract_strided_slice %319 {offsets = [0, 6], sizes = [8, 1], strides = [1, 1]} : vector<8x8xf32> to vector<8x1xf32>
    %357 = vector.extract_strided_slice %316 {offsets = [6, 0], sizes = [1, 294], strides = [1, 1]} : vector<8x296xf32> to vector<1x294xf32>
    %358 = vector.broadcast %356 : vector<8x1xf32> to vector<8x294xf32>
    %359 = vector.broadcast %357 : vector<1x294xf32> to vector<8x294xf32>
    %360 = arith.mulf %358, %359 : vector<8x294xf32>
    %361 = arith.addf %355, %360 : vector<8x294xf32>
    %362 = vector.extract_strided_slice %319 {offsets = [0, 7], sizes = [8, 1], strides = [1, 1]} : vector<8x8xf32> to vector<8x1xf32>
    %363 = vector.extract_strided_slice %316 {offsets = [7, 0], sizes = [1, 294], strides = [1, 1]} : vector<8x296xf32> to vector<1x294xf32>
    %364 = vector.broadcast %362 : vector<8x1xf32> to vector<8x294xf32>
    %365 = vector.broadcast %363 : vector<1x294xf32> to vector<8x294xf32>
    %366 = arith.mulf %364, %365 : vector<8x294xf32>
    %367 = arith.addf %361, %366 : vector<8x294xf32>
    %c1_74 = arith.constant 1 : index
    %c0_75 = arith.constant 0 : index
    %c0_76 = arith.constant 0 : index
    %368 = vector.load %arg8[%c1_74, %c0_75, %c0_76] : memref<3x8x8xf32, #tpu.memory_space<vmem>>, vector<1x8x8xf32>
    %369 = vector.shape_cast %368 : vector<1x8x8xf32> to vector<8x8xf32>
    %370 = vector.extract_strided_slice %369 {offsets = [0, 0], sizes = [8, 1], strides = [1, 1]} : vector<8x8xf32> to vector<8x1xf32>
    %371 = vector.extract_strided_slice %316 {offsets = [0, 1], sizes = [1, 294], strides = [1, 1]} : vector<8x296xf32> to vector<1x294xf32>
    %372 = vector.broadcast %370 : vector<8x1xf32> to vector<8x294xf32>
    %373 = vector.broadcast %371 : vector<1x294xf32> to vector<8x294xf32>
    %374 = arith.mulf %372, %373 : vector<8x294xf32>
    %375 = arith.addf %367, %374 : vector<8x294xf32>
    %376 = vector.extract_strided_slice %369 {offsets = [0, 1], sizes = [8, 1], strides = [1, 1]} : vector<8x8xf32> to vector<8x1xf32>
    %377 = vector.extract_strided_slice %316 {offsets = [1, 1], sizes = [1, 294], strides = [1, 1]} : vector<8x296xf32> to vector<1x294xf32>
    %378 = vector.broadcast %376 : vector<8x1xf32> to vector<8x294xf32>
    %379 = vector.broadcast %377 : vector<1x294xf32> to vector<8x294xf32>
    %380 = arith.mulf %378, %379 : vector<8x294xf32>
    %381 = arith.addf %375, %380 : vector<8x294xf32>
    %382 = vector.extract_strided_slice %369 {offsets = [0, 2], sizes = [8, 1], strides = [1, 1]} : vector<8x8xf32> to vector<8x1xf32>
    %383 = vector.extract_strided_slice %316 {offsets = [2, 1], sizes = [1, 294], strides = [1, 1]} : vector<8x296xf32> to vector<1x294xf32>
    %384 = vector.broadcast %382 : vector<8x1xf32> to vector<8x294xf32>
    %385 = vector.broadcast %383 : vector<1x294xf32> to vector<8x294xf32>
    %386 = arith.mulf %384, %385 : vector<8x294xf32>
    %387 = arith.addf %381, %386 : vector<8x294xf32>
    %388 = vector.extract_strided_slice %369 {offsets = [0, 3], sizes = [8, 1], strides = [1, 1]} : vector<8x8xf32> to vector<8x1xf32>
    %389 = vector.extract_strided_slice %316 {offsets = [3, 1], sizes = [1, 294], strides = [1, 1]} : vector<8x296xf32> to vector<1x294xf32>
    %390 = vector.broadcast %388 : vector<8x1xf32> to vector<8x294xf32>
    %391 = vector.broadcast %389 : vector<1x294xf32> to vector<8x294xf32>
    %392 = arith.mulf %390, %391 : vector<8x294xf32>
    %393 = arith.addf %387, %392 : vector<8x294xf32>
    %394 = vector.extract_strided_slice %369 {offsets = [0, 4], sizes = [8, 1], strides = [1, 1]} : vector<8x8xf32> to vector<8x1xf32>
    %395 = vector.extract_strided_slice %316 {offsets = [4, 1], sizes = [1, 294], strides = [1, 1]} : vector<8x296xf32> to vector<1x294xf32>
    %396 = vector.broadcast %394 : vector<8x1xf32> to vector<8x294xf32>
    %397 = vector.broadcast %395 : vector<1x294xf32> to vector<8x294xf32>
    %398 = arith.mulf %396, %397 : vector<8x294xf32>
    %399 = arith.addf %393, %398 : vector<8x294xf32>
    %400 = vector.extract_strided_slice %369 {offsets = [0, 5], sizes = [8, 1], strides = [1, 1]} : vector<8x8xf32> to vector<8x1xf32>
    %401 = vector.extract_strided_slice %316 {offsets = [5, 1], sizes = [1, 294], strides = [1, 1]} : vector<8x296xf32> to vector<1x294xf32>
    %402 = vector.broadcast %400 : vector<8x1xf32> to vector<8x294xf32>
    %403 = vector.broadcast %401 : vector<1x294xf32> to vector<8x294xf32>
    %404 = arith.mulf %402, %403 : vector<8x294xf32>
    %405 = arith.addf %399, %404 : vector<8x294xf32>
    %406 = vector.extract_strided_slice %369 {offsets = [0, 6], sizes = [8, 1], strides = [1, 1]} : vector<8x8xf32> to vector<8x1xf32>
    %407 = vector.extract_strided_slice %316 {offsets = [6, 1], sizes = [1, 294], strides = [1, 1]} : vector<8x296xf32> to vector<1x294xf32>
    %408 = vector.broadcast %406 : vector<8x1xf32> to vector<8x294xf32>
    %409 = vector.broadcast %407 : vector<1x294xf32> to vector<8x294xf32>
    %410 = arith.mulf %408, %409 : vector<8x294xf32>
    %411 = arith.addf %405, %410 : vector<8x294xf32>
    %412 = vector.extract_strided_slice %369 {offsets = [0, 7], sizes = [8, 1], strides = [1, 1]} : vector<8x8xf32> to vector<8x1xf32>
    %413 = vector.extract_strided_slice %316 {offsets = [7, 1], sizes = [1, 294], strides = [1, 1]} : vector<8x296xf32> to vector<1x294xf32>
    %414 = vector.broadcast %412 : vector<8x1xf32> to vector<8x294xf32>
    %415 = vector.broadcast %413 : vector<1x294xf32> to vector<8x294xf32>
    %416 = arith.mulf %414, %415 : vector<8x294xf32>
    %417 = arith.addf %411, %416 : vector<8x294xf32>
    %c2_77 = arith.constant 2 : index
    %c0_78 = arith.constant 0 : index
    %c0_79 = arith.constant 0 : index
    %418 = vector.load %arg8[%c2_77, %c0_78, %c0_79] : memref<3x8x8xf32, #tpu.memory_space<vmem>>, vector<1x8x8xf32>
    %419 = vector.shape_cast %418 : vector<1x8x8xf32> to vector<8x8xf32>
    %420 = vector.extract_strided_slice %419 {offsets = [0, 0], sizes = [8, 1], strides = [1, 1]} : vector<8x8xf32> to vector<8x1xf32>
    %421 = vector.extract_strided_slice %316 {offsets = [0, 2], sizes = [1, 294], strides = [1, 1]} : vector<8x296xf32> to vector<1x294xf32>
    %422 = vector.broadcast %420 : vector<8x1xf32> to vector<8x294xf32>
    %423 = vector.broadcast %421 : vector<1x294xf32> to vector<8x294xf32>
    %424 = arith.mulf %422, %423 : vector<8x294xf32>
    %425 = arith.addf %417, %424 : vector<8x294xf32>
    %426 = vector.extract_strided_slice %419 {offsets = [0, 1], sizes = [8, 1], strides = [1, 1]} : vector<8x8xf32> to vector<8x1xf32>
    %427 = vector.extract_strided_slice %316 {offsets = [1, 2], sizes = [1, 294], strides = [1, 1]} : vector<8x296xf32> to vector<1x294xf32>
    %428 = vector.broadcast %426 : vector<8x1xf32> to vector<8x294xf32>
    %429 = vector.broadcast %427 : vector<1x294xf32> to vector<8x294xf32>
    %430 = arith.mulf %428, %429 : vector<8x294xf32>
    %431 = arith.addf %425, %430 : vector<8x294xf32>
    %432 = vector.extract_strided_slice %419 {offsets = [0, 2], sizes = [8, 1], strides = [1, 1]} : vector<8x8xf32> to vector<8x1xf32>
    %433 = vector.extract_strided_slice %316 {offsets = [2, 2], sizes = [1, 294], strides = [1, 1]} : vector<8x296xf32> to vector<1x294xf32>
    %434 = vector.broadcast %432 : vector<8x1xf32> to vector<8x294xf32>
    %435 = vector.broadcast %433 : vector<1x294xf32> to vector<8x294xf32>
    %436 = arith.mulf %434, %435 : vector<8x294xf32>
    %437 = arith.addf %431, %436 : vector<8x294xf32>
    %438 = vector.extract_strided_slice %419 {offsets = [0, 3], sizes = [8, 1], strides = [1, 1]} : vector<8x8xf32> to vector<8x1xf32>
    %439 = vector.extract_strided_slice %316 {offsets = [3, 2], sizes = [1, 294], strides = [1, 1]} : vector<8x296xf32> to vector<1x294xf32>
    %440 = vector.broadcast %438 : vector<8x1xf32> to vector<8x294xf32>
    %441 = vector.broadcast %439 : vector<1x294xf32> to vector<8x294xf32>
    %442 = arith.mulf %440, %441 : vector<8x294xf32>
    %443 = arith.addf %437, %442 : vector<8x294xf32>
    %444 = vector.extract_strided_slice %419 {offsets = [0, 4], sizes = [8, 1], strides = [1, 1]} : vector<8x8xf32> to vector<8x1xf32>
    %445 = vector.extract_strided_slice %316 {offsets = [4, 2], sizes = [1, 294], strides = [1, 1]} : vector<8x296xf32> to vector<1x294xf32>
    %446 = vector.broadcast %444 : vector<8x1xf32> to vector<8x294xf32>
    %447 = vector.broadcast %445 : vector<1x294xf32> to vector<8x294xf32>
    %448 = arith.mulf %446, %447 : vector<8x294xf32>
    %449 = arith.addf %443, %448 : vector<8x294xf32>
    %450 = vector.extract_strided_slice %419 {offsets = [0, 5], sizes = [8, 1], strides = [1, 1]} : vector<8x8xf32> to vector<8x1xf32>
    %451 = vector.extract_strided_slice %316 {offsets = [5, 2], sizes = [1, 294], strides = [1, 1]} : vector<8x296xf32> to vector<1x294xf32>
    %452 = vector.broadcast %450 : vector<8x1xf32> to vector<8x294xf32>
    %453 = vector.broadcast %451 : vector<1x294xf32> to vector<8x294xf32>
    %454 = arith.mulf %452, %453 : vector<8x294xf32>
    %455 = arith.addf %449, %454 : vector<8x294xf32>
    %456 = vector.extract_strided_slice %419 {offsets = [0, 6], sizes = [8, 1], strides = [1, 1]} : vector<8x8xf32> to vector<8x1xf32>
    %457 = vector.extract_strided_slice %316 {offsets = [6, 2], sizes = [1, 294], strides = [1, 1]} : vector<8x296xf32> to vector<1x294xf32>
    %458 = vector.broadcast %456 : vector<8x1xf32> to vector<8x294xf32>
    %459 = vector.broadcast %457 : vector<1x294xf32> to vector<8x294xf32>
    %460 = arith.mulf %458, %459 : vector<8x294xf32>
    %461 = arith.addf %455, %460 : vector<8x294xf32>
    %462 = vector.extract_strided_slice %419 {offsets = [0, 7], sizes = [8, 1], strides = [1, 1]} : vector<8x8xf32> to vector<8x1xf32>
    %463 = vector.extract_strided_slice %316 {offsets = [7, 2], sizes = [1, 294], strides = [1, 1]} : vector<8x296xf32> to vector<1x294xf32>
    %464 = vector.broadcast %462 : vector<8x1xf32> to vector<8x294xf32>
    %465 = vector.broadcast %463 : vector<1x294xf32> to vector<8x294xf32>
    %466 = arith.mulf %464, %465 : vector<8x294xf32>
    %467 = arith.addf %461, %466 : vector<8x294xf32>
    %c0_80 = arith.constant 0 : index
    %c0_81 = arith.constant 0 : index
    %468 = vector.load %arg9[%c0_80, %c0_81] : memref<8x1xf32, #tpu.memory_space<vmem>>, vector<8x1xf32>
    %469 = vector.broadcast %468 : vector<8x1xf32> to vector<8x294xf32>
    %470 = arith.addf %467, %469 : vector<8x294xf32>
    %cst_82 = arith.constant 0.000000e+00 : f32
    %471 = vector.broadcast %cst_82 : f32 to vector<8x294xf32>
    %472 = arith.maximumf %470, %471 : vector<8x294xf32>
    %473 = vector.extract_strided_slice %231 {offsets = [4, 0], sizes = [4, 298], strides = [1, 1]} : vector<8x298xf32> to vector<4x298xf32>
    %cst_83 = arith.constant 0.000000e+00 : f32
    %474 = vector.broadcast %cst_83 : f32 to vector<8x296xf32>
    %c0_84 = arith.constant 0 : index
    %c0_85 = arith.constant 0 : index
    %c0_86 = arith.constant 0 : index
    %475 = vector.load %arg6[%c0_84, %c0_85, %c0_86] : memref<3x8x4xf32, #tpu.memory_space<vmem>>, vector<1x8x4xf32>
    %476 = vector.shape_cast %475 : vector<1x8x4xf32> to vector<8x4xf32>
    %477 = vector.extract_strided_slice %476 {offsets = [0, 0], sizes = [8, 1], strides = [1, 1]} : vector<8x4xf32> to vector<8x1xf32>
    %478 = vector.extract_strided_slice %473 {offsets = [0, 0], sizes = [1, 296], strides = [1, 1]} : vector<4x298xf32> to vector<1x296xf32>
    %479 = vector.broadcast %477 : vector<8x1xf32> to vector<8x296xf32>
    %480 = vector.broadcast %478 : vector<1x296xf32> to vector<8x296xf32>
    %481 = arith.mulf %479, %480 : vector<8x296xf32>
    %482 = arith.addf %474, %481 : vector<8x296xf32>
    %483 = vector.extract_strided_slice %476 {offsets = [0, 1], sizes = [8, 1], strides = [1, 1]} : vector<8x4xf32> to vector<8x1xf32>
    %484 = vector.extract_strided_slice %473 {offsets = [1, 0], sizes = [1, 296], strides = [1, 1]} : vector<4x298xf32> to vector<1x296xf32>
    %485 = vector.broadcast %483 : vector<8x1xf32> to vector<8x296xf32>
    %486 = vector.broadcast %484 : vector<1x296xf32> to vector<8x296xf32>
    %487 = arith.mulf %485, %486 : vector<8x296xf32>
    %488 = arith.addf %482, %487 : vector<8x296xf32>
    %489 = vector.extract_strided_slice %476 {offsets = [0, 2], sizes = [8, 1], strides = [1, 1]} : vector<8x4xf32> to vector<8x1xf32>
    %490 = vector.extract_strided_slice %473 {offsets = [2, 0], sizes = [1, 296], strides = [1, 1]} : vector<4x298xf32> to vector<1x296xf32>
    %491 = vector.broadcast %489 : vector<8x1xf32> to vector<8x296xf32>
    %492 = vector.broadcast %490 : vector<1x296xf32> to vector<8x296xf32>
    %493 = arith.mulf %491, %492 : vector<8x296xf32>
    %494 = arith.addf %488, %493 : vector<8x296xf32>
    %495 = vector.extract_strided_slice %476 {offsets = [0, 3], sizes = [8, 1], strides = [1, 1]} : vector<8x4xf32> to vector<8x1xf32>
    %496 = vector.extract_strided_slice %473 {offsets = [3, 0], sizes = [1, 296], strides = [1, 1]} : vector<4x298xf32> to vector<1x296xf32>
    %497 = vector.broadcast %495 : vector<8x1xf32> to vector<8x296xf32>
    %498 = vector.broadcast %496 : vector<1x296xf32> to vector<8x296xf32>
    %499 = arith.mulf %497, %498 : vector<8x296xf32>
    %500 = arith.addf %494, %499 : vector<8x296xf32>
    %c1_87 = arith.constant 1 : index
    %c0_88 = arith.constant 0 : index
    %c0_89 = arith.constant 0 : index
    %501 = vector.load %arg6[%c1_87, %c0_88, %c0_89] : memref<3x8x4xf32, #tpu.memory_space<vmem>>, vector<1x8x4xf32>
    %502 = vector.shape_cast %501 : vector<1x8x4xf32> to vector<8x4xf32>
    %503 = vector.extract_strided_slice %502 {offsets = [0, 0], sizes = [8, 1], strides = [1, 1]} : vector<8x4xf32> to vector<8x1xf32>
    %504 = vector.extract_strided_slice %473 {offsets = [0, 1], sizes = [1, 296], strides = [1, 1]} : vector<4x298xf32> to vector<1x296xf32>
    %505 = vector.broadcast %503 : vector<8x1xf32> to vector<8x296xf32>
    %506 = vector.broadcast %504 : vector<1x296xf32> to vector<8x296xf32>
    %507 = arith.mulf %505, %506 : vector<8x296xf32>
    %508 = arith.addf %500, %507 : vector<8x296xf32>
    %509 = vector.extract_strided_slice %502 {offsets = [0, 1], sizes = [8, 1], strides = [1, 1]} : vector<8x4xf32> to vector<8x1xf32>
    %510 = vector.extract_strided_slice %473 {offsets = [1, 1], sizes = [1, 296], strides = [1, 1]} : vector<4x298xf32> to vector<1x296xf32>
    %511 = vector.broadcast %509 : vector<8x1xf32> to vector<8x296xf32>
    %512 = vector.broadcast %510 : vector<1x296xf32> to vector<8x296xf32>
    %513 = arith.mulf %511, %512 : vector<8x296xf32>
    %514 = arith.addf %508, %513 : vector<8x296xf32>
    %515 = vector.extract_strided_slice %502 {offsets = [0, 2], sizes = [8, 1], strides = [1, 1]} : vector<8x4xf32> to vector<8x1xf32>
    %516 = vector.extract_strided_slice %473 {offsets = [2, 1], sizes = [1, 296], strides = [1, 1]} : vector<4x298xf32> to vector<1x296xf32>
    %517 = vector.broadcast %515 : vector<8x1xf32> to vector<8x296xf32>
    %518 = vector.broadcast %516 : vector<1x296xf32> to vector<8x296xf32>
    %519 = arith.mulf %517, %518 : vector<8x296xf32>
    %520 = arith.addf %514, %519 : vector<8x296xf32>
    %521 = vector.extract_strided_slice %502 {offsets = [0, 3], sizes = [8, 1], strides = [1, 1]} : vector<8x4xf32> to vector<8x1xf32>
    %522 = vector.extract_strided_slice %473 {offsets = [3, 1], sizes = [1, 296], strides = [1, 1]} : vector<4x298xf32> to vector<1x296xf32>
    %523 = vector.broadcast %521 : vector<8x1xf32> to vector<8x296xf32>
    %524 = vector.broadcast %522 : vector<1x296xf32> to vector<8x296xf32>
    %525 = arith.mulf %523, %524 : vector<8x296xf32>
    %526 = arith.addf %520, %525 : vector<8x296xf32>
    %c2_90 = arith.constant 2 : index
    %c0_91 = arith.constant 0 : index
    %c0_92 = arith.constant 0 : index
    %527 = vector.load %arg6[%c2_90, %c0_91, %c0_92] : memref<3x8x4xf32, #tpu.memory_space<vmem>>, vector<1x8x4xf32>
    %528 = vector.shape_cast %527 : vector<1x8x4xf32> to vector<8x4xf32>
    %529 = vector.extract_strided_slice %528 {offsets = [0, 0], sizes = [8, 1], strides = [1, 1]} : vector<8x4xf32> to vector<8x1xf32>
    %530 = vector.extract_strided_slice %473 {offsets = [0, 2], sizes = [1, 296], strides = [1, 1]} : vector<4x298xf32> to vector<1x296xf32>
    %531 = vector.broadcast %529 : vector<8x1xf32> to vector<8x296xf32>
    %532 = vector.broadcast %530 : vector<1x296xf32> to vector<8x296xf32>
    %533 = arith.mulf %531, %532 : vector<8x296xf32>
    %534 = arith.addf %526, %533 : vector<8x296xf32>
    %535 = vector.extract_strided_slice %528 {offsets = [0, 1], sizes = [8, 1], strides = [1, 1]} : vector<8x4xf32> to vector<8x1xf32>
    %536 = vector.extract_strided_slice %473 {offsets = [1, 2], sizes = [1, 296], strides = [1, 1]} : vector<4x298xf32> to vector<1x296xf32>
    %537 = vector.broadcast %535 : vector<8x1xf32> to vector<8x296xf32>
    %538 = vector.broadcast %536 : vector<1x296xf32> to vector<8x296xf32>
    %539 = arith.mulf %537, %538 : vector<8x296xf32>
    %540 = arith.addf %534, %539 : vector<8x296xf32>
    %541 = vector.extract_strided_slice %528 {offsets = [0, 2], sizes = [8, 1], strides = [1, 1]} : vector<8x4xf32> to vector<8x1xf32>
    %542 = vector.extract_strided_slice %473 {offsets = [2, 2], sizes = [1, 296], strides = [1, 1]} : vector<4x298xf32> to vector<1x296xf32>
    %543 = vector.broadcast %541 : vector<8x1xf32> to vector<8x296xf32>
    %544 = vector.broadcast %542 : vector<1x296xf32> to vector<8x296xf32>
    %545 = arith.mulf %543, %544 : vector<8x296xf32>
    %546 = arith.addf %540, %545 : vector<8x296xf32>
    %547 = vector.extract_strided_slice %528 {offsets = [0, 3], sizes = [8, 1], strides = [1, 1]} : vector<8x4xf32> to vector<8x1xf32>
    %548 = vector.extract_strided_slice %473 {offsets = [3, 2], sizes = [1, 296], strides = [1, 1]} : vector<4x298xf32> to vector<1x296xf32>
    %549 = vector.broadcast %547 : vector<8x1xf32> to vector<8x296xf32>
    %550 = vector.broadcast %548 : vector<1x296xf32> to vector<8x296xf32>
    %551 = arith.mulf %549, %550 : vector<8x296xf32>
    %552 = arith.addf %546, %551 : vector<8x296xf32>
    %c0_93 = arith.constant 0 : index
    %c0_94 = arith.constant 0 : index
    %553 = vector.load %arg7[%c0_93, %c0_94] : memref<8x1xf32, #tpu.memory_space<vmem>>, vector<8x1xf32>
    %554 = vector.broadcast %553 : vector<8x1xf32> to vector<8x296xf32>
    %555 = arith.addf %552, %554 : vector<8x296xf32>
    %cst_95 = arith.constant 0.000000e+00 : f32
    %556 = vector.broadcast %cst_95 : f32 to vector<8x296xf32>
    %557 = arith.maximumf %555, %556 : vector<8x296xf32>
    %cst_96 = arith.constant 0.000000e+00 : f32
    %558 = vector.broadcast %cst_96 : f32 to vector<8x294xf32>
    %c0_97 = arith.constant 0 : index
    %c0_98 = arith.constant 0 : index
    %c0_99 = arith.constant 0 : index
    %559 = vector.load %arg8[%c0_97, %c0_98, %c0_99] : memref<3x8x8xf32, #tpu.memory_space<vmem>>, vector<1x8x8xf32>
    %560 = vector.shape_cast %559 : vector<1x8x8xf32> to vector<8x8xf32>
    %561 = vector.extract_strided_slice %560 {offsets = [0, 0], sizes = [8, 1], strides = [1, 1]} : vector<8x8xf32> to vector<8x1xf32>
    %562 = vector.extract_strided_slice %557 {offsets = [0, 0], sizes = [1, 294], strides = [1, 1]} : vector<8x296xf32> to vector<1x294xf32>
    %563 = vector.broadcast %561 : vector<8x1xf32> to vector<8x294xf32>
    %564 = vector.broadcast %562 : vector<1x294xf32> to vector<8x294xf32>
    %565 = arith.mulf %563, %564 : vector<8x294xf32>
    %566 = arith.addf %558, %565 : vector<8x294xf32>
    %567 = vector.extract_strided_slice %560 {offsets = [0, 1], sizes = [8, 1], strides = [1, 1]} : vector<8x8xf32> to vector<8x1xf32>
    %568 = vector.extract_strided_slice %557 {offsets = [1, 0], sizes = [1, 294], strides = [1, 1]} : vector<8x296xf32> to vector<1x294xf32>
    %569 = vector.broadcast %567 : vector<8x1xf32> to vector<8x294xf32>
    %570 = vector.broadcast %568 : vector<1x294xf32> to vector<8x294xf32>
    %571 = arith.mulf %569, %570 : vector<8x294xf32>
    %572 = arith.addf %566, %571 : vector<8x294xf32>
    %573 = vector.extract_strided_slice %560 {offsets = [0, 2], sizes = [8, 1], strides = [1, 1]} : vector<8x8xf32> to vector<8x1xf32>
    %574 = vector.extract_strided_slice %557 {offsets = [2, 0], sizes = [1, 294], strides = [1, 1]} : vector<8x296xf32> to vector<1x294xf32>
    %575 = vector.broadcast %573 : vector<8x1xf32> to vector<8x294xf32>
    %576 = vector.broadcast %574 : vector<1x294xf32> to vector<8x294xf32>
    %577 = arith.mulf %575, %576 : vector<8x294xf32>
    %578 = arith.addf %572, %577 : vector<8x294xf32>
    %579 = vector.extract_strided_slice %560 {offsets = [0, 3], sizes = [8, 1], strides = [1, 1]} : vector<8x8xf32> to vector<8x1xf32>
    %580 = vector.extract_strided_slice %557 {offsets = [3, 0], sizes = [1, 294], strides = [1, 1]} : vector<8x296xf32> to vector<1x294xf32>
    %581 = vector.broadcast %579 : vector<8x1xf32> to vector<8x294xf32>
    %582 = vector.broadcast %580 : vector<1x294xf32> to vector<8x294xf32>
    %583 = arith.mulf %581, %582 : vector<8x294xf32>
    %584 = arith.addf %578, %583 : vector<8x294xf32>
    %585 = vector.extract_strided_slice %560 {offsets = [0, 4], sizes = [8, 1], strides = [1, 1]} : vector<8x8xf32> to vector<8x1xf32>
    %586 = vector.extract_strided_slice %557 {offsets = [4, 0], sizes = [1, 294], strides = [1, 1]} : vector<8x296xf32> to vector<1x294xf32>
    %587 = vector.broadcast %585 : vector<8x1xf32> to vector<8x294xf32>
    %588 = vector.broadcast %586 : vector<1x294xf32> to vector<8x294xf32>
    %589 = arith.mulf %587, %588 : vector<8x294xf32>
    %590 = arith.addf %584, %589 : vector<8x294xf32>
    %591 = vector.extract_strided_slice %560 {offsets = [0, 5], sizes = [8, 1], strides = [1, 1]} : vector<8x8xf32> to vector<8x1xf32>
    %592 = vector.extract_strided_slice %557 {offsets = [5, 0], sizes = [1, 294], strides = [1, 1]} : vector<8x296xf32> to vector<1x294xf32>
    %593 = vector.broadcast %591 : vector<8x1xf32> to vector<8x294xf32>
    %594 = vector.broadcast %592 : vector<1x294xf32> to vector<8x294xf32>
    %595 = arith.mulf %593, %594 : vector<8x294xf32>
    %596 = arith.addf %590, %595 : vector<8x294xf32>
    %597 = vector.extract_strided_slice %560 {offsets = [0, 6], sizes = [8, 1], strides = [1, 1]} : vector<8x8xf32> to vector<8x1xf32>
    %598 = vector.extract_strided_slice %557 {offsets = [6, 0], sizes = [1, 294], strides = [1, 1]} : vector<8x296xf32> to vector<1x294xf32>
    %599 = vector.broadcast %597 : vector<8x1xf32> to vector<8x294xf32>
    %600 = vector.broadcast %598 : vector<1x294xf32> to vector<8x294xf32>
    %601 = arith.mulf %599, %600 : vector<8x294xf32>
    %602 = arith.addf %596, %601 : vector<8x294xf32>
    %603 = vector.extract_strided_slice %560 {offsets = [0, 7], sizes = [8, 1], strides = [1, 1]} : vector<8x8xf32> to vector<8x1xf32>
    %604 = vector.extract_strided_slice %557 {offsets = [7, 0], sizes = [1, 294], strides = [1, 1]} : vector<8x296xf32> to vector<1x294xf32>
    %605 = vector.broadcast %603 : vector<8x1xf32> to vector<8x294xf32>
    %606 = vector.broadcast %604 : vector<1x294xf32> to vector<8x294xf32>
    %607 = arith.mulf %605, %606 : vector<8x294xf32>
    %608 = arith.addf %602, %607 : vector<8x294xf32>
    %c1_100 = arith.constant 1 : index
    %c0_101 = arith.constant 0 : index
    %c0_102 = arith.constant 0 : index
    %609 = vector.load %arg8[%c1_100, %c0_101, %c0_102] : memref<3x8x8xf32, #tpu.memory_space<vmem>>, vector<1x8x8xf32>
    %610 = vector.shape_cast %609 : vector<1x8x8xf32> to vector<8x8xf32>
    %611 = vector.extract_strided_slice %610 {offsets = [0, 0], sizes = [8, 1], strides = [1, 1]} : vector<8x8xf32> to vector<8x1xf32>
    %612 = vector.extract_strided_slice %557 {offsets = [0, 1], sizes = [1, 294], strides = [1, 1]} : vector<8x296xf32> to vector<1x294xf32>
    %613 = vector.broadcast %611 : vector<8x1xf32> to vector<8x294xf32>
    %614 = vector.broadcast %612 : vector<1x294xf32> to vector<8x294xf32>
    %615 = arith.mulf %613, %614 : vector<8x294xf32>
    %616 = arith.addf %608, %615 : vector<8x294xf32>
    %617 = vector.extract_strided_slice %610 {offsets = [0, 1], sizes = [8, 1], strides = [1, 1]} : vector<8x8xf32> to vector<8x1xf32>
    %618 = vector.extract_strided_slice %557 {offsets = [1, 1], sizes = [1, 294], strides = [1, 1]} : vector<8x296xf32> to vector<1x294xf32>
    %619 = vector.broadcast %617 : vector<8x1xf32> to vector<8x294xf32>
    %620 = vector.broadcast %618 : vector<1x294xf32> to vector<8x294xf32>
    %621 = arith.mulf %619, %620 : vector<8x294xf32>
    %622 = arith.addf %616, %621 : vector<8x294xf32>
    %623 = vector.extract_strided_slice %610 {offsets = [0, 2], sizes = [8, 1], strides = [1, 1]} : vector<8x8xf32> to vector<8x1xf32>
    %624 = vector.extract_strided_slice %557 {offsets = [2, 1], sizes = [1, 294], strides = [1, 1]} : vector<8x296xf32> to vector<1x294xf32>
    %625 = vector.broadcast %623 : vector<8x1xf32> to vector<8x294xf32>
    %626 = vector.broadcast %624 : vector<1x294xf32> to vector<8x294xf32>
    %627 = arith.mulf %625, %626 : vector<8x294xf32>
    %628 = arith.addf %622, %627 : vector<8x294xf32>
    %629 = vector.extract_strided_slice %610 {offsets = [0, 3], sizes = [8, 1], strides = [1, 1]} : vector<8x8xf32> to vector<8x1xf32>
    %630 = vector.extract_strided_slice %557 {offsets = [3, 1], sizes = [1, 294], strides = [1, 1]} : vector<8x296xf32> to vector<1x294xf32>
    %631 = vector.broadcast %629 : vector<8x1xf32> to vector<8x294xf32>
    %632 = vector.broadcast %630 : vector<1x294xf32> to vector<8x294xf32>
    %633 = arith.mulf %631, %632 : vector<8x294xf32>
    %634 = arith.addf %628, %633 : vector<8x294xf32>
    %635 = vector.extract_strided_slice %610 {offsets = [0, 4], sizes = [8, 1], strides = [1, 1]} : vector<8x8xf32> to vector<8x1xf32>
    %636 = vector.extract_strided_slice %557 {offsets = [4, 1], sizes = [1, 294], strides = [1, 1]} : vector<8x296xf32> to vector<1x294xf32>
    %637 = vector.broadcast %635 : vector<8x1xf32> to vector<8x294xf32>
    %638 = vector.broadcast %636 : vector<1x294xf32> to vector<8x294xf32>
    %639 = arith.mulf %637, %638 : vector<8x294xf32>
    %640 = arith.addf %634, %639 : vector<8x294xf32>
    %641 = vector.extract_strided_slice %610 {offsets = [0, 5], sizes = [8, 1], strides = [1, 1]} : vector<8x8xf32> to vector<8x1xf32>
    %642 = vector.extract_strided_slice %557 {offsets = [5, 1], sizes = [1, 294], strides = [1, 1]} : vector<8x296xf32> to vector<1x294xf32>
    %643 = vector.broadcast %641 : vector<8x1xf32> to vector<8x294xf32>
    %644 = vector.broadcast %642 : vector<1x294xf32> to vector<8x294xf32>
    %645 = arith.mulf %643, %644 : vector<8x294xf32>
    %646 = arith.addf %640, %645 : vector<8x294xf32>
    %647 = vector.extract_strided_slice %610 {offsets = [0, 6], sizes = [8, 1], strides = [1, 1]} : vector<8x8xf32> to vector<8x1xf32>
    %648 = vector.extract_strided_slice %557 {offsets = [6, 1], sizes = [1, 294], strides = [1, 1]} : vector<8x296xf32> to vector<1x294xf32>
    %649 = vector.broadcast %647 : vector<8x1xf32> to vector<8x294xf32>
    %650 = vector.broadcast %648 : vector<1x294xf32> to vector<8x294xf32>
    %651 = arith.mulf %649, %650 : vector<8x294xf32>
    %652 = arith.addf %646, %651 : vector<8x294xf32>
    %653 = vector.extract_strided_slice %610 {offsets = [0, 7], sizes = [8, 1], strides = [1, 1]} : vector<8x8xf32> to vector<8x1xf32>
    %654 = vector.extract_strided_slice %557 {offsets = [7, 1], sizes = [1, 294], strides = [1, 1]} : vector<8x296xf32> to vector<1x294xf32>
    %655 = vector.broadcast %653 : vector<8x1xf32> to vector<8x294xf32>
    %656 = vector.broadcast %654 : vector<1x294xf32> to vector<8x294xf32>
    %657 = arith.mulf %655, %656 : vector<8x294xf32>
    %658 = arith.addf %652, %657 : vector<8x294xf32>
    %c2_103 = arith.constant 2 : index
    %c0_104 = arith.constant 0 : index
    %c0_105 = arith.constant 0 : index
    %659 = vector.load %arg8[%c2_103, %c0_104, %c0_105] : memref<3x8x8xf32, #tpu.memory_space<vmem>>, vector<1x8x8xf32>
    %660 = vector.shape_cast %659 : vector<1x8x8xf32> to vector<8x8xf32>
    %661 = vector.extract_strided_slice %660 {offsets = [0, 0], sizes = [8, 1], strides = [1, 1]} : vector<8x8xf32> to vector<8x1xf32>
    %662 = vector.extract_strided_slice %557 {offsets = [0, 2], sizes = [1, 294], strides = [1, 1]} : vector<8x296xf32> to vector<1x294xf32>
    %663 = vector.broadcast %661 : vector<8x1xf32> to vector<8x294xf32>
    %664 = vector.broadcast %662 : vector<1x294xf32> to vector<8x294xf32>
    %665 = arith.mulf %663, %664 : vector<8x294xf32>
    %666 = arith.addf %658, %665 : vector<8x294xf32>
    %667 = vector.extract_strided_slice %660 {offsets = [0, 1], sizes = [8, 1], strides = [1, 1]} : vector<8x8xf32> to vector<8x1xf32>
    %668 = vector.extract_strided_slice %557 {offsets = [1, 2], sizes = [1, 294], strides = [1, 1]} : vector<8x296xf32> to vector<1x294xf32>
    %669 = vector.broadcast %667 : vector<8x1xf32> to vector<8x294xf32>
    %670 = vector.broadcast %668 : vector<1x294xf32> to vector<8x294xf32>
    %671 = arith.mulf %669, %670 : vector<8x294xf32>
    %672 = arith.addf %666, %671 : vector<8x294xf32>
    %673 = vector.extract_strided_slice %660 {offsets = [0, 2], sizes = [8, 1], strides = [1, 1]} : vector<8x8xf32> to vector<8x1xf32>
    %674 = vector.extract_strided_slice %557 {offsets = [2, 2], sizes = [1, 294], strides = [1, 1]} : vector<8x296xf32> to vector<1x294xf32>
    %675 = vector.broadcast %673 : vector<8x1xf32> to vector<8x294xf32>
    %676 = vector.broadcast %674 : vector<1x294xf32> to vector<8x294xf32>
    %677 = arith.mulf %675, %676 : vector<8x294xf32>
    %678 = arith.addf %672, %677 : vector<8x294xf32>
    %679 = vector.extract_strided_slice %660 {offsets = [0, 3], sizes = [8, 1], strides = [1, 1]} : vector<8x8xf32> to vector<8x1xf32>
    %680 = vector.extract_strided_slice %557 {offsets = [3, 2], sizes = [1, 294], strides = [1, 1]} : vector<8x296xf32> to vector<1x294xf32>
    %681 = vector.broadcast %679 : vector<8x1xf32> to vector<8x294xf32>
    %682 = vector.broadcast %680 : vector<1x294xf32> to vector<8x294xf32>
    %683 = arith.mulf %681, %682 : vector<8x294xf32>
    %684 = arith.addf %678, %683 : vector<8x294xf32>
    %685 = vector.extract_strided_slice %660 {offsets = [0, 4], sizes = [8, 1], strides = [1, 1]} : vector<8x8xf32> to vector<8x1xf32>
    %686 = vector.extract_strided_slice %557 {offsets = [4, 2], sizes = [1, 294], strides = [1, 1]} : vector<8x296xf32> to vector<1x294xf32>
    %687 = vector.broadcast %685 : vector<8x1xf32> to vector<8x294xf32>
    %688 = vector.broadcast %686 : vector<1x294xf32> to vector<8x294xf32>
    %689 = arith.mulf %687, %688 : vector<8x294xf32>
    %690 = arith.addf %684, %689 : vector<8x294xf32>
    %691 = vector.extract_strided_slice %660 {offsets = [0, 5], sizes = [8, 1], strides = [1, 1]} : vector<8x8xf32> to vector<8x1xf32>
    %692 = vector.extract_strided_slice %557 {offsets = [5, 2], sizes = [1, 294], strides = [1, 1]} : vector<8x296xf32> to vector<1x294xf32>
    %693 = vector.broadcast %691 : vector<8x1xf32> to vector<8x294xf32>
    %694 = vector.broadcast %692 : vector<1x294xf32> to vector<8x294xf32>
    %695 = arith.mulf %693, %694 : vector<8x294xf32>
    %696 = arith.addf %690, %695 : vector<8x294xf32>
    %697 = vector.extract_strided_slice %660 {offsets = [0, 6], sizes = [8, 1], strides = [1, 1]} : vector<8x8xf32> to vector<8x1xf32>
    %698 = vector.extract_strided_slice %557 {offsets = [6, 2], sizes = [1, 294], strides = [1, 1]} : vector<8x296xf32> to vector<1x294xf32>
    %699 = vector.broadcast %697 : vector<8x1xf32> to vector<8x294xf32>
    %700 = vector.broadcast %698 : vector<1x294xf32> to vector<8x294xf32>
    %701 = arith.mulf %699, %700 : vector<8x294xf32>
    %702 = arith.addf %696, %701 : vector<8x294xf32>
    %703 = vector.extract_strided_slice %660 {offsets = [0, 7], sizes = [8, 1], strides = [1, 1]} : vector<8x8xf32> to vector<8x1xf32>
    %704 = vector.extract_strided_slice %557 {offsets = [7, 2], sizes = [1, 294], strides = [1, 1]} : vector<8x296xf32> to vector<1x294xf32>
    %705 = vector.broadcast %703 : vector<8x1xf32> to vector<8x294xf32>
    %706 = vector.broadcast %704 : vector<1x294xf32> to vector<8x294xf32>
    %707 = arith.mulf %705, %706 : vector<8x294xf32>
    %708 = arith.addf %702, %707 : vector<8x294xf32>
    %c0_106 = arith.constant 0 : index
    %c0_107 = arith.constant 0 : index
    %709 = vector.load %arg9[%c0_106, %c0_107] : memref<8x1xf32, #tpu.memory_space<vmem>>, vector<8x1xf32>
    %710 = vector.broadcast %709 : vector<8x1xf32> to vector<8x294xf32>
    %711 = arith.addf %708, %710 : vector<8x294xf32>
    %cst_108 = arith.constant 0.000000e+00 : f32
    %712 = vector.broadcast %cst_108 : f32 to vector<8x294xf32>
    %713 = arith.maximumf %711, %712 : vector<8x294xf32>
    %714 = tpu.concatenate %472, %713 in 0 : vector<8x294xf32>, vector<8x294xf32> -> vector<16x294xf32>
    %715 = vector.extract_strided_slice %714 {offsets = [0, 1], sizes = [16, 293], strides = [1, 1]} : vector<16x294xf32> to vector<16x293xf32>
    %716 = vector.extract_strided_slice %714 {offsets = [0, 0], sizes = [16, 293], strides = [1, 1]} : vector<16x294xf32> to vector<16x293xf32>
    %717 = arith.maximumf %715, %716 : vector<16x293xf32>
    %c0_109 = arith.constant 0 : index
    %c0_110 = arith.constant 0 : index
    %718 = vector.load %arg17[%c0_109, %c0_110] : memref<293x147xf32, #tpu.memory_space<vmem>>, vector<293x147xf32>
    %cst_111 = arith.constant dense<0.000000e+00> : vector<16x147xf32>
    %719 = tpu.matmul %717, %718, %cst_111 {dimension_numbers = #tpu.dot_dimension_numbers<[1], [0], [0], [1], [0, 0, 1, 1], [], []>} : vector<16x293xf32>, vector<293x147xf32>, vector<16x147xf32> -> vector<16x147xf32>
    %720 = vector.extract_strided_slice %719 {offsets = [0, 0], sizes = [8, 147], strides = [1, 1]} : vector<16x147xf32> to vector<8x147xf32>
    %cst_112 = arith.constant 0.000000e+00 : f32
    %721 = vector.broadcast %cst_112 : f32 to vector<16x145xf32>
    %c0_113 = arith.constant 0 : index
    %c0_114 = arith.constant 0 : index
    %c0_115 = arith.constant 0 : index
    %722 = vector.load %arg10[%c0_113, %c0_114, %c0_115] : memref<3x16x8xf32, #tpu.memory_space<vmem>>, vector<1x16x8xf32>
    %723 = vector.shape_cast %722 : vector<1x16x8xf32> to vector<16x8xf32>
    %724 = vector.extract_strided_slice %723 {offsets = [0, 0], sizes = [16, 1], strides = [1, 1]} : vector<16x8xf32> to vector<16x1xf32>
    %725 = vector.extract_strided_slice %720 {offsets = [0, 0], sizes = [1, 145], strides = [1, 1]} : vector<8x147xf32> to vector<1x145xf32>
    %726 = vector.broadcast %724 : vector<16x1xf32> to vector<16x145xf32>
    %727 = vector.broadcast %725 : vector<1x145xf32> to vector<16x145xf32>
    %728 = arith.mulf %726, %727 : vector<16x145xf32>
    %729 = arith.addf %721, %728 : vector<16x145xf32>
    %730 = vector.extract_strided_slice %723 {offsets = [0, 1], sizes = [16, 1], strides = [1, 1]} : vector<16x8xf32> to vector<16x1xf32>
    %731 = vector.extract_strided_slice %720 {offsets = [1, 0], sizes = [1, 145], strides = [1, 1]} : vector<8x147xf32> to vector<1x145xf32>
    %732 = vector.broadcast %730 : vector<16x1xf32> to vector<16x145xf32>
    %733 = vector.broadcast %731 : vector<1x145xf32> to vector<16x145xf32>
    %734 = arith.mulf %732, %733 : vector<16x145xf32>
    %735 = arith.addf %729, %734 : vector<16x145xf32>
    %736 = vector.extract_strided_slice %723 {offsets = [0, 2], sizes = [16, 1], strides = [1, 1]} : vector<16x8xf32> to vector<16x1xf32>
    %737 = vector.extract_strided_slice %720 {offsets = [2, 0], sizes = [1, 145], strides = [1, 1]} : vector<8x147xf32> to vector<1x145xf32>
    %738 = vector.broadcast %736 : vector<16x1xf32> to vector<16x145xf32>
    %739 = vector.broadcast %737 : vector<1x145xf32> to vector<16x145xf32>
    %740 = arith.mulf %738, %739 : vector<16x145xf32>
    %741 = arith.addf %735, %740 : vector<16x145xf32>
    %742 = vector.extract_strided_slice %723 {offsets = [0, 3], sizes = [16, 1], strides = [1, 1]} : vector<16x8xf32> to vector<16x1xf32>
    %743 = vector.extract_strided_slice %720 {offsets = [3, 0], sizes = [1, 145], strides = [1, 1]} : vector<8x147xf32> to vector<1x145xf32>
    %744 = vector.broadcast %742 : vector<16x1xf32> to vector<16x145xf32>
    %745 = vector.broadcast %743 : vector<1x145xf32> to vector<16x145xf32>
    %746 = arith.mulf %744, %745 : vector<16x145xf32>
    %747 = arith.addf %741, %746 : vector<16x145xf32>
    %748 = vector.extract_strided_slice %723 {offsets = [0, 4], sizes = [16, 1], strides = [1, 1]} : vector<16x8xf32> to vector<16x1xf32>
    %749 = vector.extract_strided_slice %720 {offsets = [4, 0], sizes = [1, 145], strides = [1, 1]} : vector<8x147xf32> to vector<1x145xf32>
    %750 = vector.broadcast %748 : vector<16x1xf32> to vector<16x145xf32>
    %751 = vector.broadcast %749 : vector<1x145xf32> to vector<16x145xf32>
    %752 = arith.mulf %750, %751 : vector<16x145xf32>
    %753 = arith.addf %747, %752 : vector<16x145xf32>
    %754 = vector.extract_strided_slice %723 {offsets = [0, 5], sizes = [16, 1], strides = [1, 1]} : vector<16x8xf32> to vector<16x1xf32>
    %755 = vector.extract_strided_slice %720 {offsets = [5, 0], sizes = [1, 145], strides = [1, 1]} : vector<8x147xf32> to vector<1x145xf32>
    %756 = vector.broadcast %754 : vector<16x1xf32> to vector<16x145xf32>
    %757 = vector.broadcast %755 : vector<1x145xf32> to vector<16x145xf32>
    %758 = arith.mulf %756, %757 : vector<16x145xf32>
    %759 = arith.addf %753, %758 : vector<16x145xf32>
    %760 = vector.extract_strided_slice %723 {offsets = [0, 6], sizes = [16, 1], strides = [1, 1]} : vector<16x8xf32> to vector<16x1xf32>
    %761 = vector.extract_strided_slice %720 {offsets = [6, 0], sizes = [1, 145], strides = [1, 1]} : vector<8x147xf32> to vector<1x145xf32>
    %762 = vector.broadcast %760 : vector<16x1xf32> to vector<16x145xf32>
    %763 = vector.broadcast %761 : vector<1x145xf32> to vector<16x145xf32>
    %764 = arith.mulf %762, %763 : vector<16x145xf32>
    %765 = arith.addf %759, %764 : vector<16x145xf32>
    %766 = vector.extract_strided_slice %723 {offsets = [0, 7], sizes = [16, 1], strides = [1, 1]} : vector<16x8xf32> to vector<16x1xf32>
    %767 = vector.extract_strided_slice %720 {offsets = [7, 0], sizes = [1, 145], strides = [1, 1]} : vector<8x147xf32> to vector<1x145xf32>
    %768 = vector.broadcast %766 : vector<16x1xf32> to vector<16x145xf32>
    %769 = vector.broadcast %767 : vector<1x145xf32> to vector<16x145xf32>
    %770 = arith.mulf %768, %769 : vector<16x145xf32>
    %771 = arith.addf %765, %770 : vector<16x145xf32>
    %c1_116 = arith.constant 1 : index
    %c0_117 = arith.constant 0 : index
    %c0_118 = arith.constant 0 : index
    %772 = vector.load %arg10[%c1_116, %c0_117, %c0_118] : memref<3x16x8xf32, #tpu.memory_space<vmem>>, vector<1x16x8xf32>
    %773 = vector.shape_cast %772 : vector<1x16x8xf32> to vector<16x8xf32>
    %774 = vector.extract_strided_slice %773 {offsets = [0, 0], sizes = [16, 1], strides = [1, 1]} : vector<16x8xf32> to vector<16x1xf32>
    %775 = vector.extract_strided_slice %720 {offsets = [0, 1], sizes = [1, 145], strides = [1, 1]} : vector<8x147xf32> to vector<1x145xf32>
    %776 = vector.broadcast %774 : vector<16x1xf32> to vector<16x145xf32>
    %777 = vector.broadcast %775 : vector<1x145xf32> to vector<16x145xf32>
    %778 = arith.mulf %776, %777 : vector<16x145xf32>
    %779 = arith.addf %771, %778 : vector<16x145xf32>
    %780 = vector.extract_strided_slice %773 {offsets = [0, 1], sizes = [16, 1], strides = [1, 1]} : vector<16x8xf32> to vector<16x1xf32>
    %781 = vector.extract_strided_slice %720 {offsets = [1, 1], sizes = [1, 145], strides = [1, 1]} : vector<8x147xf32> to vector<1x145xf32>
    %782 = vector.broadcast %780 : vector<16x1xf32> to vector<16x145xf32>
    %783 = vector.broadcast %781 : vector<1x145xf32> to vector<16x145xf32>
    %784 = arith.mulf %782, %783 : vector<16x145xf32>
    %785 = arith.addf %779, %784 : vector<16x145xf32>
    %786 = vector.extract_strided_slice %773 {offsets = [0, 2], sizes = [16, 1], strides = [1, 1]} : vector<16x8xf32> to vector<16x1xf32>
    %787 = vector.extract_strided_slice %720 {offsets = [2, 1], sizes = [1, 145], strides = [1, 1]} : vector<8x147xf32> to vector<1x145xf32>
    %788 = vector.broadcast %786 : vector<16x1xf32> to vector<16x145xf32>
    %789 = vector.broadcast %787 : vector<1x145xf32> to vector<16x145xf32>
    %790 = arith.mulf %788, %789 : vector<16x145xf32>
    %791 = arith.addf %785, %790 : vector<16x145xf32>
    %792 = vector.extract_strided_slice %773 {offsets = [0, 3], sizes = [16, 1], strides = [1, 1]} : vector<16x8xf32> to vector<16x1xf32>
    %793 = vector.extract_strided_slice %720 {offsets = [3, 1], sizes = [1, 145], strides = [1, 1]} : vector<8x147xf32> to vector<1x145xf32>
    %794 = vector.broadcast %792 : vector<16x1xf32> to vector<16x145xf32>
    %795 = vector.broadcast %793 : vector<1x145xf32> to vector<16x145xf32>
    %796 = arith.mulf %794, %795 : vector<16x145xf32>
    %797 = arith.addf %791, %796 : vector<16x145xf32>
    %798 = vector.extract_strided_slice %773 {offsets = [0, 4], sizes = [16, 1], strides = [1, 1]} : vector<16x8xf32> to vector<16x1xf32>
    %799 = vector.extract_strided_slice %720 {offsets = [4, 1], sizes = [1, 145], strides = [1, 1]} : vector<8x147xf32> to vector<1x145xf32>
    %800 = vector.broadcast %798 : vector<16x1xf32> to vector<16x145xf32>
    %801 = vector.broadcast %799 : vector<1x145xf32> to vector<16x145xf32>
    %802 = arith.mulf %800, %801 : vector<16x145xf32>
    %803 = arith.addf %797, %802 : vector<16x145xf32>
    %804 = vector.extract_strided_slice %773 {offsets = [0, 5], sizes = [16, 1], strides = [1, 1]} : vector<16x8xf32> to vector<16x1xf32>
    %805 = vector.extract_strided_slice %720 {offsets = [5, 1], sizes = [1, 145], strides = [1, 1]} : vector<8x147xf32> to vector<1x145xf32>
    %806 = vector.broadcast %804 : vector<16x1xf32> to vector<16x145xf32>
    %807 = vector.broadcast %805 : vector<1x145xf32> to vector<16x145xf32>
    %808 = arith.mulf %806, %807 : vector<16x145xf32>
    %809 = arith.addf %803, %808 : vector<16x145xf32>
    %810 = vector.extract_strided_slice %773 {offsets = [0, 6], sizes = [16, 1], strides = [1, 1]} : vector<16x8xf32> to vector<16x1xf32>
    %811 = vector.extract_strided_slice %720 {offsets = [6, 1], sizes = [1, 145], strides = [1, 1]} : vector<8x147xf32> to vector<1x145xf32>
    %812 = vector.broadcast %810 : vector<16x1xf32> to vector<16x145xf32>
    %813 = vector.broadcast %811 : vector<1x145xf32> to vector<16x145xf32>
    %814 = arith.mulf %812, %813 : vector<16x145xf32>
    %815 = arith.addf %809, %814 : vector<16x145xf32>
    %816 = vector.extract_strided_slice %773 {offsets = [0, 7], sizes = [16, 1], strides = [1, 1]} : vector<16x8xf32> to vector<16x1xf32>
    %817 = vector.extract_strided_slice %720 {offsets = [7, 1], sizes = [1, 145], strides = [1, 1]} : vector<8x147xf32> to vector<1x145xf32>
    %818 = vector.broadcast %816 : vector<16x1xf32> to vector<16x145xf32>
    %819 = vector.broadcast %817 : vector<1x145xf32> to vector<16x145xf32>
    %820 = arith.mulf %818, %819 : vector<16x145xf32>
    %821 = arith.addf %815, %820 : vector<16x145xf32>
    %c2_119 = arith.constant 2 : index
    %c0_120 = arith.constant 0 : index
    %c0_121 = arith.constant 0 : index
    %822 = vector.load %arg10[%c2_119, %c0_120, %c0_121] : memref<3x16x8xf32, #tpu.memory_space<vmem>>, vector<1x16x8xf32>
    %823 = vector.shape_cast %822 : vector<1x16x8xf32> to vector<16x8xf32>
    %824 = vector.extract_strided_slice %823 {offsets = [0, 0], sizes = [16, 1], strides = [1, 1]} : vector<16x8xf32> to vector<16x1xf32>
    %825 = vector.extract_strided_slice %720 {offsets = [0, 2], sizes = [1, 145], strides = [1, 1]} : vector<8x147xf32> to vector<1x145xf32>
    %826 = vector.broadcast %824 : vector<16x1xf32> to vector<16x145xf32>
    %827 = vector.broadcast %825 : vector<1x145xf32> to vector<16x145xf32>
    %828 = arith.mulf %826, %827 : vector<16x145xf32>
    %829 = arith.addf %821, %828 : vector<16x145xf32>
    %830 = vector.extract_strided_slice %823 {offsets = [0, 1], sizes = [16, 1], strides = [1, 1]} : vector<16x8xf32> to vector<16x1xf32>
    %831 = vector.extract_strided_slice %720 {offsets = [1, 2], sizes = [1, 145], strides = [1, 1]} : vector<8x147xf32> to vector<1x145xf32>
    %832 = vector.broadcast %830 : vector<16x1xf32> to vector<16x145xf32>
    %833 = vector.broadcast %831 : vector<1x145xf32> to vector<16x145xf32>
    %834 = arith.mulf %832, %833 : vector<16x145xf32>
    %835 = arith.addf %829, %834 : vector<16x145xf32>
    %836 = vector.extract_strided_slice %823 {offsets = [0, 2], sizes = [16, 1], strides = [1, 1]} : vector<16x8xf32> to vector<16x1xf32>
    %837 = vector.extract_strided_slice %720 {offsets = [2, 2], sizes = [1, 145], strides = [1, 1]} : vector<8x147xf32> to vector<1x145xf32>
    %838 = vector.broadcast %836 : vector<16x1xf32> to vector<16x145xf32>
    %839 = vector.broadcast %837 : vector<1x145xf32> to vector<16x145xf32>
    %840 = arith.mulf %838, %839 : vector<16x145xf32>
    %841 = arith.addf %835, %840 : vector<16x145xf32>
    %842 = vector.extract_strided_slice %823 {offsets = [0, 3], sizes = [16, 1], strides = [1, 1]} : vector<16x8xf32> to vector<16x1xf32>
    %843 = vector.extract_strided_slice %720 {offsets = [3, 2], sizes = [1, 145], strides = [1, 1]} : vector<8x147xf32> to vector<1x145xf32>
    %844 = vector.broadcast %842 : vector<16x1xf32> to vector<16x145xf32>
    %845 = vector.broadcast %843 : vector<1x145xf32> to vector<16x145xf32>
    %846 = arith.mulf %844, %845 : vector<16x145xf32>
    %847 = arith.addf %841, %846 : vector<16x145xf32>
    %848 = vector.extract_strided_slice %823 {offsets = [0, 4], sizes = [16, 1], strides = [1, 1]} : vector<16x8xf32> to vector<16x1xf32>
    %849 = vector.extract_strided_slice %720 {offsets = [4, 2], sizes = [1, 145], strides = [1, 1]} : vector<8x147xf32> to vector<1x145xf32>
    %850 = vector.broadcast %848 : vector<16x1xf32> to vector<16x145xf32>
    %851 = vector.broadcast %849 : vector<1x145xf32> to vector<16x145xf32>
    %852 = arith.mulf %850, %851 : vector<16x145xf32>
    %853 = arith.addf %847, %852 : vector<16x145xf32>
    %854 = vector.extract_strided_slice %823 {offsets = [0, 5], sizes = [16, 1], strides = [1, 1]} : vector<16x8xf32> to vector<16x1xf32>
    %855 = vector.extract_strided_slice %720 {offsets = [5, 2], sizes = [1, 145], strides = [1, 1]} : vector<8x147xf32> to vector<1x145xf32>
    %856 = vector.broadcast %854 : vector<16x1xf32> to vector<16x145xf32>
    %857 = vector.broadcast %855 : vector<1x145xf32> to vector<16x145xf32>
    %858 = arith.mulf %856, %857 : vector<16x145xf32>
    %859 = arith.addf %853, %858 : vector<16x145xf32>
    %860 = vector.extract_strided_slice %823 {offsets = [0, 6], sizes = [16, 1], strides = [1, 1]} : vector<16x8xf32> to vector<16x1xf32>
    %861 = vector.extract_strided_slice %720 {offsets = [6, 2], sizes = [1, 145], strides = [1, 1]} : vector<8x147xf32> to vector<1x145xf32>
    %862 = vector.broadcast %860 : vector<16x1xf32> to vector<16x145xf32>
    %863 = vector.broadcast %861 : vector<1x145xf32> to vector<16x145xf32>
    %864 = arith.mulf %862, %863 : vector<16x145xf32>
    %865 = arith.addf %859, %864 : vector<16x145xf32>
    %866 = vector.extract_strided_slice %823 {offsets = [0, 7], sizes = [16, 1], strides = [1, 1]} : vector<16x8xf32> to vector<16x1xf32>
    %867 = vector.extract_strided_slice %720 {offsets = [7, 2], sizes = [1, 145], strides = [1, 1]} : vector<8x147xf32> to vector<1x145xf32>
    %868 = vector.broadcast %866 : vector<16x1xf32> to vector<16x145xf32>
    %869 = vector.broadcast %867 : vector<1x145xf32> to vector<16x145xf32>
    %870 = arith.mulf %868, %869 : vector<16x145xf32>
    %871 = arith.addf %865, %870 : vector<16x145xf32>
    %c0_122 = arith.constant 0 : index
    %c0_123 = arith.constant 0 : index
    %872 = vector.load %arg11[%c0_122, %c0_123] : memref<16x1xf32, #tpu.memory_space<vmem>>, vector<16x1xf32>
    %873 = vector.broadcast %872 : vector<16x1xf32> to vector<16x145xf32>
    %874 = arith.addf %871, %873 : vector<16x145xf32>
    %cst_124 = arith.constant 0.000000e+00 : f32
    %875 = vector.broadcast %cst_124 : f32 to vector<16x145xf32>
    %876 = arith.maximumf %874, %875 : vector<16x145xf32>
    %877 = vector.extract_strided_slice %719 {offsets = [8, 0], sizes = [8, 147], strides = [1, 1]} : vector<16x147xf32> to vector<8x147xf32>
    %cst_125 = arith.constant 0.000000e+00 : f32
    %878 = vector.broadcast %cst_125 : f32 to vector<16x145xf32>
    %c0_126 = arith.constant 0 : index
    %c0_127 = arith.constant 0 : index
    %c0_128 = arith.constant 0 : index
    %879 = vector.load %arg10[%c0_126, %c0_127, %c0_128] : memref<3x16x8xf32, #tpu.memory_space<vmem>>, vector<1x16x8xf32>
    %880 = vector.shape_cast %879 : vector<1x16x8xf32> to vector<16x8xf32>
    %881 = vector.extract_strided_slice %880 {offsets = [0, 0], sizes = [16, 1], strides = [1, 1]} : vector<16x8xf32> to vector<16x1xf32>
    %882 = vector.extract_strided_slice %877 {offsets = [0, 0], sizes = [1, 145], strides = [1, 1]} : vector<8x147xf32> to vector<1x145xf32>
    %883 = vector.broadcast %881 : vector<16x1xf32> to vector<16x145xf32>
    %884 = vector.broadcast %882 : vector<1x145xf32> to vector<16x145xf32>
    %885 = arith.mulf %883, %884 : vector<16x145xf32>
    %886 = arith.addf %878, %885 : vector<16x145xf32>
    %887 = vector.extract_strided_slice %880 {offsets = [0, 1], sizes = [16, 1], strides = [1, 1]} : vector<16x8xf32> to vector<16x1xf32>
    %888 = vector.extract_strided_slice %877 {offsets = [1, 0], sizes = [1, 145], strides = [1, 1]} : vector<8x147xf32> to vector<1x145xf32>
    %889 = vector.broadcast %887 : vector<16x1xf32> to vector<16x145xf32>
    %890 = vector.broadcast %888 : vector<1x145xf32> to vector<16x145xf32>
    %891 = arith.mulf %889, %890 : vector<16x145xf32>
    %892 = arith.addf %886, %891 : vector<16x145xf32>
    %893 = vector.extract_strided_slice %880 {offsets = [0, 2], sizes = [16, 1], strides = [1, 1]} : vector<16x8xf32> to vector<16x1xf32>
    %894 = vector.extract_strided_slice %877 {offsets = [2, 0], sizes = [1, 145], strides = [1, 1]} : vector<8x147xf32> to vector<1x145xf32>
    %895 = vector.broadcast %893 : vector<16x1xf32> to vector<16x145xf32>
    %896 = vector.broadcast %894 : vector<1x145xf32> to vector<16x145xf32>
    %897 = arith.mulf %895, %896 : vector<16x145xf32>
    %898 = arith.addf %892, %897 : vector<16x145xf32>
    %899 = vector.extract_strided_slice %880 {offsets = [0, 3], sizes = [16, 1], strides = [1, 1]} : vector<16x8xf32> to vector<16x1xf32>
    %900 = vector.extract_strided_slice %877 {offsets = [3, 0], sizes = [1, 145], strides = [1, 1]} : vector<8x147xf32> to vector<1x145xf32>
    %901 = vector.broadcast %899 : vector<16x1xf32> to vector<16x145xf32>
    %902 = vector.broadcast %900 : vector<1x145xf32> to vector<16x145xf32>
    %903 = arith.mulf %901, %902 : vector<16x145xf32>
    %904 = arith.addf %898, %903 : vector<16x145xf32>
    %905 = vector.extract_strided_slice %880 {offsets = [0, 4], sizes = [16, 1], strides = [1, 1]} : vector<16x8xf32> to vector<16x1xf32>
    %906 = vector.extract_strided_slice %877 {offsets = [4, 0], sizes = [1, 145], strides = [1, 1]} : vector<8x147xf32> to vector<1x145xf32>
    %907 = vector.broadcast %905 : vector<16x1xf32> to vector<16x145xf32>
    %908 = vector.broadcast %906 : vector<1x145xf32> to vector<16x145xf32>
    %909 = arith.mulf %907, %908 : vector<16x145xf32>
    %910 = arith.addf %904, %909 : vector<16x145xf32>
    %911 = vector.extract_strided_slice %880 {offsets = [0, 5], sizes = [16, 1], strides = [1, 1]} : vector<16x8xf32> to vector<16x1xf32>
    %912 = vector.extract_strided_slice %877 {offsets = [5, 0], sizes = [1, 145], strides = [1, 1]} : vector<8x147xf32> to vector<1x145xf32>
    %913 = vector.broadcast %911 : vector<16x1xf32> to vector<16x145xf32>
    %914 = vector.broadcast %912 : vector<1x145xf32> to vector<16x145xf32>
    %915 = arith.mulf %913, %914 : vector<16x145xf32>
    %916 = arith.addf %910, %915 : vector<16x145xf32>
    %917 = vector.extract_strided_slice %880 {offsets = [0, 6], sizes = [16, 1], strides = [1, 1]} : vector<16x8xf32> to vector<16x1xf32>
    %918 = vector.extract_strided_slice %877 {offsets = [6, 0], sizes = [1, 145], strides = [1, 1]} : vector<8x147xf32> to vector<1x145xf32>
    %919 = vector.broadcast %917 : vector<16x1xf32> to vector<16x145xf32>
    %920 = vector.broadcast %918 : vector<1x145xf32> to vector<16x145xf32>
    %921 = arith.mulf %919, %920 : vector<16x145xf32>
    %922 = arith.addf %916, %921 : vector<16x145xf32>
    %923 = vector.extract_strided_slice %880 {offsets = [0, 7], sizes = [16, 1], strides = [1, 1]} : vector<16x8xf32> to vector<16x1xf32>
    %924 = vector.extract_strided_slice %877 {offsets = [7, 0], sizes = [1, 145], strides = [1, 1]} : vector<8x147xf32> to vector<1x145xf32>
    %925 = vector.broadcast %923 : vector<16x1xf32> to vector<16x145xf32>
    %926 = vector.broadcast %924 : vector<1x145xf32> to vector<16x145xf32>
    %927 = arith.mulf %925, %926 : vector<16x145xf32>
    %928 = arith.addf %922, %927 : vector<16x145xf32>
    %c1_129 = arith.constant 1 : index
    %c0_130 = arith.constant 0 : index
    %c0_131 = arith.constant 0 : index
    %929 = vector.load %arg10[%c1_129, %c0_130, %c0_131] : memref<3x16x8xf32, #tpu.memory_space<vmem>>, vector<1x16x8xf32>
    %930 = vector.shape_cast %929 : vector<1x16x8xf32> to vector<16x8xf32>
    %931 = vector.extract_strided_slice %930 {offsets = [0, 0], sizes = [16, 1], strides = [1, 1]} : vector<16x8xf32> to vector<16x1xf32>
    %932 = vector.extract_strided_slice %877 {offsets = [0, 1], sizes = [1, 145], strides = [1, 1]} : vector<8x147xf32> to vector<1x145xf32>
    %933 = vector.broadcast %931 : vector<16x1xf32> to vector<16x145xf32>
    %934 = vector.broadcast %932 : vector<1x145xf32> to vector<16x145xf32>
    %935 = arith.mulf %933, %934 : vector<16x145xf32>
    %936 = arith.addf %928, %935 : vector<16x145xf32>
    %937 = vector.extract_strided_slice %930 {offsets = [0, 1], sizes = [16, 1], strides = [1, 1]} : vector<16x8xf32> to vector<16x1xf32>
    %938 = vector.extract_strided_slice %877 {offsets = [1, 1], sizes = [1, 145], strides = [1, 1]} : vector<8x147xf32> to vector<1x145xf32>
    %939 = vector.broadcast %937 : vector<16x1xf32> to vector<16x145xf32>
    %940 = vector.broadcast %938 : vector<1x145xf32> to vector<16x145xf32>
    %941 = arith.mulf %939, %940 : vector<16x145xf32>
    %942 = arith.addf %936, %941 : vector<16x145xf32>
    %943 = vector.extract_strided_slice %930 {offsets = [0, 2], sizes = [16, 1], strides = [1, 1]} : vector<16x8xf32> to vector<16x1xf32>
    %944 = vector.extract_strided_slice %877 {offsets = [2, 1], sizes = [1, 145], strides = [1, 1]} : vector<8x147xf32> to vector<1x145xf32>
    %945 = vector.broadcast %943 : vector<16x1xf32> to vector<16x145xf32>
    %946 = vector.broadcast %944 : vector<1x145xf32> to vector<16x145xf32>
    %947 = arith.mulf %945, %946 : vector<16x145xf32>
    %948 = arith.addf %942, %947 : vector<16x145xf32>
    %949 = vector.extract_strided_slice %930 {offsets = [0, 3], sizes = [16, 1], strides = [1, 1]} : vector<16x8xf32> to vector<16x1xf32>
    %950 = vector.extract_strided_slice %877 {offsets = [3, 1], sizes = [1, 145], strides = [1, 1]} : vector<8x147xf32> to vector<1x145xf32>
    %951 = vector.broadcast %949 : vector<16x1xf32> to vector<16x145xf32>
    %952 = vector.broadcast %950 : vector<1x145xf32> to vector<16x145xf32>
    %953 = arith.mulf %951, %952 : vector<16x145xf32>
    %954 = arith.addf %948, %953 : vector<16x145xf32>
    %955 = vector.extract_strided_slice %930 {offsets = [0, 4], sizes = [16, 1], strides = [1, 1]} : vector<16x8xf32> to vector<16x1xf32>
    %956 = vector.extract_strided_slice %877 {offsets = [4, 1], sizes = [1, 145], strides = [1, 1]} : vector<8x147xf32> to vector<1x145xf32>
    %957 = vector.broadcast %955 : vector<16x1xf32> to vector<16x145xf32>
    %958 = vector.broadcast %956 : vector<1x145xf32> to vector<16x145xf32>
    %959 = arith.mulf %957, %958 : vector<16x145xf32>
    %960 = arith.addf %954, %959 : vector<16x145xf32>
    %961 = vector.extract_strided_slice %930 {offsets = [0, 5], sizes = [16, 1], strides = [1, 1]} : vector<16x8xf32> to vector<16x1xf32>
    %962 = vector.extract_strided_slice %877 {offsets = [5, 1], sizes = [1, 145], strides = [1, 1]} : vector<8x147xf32> to vector<1x145xf32>
    %963 = vector.broadcast %961 : vector<16x1xf32> to vector<16x145xf32>
    %964 = vector.broadcast %962 : vector<1x145xf32> to vector<16x145xf32>
    %965 = arith.mulf %963, %964 : vector<16x145xf32>
    %966 = arith.addf %960, %965 : vector<16x145xf32>
    %967 = vector.extract_strided_slice %930 {offsets = [0, 6], sizes = [16, 1], strides = [1, 1]} : vector<16x8xf32> to vector<16x1xf32>
    %968 = vector.extract_strided_slice %877 {offsets = [6, 1], sizes = [1, 145], strides = [1, 1]} : vector<8x147xf32> to vector<1x145xf32>
    %969 = vector.broadcast %967 : vector<16x1xf32> to vector<16x145xf32>
    %970 = vector.broadcast %968 : vector<1x145xf32> to vector<16x145xf32>
    %971 = arith.mulf %969, %970 : vector<16x145xf32>
    %972 = arith.addf %966, %971 : vector<16x145xf32>
    %973 = vector.extract_strided_slice %930 {offsets = [0, 7], sizes = [16, 1], strides = [1, 1]} : vector<16x8xf32> to vector<16x1xf32>
    %974 = vector.extract_strided_slice %877 {offsets = [7, 1], sizes = [1, 145], strides = [1, 1]} : vector<8x147xf32> to vector<1x145xf32>
    %975 = vector.broadcast %973 : vector<16x1xf32> to vector<16x145xf32>
    %976 = vector.broadcast %974 : vector<1x145xf32> to vector<16x145xf32>
    %977 = arith.mulf %975, %976 : vector<16x145xf32>
    %978 = arith.addf %972, %977 : vector<16x145xf32>
    %c2_132 = arith.constant 2 : index
    %c0_133 = arith.constant 0 : index
    %c0_134 = arith.constant 0 : index
    %979 = vector.load %arg10[%c2_132, %c0_133, %c0_134] : memref<3x16x8xf32, #tpu.memory_space<vmem>>, vector<1x16x8xf32>
    %980 = vector.shape_cast %979 : vector<1x16x8xf32> to vector<16x8xf32>
    %981 = vector.extract_strided_slice %980 {offsets = [0, 0], sizes = [16, 1], strides = [1, 1]} : vector<16x8xf32> to vector<16x1xf32>
    %982 = vector.extract_strided_slice %877 {offsets = [0, 2], sizes = [1, 145], strides = [1, 1]} : vector<8x147xf32> to vector<1x145xf32>
    %983 = vector.broadcast %981 : vector<16x1xf32> to vector<16x145xf32>
    %984 = vector.broadcast %982 : vector<1x145xf32> to vector<16x145xf32>
    %985 = arith.mulf %983, %984 : vector<16x145xf32>
    %986 = arith.addf %978, %985 : vector<16x145xf32>
    %987 = vector.extract_strided_slice %980 {offsets = [0, 1], sizes = [16, 1], strides = [1, 1]} : vector<16x8xf32> to vector<16x1xf32>
    %988 = vector.extract_strided_slice %877 {offsets = [1, 2], sizes = [1, 145], strides = [1, 1]} : vector<8x147xf32> to vector<1x145xf32>
    %989 = vector.broadcast %987 : vector<16x1xf32> to vector<16x145xf32>
    %990 = vector.broadcast %988 : vector<1x145xf32> to vector<16x145xf32>
    %991 = arith.mulf %989, %990 : vector<16x145xf32>
    %992 = arith.addf %986, %991 : vector<16x145xf32>
    %993 = vector.extract_strided_slice %980 {offsets = [0, 2], sizes = [16, 1], strides = [1, 1]} : vector<16x8xf32> to vector<16x1xf32>
    %994 = vector.extract_strided_slice %877 {offsets = [2, 2], sizes = [1, 145], strides = [1, 1]} : vector<8x147xf32> to vector<1x145xf32>
    %995 = vector.broadcast %993 : vector<16x1xf32> to vector<16x145xf32>
    %996 = vector.broadcast %994 : vector<1x145xf32> to vector<16x145xf32>
    %997 = arith.mulf %995, %996 : vector<16x145xf32>
    %998 = arith.addf %992, %997 : vector<16x145xf32>
    %999 = vector.extract_strided_slice %980 {offsets = [0, 3], sizes = [16, 1], strides = [1, 1]} : vector<16x8xf32> to vector<16x1xf32>
    %1000 = vector.extract_strided_slice %877 {offsets = [3, 2], sizes = [1, 145], strides = [1, 1]} : vector<8x147xf32> to vector<1x145xf32>
    %1001 = vector.broadcast %999 : vector<16x1xf32> to vector<16x145xf32>
    %1002 = vector.broadcast %1000 : vector<1x145xf32> to vector<16x145xf32>
    %1003 = arith.mulf %1001, %1002 : vector<16x145xf32>
    %1004 = arith.addf %998, %1003 : vector<16x145xf32>
    %1005 = vector.extract_strided_slice %980 {offsets = [0, 4], sizes = [16, 1], strides = [1, 1]} : vector<16x8xf32> to vector<16x1xf32>
    %1006 = vector.extract_strided_slice %877 {offsets = [4, 2], sizes = [1, 145], strides = [1, 1]} : vector<8x147xf32> to vector<1x145xf32>
    %1007 = vector.broadcast %1005 : vector<16x1xf32> to vector<16x145xf32>
    %1008 = vector.broadcast %1006 : vector<1x145xf32> to vector<16x145xf32>
    %1009 = arith.mulf %1007, %1008 : vector<16x145xf32>
    %1010 = arith.addf %1004, %1009 : vector<16x145xf32>
    %1011 = vector.extract_strided_slice %980 {offsets = [0, 5], sizes = [16, 1], strides = [1, 1]} : vector<16x8xf32> to vector<16x1xf32>
    %1012 = vector.extract_strided_slice %877 {offsets = [5, 2], sizes = [1, 145], strides = [1, 1]} : vector<8x147xf32> to vector<1x145xf32>
    %1013 = vector.broadcast %1011 : vector<16x1xf32> to vector<16x145xf32>
    %1014 = vector.broadcast %1012 : vector<1x145xf32> to vector<16x145xf32>
    %1015 = arith.mulf %1013, %1014 : vector<16x145xf32>
    %1016 = arith.addf %1010, %1015 : vector<16x145xf32>
    %1017 = vector.extract_strided_slice %980 {offsets = [0, 6], sizes = [16, 1], strides = [1, 1]} : vector<16x8xf32> to vector<16x1xf32>
    %1018 = vector.extract_strided_slice %877 {offsets = [6, 2], sizes = [1, 145], strides = [1, 1]} : vector<8x147xf32> to vector<1x145xf32>
    %1019 = vector.broadcast %1017 : vector<16x1xf32> to vector<16x145xf32>
    %1020 = vector.broadcast %1018 : vector<1x145xf32> to vector<16x145xf32>
    %1021 = arith.mulf %1019, %1020 : vector<16x145xf32>
    %1022 = arith.addf %1016, %1021 : vector<16x145xf32>
    %1023 = vector.extract_strided_slice %980 {offsets = [0, 7], sizes = [16, 1], strides = [1, 1]} : vector<16x8xf32> to vector<16x1xf32>
    %1024 = vector.extract_strided_slice %877 {offsets = [7, 2], sizes = [1, 145], strides = [1, 1]} : vector<8x147xf32> to vector<1x145xf32>
    %1025 = vector.broadcast %1023 : vector<16x1xf32> to vector<16x145xf32>
    %1026 = vector.broadcast %1024 : vector<1x145xf32> to vector<16x145xf32>
    %1027 = arith.mulf %1025, %1026 : vector<16x145xf32>
    %1028 = arith.addf %1022, %1027 : vector<16x145xf32>
    %c0_135 = arith.constant 0 : index
    %c0_136 = arith.constant 0 : index
    %1029 = vector.load %arg11[%c0_135, %c0_136] : memref<16x1xf32, #tpu.memory_space<vmem>>, vector<16x1xf32>
    %1030 = vector.broadcast %1029 : vector<16x1xf32> to vector<16x145xf32>
    %1031 = arith.addf %1028, %1030 : vector<16x145xf32>
    %cst_137 = arith.constant 0.000000e+00 : f32
    %1032 = vector.broadcast %cst_137 : f32 to vector<16x145xf32>
    %1033 = arith.maximumf %1031, %1032 : vector<16x145xf32>
    %1034 = tpu.concatenate %876, %1033 in 0 : vector<16x145xf32>, vector<16x145xf32> -> vector<32x145xf32>
    %1035 = vector.extract_strided_slice %1034 {offsets = [0, 1], sizes = [32, 144], strides = [1, 1]} : vector<32x145xf32> to vector<32x144xf32>
    %1036 = vector.extract_strided_slice %1034 {offsets = [0, 0], sizes = [32, 144], strides = [1, 1]} : vector<32x145xf32> to vector<32x144xf32>
    %1037 = arith.maximumf %1035, %1036 : vector<32x144xf32>
    %1038 = vector.extract_strided_slice %1034 {offsets = [0, 0], sizes = [32, 1], strides = [1, 1]} : vector<32x145xf32> to vector<32x1xf32>
    %cst_138 = arith.constant 0.000000e+00 : f32
    %1039 = vector.broadcast %cst_138 : f32 to vector<32x1xf32>
    %1040 = arith.maximumf %1038, %1039 : vector<32x1xf32>
    %1041 = tpu.concatenate %1040, %1037 in 1 : vector<32x1xf32>, vector<32x144xf32> -> vector<32x145xf32>
    %c0_139 = arith.constant 0 : index
    %c0_140 = arith.constant 0 : index
    %1042 = vector.load %arg18[%c0_139, %c0_140] : memref<145x73xf32, #tpu.memory_space<vmem>>, vector<145x73xf32>
    %cst_141 = arith.constant dense<0.000000e+00> : vector<32x73xf32>
    %1043 = tpu.matmul %1041, %1042, %cst_141 {dimension_numbers = #tpu.dot_dimension_numbers<[1], [0], [0], [1], [0, 0, 1, 1], [], []>} : vector<32x145xf32>, vector<145x73xf32>, vector<32x73xf32> -> vector<32x73xf32>
    %1044 = vector.extract_strided_slice %1043 {offsets = [0, 0], sizes = [16, 73], strides = [1, 1]} : vector<32x73xf32> to vector<16x73xf32>
    %cst_142 = arith.constant 0.000000e+00 : f32
    %1045 = vector.broadcast %cst_142 : f32 to vector<32x71xf32>
    %c0_143 = arith.constant 0 : index
    %c0_144 = arith.constant 0 : index
    %c0_145 = arith.constant 0 : index
    %1046 = vector.load %arg12[%c0_143, %c0_144, %c0_145] : memref<3x32x16xf32, #tpu.memory_space<vmem>>, vector<1x32x16xf32>
    %1047 = vector.shape_cast %1046 : vector<1x32x16xf32> to vector<32x16xf32>
    %1048 = vector.extract_strided_slice %1044 {offsets = [0, 0], sizes = [16, 71], strides = [1, 1]} : vector<16x73xf32> to vector<16x71xf32>
    %cst_146 = arith.constant dense<0.000000e+00> : vector<32x71xf32>
    %1049 = tpu.matmul %1047, %1048, %cst_146 {dimension_numbers = #tpu.dot_dimension_numbers<[1], [0], [0], [1], [0, 0, 1, 1], [], []>} : vector<32x16xf32>, vector<16x71xf32>, vector<32x71xf32> -> vector<32x71xf32>
    %1050 = arith.addf %1045, %1049 : vector<32x71xf32>
    %c1_147 = arith.constant 1 : index
    %c0_148 = arith.constant 0 : index
    %c0_149 = arith.constant 0 : index
    %1051 = vector.load %arg12[%c1_147, %c0_148, %c0_149] : memref<3x32x16xf32, #tpu.memory_space<vmem>>, vector<1x32x16xf32>
    %1052 = vector.shape_cast %1051 : vector<1x32x16xf32> to vector<32x16xf32>
    %1053 = vector.extract_strided_slice %1044 {offsets = [0, 1], sizes = [16, 71], strides = [1, 1]} : vector<16x73xf32> to vector<16x71xf32>
    %cst_150 = arith.constant dense<0.000000e+00> : vector<32x71xf32>
    %1054 = tpu.matmul %1052, %1053, %cst_150 {dimension_numbers = #tpu.dot_dimension_numbers<[1], [0], [0], [1], [0, 0, 1, 1], [], []>} : vector<32x16xf32>, vector<16x71xf32>, vector<32x71xf32> -> vector<32x71xf32>
    %1055 = arith.addf %1050, %1054 : vector<32x71xf32>
    %c2_151 = arith.constant 2 : index
    %c0_152 = arith.constant 0 : index
    %c0_153 = arith.constant 0 : index
    %1056 = vector.load %arg12[%c2_151, %c0_152, %c0_153] : memref<3x32x16xf32, #tpu.memory_space<vmem>>, vector<1x32x16xf32>
    %1057 = vector.shape_cast %1056 : vector<1x32x16xf32> to vector<32x16xf32>
    %1058 = vector.extract_strided_slice %1044 {offsets = [0, 2], sizes = [16, 71], strides = [1, 1]} : vector<16x73xf32> to vector<16x71xf32>
    %cst_154 = arith.constant dense<0.000000e+00> : vector<32x71xf32>
    %1059 = tpu.matmul %1057, %1058, %cst_154 {dimension_numbers = #tpu.dot_dimension_numbers<[1], [0], [0], [1], [0, 0, 1, 1], [], []>} : vector<32x16xf32>, vector<16x71xf32>, vector<32x71xf32> -> vector<32x71xf32>
    %1060 = arith.addf %1055, %1059 : vector<32x71xf32>
    %c0_155 = arith.constant 0 : index
    %c0_156 = arith.constant 0 : index
    %1061 = vector.load %arg13[%c0_155, %c0_156] : memref<32x1xf32, #tpu.memory_space<vmem>>, vector<32x1xf32>
    %1062 = vector.broadcast %1061 : vector<32x1xf32> to vector<32x71xf32>
    %1063 = arith.addf %1060, %1062 : vector<32x71xf32>
    %cst_157 = arith.constant 0.000000e+00 : f32
    %1064 = vector.broadcast %cst_157 : f32 to vector<32x71xf32>
    %1065 = arith.maximumf %1063, %1064 : vector<32x71xf32>
    %1066 = vector.extract_strided_slice %1043 {offsets = [16, 0], sizes = [16, 73], strides = [1, 1]} : vector<32x73xf32> to vector<16x73xf32>
    %cst_158 = arith.constant 0.000000e+00 : f32
    %1067 = vector.broadcast %cst_158 : f32 to vector<32x71xf32>
    %c0_159 = arith.constant 0 : index
    %c0_160 = arith.constant 0 : index
    %c0_161 = arith.constant 0 : index
    %1068 = vector.load %arg12[%c0_159, %c0_160, %c0_161] : memref<3x32x16xf32, #tpu.memory_space<vmem>>, vector<1x32x16xf32>
    %1069 = vector.shape_cast %1068 : vector<1x32x16xf32> to vector<32x16xf32>
    %1070 = vector.extract_strided_slice %1066 {offsets = [0, 0], sizes = [16, 71], strides = [1, 1]} : vector<16x73xf32> to vector<16x71xf32>
    %cst_162 = arith.constant dense<0.000000e+00> : vector<32x71xf32>
    %1071 = tpu.matmul %1069, %1070, %cst_162 {dimension_numbers = #tpu.dot_dimension_numbers<[1], [0], [0], [1], [0, 0, 1, 1], [], []>} : vector<32x16xf32>, vector<16x71xf32>, vector<32x71xf32> -> vector<32x71xf32>
    %1072 = arith.addf %1067, %1071 : vector<32x71xf32>
    %c1_163 = arith.constant 1 : index
    %c0_164 = arith.constant 0 : index
    %c0_165 = arith.constant 0 : index
    %1073 = vector.load %arg12[%c1_163, %c0_164, %c0_165] : memref<3x32x16xf32, #tpu.memory_space<vmem>>, vector<1x32x16xf32>
    %1074 = vector.shape_cast %1073 : vector<1x32x16xf32> to vector<32x16xf32>
    %1075 = vector.extract_strided_slice %1066 {offsets = [0, 1], sizes = [16, 71], strides = [1, 1]} : vector<16x73xf32> to vector<16x71xf32>
    %cst_166 = arith.constant dense<0.000000e+00> : vector<32x71xf32>
    %1076 = tpu.matmul %1074, %1075, %cst_166 {dimension_numbers = #tpu.dot_dimension_numbers<[1], [0], [0], [1], [0, 0, 1, 1], [], []>} : vector<32x16xf32>, vector<16x71xf32>, vector<32x71xf32> -> vector<32x71xf32>
    %1077 = arith.addf %1072, %1076 : vector<32x71xf32>
    %c2_167 = arith.constant 2 : index
    %c0_168 = arith.constant 0 : index
    %c0_169 = arith.constant 0 : index
    %1078 = vector.load %arg12[%c2_167, %c0_168, %c0_169] : memref<3x32x16xf32, #tpu.memory_space<vmem>>, vector<1x32x16xf32>
    %1079 = vector.shape_cast %1078 : vector<1x32x16xf32> to vector<32x16xf32>
    %1080 = vector.extract_strided_slice %1066 {offsets = [0, 2], sizes = [16, 71], strides = [1, 1]} : vector<16x73xf32> to vector<16x71xf32>
    %cst_170 = arith.constant dense<0.000000e+00> : vector<32x71xf32>
    %1081 = tpu.matmul %1079, %1080, %cst_170 {dimension_numbers = #tpu.dot_dimension_numbers<[1], [0], [0], [1], [0, 0, 1, 1], [], []>} : vector<32x16xf32>, vector<16x71xf32>, vector<32x71xf32> -> vector<32x71xf32>
    %1082 = arith.addf %1077, %1081 : vector<32x71xf32>
    %c0_171 = arith.constant 0 : index
    %c0_172 = arith.constant 0 : index
    %1083 = vector.load %arg13[%c0_171, %c0_172] : memref<32x1xf32, #tpu.memory_space<vmem>>, vector<32x1xf32>
    %1084 = vector.broadcast %1083 : vector<32x1xf32> to vector<32x71xf32>
    %1085 = arith.addf %1082, %1084 : vector<32x71xf32>
    %cst_173 = arith.constant 0.000000e+00 : f32
    %1086 = vector.broadcast %cst_173 : f32 to vector<32x71xf32>
    %1087 = arith.maximumf %1085, %1086 : vector<32x71xf32>
    %1088 = tpu.concatenate %1065, %1087 in 0 : vector<32x71xf32>, vector<32x71xf32> -> vector<64x71xf32>
    %1089 = vector.extract_strided_slice %1088 {offsets = [0, 1], sizes = [64, 70], strides = [1, 1]} : vector<64x71xf32> to vector<64x70xf32>
    %1090 = vector.extract_strided_slice %1088 {offsets = [0, 0], sizes = [64, 70], strides = [1, 1]} : vector<64x71xf32> to vector<64x70xf32>
    %1091 = arith.maximumf %1089, %1090 : vector<64x70xf32>
    %1092 = vector.extract_strided_slice %1088 {offsets = [0, 0], sizes = [64, 1], strides = [1, 1]} : vector<64x71xf32> to vector<64x1xf32>
    %cst_174 = arith.constant 0.000000e+00 : f32
    %1093 = vector.broadcast %cst_174 : f32 to vector<64x1xf32>
    %1094 = arith.maximumf %1092, %1093 : vector<64x1xf32>
    %1095 = tpu.concatenate %1094, %1091 in 1 : vector<64x1xf32>, vector<64x70xf32> -> vector<64x71xf32>
    %c0_175 = arith.constant 0 : index
    %c0_176 = arith.constant 0 : index
    %1096 = vector.load %arg19[%c0_175, %c0_176] : memref<71x36xf32, #tpu.memory_space<vmem>>, vector<71x36xf32>
    %cst_177 = arith.constant dense<0.000000e+00> : vector<64x36xf32>
    %1097 = tpu.matmul %1095, %1096, %cst_177 {dimension_numbers = #tpu.dot_dimension_numbers<[1], [0], [0], [1], [0, 0, 1, 1], [], []>} : vector<64x71xf32>, vector<71x36xf32>, vector<64x36xf32> -> vector<64x36xf32>
    %1098 = vector.extract_strided_slice %1097 {offsets = [0, 0], sizes = [32, 36], strides = [1, 1]} : vector<64x36xf32> to vector<32x36xf32>
    %cst_178 = arith.constant 0.000000e+00 : f32
    %1099 = vector.broadcast %cst_178 : f32 to vector<64x34xf32>
    %c0_179 = arith.constant 0 : index
    %c0_180 = arith.constant 0 : index
    %c0_181 = arith.constant 0 : index
    %1100 = vector.load %arg14[%c0_179, %c0_180, %c0_181] : memref<3x64x32xf32, #tpu.memory_space<vmem>>, vector<1x64x32xf32>
    %1101 = vector.shape_cast %1100 : vector<1x64x32xf32> to vector<64x32xf32>
    %1102 = vector.extract_strided_slice %1098 {offsets = [0, 0], sizes = [32, 34], strides = [1, 1]} : vector<32x36xf32> to vector<32x34xf32>
    %cst_182 = arith.constant dense<0.000000e+00> : vector<64x34xf32>
    %1103 = tpu.matmul %1101, %1102, %cst_182 {dimension_numbers = #tpu.dot_dimension_numbers<[1], [0], [0], [1], [0, 0, 1, 1], [], []>} : vector<64x32xf32>, vector<32x34xf32>, vector<64x34xf32> -> vector<64x34xf32>
    %1104 = arith.addf %1099, %1103 : vector<64x34xf32>
    %c1_183 = arith.constant 1 : index
    %c0_184 = arith.constant 0 : index
    %c0_185 = arith.constant 0 : index
    %1105 = vector.load %arg14[%c1_183, %c0_184, %c0_185] : memref<3x64x32xf32, #tpu.memory_space<vmem>>, vector<1x64x32xf32>
    %1106 = vector.shape_cast %1105 : vector<1x64x32xf32> to vector<64x32xf32>
    %1107 = vector.extract_strided_slice %1098 {offsets = [0, 1], sizes = [32, 34], strides = [1, 1]} : vector<32x36xf32> to vector<32x34xf32>
    %cst_186 = arith.constant dense<0.000000e+00> : vector<64x34xf32>
    %1108 = tpu.matmul %1106, %1107, %cst_186 {dimension_numbers = #tpu.dot_dimension_numbers<[1], [0], [0], [1], [0, 0, 1, 1], [], []>} : vector<64x32xf32>, vector<32x34xf32>, vector<64x34xf32> -> vector<64x34xf32>
    %1109 = arith.addf %1104, %1108 : vector<64x34xf32>
    %c2_187 = arith.constant 2 : index
    %c0_188 = arith.constant 0 : index
    %c0_189 = arith.constant 0 : index
    %1110 = vector.load %arg14[%c2_187, %c0_188, %c0_189] : memref<3x64x32xf32, #tpu.memory_space<vmem>>, vector<1x64x32xf32>
    %1111 = vector.shape_cast %1110 : vector<1x64x32xf32> to vector<64x32xf32>
    %1112 = vector.extract_strided_slice %1098 {offsets = [0, 2], sizes = [32, 34], strides = [1, 1]} : vector<32x36xf32> to vector<32x34xf32>
    %cst_190 = arith.constant dense<0.000000e+00> : vector<64x34xf32>
    %1113 = tpu.matmul %1111, %1112, %cst_190 {dimension_numbers = #tpu.dot_dimension_numbers<[1], [0], [0], [1], [0, 0, 1, 1], [], []>} : vector<64x32xf32>, vector<32x34xf32>, vector<64x34xf32> -> vector<64x34xf32>
    %1114 = arith.addf %1109, %1113 : vector<64x34xf32>
    %c0_191 = arith.constant 0 : index
    %c0_192 = arith.constant 0 : index
    %1115 = vector.load %arg15[%c0_191, %c0_192] : memref<64x1xf32, #tpu.memory_space<vmem>>, vector<64x1xf32>
    %1116 = vector.broadcast %1115 : vector<64x1xf32> to vector<64x34xf32>
    %1117 = arith.addf %1114, %1116 : vector<64x34xf32>
    %cst_193 = arith.constant 0.000000e+00 : f32
    %1118 = vector.broadcast %cst_193 : f32 to vector<64x34xf32>
    %1119 = arith.maximumf %1117, %1118 : vector<64x34xf32>
    %1120 = vector.extract_strided_slice %1119 {offsets = [0, 0], sizes = [64, 29], strides = [1, 1]} : vector<64x34xf32> to vector<64x29xf32>
    %cst_194 = arith.constant dense<0.000000e+00> : vector<64xf32>
    %1121 = vector.multi_reduction <add>, %1120, %cst_194 [1] : vector<64x29xf32> to vector<64xf32>
    %1122 = vector.shape_cast %1121 : vector<64xf32> to vector<64x1xf32>
    %cst_195 = arith.constant 0.0333333351 : f32
    %1123 = vector.broadcast %cst_195 : f32 to vector<64x1xf32>
    %1124 = arith.mulf %1122, %1123 : vector<64x1xf32>
    %1125 = vector.extract_strided_slice %1097 {offsets = [32, 0], sizes = [32, 36], strides = [1, 1]} : vector<64x36xf32> to vector<32x36xf32>
    %cst_196 = arith.constant 0.000000e+00 : f32
    %1126 = vector.broadcast %cst_196 : f32 to vector<64x34xf32>
    %c0_197 = arith.constant 0 : index
    %c0_198 = arith.constant 0 : index
    %c0_199 = arith.constant 0 : index
    %1127 = vector.load %arg14[%c0_197, %c0_198, %c0_199] : memref<3x64x32xf32, #tpu.memory_space<vmem>>, vector<1x64x32xf32>
    %1128 = vector.shape_cast %1127 : vector<1x64x32xf32> to vector<64x32xf32>
    %1129 = vector.extract_strided_slice %1125 {offsets = [0, 0], sizes = [32, 34], strides = [1, 1]} : vector<32x36xf32> to vector<32x34xf32>
    %cst_200 = arith.constant dense<0.000000e+00> : vector<64x34xf32>
    %1130 = tpu.matmul %1128, %1129, %cst_200 {dimension_numbers = #tpu.dot_dimension_numbers<[1], [0], [0], [1], [0, 0, 1, 1], [], []>} : vector<64x32xf32>, vector<32x34xf32>, vector<64x34xf32> -> vector<64x34xf32>
    %1131 = arith.addf %1126, %1130 : vector<64x34xf32>
    %c1_201 = arith.constant 1 : index
    %c0_202 = arith.constant 0 : index
    %c0_203 = arith.constant 0 : index
    %1132 = vector.load %arg14[%c1_201, %c0_202, %c0_203] : memref<3x64x32xf32, #tpu.memory_space<vmem>>, vector<1x64x32xf32>
    %1133 = vector.shape_cast %1132 : vector<1x64x32xf32> to vector<64x32xf32>
    %1134 = vector.extract_strided_slice %1125 {offsets = [0, 1], sizes = [32, 34], strides = [1, 1]} : vector<32x36xf32> to vector<32x34xf32>
    %cst_204 = arith.constant dense<0.000000e+00> : vector<64x34xf32>
    %1135 = tpu.matmul %1133, %1134, %cst_204 {dimension_numbers = #tpu.dot_dimension_numbers<[1], [0], [0], [1], [0, 0, 1, 1], [], []>} : vector<64x32xf32>, vector<32x34xf32>, vector<64x34xf32> -> vector<64x34xf32>
    %1136 = arith.addf %1131, %1135 : vector<64x34xf32>
    %c2_205 = arith.constant 2 : index
    %c0_206 = arith.constant 0 : index
    %c0_207 = arith.constant 0 : index
    %1137 = vector.load %arg14[%c2_205, %c0_206, %c0_207] : memref<3x64x32xf32, #tpu.memory_space<vmem>>, vector<1x64x32xf32>
    %1138 = vector.shape_cast %1137 : vector<1x64x32xf32> to vector<64x32xf32>
    %1139 = vector.extract_strided_slice %1125 {offsets = [0, 2], sizes = [32, 34], strides = [1, 1]} : vector<32x36xf32> to vector<32x34xf32>
    %cst_208 = arith.constant dense<0.000000e+00> : vector<64x34xf32>
    %1140 = tpu.matmul %1138, %1139, %cst_208 {dimension_numbers = #tpu.dot_dimension_numbers<[1], [0], [0], [1], [0, 0, 1, 1], [], []>} : vector<64x32xf32>, vector<32x34xf32>, vector<64x34xf32> -> vector<64x34xf32>
    %1141 = arith.addf %1136, %1140 : vector<64x34xf32>
    %c0_209 = arith.constant 0 : index
    %c0_210 = arith.constant 0 : index
    %1142 = vector.load %arg15[%c0_209, %c0_210] : memref<64x1xf32, #tpu.memory_space<vmem>>, vector<64x1xf32>
    %1143 = vector.broadcast %1142 : vector<64x1xf32> to vector<64x34xf32>
    %1144 = arith.addf %1141, %1143 : vector<64x34xf32>
    %cst_211 = arith.constant 0.000000e+00 : f32
    %1145 = vector.broadcast %cst_211 : f32 to vector<64x34xf32>
    %1146 = arith.maximumf %1144, %1145 : vector<64x34xf32>
    %1147 = vector.extract_strided_slice %1146 {offsets = [0, 0], sizes = [64, 29], strides = [1, 1]} : vector<64x34xf32> to vector<64x29xf32>
    %cst_212 = arith.constant dense<0.000000e+00> : vector<64xf32>
    %1148 = vector.multi_reduction <add>, %1147, %cst_212 [1] : vector<64x29xf32> to vector<64xf32>
    %1149 = vector.shape_cast %1148 : vector<64xf32> to vector<64x1xf32>
    %cst_213 = arith.constant 0.0333333351 : f32
    %1150 = vector.broadcast %cst_213 : f32 to vector<64x1xf32>
    %1151 = arith.mulf %1149, %1150 : vector<64x1xf32>
    %1152 = tpu.concatenate %1124, %1151 in 1 : vector<64x1xf32>, vector<64x1xf32> -> vector<64x2xf32>
    %c0_214 = arith.constant 0 : index
    %c0_215 = arith.constant 0 : index
    %1153 = vector.load %arg20[%c0_214, %c0_215] : memref<32x64xf32, #tpu.memory_space<vmem>>, vector<32x64xf32>
    %cst_216 = arith.constant dense<0.000000e+00> : vector<32x2xf32>
    %1154 = tpu.matmul %1153, %1152, %cst_216 {dimension_numbers = #tpu.dot_dimension_numbers<[1], [0], [0], [1], [0, 0, 1, 1], [], []>} : vector<32x64xf32>, vector<64x2xf32>, vector<32x2xf32> -> vector<32x2xf32>
    %c0_217 = arith.constant 0 : index
    %c0_218 = arith.constant 0 : index
    %1155 = vector.load %arg21[%c0_217, %c0_218] : memref<32x1xf32, #tpu.memory_space<vmem>>, vector<32x1xf32>
    %1156 = vector.broadcast %1155 : vector<32x1xf32> to vector<32x2xf32>
    %1157 = arith.addf %1154, %1156 : vector<32x2xf32>
    %cst_219 = arith.constant 0.000000e+00 : f32
    %1158 = vector.broadcast %cst_219 : f32 to vector<32x2xf32>
    %1159 = arith.maximumf %1157, %1158 : vector<32x2xf32>
    %c0_220 = arith.constant 0 : index
    %c0_221 = arith.constant 0 : index
    %1160 = vector.load %arg22[%c0_220, %c0_221] : memref<3x32xf32, #tpu.memory_space<vmem>>, vector<3x32xf32>
    %cst_222 = arith.constant dense<0.000000e+00> : vector<3x2xf32>
    %1161 = tpu.matmul %1160, %1159, %cst_222 {dimension_numbers = #tpu.dot_dimension_numbers<[1], [0], [0], [1], [0, 0, 1, 1], [], []>} : vector<3x32xf32>, vector<32x2xf32>, vector<3x2xf32> -> vector<3x2xf32>
    %c0_223 = arith.constant 0 : index
    %c0_224 = arith.constant 0 : index
    %1162 = vector.load %arg23[%c0_223, %c0_224] : memref<3x1xf32, #tpu.memory_space<vmem>>, vector<3x1xf32>
    %1163 = vector.broadcast %1162 : vector<3x1xf32> to vector<3x2xf32>
    %1164 = arith.addf %1161, %1163 : vector<3x2xf32>
    %c0_225 = arith.constant 0 : index
    %c0_226 = arith.constant 0 : index
    %c0_227 = arith.constant 0 : index
    %1165 = vector.load %arg24[%c0_225, %c0_226, %c0_227] : memref<1x3x2xf32, #tpu.memory_space<vmem>>, vector<1x3x2xf32>
    %1166 = vector.shape_cast %1165 : vector<1x3x2xf32> to vector<3x2xf32>
    %1167 = vector.shape_cast %1164 : vector<3x2xf32> to vector<1x3x2xf32>
    tpu.vector_store %arg24[%c0_225, %c0_226, %c0_227], %1167 {strides = array<i32>} : memref<1x3x2xf32, #tpu.memory_space<vmem>>, vector<1x3x2xf32>,
    return
  }
  func.func @transform_0(%arg0: i32) -> (i32, i32, i32) {
    %c0_i32 = arith.constant 0 : i32
    %c0_i32_0 = arith.constant 0 : i32
    %c0_i32_1 = arith.constant 0 : i32
    return %arg0, %c0_i32, %c0_i32_0 : i32, i32, i32
  }
  func.func @transform_1(%arg0: i32) -> (i32, i32, i32) {
    %c0_i32 = arith.constant 0 : i32
    %c0_i32_0 = arith.constant 0 : i32
    %c0_i32_1 = arith.constant 0 : i32
    %c0_i32_2 = arith.constant 0 : i32
    return %c0_i32, %c0_i32_0, %c0_i32_1 : i32, i32, i32
  }
  func.func @transform_2(%arg0: i32) -> (i32, i32) {
    %c0_i32 = arith.constant 0 : i32
    %c0_i32_0 = arith.constant 0 : i32
    %c0_i32_1 = arith.constant 0 : i32
    return %c0_i32, %c0_i32_0 : i32, i32
  }
  func.func @transform_3(%arg0: i32) -> (i32, i32, i32) {
    %c0_i32 = arith.constant 0 : i32
    %c0_i32_0 = arith.constant 0 : i32
    %c0_i32_1 = arith.constant 0 : i32
    %c0_i32_2 = arith.constant 0 : i32
    return %c0_i32, %c0_i32_0, %c0_i32_1 : i32, i32, i32
  }
  func.func @transform_4(%arg0: i32) -> (i32, i32) {
    %c0_i32 = arith.constant 0 : i32
    %c0_i32_0 = arith.constant 0 : i32
    %c0_i32_1 = arith.constant 0 : i32
    return %c0_i32, %c0_i32_0 : i32, i32
  }
  func.func @transform_5(%arg0: i32) -> (i32, i32, i32) {
    %c0_i32 = arith.constant 0 : i32
    %c0_i32_0 = arith.constant 0 : i32
    %c0_i32_1 = arith.constant 0 : i32
    %c0_i32_2 = arith.constant 0 : i32
    return %c0_i32, %c0_i32_0, %c0_i32_1 : i32, i32, i32
  }
  func.func @transform_6(%arg0: i32) -> (i32, i32) {
    %c0_i32 = arith.constant 0 : i32
    %c0_i32_0 = arith.constant 0 : i32
    %c0_i32_1 = arith.constant 0 : i32
    return %c0_i32, %c0_i32_0 : i32, i32
  }
  func.func @transform_7(%arg0: i32) -> (i32, i32, i32) {
    %c0_i32 = arith.constant 0 : i32
    %c0_i32_0 = arith.constant 0 : i32
    %c0_i32_1 = arith.constant 0 : i32
    %c0_i32_2 = arith.constant 0 : i32
    return %c0_i32, %c0_i32_0, %c0_i32_1 : i32, i32, i32
  }
  func.func @transform_8(%arg0: i32) -> (i32, i32) {
    %c0_i32 = arith.constant 0 : i32
    %c0_i32_0 = arith.constant 0 : i32
    %c0_i32_1 = arith.constant 0 : i32
    return %c0_i32, %c0_i32_0 : i32, i32
  }
  func.func @transform_9(%arg0: i32) -> (i32, i32, i32) {
    %c0_i32 = arith.constant 0 : i32
    %c0_i32_0 = arith.constant 0 : i32
    %c0_i32_1 = arith.constant 0 : i32
    %c0_i32_2 = arith.constant 0 : i32
    return %c0_i32, %c0_i32_0, %c0_i32_1 : i32, i32, i32
  }
  func.func @transform_10(%arg0: i32) -> (i32, i32) {
    %c0_i32 = arith.constant 0 : i32
    %c0_i32_0 = arith.constant 0 : i32
    %c0_i32_1 = arith.constant 0 : i32
    return %c0_i32, %c0_i32_0 : i32, i32
  }
  func.func @transform_11(%arg0: i32) -> (i32, i32, i32) {
    %c0_i32 = arith.constant 0 : i32
    %c0_i32_0 = arith.constant 0 : i32
    %c0_i32_1 = arith.constant 0 : i32
    %c0_i32_2 = arith.constant 0 : i32
    return %c0_i32, %c0_i32_0, %c0_i32_1 : i32, i32, i32
  }
  func.func @transform_12(%arg0: i32) -> (i32, i32) {
    %c0_i32 = arith.constant 0 : i32
    %c0_i32_0 = arith.constant 0 : i32
    %c0_i32_1 = arith.constant 0 : i32
    return %c0_i32, %c0_i32_0 : i32, i32
  }
  func.func @transform_13(%arg0: i32) -> (i32, i32, i32) {
    %c0_i32 = arith.constant 0 : i32
    %c0_i32_0 = arith.constant 0 : i32
    %c0_i32_1 = arith.constant 0 : i32
    %c0_i32_2 = arith.constant 0 : i32
    return %c0_i32, %c0_i32_0, %c0_i32_1 : i32, i32, i32
  }
  func.func @transform_14(%arg0: i32) -> (i32, i32) {
    %c0_i32 = arith.constant 0 : i32
    %c0_i32_0 = arith.constant 0 : i32
    %c0_i32_1 = arith.constant 0 : i32
    return %c0_i32, %c0_i32_0 : i32, i32
  }
  func.func @transform_15(%arg0: i32) -> (i32, i32) {
    %c0_i32 = arith.constant 0 : i32
    %c0_i32_0 = arith.constant 0 : i32
    %c0_i32_1 = arith.constant 0 : i32
    return %c0_i32, %c0_i32_0 : i32, i32
  }
  func.func @transform_16(%arg0: i32) -> (i32, i32) {
    %c0_i32 = arith.constant 0 : i32
    %c0_i32_0 = arith.constant 0 : i32
    %c0_i32_1 = arith.constant 0 : i32
    return %c0_i32, %c0_i32_0 : i32, i32
  }
  func.func @transform_17(%arg0: i32) -> (i32, i32) {
    %c0_i32 = arith.constant 0 : i32
    %c0_i32_0 = arith.constant 0 : i32
    %c0_i32_1 = arith.constant 0 : i32
    return %c0_i32, %c0_i32_0 : i32, i32
  }
  func.func @transform_18(%arg0: i32) -> (i32, i32) {
    %c0_i32 = arith.constant 0 : i32
    %c0_i32_0 = arith.constant 0 : i32
    %c0_i32_1 = arith.constant 0 : i32
    return %c0_i32, %c0_i32_0 : i32, i32
  }
  func.func @transform_19(%arg0: i32) -> (i32, i32) {
    %c0_i32 = arith.constant 0 : i32
    %c0_i32_0 = arith.constant 0 : i32
    %c0_i32_1 = arith.constant 0 : i32
    return %c0_i32, %c0_i32_0 : i32, i32
  }
  func.func @transform_20(%arg0: i32) -> (i32, i32) {
    %c0_i32 = arith.constant 0 : i32
    %c0_i32_0 = arith.constant 0 : i32
    %c0_i32_1 = arith.constant 0 : i32
    return %c0_i32, %c0_i32_0 : i32, i32
  }
  func.func @transform_21(%arg0: i32) -> (i32, i32) {
    %c0_i32 = arith.constant 0 : i32
    %c0_i32_0 = arith.constant 0 : i32
    %c0_i32_1 = arith.constant 0 : i32
    return %c0_i32, %c0_i32_0 : i32, i32
  }
  func.func @transform_22(%arg0: i32) -> (i32, i32) {
    %c0_i32 = arith.constant 0 : i32
    %c0_i32_0 = arith.constant 0 : i32
    %c0_i32_1 = arith.constant 0 : i32
    return %c0_i32, %c0_i32_0 : i32, i32
  }
  func.func @transform_23(%arg0: i32) -> (i32, i32, i32) {
    %c0_i32 = arith.constant 0 : i32
    %c0_i32_0 = arith.constant 0 : i32
    %c0_i32_1 = arith.constant 0 : i32
    return %arg0, %c0_i32, %c0_i32_0 : i32, i32, i32
  }
}

</mosaic_0001>

<llo_original>
// kernel: forward.1
$region0: #{forward.1}
  #allocation0 [shape = 'u32[]', space=smem, size = 0x4, offset = 0x4, fixed_abs, tag = 'smem constant byte address 0x4 - core index']
  #allocation1 [shape = 'u32[144,128]{1,0:T(1,128)}', space=vmem, size = 0x12000, scoped, tag = 'internal scratch']
  %s0 = inlined_call_operand.vmem [shape: f32[2,1,600], index: 0, kind: input, shape index: {}]
  %s1 = inlined_call_operand.vmem [shape: f32[3,4,1], index: 1, kind: input, shape index: {}]
  %s2 = inlined_call_operand.vmem [shape: f32[4,1], index: 2, kind: input, shape index: {}]
  %s3 = inlined_call_operand.vmem [shape: f32[3,4,4], index: 3, kind: input, shape index: {}]
  %s4 = inlined_call_operand.vmem [shape: f32[4,1], index: 4, kind: input, shape index: {}]
  %s5 = inlined_call_operand.vmem [shape: f32[3,8,4], index: 5, kind: input, shape index: {}]
  %s6 = inlined_call_operand.vmem [shape: f32[8,1], index: 6, kind: input, shape index: {}]
  %s7 = inlined_call_operand.vmem [shape: f32[3,8,8], index: 7, kind: input, shape index: {}]
  %s8 = inlined_call_operand.vmem [shape: f32[8,1], index: 8, kind: input, shape index: {}]
  %s9 = inlined_call_operand.vmem [shape: f32[3,16,8], index: 9, kind: input, shape index: {}]
  %s10 = inlined_call_operand.vmem [shape: f32[16,1], index: 10, kind: input, shape index: {}]
  %s11 = inlined_call_operand.vmem [shape: f32[3,32,16], index: 11, kind: input, shape index: {}]
  %s12 = inlined_call_operand.vmem [shape: f32[32,1], index: 12, kind: input, shape index: {}]
  %s13 = inlined_call_operand.vmem [shape: f32[3,64,32], index: 13, kind: input, shape index: {}]
  %s14 = inlined_call_operand.vmem [shape: f32[64,1], index: 14, kind: input, shape index: {}]
  %s15 = inlined_call_operand.vmem [shape: f32[595,298], index: 15, kind: input, shape index: {}]
  %s16 = inlined_call_operand.vmem [shape: f32[293,147], index: 16, kind: input, shape index: {}]
  %s17 = inlined_call_operand.vmem [shape: f32[145,73], index: 17, kind: input, shape index: {}]
  %s18 = inlined_call_operand.vmem [shape: f32[71,36], index: 18, kind: input, shape index: {}]
  %s19 = inlined_call_operand.vmem [shape: f32[32,64], index: 19, kind: input, shape index: {}]
  %s20 = inlined_call_operand.vmem [shape: f32[32,1], index: 20, kind: input, shape index: {}]
  %s21 = inlined_call_operand.vmem [shape: f32[3,32], index: 21, kind: input, shape index: {}]
  %s22 = inlined_call_operand.vmem [shape: f32[3,1], index: 22, kind: input, shape index: {}]
  %s23 = inlined_call_operand.vmem [shape: f32[1,3,2], index: 23, kind: output, shape index: {}]
  %s24 = sld [smem:[#allocation0]]
  $region102: #{forward.1} parent=0
    _
  %s26 = ssub.s32 1, %s24
  %s27 = scalar_select 0, %s26, %s24
  // Predicated region
  $region2: #{forward.1} parent=0 // pred_check
    _
  $region3: #{forward.1} parent=0 // pred_check_branch
    %29 = sbr.rel (0) target = $region5
  $region4: #{forward.1} parent=0 // pred_region
    _
  $region5: #{forward.1} parent=0 // pred_fallthru
    _
  // Predicated region
  $region6: #{forward.1} parent=0 // pred_check
    _
  $region7: #{forward.1} parent=0 // pred_check_branch
    %31 = sbr.rel (0) target = $region9
  $region8: #{forward.1} parent=0 // pred_region
    _
  $region9: #{forward.1} parent=0 // pred_fallthru
    _
  // Predicated region
  $region10: #{forward.1} parent=0 // pred_check
    _
  $region11: #{forward.1} parent=0 // pred_check_branch
    %33 = sbr.rel (0) target = $region13
  $region12: #{forward.1} parent=0 // pred_region
    _
  $region13: #{forward.1} parent=0 // pred_fallthru
    _
  // Predicated region
  $region14: #{forward.1} parent=0 // pred_check
    _
  $region15: #{forward.1} parent=0 // pred_check_branch
    %35 = sbr.rel (0) target = $region17
  $region16: #{forward.1} parent=0 // pred_region
    _
  $region17: #{forward.1} parent=0 // pred_fallthru
    _
  // Predicated region
  $region18: #{forward.1} parent=0 // pred_check
    _
  $region19: #{forward.1} parent=0 // pred_check_branch
    %37 = sbr.rel (0) target = $region21
  $region20: #{forward.1} parent=0 // pred_region
    _
  $region21: #{forward.1} parent=0 // pred_fallthru
    _
  // Predicated region
  $region22: #{forward.1} parent=0 // pred_check
    _
  $region23: #{forward.1} parent=0 // pred_check_branch
    %39 = sbr.rel (0) target = $region25
  $region24: #{forward.1} parent=0 // pred_region
    _
  $region25: #{forward.1} parent=0 // pred_fallthru
    _
  // Predicated region
  $region26: #{forward.1} parent=0 // pred_check
    _
  $region27: #{forward.1} parent=0 // pred_check_branch
    %41 = sbr.rel (0) target = $region29
  $region28: #{forward.1} parent=0 // pred_region
    _
  $region29: #{forward.1} parent=0 // pred_fallthru
    _
  // Predicated region
  $region30: #{forward.1} parent=0 // pred_check
    _
  $region31: #{forward.1} parent=0 // pred_check_branch
    %43 = sbr.rel (0) target = $region33
  $region32: #{forward.1} parent=0 // pred_region
    _
  $region33: #{forward.1} parent=0 // pred_fallthru
    _
  // Predicated region
  $region34: #{forward.1} parent=0 // pred_check
    _
  $region35: #{forward.1} parent=0 // pred_check_branch
    %45 = sbr.rel (0) target = $region37
  $region36: #{forward.1} parent=0 // pred_region
    _
  $region37: #{forward.1} parent=0 // pred_fallthru
    _
  // Predicated region
  $region38: #{forward.1} parent=0 // pred_check
    _
  $region39: #{forward.1} parent=0 // pred_check_branch
    %47 = sbr.rel (0) target = $region41
  $region40: #{forward.1} parent=0 // pred_region
    _
  $region41: #{forward.1} parent=0 // pred_fallthru
    _
  // Predicated region
  $region42: #{forward.1} parent=0 // pred_check
    _
  $region43: #{forward.1} parent=0 // pred_check_branch
    %49 = sbr.rel (0) target = $region45
  $region44: #{forward.1} parent=0 // pred_region
    _
  $region45: #{forward.1} parent=0 // pred_fallthru
    _
  // Predicated region
  $region46: #{forward.1} parent=0 // pred_check
    _
  $region47: #{forward.1} parent=0 // pred_check_branch
    %51 = sbr.rel (0) target = $region49
  $region48: #{forward.1} parent=0 // pred_region
    _
  $region49: #{forward.1} parent=0 // pred_fallthru
    _
  // Predicated region
  $region50: #{forward.1} parent=0 // pred_check
    _
  $region51: #{forward.1} parent=0 // pred_check_branch
    %53 = sbr.rel (0) target = $region53
  $region52: #{forward.1} parent=0 // pred_region
    _
  $region53: #{forward.1} parent=0 // pred_fallthru
    _
  // Predicated region
  $region54: #{forward.1} parent=0 // pred_check
    _
  $region55: #{forward.1} parent=0 // pred_check_branch
    %55 = sbr.rel (0) target = $region57
  $region56: #{forward.1} parent=0 // pred_region
    _
  $region57: #{forward.1} parent=0 // pred_fallthru
    _
  // Predicated region
  $region58: #{forward.1} parent=0 // pred_check
    _
  $region59: #{forward.1} parent=0 // pred_check_branch
    %57 = sbr.rel (0) target = $region61
  $region60: #{forward.1} parent=0 // pred_region
    _
  $region61: #{forward.1} parent=0 // pred_fallthru
    _
  // Predicated region
  $region62: #{forward.1} parent=0 // pred_check
    _
  $region63: #{forward.1} parent=0 // pred_check_branch
    %59 = sbr.rel (0) target = $region65
  $region64: #{forward.1} parent=0 // pred_region
    _
  $region65: #{forward.1} parent=0 // pred_fallthru
    _
  // Predicated region
  $region66: #{forward.1} parent=0 // pred_check
    _
  $region67: #{forward.1} parent=0 // pred_check_branch
    %61 = sbr.rel (0) target = $region69
  $region68: #{forward.1} parent=0 // pred_region
    _
  $region69: #{forward.1} parent=0 // pred_fallthru
    _
  // Predicated region
  $region70: #{forward.1} parent=0 // pred_check
    _
  $region71: #{forward.1} parent=0 // pred_check_branch
    %63 = sbr.rel (0) target = $region73
  $region72: #{forward.1} parent=0 // pred_region
    _
  $region73: #{forward.1} parent=0 // pred_fallthru
    _
  // Predicated region
  $region74: #{forward.1} parent=0 // pred_check
    _
  $region75: #{forward.1} parent=0 // pred_check_branch
    %65 = sbr.rel (0) target = $region77
  $region76: #{forward.1} parent=0 // pred_region
    _
  $region77: #{forward.1} parent=0 // pred_fallthru
    _
  // Predicated region
  $region78: #{forward.1} parent=0 // pred_check
    _
  $region79: #{forward.1} parent=0 // pred_check_branch
    %67 = sbr.rel (0) target = $region81
  $region80: #{forward.1} parent=0 // pred_region
    _
  $region81: #{forward.1} parent=0 // pred_fallthru
    _
  // Predicated region
  $region82: #{forward.1} parent=0 // pred_check
    _
  $region83: #{forward.1} parent=0 // pred_check_branch
    %69 = sbr.rel (0) target = $region85
  $region84: #{forward.1} parent=0 // pred_region
    _
  $region85: #{forward.1} parent=0 // pred_fallthru
    _
  // Predicated region
  $region86: #{forward.1} parent=0 // pred_check
    _
  $region87: #{forward.1} parent=0 // pred_check_branch
    %71 = sbr.rel (0) target = $region89
  $region88: #{forward.1} parent=0 // pred_region
    _
  $region89: #{forward.1} parent=0 // pred_fallthru
    _
  // Predicated region
  $region90: #{forward.1} parent=0 // pred_check
    _
  $region91: #{forward.1} parent=0 // pred_check_branch
    %73 = sbr.rel (0) target = $region93
  $region92: #{forward.1} parent=0 // pred_region
    _
  $region93: #{forward.1} parent=0 // pred_fallthru
    _
  %v74 = vld [vmem:[%s0] sm:$0x1f]
  %v75 = vld [vmem:[%s1] sm:$0xf]
  %77 = vset.pattern.permute.xlu0 0
  %78 = vperm.xlu0 %77, %v75
  %v79 = vpop.permute.xlu0 %78
  %v82 = vlaneseq
  %v83 = vshrl.u32 %v82, 7
  %v84 = vsub.s32 0, %v83
  %v85 = vrot.slane %v74, %v84
  %v86 = vlaneseq
  %v87 = vshrl.u32 %v86, 7
  %v88 = vsub.s32 1, %v87
  %v89 = vrot.slane %v74, %v88
  %v90 = vlaneseq
  %v91 = vshrl.u32 %v90, 7
  %v92 = vsub.s32 2, %v91
  %v93 = vrot.slane %v74, %v92
  %v94 = vlaneseq
  %v95 = vshrl.u32 %v94, 7
  %v96 = vsub.s32 3, %v95
  %v97 = vrot.slane %v74, %v96
  %v98 = vlaneseq
  %v99 = vshrl.u32 %v98, 7
  %v100 = vsub.s32 4, %v99
  %v101 = vrot.slane %v74, %v100
  %v107 = vmul.f32 %v79, %v85
  %v108 = vmul.f32 %v79, %v89
  %v109 = vmul.f32 %v79, %v93
  %v110 = vmul.f32 %v79, %v97
  %v111 = vmul.f32 %v79, %v101
  %v112 = vadd.f32 %v107, 0.0
  %v113 = vadd.f32 %v108, 0.0
  %v114 = vadd.f32 %v109, 0.0
  %v115 = vadd.f32 %v110, 0.0
  %v116 = vadd.f32 %v111, 0.0
  %s117 = scalar_lea.vmem %s1, 4
  %v118 = vld [vmem:[%s117] sm:$0xf]
  %120 = vset.pattern.permute.xlu0 0
  %121 = vperm.xlu0 %120, %v118
  %v122 = vpop.permute.xlu0 %121
  %v124 = vmul.f32 %v122, %v85
  %v125 = vmul.f32 %v122, %v89
  %v126 = vmul.f32 %v122, %v93
  %v127 = vmul.f32 %v122, %v97
  %v128 = vmul.f32 %v122, %v101
  %134 = vrot.lane.b32.xlu0 %v124, 127
  %v135 = vpop.permute.xlu0 %134
  %136 = vrot.lane.b32.xlu0 %v125, 127
  %v137 = vpop.permute.xlu0 %136
  %138 = vrot.lane.b32.xlu0 %v126, 127
  %v139 = vpop.permute.xlu0 %138
  %140 = vrot.lane.b32.xlu0 %v127, 127
  %v141 = vpop.permute.xlu0 %140
  %142 = vrot.lane.b32.xlu0 %v128, 127
  %v143 = vpop.permute.xlu0 %142
  %vm144 = vcmask 1039360
  %v145 = vsel %vm144, %v135, %v137
  %v146 = vsel %vm144, %v137, %v139
  %v147 = vsel %vm144, %v139, %v141
  %v148 = vsel %vm144, %v141, %v143
  %v154 = vadd.f32 %v112, %v145
  %v155 = vadd.f32 %v113, %v146
  %v156 = vadd.f32 %v114, %v147
  %v157 = vadd.f32 %v115, %v148
  %v158 = vadd.f32 %v116, %v143
  %s159 = scalar_lea.vmem %s1, 8
  %v160 = vld [vmem:[%s159] sm:$0xf]
  %162 = vset.pattern.permute.xlu0 0
  %163 = vperm.xlu0 %162, %v160
  %v164 = vpop.permute.xlu0 %163
  %v166 = vmul.f32 %v164, %v85
  %v167 = vmul.f32 %v164, %v89
  %v168 = vmul.f32 %v164, %v93
  %v169 = vmul.f32 %v164, %v97
  %v170 = vmul.f32 %v164, %v101
  %176 = vrot.lane.b32.xlu0 %v166, 126
  %v177 = vpop.permute.xlu0 %176
  %178 = vrot.lane.b32.xlu0 %v167, 126
  %v179 = vpop.permute.xlu0 %178
  %180 = vrot.lane.b32.xlu0 %v168, 126
  %v181 = vpop.permute.xlu0 %180
  %182 = vrot.lane.b32.xlu0 %v169, 126
  %v183 = vpop.permute.xlu0 %182
  %184 = vrot.lane.b32.xlu0 %v170, 126
  %v185 = vpop.permute.xlu0 %184
  %vm186 = vcmask 1031168
  %v187 = vsel %vm186, %v177, %v179
  %v188 = vsel %vm186, %v179, %v181
  %v189 = vsel %vm186, %v181, %v183
  %v190 = vsel %vm186, %v183, %v185
  %v196 = vadd.f32 %v154, %v187
  %v197 = vadd.f32 %v155, %v188
  %v198 = vadd.f32 %v156, %v189
  %v199 = vadd.f32 %v157, %v190
  %v200 = vadd.f32 %v158, %v185
  %v201 = vld [vmem:[%s2] sm:$0xf]
  %203 = vset.pattern.permute.xlu0 0
  %204 = vperm.xlu0 %203, %v201
  %v205 = vpop.permute.xlu0 %204
  %v207 = vadd.f32 %v196, %v205
  %v208 = vadd.f32 %v197, %v205
  %v209 = vadd.f32 %v198, %v205
  %v210 = vadd.f32 %v199, %v205
  %v211 = vadd.f32 %v200, %v205
  %v212 = vmax.f32 %v207, 0.0
  %v213 = vmax.f32 %v208, 0.0
  %v214 = vmax.f32 %v209, 0.0
  %v215 = vmax.f32 %v210, 0.0
  %v216 = vmax.f32 %v211, 0.0
  %v217 = vld [vmem:[%s3] sm:$0xf]
  %219 = vset.pattern.permute.xlu0 0
  %220 = vperm.xlu0 %219, %v217
  %v221 = vpop.permute.xlu0 %220
  %v223 = vlaneseq
  %v224 = vshrl.u32 %v223, 7
  %v225 = vsub.s32 0, %v224
  %v226 = vrot.slane %v212, %v225
  %v227 = vlaneseq
  %v228 = vshrl.u32 %v227, 7
  %v229 = vsub.s32 0, %v228
  %v230 = vrot.slane %v213, %v229
  %v231 = vlaneseq
  %v232 = vshrl.u32 %v231, 7
  %v233 = vsub.s32 0, %v232
  %v234 = vrot.slane %v214, %v233
  %v235 = vlaneseq
  %v236 = vshrl.u32 %v235, 7
  %v237 = vsub.s32 0, %v236
  %v238 = vrot.slane %v215, %v237
  %v239 = vlaneseq
  %v240 = vshrl.u32 %v239, 7
  %v241 = vsub.s32 0, %v240
  %v242 = vrot.slane %v216, %v241
  %v243 = vmul.f32 %v221, %v226
  %v244 = vmul.f32 %v221, %v230
  %v245 = vmul.f32 %v221, %v234
  %v246 = vmul.f32 %v221, %v238
  %v247 = vmul.f32 %v221, %v242
  %v248 = vadd.f32 %v243, 0.0
  %v249 = vadd.f32 %v244, 0.0
  %v250 = vadd.f32 %v245, 0.0
  %v251 = vadd.f32 %v246, 0.0
  %v252 = vadd.f32 %v247, 0.0
  %253 = vset.pattern.permute.xlu0 1
  %254 = vperm.xlu0 %253, %v217
  %v255 = vpop.permute.xlu0 %254
  %v257 = vlaneseq
  %v258 = vshrl.u32 %v257, 7
  %v259 = vsub.s32 1, %v258
  %v260 = vrot.slane %v212, %v259
  %v261 = vlaneseq
  %v262 = vshrl.u32 %v261, 7
  %v263 = vsub.s32 1, %v262
  %v264 = vrot.slane %v213, %v263
  %v265 = vlaneseq
  %v266 = vshrl.u32 %v265, 7
  %v267 = vsub.s32 1, %v266
  %v268 = vrot.slane %v214, %v267
  %v269 = vlaneseq
  %v270 = vshrl.u32 %v269, 7
  %v271 = vsub.s32 1, %v270
  %v272 = vrot.slane %v215, %v271
  %v273 = vlaneseq
  %v274 = vshrl.u32 %v273, 7
  %v275 = vsub.s32 1, %v274
  %v276 = vrot.slane %v216, %v275
  %v277 = vmul.f32 %v255, %v260
  %v278 = vmul.f32 %v255, %v264
  %v279 = vmul.f32 %v255, %v268
  %v280 = vmul.f32 %v255, %v272
  %v281 = vmul.f32 %v255, %v276
  %v282 = vadd.f32 %v248, %v277
  %v283 = vadd.f32 %v249, %v278
  %v284 = vadd.f32 %v250, %v279
  %v285 = vadd.f32 %v251, %v280
  %v286 = vadd.f32 %v252, %v281
  %287 = vset.pattern.permute.xlu0 2
  %288 = vperm.xlu0 %287, %v217
  %v289 = vpop.permute.xlu0 %288
  %v291 = vlaneseq
  %v292 = vshrl.u32 %v291, 7
  %v293 = vsub.s32 2, %v292
  %v294 = vrot.slane %v212, %v293
  %v295 = vlaneseq
  %v296 = vshrl.u32 %v295, 7
  %v297 = vsub.s32 2, %v296
  %v298 = vrot.slane %v213, %v297
  %v299 = vlaneseq
  %v300 = vshrl.u32 %v299, 7
  %v301 = vsub.s32 2, %v300
  %v302 = vrot.slane %v214, %v301
  %v303 = vlaneseq
  %v304 = vshrl.u32 %v303, 7
  %v305 = vsub.s32 2, %v304
  %v306 = vrot.slane %v215, %v305
  %v307 = vlaneseq
  %v308 = vshrl.u32 %v307, 7
  %v309 = vsub.s32 2, %v308
  %v310 = vrot.slane %v216, %v309
  %v311 = vmul.f32 %v289, %v294
  %v312 = vmul.f32 %v289, %v298
  %v313 = vmul.f32 %v289, %v302
  %v314 = vmul.f32 %v289, %v306
  %v315 = vmul.f32 %v289, %v310
  %v316 = vadd.f32 %v282, %v311
  %v317 = vadd.f32 %v283, %v312
  %v318 = vadd.f32 %v284, %v313
  %v319 = vadd.f32 %v285, %v314
  %v320 = vadd.f32 %v286, %v315
  %321 = vset.pattern.permute.xlu0 3
  %322 = vperm.xlu0 %321, %v217
  %v323 = vpop.permute.xlu0 %322
  %v325 = vlaneseq
  %v326 = vshrl.u32 %v325, 7
  %v327 = vsub.s32 3, %v326
  %v328 = vrot.slane %v212, %v327
  %v329 = vlaneseq
  %v330 = vshrl.u32 %v329, 7
  %v331 = vsub.s32 3, %v330
  %v332 = vrot.slane %v213, %v331
  %v333 = vlaneseq
  %v334 = vshrl.u32 %v333, 7
  %v335 = vsub.s32 3, %v334
  %v336 = vrot.slane %v214, %v335
  %v337 = vlaneseq
  %v338 = vshrl.u32 %v337, 7
  %v339 = vsub.s32 3, %v338
  %v340 = vrot.slane %v215, %v339
  %v341 = vlaneseq
  %v342 = vshrl.u32 %v341, 7
  %v343 = vsub.s32 3, %v342
  %v344 = vrot.slane %v216, %v343
  %v345 = vmul.f32 %v323, %v328
  %v346 = vmul.f32 %v323, %v332
  %v347 = vmul.f32 %v323, %v336
  %v348 = vmul.f32 %v323, %v340
  %v349 = vmul.f32 %v323, %v344
  %v350 = vadd.f32 %v316, %v345
  %v351 = vadd.f32 %v317, %v346
  %v352 = vadd.f32 %v318, %v347
  %v353 = vadd.f32 %v319, %v348
  %v354 = vadd.f32 %v320, %v349
  %s355 = scalar_lea.vmem %s3, 4
  %v356 = vld [vmem:[%s355] sm:$0xf]
  %358 = vset.pattern.permute.xlu0 0
  %359 = vperm.xlu0 %358, %v356
  %v360 = vpop.permute.xlu0 %359
  %v362 = vmul.f32 %v360, %v226
  %v363 = vmul.f32 %v360, %v230
  %v364 = vmul.f32 %v360, %v234
  %v365 = vmul.f32 %v360, %v238
  %v366 = vmul.f32 %v360, %v242
  %372 = vrot.lane.b32.xlu0 %v362, 127
  %v373 = vpop.permute.xlu0 %372
  %374 = vrot.lane.b32.xlu0 %v363, 127
  %v375 = vpop.permute.xlu0 %374
  %376 = vrot.lane.b32.xlu0 %v364, 127
  %v377 = vpop.permute.xlu0 %376
  %378 = vrot.lane.b32.xlu0 %v365, 127
  %v379 = vpop.permute.xlu0 %378
  %380 = vrot.lane.b32.xlu0 %v366, 127
  %v381 = vpop.permute.xlu0 %380
  %v382 = vsel %vm144, %v373, %v375
  %v383 = vsel %vm144, %v375, %v377
  %v384 = vsel %vm144, %v377, %v379
  %v385 = vsel %vm144, %v379, %v381
  %v391 = vadd.f32 %v350, %v382
  %v392 = vadd.f32 %v351, %v383
  %v393 = vadd.f32 %v352, %v384
  %v394 = vadd.f32 %v353, %v385
  %v395 = vadd.f32 %v354, %v381
  %396 = vset.pattern.permute.xlu0 1
  %397 = vperm.xlu0 %396, %v356
  %v398 = vpop.permute.xlu0 %397
  %v400 = vmul.f32 %v398, %v260
  %v401 = vmul.f32 %v398, %v264
  %v402 = vmul.f32 %v398, %v268
  %v403 = vmul.f32 %v398, %v272
  %v404 = vmul.f32 %v398, %v276
  %410 = vrot.lane.b32.xlu0 %v400, 127
  %v411 = vpop.permute.xlu0 %410
  %412 = vrot.lane.b32.xlu0 %v401, 127
  %v413 = vpop.permute.xlu0 %412
  %414 = vrot.lane.b32.xlu0 %v402, 127
  %v415 = vpop.permute.xlu0 %414
  %416 = vrot.lane.b32.xlu0 %v403, 127
  %v417 = vpop.permute.xlu0 %416
  %418 = vrot.lane.b32.xlu0 %v404, 127
  %v419 = vpop.permute.xlu0 %418
  %v420 = vsel %vm144, %v411, %v413
  %v421 = vsel %vm144, %v413, %v415
  %v422 = vsel %vm144, %v415, %v417
  %v423 = vsel %vm144, %v417, %v419
  %v429 = vadd.f32 %v391, %v420
  %v430 = vadd.f32 %v392, %v421
  %v431 = vadd.f32 %v393, %v422
  %v432 = vadd.f32 %v394, %v423
  %v433 = vadd.f32 %v395, %v419
  %434 = vset.pattern.permute.xlu0 2
  %435 = vperm.xlu0 %434, %v356
  %v436 = vpop.permute.xlu0 %435
  %v438 = vmul.f32 %v436, %v294
  %v439 = vmul.f32 %v436, %v298
  %v440 = vmul.f32 %v436, %v302
  %v441 = vmul.f32 %v436, %v306
  %v442 = vmul.f32 %v436, %v310
  %448 = vrot.lane.b32.xlu0 %v438, 127
  %v449 = vpop.permute.xlu0 %448
  %450 = vrot.lane.b32.xlu0 %v439, 127
  %v451 = vpop.permute.xlu0 %450
  %452 = vrot.lane.b32.xlu0 %v440, 127
  %v453 = vpop.permute.xlu0 %452
  %454 = vrot.lane.b32.xlu0 %v441, 127
  %v455 = vpop.permute.xlu0 %454
  %456 = vrot.lane.b32.xlu0 %v442, 127
  %v457 = vpop.permute.xlu0 %456
  %v458 = vsel %vm144, %v449, %v451
  %v459 = vsel %vm144, %v451, %v453
  %v460 = vsel %vm144, %v453, %v455
  %v461 = vsel %vm144, %v455, %v457
  %v467 = vadd.f32 %v429, %v458
  %v468 = vadd.f32 %v430, %v459
  %v469 = vadd.f32 %v431, %v460
  %v470 = vadd.f32 %v432, %v461
  %v471 = vadd.f32 %v433, %v457
  %472 = vset.pattern.permute.xlu0 3
  %473 = vperm.xlu0 %472, %v356
  %v474 = vpop.permute.xlu0 %473
  %v476 = vmul.f32 %v474, %v328
  %v477 = vmul.f32 %v474, %v332
  %v478 = vmul.f32 %v474, %v336
  %v479 = vmul.f32 %v474, %v340
  %v480 = vmul.f32 %v474, %v344
  %486 = vrot.lane.b32.xlu0 %v476, 127
  %v487 = vpop.permute.xlu0 %486
  %488 = vrot.lane.b32.xlu0 %v477, 127
  %v489 = vpop.permute.xlu0 %488
  %490 = vrot.lane.b32.xlu0 %v478, 127
  %v491 = vpop.permute.xlu0 %490
  %492 = vrot.lane.b32.xlu0 %v479, 127
  %v493 = vpop.permute.xlu0 %492
  %494 = vrot.lane.b32.xlu0 %v480, 127
  %v495 = vpop.permute.xlu0 %494
  %v496 = vsel %vm144, %v487, %v489
  %v497 = vsel %vm144, %v489, %v491
  %v498 = vsel %vm144, %v491, %v493
  %v499 = vsel %vm144, %v493, %v495
  %v505 = vadd.f32 %v467, %v496
  %v506 = vadd.f32 %v468, %v497
  %v507 = vadd.f32 %v469, %v498
  %v508 = vadd.f32 %v470, %v499
  %v509 = vadd.f32 %v471, %v495
  %s510 = scalar_lea.vmem %s3, 8
  %v511 = vld [vmem:[%s510] sm:$0xf]
  %513 = vset.pattern.permute.xlu0 0
  %514 = vperm.xlu0 %513, %v511
  %v515 = vpop.permute.xlu0 %514
  %v517 = vmul.f32 %v515, %v226
  %v518 = vmul.f32 %v515, %v230
  %v519 = vmul.f32 %v515, %v234
  %v520 = vmul.f32 %v515, %v238
  %v521 = vmul.f32 %v515, %v242
  %527 = vrot.lane.b32.xlu0 %v517, 126
  %v528 = vpop.permute.xlu0 %527
  %529 = vrot.lane.b32.xlu0 %v518, 126
  %v530 = vpop.permute.xlu0 %529
  %531 = vrot.lane.b32.xlu0 %v519, 126
  %v532 = vpop.permute.xlu0 %531
  %533 = vrot.lane.b32.xlu0 %v520, 126
  %v534 = vpop.permute.xlu0 %533
  %535 = vrot.lane.b32.xlu0 %v521, 126
  %v536 = vpop.permute.xlu0 %535
  %v537 = vsel %vm186, %v528, %v530
  %v538 = vsel %vm186, %v530, %v532
  %v539 = vsel %vm186, %v532, %v534
  %v540 = vsel %vm186, %v534, %v536
  %v546 = vadd.f32 %v505, %v537
  %v547 = vadd.f32 %v506, %v538
  %v548 = vadd.f32 %v507, %v539
  %v549 = vadd.f32 %v508, %v540
  %v550 = vadd.f32 %v509, %v536
  %551 = vset.pattern.permute.xlu0 1
  %552 = vperm.xlu0 %551, %v511
  %v553 = vpop.permute.xlu0 %552
  %v555 = vmul.f32 %v553, %v260
  %v556 = vmul.f32 %v553, %v264
  %v557 = vmul.f32 %v553, %v268
  %v558 = vmul.f32 %v553, %v272
  %v559 = vmul.f32 %v553, %v276
  %565 = vrot.lane.b32.xlu0 %v555, 126
  %v566 = vpop.permute.xlu0 %565
  %567 = vrot.lane.b32.xlu0 %v556, 126
  %v568 = vpop.permute.xlu0 %567
  %569 = vrot.lane.b32.xlu0 %v557, 126
  %v570 = vpop.permute.xlu0 %569
  %571 = vrot.lane.b32.xlu0 %v558, 126
  %v572 = vpop.permute.xlu0 %571
  %573 = vrot.lane.b32.xlu0 %v559, 126
  %v574 = vpop.permute.xlu0 %573
  %v575 = vsel %vm186, %v566, %v568
  %v576 = vsel %vm186, %v568, %v570
  %v577 = vsel %vm186, %v570, %v572
  %v578 = vsel %vm186, %v572, %v574
  %v584 = vadd.f32 %v546, %v575
  %v585 = vadd.f32 %v547, %v576
  %v586 = vadd.f32 %v548, %v577
  %v587 = vadd.f32 %v549, %v578
  %v588 = vadd.f32 %v550, %v574
  %589 = vset.pattern.permute.xlu0 2
  %590 = vperm.xlu0 %589, %v511
  %v591 = vpop.permute.xlu0 %590
  %v593 = vmul.f32 %v591, %v294
  %v594 = vmul.f32 %v591, %v298
  %v595 = vmul.f32 %v591, %v302
  %v596 = vmul.f32 %v591, %v306
  %v597 = vmul.f32 %v591, %v310
  %603 = vrot.lane.b32.xlu0 %v593, 126
  %v604 = vpop.permute.xlu0 %603
  %605 = vrot.lane.b32.xlu0 %v594, 126
  %v606 = vpop.permute.xlu0 %605
  %607 = vrot.lane.b32.xlu0 %v595, 126
  %v608 = vpop.permute.xlu0 %607
  %609 = vrot.lane.b32.xlu0 %v596, 126
  %v610 = vpop.permute.xlu0 %609
  %611 = vrot.lane.b32.xlu0 %v597, 126
  %v612 = vpop.permute.xlu0 %611
  %v613 = vsel %vm186, %v604, %v606
  %v614 = vsel %vm186, %v606, %v608
  %v615 = vsel %vm186, %v608, %v610
  %v616 = vsel %vm186, %v610, %v612
  %v622 = vadd.f32 %v584, %v613
  %v623 = vadd.f32 %v585, %v614
  %v624 = vadd.f32 %v586, %v615
  %v625 = vadd.f32 %v587, %v616
  %v626 = vadd.f32 %v588, %v612
  %627 = vset.pattern.permute.xlu0 3
  %628 = vperm.xlu0 %627, %v511
  %v629 = vpop.permute.xlu0 %628
  %v631 = vmul.f32 %v629, %v328
  %v632 = vmul.f32 %v629, %v332
  %v633 = vmul.f32 %v629, %v336
  %v634 = vmul.f32 %v629, %v340
  %v635 = vmul.f32 %v629, %v344
  %641 = vrot.lane.b32.xlu0 %v631, 126
  %v642 = vpop.permute.xlu0 %641
  %643 = vrot.lane.b32.xlu0 %v632, 126
  %v644 = vpop.permute.xlu0 %643
  %645 = vrot.lane.b32.xlu0 %v633, 126
  %v646 = vpop.permute.xlu0 %645
  %647 = vrot.lane.b32.xlu0 %v634, 126
  %v648 = vpop.permute.xlu0 %647
  %649 = vrot.lane.b32.xlu0 %v635, 126
  %v650 = vpop.permute.xlu0 %649
  %v651 = vsel %vm186, %v642, %v644
  %v652 = vsel %vm186, %v644, %v646
  %v653 = vsel %vm186, %v646, %v648
  %v654 = vsel %vm186, %v648, %v650
  %v660 = vadd.f32 %v622, %v651
  %v661 = vadd.f32 %v623, %v652
  %v662 = vadd.f32 %v624, %v653
  %v663 = vadd.f32 %v625, %v654
  %v664 = vadd.f32 %v626, %v650
  %v665 = vld [vmem:[%s4] sm:$0xf]
  %667 = vset.pattern.permute.xlu0 0
  %668 = vperm.xlu0 %667, %v665
  %v669 = vpop.permute.xlu0 %668
  %v671 = vadd.f32 %v660, %v669
  %v672 = vadd.f32 %v661, %v669
  %v673 = vadd.f32 %v662, %v669
  %v674 = vadd.f32 %v663, %v669
  %v675 = vadd.f32 %v664, %v669
  %v676 = vmax.f32 %v671, 0.0
  %v677 = vmax.f32 %v672, 0.0
  %v678 = vmax.f32 %v673, 0.0
  %v679 = vmax.f32 %v674, 0.0
  %v680 = vmax.f32 %v675, 0.0
  %s681 = scalar_lea.vmem %s0, 5
  %v682 = vld [vmem:[%s681] sm:$0x1f]
  %v684 = vlaneseq
  %v685 = vshrl.u32 %v684, 7
  %v686 = vsub.s32 0, %v685
  %v687 = vrot.slane %v682, %v686
  %v688 = vlaneseq
  %v689 = vshrl.u32 %v688, 7
  %v690 = vsub.s32 1, %v689
  %v691 = vrot.slane %v682, %v690
  %v692 = vlaneseq
  %v693 = vshrl.u32 %v692, 7
  %v694 = vsub.s32 2, %v693
  %v695 = vrot.slane %v682, %v694
  %v696 = vlaneseq
  %v697 = vshrl.u32 %v696, 7
  %v698 = vsub.s32 3, %v697
  %v699 = vrot.slane %v682, %v698
  %v700 = vlaneseq
  %v701 = vshrl.u32 %v700, 7
  %v702 = vsub.s32 4, %v701
  %v703 = vrot.slane %v682, %v702
  %v709 = vmul.f32 %v79, %v687
  %v710 = vmul.f32 %v79, %v691
  %v711 = vmul.f32 %v79, %v695
  %v712 = vmul.f32 %v79, %v699
  %v713 = vmul.f32 %v79, %v703
  %v714 = vadd.f32 %v709, 0.0
  %v715 = vadd.f32 %v710, 0.0
  %v716 = vadd.f32 %v711, 0.0
  %v717 = vadd.f32 %v712, 0.0
  %v718 = vadd.f32 %v713, 0.0
  %v719 = vmul.f32 %v122, %v687
  %v720 = vmul.f32 %v122, %v691
  %v721 = vmul.f32 %v122, %v695
  %v722 = vmul.f32 %v122, %v699
  %v723 = vmul.f32 %v122, %v703
  %729 = vrot.lane.b32.xlu0 %v719, 127
  %v730 = vpop.permute.xlu0 %729
  %731 = vrot.lane.b32.xlu0 %v720, 127
  %v732 = vpop.permute.xlu0 %731
  %733 = vrot.lane.b32.xlu0 %v721, 127
  %v734 = vpop.permute.xlu0 %733
  %735 = vrot.lane.b32.xlu0 %v722, 127
  %v736 = vpop.permute.xlu0 %735
  %737 = vrot.lane.b32.xlu0 %v723, 127
  %v738 = vpop.permute.xlu0 %737
  %v739 = vsel %vm144, %v730, %v732
  %v740 = vsel %vm144, %v732, %v734
  %v741 = vsel %vm144, %v734, %v736
  %v742 = vsel %vm144, %v736, %v738
  %v748 = vadd.f32 %v714, %v739
  %v749 = vadd.f32 %v715, %v740
  %v750 = vadd.f32 %v716, %v741
  %v751 = vadd.f32 %v717, %v742
  %v752 = vadd.f32 %v718, %v738
  %v753 = vmul.f32 %v164, %v687
  %v754 = vmul.f32 %v164, %v691
  %v755 = vmul.f32 %v164, %v695
  %v756 = vmul.f32 %v164, %v699
  %v757 = vmul.f32 %v164, %v703
  %763 = vrot.lane.b32.xlu0 %v753, 126
  %v764 = vpop.permute.xlu0 %763
  %765 = vrot.lane.b32.xlu0 %v754, 126
  %v766 = vpop.permute.xlu0 %765
  %767 = vrot.lane.b32.xlu0 %v755, 126
  %v768 = vpop.permute.xlu0 %767
  %769 = vrot.lane.b32.xlu0 %v756, 126
  %v770 = vpop.permute.xlu0 %769
  %771 = vrot.lane.b32.xlu0 %v757, 126
  %v772 = vpop.permute.xlu0 %771
  %v773 = vsel %vm186, %v764, %v766
  %v774 = vsel %vm186, %v766, %v768
  %v775 = vsel %vm186, %v768, %v770
  %v776 = vsel %vm186, %v770, %v772
  %v782 = vadd.f32 %v748, %v773
  %v783 = vadd.f32 %v749, %v774
  %v784 = vadd.f32 %v750, %v775
  %v785 = vadd.f32 %v751, %v776
  %v786 = vadd.f32 %v752, %v772
  %v787 = vadd.f32 %v782, %v205
  %v788 = vadd.f32 %v783, %v205
  %v789 = vadd.f32 %v784, %v205
  %v790 = vadd.f32 %v785, %v205
  %v791 = vadd.f32 %v786, %v205
  %v792 = vmax.f32 %v787, 0.0
  %v793 = vmax.f32 %v788, 0.0
  %v794 = vmax.f32 %v789, 0.0
  %v795 = vmax.f32 %v790, 0.0
  %v796 = vmax.f32 %v791, 0.0
  %v797 = vlaneseq
  %v798 = vshrl.u32 %v797, 7
  %v799 = vsub.s32 0, %v798
  %v800 = vrot.slane %v792, %v799
  %v801 = vlaneseq
  %v802 = vshrl.u32 %v801, 7
  %v803 = vsub.s32 0, %v802
  %v804 = vrot.slane %v793, %v803
  %v805 = vlaneseq
  %v806 = vshrl.u32 %v805, 7
  %v807 = vsub.s32 0, %v806
  %v808 = vrot.slane %v794, %v807
  %v809 = vlaneseq
  %v810 = vshrl.u32 %v809, 7
  %v811 = vsub.s32 0, %v810
  %v812 = vrot.slane %v795, %v811
  %v813 = vlaneseq
  %v814 = vshrl.u32 %v813, 7
  %v815 = vsub.s32 0, %v814
  %v816 = vrot.slane %v796, %v815
  %v817 = vmul.f32 %v221, %v800
  %v818 = vmul.f32 %v221, %v804
  %v819 = vmul.f32 %v221, %v808
  %v820 = vmul.f32 %v221, %v812
  %v821 = vmul.f32 %v221, %v816
  %v822 = vadd.f32 %v817, 0.0
  %v823 = vadd.f32 %v818, 0.0
  %v824 = vadd.f32 %v819, 0.0
  %v825 = vadd.f32 %v820, 0.0
  %v826 = vadd.f32 %v821, 0.0
  %v827 = vlaneseq
  %v828 = vshrl.u32 %v827, 7
  %v829 = vsub.s32 1, %v828
  %v830 = vrot.slane %v792, %v829
  %v831 = vlaneseq
  %v832 = vshrl.u32 %v831, 7
  %v833 = vsub.s32 1, %v832
  %v834 = vrot.slane %v793, %v833
  %v835 = vlaneseq
  %v836 = vshrl.u32 %v835, 7
  %v837 = vsub.s32 1, %v836
  %v838 = vrot.slane %v794, %v837
  %v839 = vlaneseq
  %v840 = vshrl.u32 %v839, 7
  %v841 = vsub.s32 1, %v840
  %v842 = vrot.slane %v795, %v841
  %v843 = vlaneseq
  %v844 = vshrl.u32 %v843, 7
  %v845 = vsub.s32 1, %v844
  %v846 = vrot.slane %v796, %v845
  %v847 = vmul.f32 %v255, %v830
  %v848 = vmul.f32 %v255, %v834
  %v849 = vmul.f32 %v255, %v838
  %v850 = vmul.f32 %v255, %v842
  %v851 = vmul.f32 %v255, %v846
  %v852 = vadd.f32 %v822, %v847
  %v853 = vadd.f32 %v823, %v848
  %v854 = vadd.f32 %v824, %v849
  %v855 = vadd.f32 %v825, %v850
  %v856 = vadd.f32 %v826, %v851
  %v857 = vlaneseq
  %v858 = vshrl.u32 %v857, 7
  %v859 = vsub.s32 2, %v858
  %v860 = vrot.slane %v792, %v859
  %v861 = vlaneseq
  %v862 = vshrl.u32 %v861, 7
  %v863 = vsub.s32 2, %v862
  %v864 = vrot.slane %v793, %v863
  %v865 = vlaneseq
  %v866 = vshrl.u32 %v865, 7
  %v867 = vsub.s32 2, %v866
  %v868 = vrot.slane %v794, %v867
  %v869 = vlaneseq
  %v870 = vshrl.u32 %v869, 7
  %v871 = vsub.s32 2, %v870
  %v872 = vrot.slane %v795, %v871
  %v873 = vlaneseq
  %v874 = vshrl.u32 %v873, 7
  %v875 = vsub.s32 2, %v874
  %v876 = vrot.slane %v796, %v875
  %v877 = vmul.f32 %v289, %v860
  %v878 = vmul.f32 %v289, %v864
  %v879 = vmul.f32 %v289, %v868
  %v880 = vmul.f32 %v289, %v872
  %v881 = vmul.f32 %v289, %v876
  %v882 = vadd.f32 %v852, %v877
  %v883 = vadd.f32 %v853, %v878
  %v884 = vadd.f32 %v854, %v879
  %v885 = vadd.f32 %v855, %v880
  %v886 = vadd.f32 %v856, %v881
  %v887 = vlaneseq
  %v888 = vshrl.u32 %v887, 7
  %v889 = vsub.s32 3, %v888
  %v890 = vrot.slane %v792, %v889
  %v891 = vlaneseq
  %v892 = vshrl.u32 %v891, 7
  %v893 = vsub.s32 3, %v892
  %v894 = vrot.slane %v793, %v893
  %v895 = vlaneseq
  %v896 = vshrl.u32 %v895, 7
  %v897 = vsub.s32 3, %v896
  %v898 = vrot.slane %v794, %v897
  %v899 = vlaneseq
  %v900 = vshrl.u32 %v899, 7
  %v901 = vsub.s32 3, %v900
  %v902 = vrot.slane %v795, %v901
  %v903 = vlaneseq
  %v904 = vshrl.u32 %v903, 7
  %v905 = vsub.s32 3, %v904
  %v906 = vrot.slane %v796, %v905
  %v907 = vmul.f32 %v323, %v890
  %v908 = vmul.f32 %v323, %v894
  %v909 = vmul.f32 %v323, %v898
  %v910 = vmul.f32 %v323, %v902
  %v911 = vmul.f32 %v323, %v906
  %v912 = vadd.f32 %v882, %v907
  %v913 = vadd.f32 %v883, %v908
  %v914 = vadd.f32 %v884, %v909
  %v915 = vadd.f32 %v885, %v910
  %v916 = vadd.f32 %v886, %v911
  %v917 = vmul.f32 %v360, %v800
  %v918 = vmul.f32 %v360, %v804
  %v919 = vmul.f32 %v360, %v808
  %v920 = vmul.f32 %v360, %v812
  %v921 = vmul.f32 %v360, %v816
  %927 = vrot.lane.b32.xlu0 %v917, 127
  %v928 = vpop.permute.xlu0 %927
  %929 = vrot.lane.b32.xlu0 %v918, 127
  %v930 = vpop.permute.xlu0 %929
  %931 = vrot.lane.b32.xlu0 %v919, 127
  %v932 = vpop.permute.xlu0 %931
  %933 = vrot.lane.b32.xlu0 %v920, 127
  %v934 = vpop.permute.xlu0 %933
  %935 = vrot.lane.b32.xlu0 %v921, 127
  %v936 = vpop.permute.xlu0 %935
  %v937 = vsel %vm144, %v928, %v930
  %v938 = vsel %vm144, %v930, %v932
  %v939 = vsel %vm144, %v932, %v934
  %v940 = vsel %vm144, %v934, %v936
  %v946 = vadd.f32 %v912, %v937
  %v947 = vadd.f32 %v913, %v938
  %v948 = vadd.f32 %v914, %v939
  %v949 = vadd.f32 %v915, %v940
  %v950 = vadd.f32 %v916, %v936
  %v951 = vmul.f32 %v398, %v830
  %v952 = vmul.f32 %v398, %v834
  %v953 = vmul.f32 %v398, %v838
  %v954 = vmul.f32 %v398, %v842
  %v955 = vmul.f32 %v398, %v846
  %961 = vrot.lane.b32.xlu0 %v951, 127
  %v962 = vpop.permute.xlu0 %961
  %963 = vrot.lane.b32.xlu0 %v952, 127
  %v964 = vpop.permute.xlu0 %963
  %965 = vrot.lane.b32.xlu0 %v953, 127
  %v966 = vpop.permute.xlu0 %965
  %967 = vrot.lane.b32.xlu0 %v954, 127
  %v968 = vpop.permute.xlu0 %967
  %969 = vrot.lane.b32.xlu0 %v955, 127
  %v970 = vpop.permute.xlu0 %969
  %v971 = vsel %vm144, %v962, %v964
  %v972 = vsel %vm144, %v964, %v966
  %v973 = vsel %vm144, %v966, %v968
  %v974 = vsel %vm144, %v968, %v970
  %v980 = vadd.f32 %v946, %v971
  %v981 = vadd.f32 %v947, %v972
  %v982 = vadd.f32 %v948, %v973
  %v983 = vadd.f32 %v949, %v974
  %v984 = vadd.f32 %v950, %v970
  %v985 = vmul.f32 %v436, %v860
  %v986 = vmul.f32 %v436, %v864
  %v987 = vmul.f32 %v436, %v868
  %v988 = vmul.f32 %v436, %v872
  %v989 = vmul.f32 %v436, %v876
  %995 = vrot.lane.b32.xlu0 %v985, 127
  %v996 = vpop.permute.xlu0 %995
  %997 = vrot.lane.b32.xlu0 %v986, 127
  %v998 = vpop.permute.xlu0 %997
  %999 = vrot.lane.b32.xlu0 %v987, 127
  %v1000 = vpop.permute.xlu0 %999
  %1001 = vrot.lane.b32.xlu0 %v988, 127
  %v1002 = vpop.permute.xlu0 %1001
  %1003 = vrot.lane.b32.xlu0 %v989, 127
  %v1004 = vpop.permute.xlu0 %1003
  %v1005 = vsel %vm144, %v996, %v998
  %v1006 = vsel %vm144, %v998, %v1000
  %v1007 = vsel %vm144, %v1000, %v1002
  %v1008 = vsel %vm144, %v1002, %v1004
  %v1014 = vadd.f32 %v980, %v1005
  %v1015 = vadd.f32 %v981, %v1006
  %v1016 = vadd.f32 %v982, %v1007
  %v1017 = vadd.f32 %v983, %v1008
  %v1018 = vadd.f32 %v984, %v1004
  %v1019 = vmul.f32 %v474, %v890
  %v1020 = vmul.f32 %v474, %v894
  %v1021 = vmul.f32 %v474, %v898
  %v1022 = vmul.f32 %v474, %v902
  %v1023 = vmul.f32 %v474, %v906
  %1029 = vrot.lane.b32.xlu0 %v1019, 127
  %v1030 = vpop.permute.xlu0 %1029
  %1031 = vrot.lane.b32.xlu0 %v1020, 127
  %v1032 = vpop.permute.xlu0 %1031
  %1033 = vrot.lane.b32.xlu0 %v1021, 127
  %v1034 = vpop.permute.xlu0 %1033
  %1035 = vrot.lane.b32.xlu0 %v1022, 127
  %v1036 = vpop.permute.xlu0 %1035
  %1037 = vrot.lane.b32.xlu0 %v1023, 127
  %v1038 = vpop.permute.xlu0 %1037
  %v1039 = vsel %vm144, %v1030, %v1032
  %v1040 = vsel %vm144, %v1032, %v1034
  %v1041 = vsel %vm144, %v1034, %v1036
  %v1042 = vsel %vm144, %v1036, %v1038
  %v1048 = vadd.f32 %v1014, %v1039
  %v1049 = vadd.f32 %v1015, %v1040
  %v1050 = vadd.f32 %v1016, %v1041
  %v1051 = vadd.f32 %v1017, %v1042
  %v1052 = vadd.f32 %v1018, %v1038
  %v1053 = vmul.f32 %v515, %v800
  %v1054 = vmul.f32 %v515, %v804
  %v1055 = vmul.f32 %v515, %v808
  %v1056 = vmul.f32 %v515, %v812
  %v1057 = vmul.f32 %v515, %v816
  %1063 = vrot.lane.b32.xlu0 %v1053, 126
  %v1064 = vpop.permute.xlu0 %1063
  %1065 = vrot.lane.b32.xlu0 %v1054, 126
  %v1066 = vpop.permute.xlu0 %1065
  %1067 = vrot.lane.b32.xlu0 %v1055, 126
  %v1068 = vpop.permute.xlu0 %1067
  %1069 = vrot.lane.b32.xlu0 %v1056, 126
  %v1070 = vpop.permute.xlu0 %1069
  %1071 = vrot.lane.b32.xlu0 %v1057, 126
  %v1072 = vpop.permute.xlu0 %1071
  %v1073 = vsel %vm186, %v1064, %v1066
  %v1074 = vsel %vm186, %v1066, %v1068
  %v1075 = vsel %vm186, %v1068, %v1070
  %v1076 = vsel %vm186, %v1070, %v1072
  %v1082 = vadd.f32 %v1048, %v1073
  %v1083 = vadd.f32 %v1049, %v1074
  %v1084 = vadd.f32 %v1050, %v1075
  %v1085 = vadd.f32 %v1051, %v1076
  %v1086 = vadd.f32 %v1052, %v1072
  %v1087 = vmul.f32 %v553, %v830
  %v1088 = vmul.f32 %v553, %v834
  %v1089 = vmul.f32 %v553, %v838
  %v1090 = vmul.f32 %v553, %v842
  %v1091 = vmul.f32 %v553, %v846
  %1097 = vrot.lane.b32.xlu0 %v1087, 126
  %v1098 = vpop.permute.xlu0 %1097
  %1099 = vrot.lane.b32.xlu0 %v1088, 126
  %v1100 = vpop.permute.xlu0 %1099
  %1101 = vrot.lane.b32.xlu0 %v1089, 126
  %v1102 = vpop.permute.xlu0 %1101
  %1103 = vrot.lane.b32.xlu0 %v1090, 126
  %v1104 = vpop.permute.xlu0 %1103
  %1105 = vrot.lane.b32.xlu0 %v1091, 126
  %v1106 = vpop.permute.xlu0 %1105
  %v1107 = vsel %vm186, %v1098, %v1100
  %v1108 = vsel %vm186, %v1100, %v1102
  %v1109 = vsel %vm186, %v1102, %v1104
  %v1110 = vsel %vm186, %v1104, %v1106
  %v1116 = vadd.f32 %v1082, %v1107
  %v1117 = vadd.f32 %v1083, %v1108
  %v1118 = vadd.f32 %v1084, %v1109
  %v1119 = vadd.f32 %v1085, %v1110
  %v1120 = vadd.f32 %v1086, %v1106
  %v1121 = vmul.f32 %v591, %v860
  %v1122 = vmul.f32 %v591, %v864
  %v1123 = vmul.f32 %v591, %v868
  %v1124 = vmul.f32 %v591, %v872
  %v1125 = vmul.f32 %v591, %v876
  %1131 = vrot.lane.b32.xlu0 %v1121, 126
  %v1132 = vpop.permute.xlu0 %1131
  %1133 = vrot.lane.b32.xlu0 %v1122, 126
  %v1134 = vpop.permute.xlu0 %1133
  %1135 = vrot.lane.b32.xlu0 %v1123, 126
  %v1136 = vpop.permute.xlu0 %1135
  %1137 = vrot.lane.b32.xlu0 %v1124, 126
  %v1138 = vpop.permute.xlu0 %1137
  %1139 = vrot.lane.b32.xlu0 %v1125, 126
  %v1140 = vpop.permute.xlu0 %1139
  %v1141 = vsel %vm186, %v1132, %v1134
  %v1142 = vsel %vm186, %v1134, %v1136
  %v1143 = vsel %vm186, %v1136, %v1138
  %v1144 = vsel %vm186, %v1138, %v1140
  %v1150 = vadd.f32 %v1116, %v1141
  %v1151 = vadd.f32 %v1117, %v1142
  %v1152 = vadd.f32 %v1118, %v1143
  %v1153 = vadd.f32 %v1119, %v1144
  %v1154 = vadd.f32 %v1120, %v1140
  %v1155 = vmul.f32 %v629, %v890
  %v1156 = vmul.f32 %v629, %v894
  %v1157 = vmul.f32 %v629, %v898
  %v1158 = vmul.f32 %v629, %v902
  %v1159 = vmul.f32 %v629, %v906
  %1165 = vrot.lane.b32.xlu0 %v1155, 126
  %v1166 = vpop.permute.xlu0 %1165
  %1167 = vrot.lane.b32.xlu0 %v1156, 126
  %v1168 = vpop.permute.xlu0 %1167
  %1169 = vrot.lane.b32.xlu0 %v1157, 126
  %v1170 = vpop.permute.xlu0 %1169
  %1171 = vrot.lane.b32.xlu0 %v1158, 126
  %v1172 = vpop.permute.xlu0 %1171
  %1173 = vrot.lane.b32.xlu0 %v1159, 126
  %v1174 = vpop.permute.xlu0 %1173
  %v1175 = vsel %vm186, %v1166, %v1168
  %v1176 = vsel %vm186, %v1168, %v1170
  %v1177 = vsel %vm186, %v1170, %v1172
  %v1178 = vsel %vm186, %v1172, %v1174
  %v1184 = vadd.f32 %v1150, %v1175
  %v1185 = vadd.f32 %v1151, %v1176
  %v1186 = vadd.f32 %v1152, %v1177
  %v1187 = vadd.f32 %v1153, %v1178
  %v1188 = vadd.f32 %v1154, %v1174
  %v1189 = vadd.f32 %v1184, %v669
  %v1190 = vadd.f32 %v1185, %v669
  %v1191 = vadd.f32 %v1186, %v669
  %v1192 = vadd.f32 %v1187, %v669
  %v1193 = vadd.f32 %v1188, %v669
  %v1194 = vmax.f32 %v1189, 0.0
  %v1195 = vmax.f32 %v1190, 0.0
  %v1196 = vmax.f32 %v1191, 0.0
  %v1197 = vmax.f32 %v1192, 0.0
  %v1198 = vmax.f32 %v1193, 0.0
  %v1204 = vrot.slane %v1194, 4
  %v1205 = vrot.slane %v1195, 4
  %v1206 = vrot.slane %v1196, 4
  %v1207 = vrot.slane %v1197, 4
  %v1208 = vrot.slane %v1198, 4
  %vm1214 = vcmask 1043456
  %v1215 = vsel %vm1214, %v676, %v1204
  %v1216 = vsel %vm1214, %v677, %v1205
  %v1217 = vsel %vm1214, %v678, %v1206
  %v1218 = vsel %vm1214, %v679, %v1207
  %v1219 = vsel %vm1214, %v680, %v1208
  %1225 = vrot.lane.b32.xlu0 %v1215, 1
  %v1226 = vpop.permute.xlu0 %1225
  %1227 = vrot.lane.b32.xlu0 %v1216, 1
  %v1228 = vpop.permute.xlu0 %1227
  %1229 = vrot.lane.b32.xlu0 %v1217, 1
  %v1230 = vpop.permute.xlu0 %1229
  %1231 = vrot.lane.b32.xlu0 %v1218, 1
  %v1232 = vpop.permute.xlu0 %1231
  %1233 = vrot.lane.b32.xlu0 %v1219, 1
  %v1234 = vpop.permute.xlu0 %1233
  %vm1235 = vcmask 7168
  %v1236 = vsel %vm1235, %v1226, %v1228
  %v1237 = vsel %vm1235, %v1228, %v1230
  %v1238 = vsel %vm1235, %v1230, %v1232
  %v1239 = vsel %vm1235, %v1232, %v1234
  %v1245 = vmax.f32 %v1215, %v1226
  %v1246 = vmax.f32 %v1216, %v1236
  %v1247 = vmax.f32 %v1217, %v1237
  %v1248 = vmax.f32 %v1218, %v1238
  %v1249 = vmax.f32 %v1219, %v1239
  %v1250 = vld [vmem:[%s15] sm:$0xff]
  %v1251 = vld [vmem:[%s15 + $0x8] sm:$0xff]
  %v1252 = vld [vmem:[%s15 + $0x10] sm:$0xff]
  %v1253 = vld [vmem:[%s15 + $0x18] sm:$0xff]
  %v1254 = vld [vmem:[%s15 + $0x20] sm:$0xff]
  %v1255 = vld [vmem:[%s15 + $0x28] sm:$0xff]
  %v1256 = vld [vmem:[%s15 + $0x30] sm:$0xff]
  %v1257 = vld [vmem:[%s15 + $0x38] sm:$0xff]
  %v1258 = vld [vmem:[%s15 + $0x40] sm:$0xff]
  %v1259 = vld [vmem:[%s15 + $0x48] sm:$0xff]
  %v1260 = vld [vmem:[%s15 + $0x50] sm:$0xff]
  %v1261 = vld [vmem:[%s15 + $0x58] sm:$0xff]
  %v1262 = vld [vmem:[%s15 + $0x60] sm:$0xff]
  %v1263 = vld [vmem:[%s15 + $0x68] sm:$0xff]
  %v1264 = vld [vmem:[%s15 + $0x70] sm:$0xff]
  %v1265 = vld [vmem:[%s15 + $0x78] sm:$0xff]
  %v1266 = vld [vmem:[%s15 + $0x80] sm:$0xff]
  %v1267 = vld [vmem:[%s15 + $0x88] sm:$0xff]
  %v1268 = vld [vmem:[%s15 + $0x90] sm:$0xff]
  %v1269 = vld [vmem:[%s15 + $0x98] sm:$0xff]
  %v1270 = vld [vmem:[%s15 + $0xa0] sm:$0xff]
  %v1271 = vld [vmem:[%s15 + $0xa8] sm:$0xff]
  %v1272 = vld [vmem:[%s15 + $0xb0] sm:$0xff]
  %v1273 = vld [vmem:[%s15 + $0xb8] sm:$0xff]
  %v1274 = vld [vmem:[%s15 + $0xc0] sm:$0xff]
  %v1275 = vld [vmem:[%s15 + $0xc8] sm:$0xff]
  %v1276 = vld [vmem:[%s15 + $0xd0] sm:$0xff]
  %v1277 = vld [vmem:[%s15 + $0xd8] sm:$0xff]
  %v1278 = vld [vmem:[%s15 + $0xe0] sm:$0xff]
  %v1279 = vld [vmem:[%s15 + $0xe8] sm:$0xff]
  %v1280 = vld [vmem:[%s15 + $0xf0] sm:$0xff]
  %v1281 = vld [vmem:[%s15 + $0xf8] sm:$0xff]
  %v1282 = vld [vmem:[%s15 + $0x100] sm:$0xff]
  %v1283 = vld [vmem:[%s15 + $0x108] sm:$0xff]
  %v1284 = vld [vmem:[%s15 + $0x110] sm:$0xff]
  %v1285 = vld [vmem:[%s15 + $0x118] sm:$0xff]
  %v1286 = vld [vmem:[%s15 + $0x120] sm:$0xff]
  %v1287 = vld [vmem:[%s15 + $0x128] sm:$0xff]
  %v1288 = vld [vmem:[%s15 + $0x130] sm:$0xff]
  %v1289 = vld [vmem:[%s15 + $0x138] sm:$0xff]
  %v1290 = vld [vmem:[%s15 + $0x140] sm:$0xff]
  %v1291 = vld [vmem:[%s15 + $0x148] sm:$0xff]
  %v1292 = vld [vmem:[%s15 + $0x150] sm:$0xff]
  %v1293 = vld [vmem:[%s15 + $0x158] sm:$0xff]
  %v1294 = vld [vmem:[%s15 + $0x160] sm:$0xff]
  %v1295 = vld [vmem:[%s15 + $0x168] sm:$0xff]
  %v1296 = vld [vmem:[%s15 + $0x170] sm:$0xff]
  %v1297 = vld [vmem:[%s15 + $0x178] sm:$0xff]
  %v1298 = vld [vmem:[%s15 + $0x180] sm:$0xff]
  %v1299 = vld [vmem:[%s15 + $0x188] sm:$0xff]
  %v1300 = vld [vmem:[%s15 + $0x190] sm:$0xff]
  %v1301 = vld [vmem:[%s15 + $0x198] sm:$0xff]
  %v1302 = vld [vmem:[%s15 + $0x1a0] sm:$0xff]
  %v1303 = vld [vmem:[%s15 + $0x1a8] sm:$0xff]
  %v1304 = vld [vmem:[%s15 + $0x1b0] sm:$0xff]
  %v1305 = vld [vmem:[%s15 + $0x1b8] sm:$0xff]
  %v1306 = vld [vmem:[%s15 + $0x1c0] sm:$0xff]
  %v1307 = vld [vmem:[%s15 + $0x1c8] sm:$0xff]
  %v1308 = vld [vmem:[%s15 + $0x1d0] sm:$0xff]
  %v1309 = vld [vmem:[%s15 + $0x1d8] sm:$0xff]
  %v1310 = vld [vmem:[%s15 + $0x1e0] sm:$0xff]
  %v1311 = vld [vmem:[%s15 + $0x1e8] sm:$0xff]
  %v1312 = vld [vmem:[%s15 + $0x1f0] sm:$0xff]
  %v1313 = vld [vmem:[%s15 + $0x1f8] sm:$0xff]
  %v1314 = vld [vmem:[%s15 + $0x200] sm:$0xff]
  %v1315 = vld [vmem:[%s15 + $0x208] sm:$0xff]
  %v1316 = vld [vmem:[%s15 + $0x210] sm:$0xff]
  %v1317 = vld [vmem:[%s15 + $0x218] sm:$0xff]
  %v1318 = vld [vmem:[%s15 + $0x220] sm:$0xff]
  %v1319 = vld [vmem:[%s15 + $0x228] sm:$0xff]
  %v1320 = vld [vmem:[%s15 + $0x230] sm:$0xff]
  %v1321 = vld [vmem:[%s15 + $0x238] sm:$0xff]
  %v1322 = vld [vmem:[%s15 + $0x240] sm:$0xff]
  %v1323 = vld [vmem:[%s15 + $0x248] sm:$0xff]
  %v1324 = vld [vmem:[%s15 + $0x250] sm:$0xff]
  %v1325 = vld [vmem:[%s15 + $0x258] sm:$0xff]
  %v1326 = vld [vmem:[%s15 + $0x260] sm:$0xff]
  %v1327 = vld [vmem:[%s15 + $0x268] sm:$0xff]
  %v1328 = vld [vmem:[%s15 + $0x270] sm:$0xff]
  %v1329 = vld [vmem:[%s15 + $0x278] sm:$0xff]
  %v1330 = vld [vmem:[%s15 + $0x280] sm:$0xff]
  %v1331 = vld [vmem:[%s15 + $0x288] sm:$0xff]
  %v1332 = vld [vmem:[%s15 + $0x290] sm:$0xff]
  %v1333 = vld [vmem:[%s15 + $0x298] sm:$0xff]
  %v1334 = vld [vmem:[%s15 + $0x2a0] sm:$0xff]
  %v1335 = vld [vmem:[%s15 + $0x2a8] sm:$0xff]
  %v1336 = vld [vmem:[%s15 + $0x2b0] sm:$0xff]
  %v1337 = vld [vmem:[%s15 + $0x2b8] sm:$0xff]
  %v1338 = vld [vmem:[%s15 + $0x2c0] sm:$0xff]
  %v1339 = vld [vmem:[%s15 + $0x2c8] sm:$0xff]
  %v1340 = vld [vmem:[%s15 + $0x2d0] sm:$0xff]
  %v1341 = vld [vmem:[%s15 + $0x2d8] sm:$0xff]
  %v1342 = vld [vmem:[%s15 + $0x2e0] sm:$0xff]
  %v1343 = vld [vmem:[%s15 + $0x2e8] sm:$0xff]
  %v1344 = vld [vmem:[%s15 + $0x2f0] sm:$0xff]
  %v1345 = vld [vmem:[%s15 + $0x2f8] sm:$0xff]
  %v1346 = vld [vmem:[%s15 + $0x300] sm:$0xff]
  %v1347 = vld [vmem:[%s15 + $0x308] sm:$0xff]
  %v1348 = vld [vmem:[%s15 + $0x310] sm:$0xff]
  %v1349 = vld [vmem:[%s15 + $0x318] sm:$0xff]
  %v1350 = vld [vmem:[%s15 + $0x320] sm:$0xff]
  %v1351 = vld [vmem:[%s15 + $0x328] sm:$0xff]
  %v1352 = vld [vmem:[%s15 + $0x330] sm:$0xff]
  %v1353 = vld [vmem:[%s15 + $0x338] sm:$0xff]
  %v1354 = vld [vmem:[%s15 + $0x340] sm:$0xff]
  %v1355 = vld [vmem:[%s15 + $0x348] sm:$0xff]
  %v1356 = vld [vmem:[%s15 + $0x350] sm:$0xff]
  %v1357 = vld [vmem:[%s15 + $0x358] sm:$0xff]
  %v1358 = vld [vmem:[%s15 + $0x360] sm:$0xff]
  %v1359 = vld [vmem:[%s15 + $0x368] sm:$0xff]
  %v1360 = vld [vmem:[%s15 + $0x370] sm:$0xff]
  %v1361 = vld [vmem:[%s15 + $0x378] sm:$0xff]
  %v1362 = vld [vmem:[%s15 + $0x380] sm:$0xff]
  %v1363 = vld [vmem:[%s15 + $0x388] sm:$0xff]
  %v1364 = vld [vmem:[%s15 + $0x390] sm:$0xff]
  %v1365 = vld [vmem:[%s15 + $0x398] sm:$0xff]
  %v1366 = vld [vmem:[%s15 + $0x3a0] sm:$0xff]
  %v1367 = vld [vmem:[%s15 + $0x3a8] sm:$0xff]
  %v1368 = vld [vmem:[%s15 + $0x3b0] sm:$0xff]
  %v1369 = vld [vmem:[%s15 + $0x3b8] sm:$0xff]
  %v1370 = vld [vmem:[%s15 + $0x3c0] sm:$0xff]
  %v1371 = vld [vmem:[%s15 + $0x3c8] sm:$0xff]
  %v1372 = vld [vmem:[%s15 + $0x3d0] sm:$0xff]
  %v1373 = vld [vmem:[%s15 + $0x3d8] sm:$0xff]
  %v1374 = vld [vmem:[%s15 + $0x3e0] sm:$0xff]
  %v1375 = vld [vmem:[%s15 + $0x3e8] sm:$0xff]
  %v1376 = vld [vmem:[%s15 + $0x3f0] sm:$0xff]
  %v1377 = vld [vmem:[%s15 + $0x3f8] sm:$0xff]
  %v1378 = vld [vmem:[%s15 + $0x400] sm:$0xff]
  %v1379 = vld [vmem:[%s15 + $0x408] sm:$0xff]
  %v1380 = vld [vmem:[%s15 + $0x410] sm:$0xff]
  %v1381 = vld [vmem:[%s15 + $0x418] sm:$0xff]
  %v1382 = vld [vmem:[%s15 + $0x420] sm:$0xff]
  %v1383 = vld [vmem:[%s15 + $0x428] sm:$0xff]
  %v1384 = vld [vmem:[%s15 + $0x430] sm:$0xff]
  %v1385 = vld [vmem:[%s15 + $0x438] sm:$0xff]
  %v1386 = vld [vmem:[%s15 + $0x440] sm:$0xff]
  %v1387 = vld [vmem:[%s15 + $0x448] sm:$0xff]
  %v1388 = vld [vmem:[%s15 + $0x450] sm:$0xff]
  %v1389 = vld [vmem:[%s15 + $0x458] sm:$0xff]
  %v1390 = vld [vmem:[%s15 + $0x460] sm:$0xff]
  %v1391 = vld [vmem:[%s15 + $0x468] sm:$0xff]
  %v1392 = vld [vmem:[%s15 + $0x470] sm:$0xff]
  %v1393 = vld [vmem:[%s15 + $0x478] sm:$0xff]
  %v1394 = vld [vmem:[%s15 + $0x480] sm:$0xff]
  %v1395 = vld [vmem:[%s15 + $0x488] sm:$0xff]
  %v1396 = vld [vmem:[%s15 + $0x490] sm:$0xff]
  %v1397 = vld [vmem:[%s15 + $0x498] sm:$0xff]
  %v1398 = vld [vmem:[%s15 + $0x4a0] sm:$0xff]
  %v1399 = vld [vmem:[%s15 + $0x4a8] sm:$0xff]
  %v1400 = vld [vmem:[%s15 + $0x4b0] sm:$0xff]
  %v1401 = vld [vmem:[%s15 + $0x4b8] sm:$0xff]
  %v1402 = vld [vmem:[%s15 + $0x4c0] sm:$0xff]
  %v1403 = vld [vmem:[%s15 + $0x4c8] sm:$0xff]
  %v1404 = vld [vmem:[%s15 + $0x4d0] sm:$0xff]
  %v1405 = vld [vmem:[%s15 + $0x4d8] sm:$0xff]
  %v1406 = vld [vmem:[%s15 + $0x4e0] sm:$0xff]
  %v1407 = vld [vmem:[%s15 + $0x4e8] sm:$0xff]
  %v1408 = vld [vmem:[%s15 + $0x4f0] sm:$0xff]
  %v1409 = vld [vmem:[%s15 + $0x4f8] sm:$0xff]
  %v1410 = vld [vmem:[%s15 + $0x500] sm:$0xff]
  %v1411 = vld [vmem:[%s15 + $0x508] sm:$0xff]
  %v1412 = vld [vmem:[%s15 + $0x510] sm:$0xff]
  %v1413 = vld [vmem:[%s15 + $0x518] sm:$0xff]
  %v1414 = vld [vmem:[%s15 + $0x520] sm:$0xff]
  %v1415 = vld [vmem:[%s15 + $0x528] sm:$0xff]
  %v1416 = vld [vmem:[%s15 + $0x530] sm:$0xff]
  %v1417 = vld [vmem:[%s15 + $0x538] sm:$0xff]
  %v1418 = vld [vmem:[%s15 + $0x540] sm:$0xff]
  %v1419 = vld [vmem:[%s15 + $0x548] sm:$0xff]
  %v1420 = vld [vmem:[%s15 + $0x550] sm:$0xff]
  %v1421 = vld [vmem:[%s15 + $0x558] sm:$0xff]
  %v1422 = vld [vmem:[%s15 + $0x560] sm:$0xff]
  %v1423 = vld [vmem:[%s15 + $0x568] sm:$0xff]
  %v1424 = vld [vmem:[%s15 + $0x570] sm:$0xff]
  %v1425 = vld [vmem:[%s15 + $0x578] sm:$0xff]
  %v1426 = vld [vmem:[%s15 + $0x580] sm:$0xff]
  %v1427 = vld [vmem:[%s15 + $0x588] sm:$0xff]
  %v1428 = vld [vmem:[%s15 + $0x590] sm:$0xff]
  %v1429 = vld [vmem:[%s15 + $0x598] sm:$0xff]
  %v1430 = vld [vmem:[%s15 + $0x5a0] sm:$0xff]
  %v1431 = vld [vmem:[%s15 + $0x5a8] sm:$0xff]
  %v1432 = vld [vmem:[%s15 + $0x5b0] sm:$0xff]
  %v1433 = vld [vmem:[%s15 + $0x5b8] sm:$0xff]
  %v1434 = vld [vmem:[%s15 + $0x5c0] sm:$0xff]
  %v1435 = vld [vmem:[%s15 + $0x5c8] sm:$0xff]
  %v1436 = vld [vmem:[%s15 + $0x5d0] sm:$0xff]
  %v1437 = vld [vmem:[%s15 + $0x5d8] sm:$0xff]
  %v1438 = vld [vmem:[%s15 + $0x5e0] sm:$0xff]
  %v1439 = vld [vmem:[%s15 + $0x5e8] sm:$0xff]
  %v1440 = vld [vmem:[%s15 + $0x5f0] sm:$0xff]
  %v1441 = vld [vmem:[%s15 + $0x5f8] sm:$0xff]
  %v1442 = vld [vmem:[%s15 + $0x600] sm:$0xff]
  %v1443 = vld [vmem:[%s15 + $0x608] sm:$0xff]
  %v1444 = vld [vmem:[%s15 + $0x610] sm:$0xff]
  %v1445 = vld [vmem:[%s15 + $0x618] sm:$0xff]
  %v1446 = vld [vmem:[%s15 + $0x620] sm:$0xff]
  %v1447 = vld [vmem:[%s15 + $0x628] sm:$0xff]
  %v1448 = vld [vmem:[%s15 + $0x630] sm:$0xff]
  %v1449 = vld [vmem:[%s15 + $0x638] sm:$0xff]
  %v1450 = vld [vmem:[%s15 + $0x640] sm:$0xff]
  %v1451 = vld [vmem:[%s15 + $0x648] sm:$0xff]
  %v1452 = vld [vmem:[%s15 + $0x650] sm:$0xff]
  %v1453 = vld [vmem:[%s15 + $0x658] sm:$0xff]
  %v1454 = vld [vmem:[%s15 + $0x660] sm:$0xff]
  %v1455 = vld [vmem:[%s15 + $0x668] sm:$0xff]
  %v1456 = vld [vmem:[%s15 + $0x670] sm:$0xff]
  %v1457 = vld [vmem:[%s15 + $0x678] sm:$0xff]
  %v1458 = vld [vmem:[%s15 + $0x680] sm:$0xff]
  %v1459 = vld [vmem:[%s15 + $0x688] sm:$0xff]
  %v1460 = vld [vmem:[%s15 + $0x690] sm:$0xff]
  %v1461 = vld [vmem:[%s15 + $0x698] sm:$0xff]
  %v1462 = vld [vmem:[%s15 + $0x6a0] sm:$0xff]
  %v1463 = vld [vmem:[%s15 + $0x6a8] sm:$0xff]
  %v1464 = vld [vmem:[%s15 + $0x6b0] sm:$0xff]
  %v1465 = vld [vmem:[%s15 + $0x6b8] sm:$0xff]
  %v1466 = vld [vmem:[%s15 + $0x6c0] sm:$0xff]
  %v1467 = vld [vmem:[%s15 + $0x6c8] sm:$0xff]
  %v1468 = vld [vmem:[%s15 + $0x6d0] sm:$0xff]
  %v1469 = vld [vmem:[%s15 + $0x6d8] sm:$0xff]
  %v1470 = vld [vmem:[%s15 + $0x6e0] sm:$0xff]
  %v1471 = vld [vmem:[%s15 + $0x6e8] sm:$0xff]
  %v1472 = vld [vmem:[%s15 + $0x6f0] sm:$0x7]
  %v1473 = vld [vmem:[%s15 + $0x6f8] sm:$0x7]
  %v1474 = vld [vmem:[%s15 + $0x700] sm:$0x7]
  %1480 = vrot.lane.b32.xlu0 %v1245, 127
  %v1481 = vpop.permute.xlu0 %1480
  %1482 = vrot.lane.b32.xlu0 %v1246, 127
  %v1483 = vpop.permute.xlu0 %1482
  %1484 = vrot.lane.b32.xlu0 %v1247, 127
  %v1485 = vpop.permute.xlu0 %1484
  %1486 = vrot.lane.b32.xlu0 %v1248, 127
  %v1487 = vpop.permute.xlu0 %1486
  %1488 = vrot.lane.b32.xlu0 %v1249, 127
  %v1489 = vpop.permute.xlu0 %1488
  %v1490 = vsel %vm144, %v1481, %v1483
  %v1491 = vsel %vm144, %v1483, %v1485
  %v1492 = vsel %vm144, %v1485, %v1487
  %v1493 = vsel %vm144, %v1487, %v1489
  %vm1498 = vcmask 678912
  %v1499 = vsel %vm1498, %v1489, 0
  %vm1501 = vcmask 1042432
  %v1503 = vsel %vm1501, %v1472, 0
  %v1506 = vsel %vm1501, %v1473, 0
  %v1509 = vsel %vm1501, %v1474, 0
  %1511 = vmatprep.subr.mxu0 %v1296
  %1512 = vmatpush1.msra.mxu0 %v1295
  %1513 = vmatprep.subr.mxu0 %v1293
  %1514 = vmatpush1.msra.mxu0 %v1292
  %1515 = vmatprep.subr.mxu0 %v1290
  %1516 = vmatpush1.msra.mxu0 %v1289
  %1517 = vmatprep.subr.mxu0 %v1287
  %1518 = vmatpush1.msra.mxu0 %v1286
  %1519 = vmatprep.subr.mxu0 %v1284
  %1520 = vmatpush1.msra.mxu0 %v1283
  %1521 = vmatprep.subr.mxu0 %v1281
  %1522 = vmatpush1.msra.mxu0 %v1280
  %1523 = vmatprep.subr.mxu0 %v1278
  %1524 = vmatpush1.msra.mxu0 %v1277
  %1525 = vmatprep.subr.mxu0 %v1275
  %1526 = vmatpush1.msra.mxu0 %v1274
  %1527 = vmatprep.subr.mxu0 %v1272
  %1528 = vmatpush1.msra.mxu0 %v1271
  %1529 = vmatprep.subr.mxu0 %v1269
  %1530 = vmatpush1.msra.mxu0 %v1268
  %1531 = vmatprep.subr.mxu0 %v1266
  %1532 = vmatpush1.msra.mxu0 %v1265
  %1533 = vmatprep.subr.mxu0 %v1263
  %1534 = vmatpush1.msra.mxu0 %v1262
  %1535 = vmatprep.subr.mxu0 %v1260
  %1536 = vmatpush1.msra.mxu0 %v1259
  %1537 = vmatprep.subr.mxu0 %v1257
  %1538 = vmatpush1.msra.mxu0 %v1256
  %1539 = vmatprep.subr.mxu0 %v1254
  %1540 = vmatpush1.msra.mxu0 %v1253
  %1541 = vmatprep.subr.mxu0 %v1251
  %1542 = vmatpush1.msra.mxu0 %v1250
  %1543 = vmatprep.subr.mxu0 %v1344
  %1544 = vmatpush2.msra.mxu0 %v1343
  %1545 = vmatprep.subr.mxu0 %v1341
  %1546 = vmatpush2.msra.mxu0 %v1340
  %1547 = vmatprep.subr.mxu0 %v1338
  %1548 = vmatpush2.msra.mxu0 %v1337
  %1549 = vmatprep.subr.mxu0 %v1335
  %1550 = vmatpush2.msra.mxu0 %v1334
  %1551 = vmatprep.subr.mxu0 %v1332
  %1552 = vmatpush2.msra.mxu0 %v1331
  %1553 = vmatprep.subr.mxu0 %v1329
  %1554 = vmatpush2.msra.mxu0 %v1328
  %1555 = vmatprep.subr.mxu0 %v1326
  %1556 = vmatpush2.msra.mxu0 %v1325
  %1557 = vmatprep.subr.mxu0 %v1323
  %1558 = vmatpush2.msra.mxu0 %v1322
  %1559 = vmatprep.subr.mxu0 %v1320
  %1560 = vmatpush2.msra.mxu0 %v1319
  %1561 = vmatprep.subr.mxu0 %v1317
  %1562 = vmatpush2.msra.mxu0 %v1316
  %1563 = vmatprep.subr.mxu0 %v1314
  %1564 = vmatpush2.msra.mxu0 %v1313
  %1565 = vmatprep.subr.mxu0 %v1311
  %1566 = vmatpush2.msra.mxu0 %v1310
  %1567 = vmatprep.subr.mxu0 %v1308
  %1568 = vmatpush2.msra.mxu0 %v1307
  %1569 = vmatprep.subr.mxu0 %v1305
  %1570 = vmatpush2.msra.mxu0 %v1304
  %1571 = vmatprep.subr.mxu0 %v1302
  %1572 = vmatpush2.msra.mxu0 %v1301
  %1573 = vmatprep.subr.mxu0 %v1299
  %1574 = vmatpush2.msra.mxu0 %v1298
  %1575 = vmatprep.mubr.f32.mxu0 %v1491
  %1576 = vmatmul.mubr.f32.gmra.mxu0 %v1490
  %v1577 = vpop.f32.mrf.mxu0
  %v1578 = vadd.f32 0.0, %v1577
  %v1579 = vpop.f32.mrf.mxu0
  %v1580 = vadd.f32 0.0, %v1579
  %1581 = vdwg.mxu0
  %1582 = vmatprep.subr.mxu0 %v1392
  %1583 = vmatpush1.msra.mxu0 %v1391
  %1584 = vmatprep.subr.mxu0 %v1389
  %1585 = vmatpush1.msra.mxu0 %v1388
  %1586 = vmatprep.subr.mxu0 %v1386
  %1587 = vmatpush1.msra.mxu0 %v1385
  %1588 = vmatprep.subr.mxu0 %v1383
  %1589 = vmatpush1.msra.mxu0 %v1382
  %1590 = vmatprep.subr.mxu0 %v1380
  %1591 = vmatpush1.msra.mxu0 %v1379
  %1592 = vmatprep.subr.mxu0 %v1377
  %1593 = vmatpush1.msra.mxu0 %v1376
  %1594 = vmatprep.subr.mxu0 %v1374
  %1595 = vmatpush1.msra.mxu0 %v1373
  %1596 = vmatprep.subr.mxu0 %v1371
  %1597 = vmatpush1.msra.mxu0 %v1370
  %1598 = vmatprep.subr.mxu0 %v1368
  %1599 = vmatpush1.msra.mxu0 %v1367
  %1600 = vmatprep.subr.mxu0 %v1365
  %1601 = vmatpush1.msra.mxu0 %v1364
  %1602 = vmatprep.subr.mxu0 %v1362
  %1603 = vmatpush1.msra.mxu0 %v1361
  %1604 = vmatprep.subr.mxu0 %v1359
  %1605 = vmatpush1.msra.mxu0 %v1358
  %1606 = vmatprep.subr.mxu0 %v1356
  %1607 = vmatpush1.msra.mxu0 %v1355
  %1608 = vmatprep.subr.mxu0 %v1353
  %1609 = vmatpush1.msra.mxu0 %v1352
  %1610 = vmatprep.subr.mxu0 %v1350
  %1611 = vmatpush1.msra.mxu0 %v1349
  %1612 = vmatprep.subr.mxu0 %v1347
  %1613 = vmatpush1.msra.mxu0 %v1346
  %1614 = vmatprep.subr.mxu0 %v1440
  %1615 = vmatpush2.msra.mxu0 %v1439
  %1616 = vmatprep.subr.mxu0 %v1437
  %1617 = vmatpush2.msra.mxu0 %v1436
  %1618 = vmatprep.subr.mxu0 %v1434
  %1619 = vmatpush2.msra.mxu0 %v1433
  %1620 = vmatprep.subr.mxu0 %v1431
  %1621 = vmatpush2.msra.mxu0 %v1430
  %1622 = vmatprep.subr.mxu0 %v1428
  %1623 = vmatpush2.msra.mxu0 %v1427
  %1624 = vmatprep.subr.mxu0 %v1425
  %1625 = vmatpush2.msra.mxu0 %v1424
  %1626 = vmatprep.subr.mxu0 %v1422
  %1627 = vmatpush2.msra.mxu0 %v1421
  %1628 = vmatprep.subr.mxu0 %v1419
  %1629 = vmatpush2.msra.mxu0 %v1418
  %1630 = vmatprep.subr.mxu0 %v1416
  %1631 = vmatpush2.msra.mxu0 %v1415
  %1632 = vmatprep.subr.mxu0 %v1413
  %1633 = vmatpush2.msra.mxu0 %v1412
  %1634 = vmatprep.subr.mxu0 %v1410
  %1635 = vmatpush2.msra.mxu0 %v1409
  %1636 = vmatprep.subr.mxu0 %v1407
  %1637 = vmatpush2.msra.mxu0 %v1406
  %1638 = vmatprep.subr.mxu0 %v1404
  %1639 = vmatpush2.msra.mxu0 %v1403
  %1640 = vmatprep.subr.mxu0 %v1401
  %1641 = vmatpush2.msra.mxu0 %v1400
  %1642 = vmatprep.subr.mxu0 %v1398
  %1643 = vmatpush2.msra.mxu0 %v1397
  %1644 = vmatprep.subr.mxu0 %v1395
  %1645 = vmatpush2.msra.mxu0 %v1394
  %1646 = vmatprep.mubr.f32.mxu0 %v1493
  %1647 = vmatmul.mubr.f32.gmra.mxu0 %v1492
  %v1648 = vpop.f32.mrf.mxu0
  %v1649 = vadd.f32 %v1578, %v1648
  %v1650 = vpop.f32.mrf.mxu0
  %v1651 = vadd.f32 %v1580, %v1650
  %1652 = vdwg.mxu0
  %1653 = vmatprep.subr.mxu0 0.0
  %1654 = vmatpush1.msra.mxu0 0.0
  %1655 = vmatprep.subr.mxu0 0.0
  %1656 = vmatpush1.msra.mxu0 0.0
  %1657 = vmatprep.subr.mxu0 0.0
  %1658 = vmatpush1.msra.mxu0 0.0
  %1659 = vmatprep.subr.mxu0 0.0
  %1660 = vmatpush1.msra.mxu0 0.0
  %1661 = vmatprep.subr.mxu0 0.0
  %1662 = vmatpush1.msra.mxu0 0.0
  %1663 = vmatprep.subr.mxu0 %v1506
  %1664 = vmatpush1.msra.mxu0 %v1503
  %1665 = vmatprep.subr.mxu0 %v1470
  %1666 = vmatpush1.msra.mxu0 %v1469
  %1667 = vmatprep.subr.mxu0 %v1467
  %1668 = vmatpush1.msra.mxu0 %v1466
  %1669 = vmatprep.subr.mxu0 %v1464
  %1670 = vmatpush1.msra.mxu0 %v1463
  %1671 = vmatprep.subr.mxu0 %v1461
  %1672 = vmatpush1.msra.mxu0 %v1460
  %1673 = vmatprep.subr.mxu0 %v1458
  %1674 = vmatpush1.msra.mxu0 %v1457
  %1675 = vmatprep.subr.mxu0 %v1455
  %1676 = vmatpush1.msra.mxu0 %v1454
  %1677 = vmatprep.subr.mxu0 %v1452
  %1678 = vmatpush1.msra.mxu0 %v1451
  %1679 = vmatprep.subr.mxu0 %v1449
  %1680 = vmatpush1.msra.mxu0 %v1448
  %1681 = vmatprep.subr.mxu0 %v1446
  %1682 = vmatpush1.msra.mxu0 %v1445
  %1683 = vmatprep.subr.mxu0 %v1443
  %1684 = vmatpush1.msra.mxu0 %v1442
  %1685 = vmatprep.subr.mxu0 0.0
  %1686 = vmatpush2.msra.mxu0 0.0
  %1687 = vmatprep.subr.mxu0 0.0
  %1688 = vmatpush2.msra.mxu0 0.0
  %1689 = vmatprep.subr.mxu0 0.0
  %1690 = vmatpush2.msra.mxu0 0.0
  %1691 = vmatprep.subr.mxu0 0.0
  %1692 = vmatpush2.msra.mxu0 0.0
  %1693 = vmatprep.subr.mxu0 0.0
  %1694 = vmatpush2.msra.mxu0 0.0
  %1695 = vmatprep.subr.mxu0 0.0
  %1696 = vmatpush2.msra.mxu0 0.0
  %1697 = vmatprep.subr.mxu0 0.0
  %1698 = vmatpush2.msra.mxu0 0.0
  %1699 = vmatprep.subr.mxu0 0.0
  %1700 = vmatpush2.msra.mxu0 0.0
  %1701 = vmatprep.subr.mxu0 0.0
  %1702 = vmatpush2.msra.mxu0 0.0
  %1703 = vmatprep.subr.mxu0 0.0
  %1704 = vmatpush2.msra.mxu0 0.0
  %1705 = vmatprep.subr.mxu0 0.0
  %1706 = vmatpush2.msra.mxu0 0.0
  %1707 = vmatprep.subr.mxu0 0.0
  %1708 = vmatpush2.msra.mxu0 0.0
  %1709 = vmatprep.subr.mxu0 0.0
  %1710 = vmatpush2.msra.mxu0 0.0
  %1711 = vmatprep.subr.mxu0 0.0
  %1712 = vmatpush2.msra.mxu0 0.0
  %1713 = vmatprep.subr.mxu0 0.0
  %1714 = vmatpush2.msra.mxu0 0.0
  %1715 = vmatprep.subr.mxu0 0.0
  %1716 = vmatpush2.msra.mxu0 0.0
  %1717 = vmatprep.mubr.f32.mxu0 0.0
  %1718 = vmatmul.mubr.f32.gmra.mxu0 %v1499
  %v1719 = vpop.f32.mrf.mxu0
  %v1720 = vadd.f32 %v1649, %v1719
  %v1721 = vpop.f32.mrf.mxu0
  %v1722 = vadd.f32 %v1651, %v1721
  %1723 = vdwg.mxu0
  %1724 = vmatprep.subr.mxu0 0.0
  %1725 = vmatpush1.msra.mxu0 %v1297
  %1726 = vmatprep.subr.mxu0 0.0
  %1727 = vmatpush1.msra.mxu0 %v1294
  %1728 = vmatprep.subr.mxu0 0.0
  %1729 = vmatpush1.msra.mxu0 %v1291
  %1730 = vmatprep.subr.mxu0 0.0
  %1731 = vmatpush1.msra.mxu0 %v1288
  %1732 = vmatprep.subr.mxu0 0.0
  %1733 = vmatpush1.msra.mxu0 %v1285
  %1734 = vmatprep.subr.mxu0 0.0
  %1735 = vmatpush1.msra.mxu0 %v1282
  %1736 = vmatprep.subr.mxu0 0.0
  %1737 = vmatpush1.msra.mxu0 %v1279
  %1738 = vmatprep.subr.mxu0 0.0
  %1739 = vmatpush1.msra.mxu0 %v1276
  %1740 = vmatprep.subr.mxu0 0.0
  %1741 = vmatpush1.msra.mxu0 %v1273
  %1742 = vmatprep.subr.mxu0 0.0
  %1743 = vmatpush1.msra.mxu0 %v1270
  %1744 = vmatprep.subr.mxu0 0.0
  %1745 = vmatpush1.msra.mxu0 %v1267
  %1746 = vmatprep.subr.mxu0 0.0
  %1747 = vmatpush1.msra.mxu0 %v1264
  %1748 = vmatprep.subr.mxu0 0.0
  %1749 = vmatpush1.msra.mxu0 %v1261
  %1750 = vmatprep.subr.mxu0 0.0
  %1751 = vmatpush1.msra.mxu0 %v1258
  %1752 = vmatprep.subr.mxu0 0.0
  %1753 = vmatpush1.msra.mxu0 %v1255
  %1754 = vmatprep.subr.mxu0 0.0
  %1755 = vmatpush1.msra.mxu0 %v1252
  %1756 = vmatprep.subr.mxu0 0.0
  %1757 = vmatpush2.msra.mxu0 %v1345
  %1758 = vmatprep.subr.mxu0 0.0
  %1759 = vmatpush2.msra.mxu0 %v1342
  %1760 = vmatprep.subr.mxu0 0.0
  %1761 = vmatpush2.msra.mxu0 %v1339
  %1762 = vmatprep.subr.mxu0 0.0
  %1763 = vmatpush2.msra.mxu0 %v1336
  %1764 = vmatprep.subr.mxu0 0.0
  %1765 = vmatpush2.msra.mxu0 %v1333
  %1766 = vmatprep.subr.mxu0 0.0
  %1767 = vmatpush2.msra.mxu0 %v1330
  %1768 = vmatprep.subr.mxu0 0.0
  %1769 = vmatpush2.msra.mxu0 %v1327
  %1770 = vmatprep.subr.mxu0 0.0
  %1771 = vmatpush2.msra.mxu0 %v1324
  %1772 = vmatprep.subr.mxu0 0.0
  %1773 = vmatpush2.msra.mxu0 %v1321
  %1774 = vmatprep.subr.mxu0 0.0
  %1775 = vmatpush2.msra.mxu0 %v1318
  %1776 = vmatprep.subr.mxu0 0.0
  %1777 = vmatpush2.msra.mxu0 %v1315
  %1778 = vmatprep.subr.mxu0 0.0
  %1779 = vmatpush2.msra.mxu0 %v1312
  %1780 = vmatprep.subr.mxu0 0.0
  %1781 = vmatpush2.msra.mxu0 %v1309
  %1782 = vmatprep.subr.mxu0 0.0
  %1783 = vmatpush2.msra.mxu0 %v1306
  %1784 = vmatprep.subr.mxu0 0.0
  %1785 = vmatpush2.msra.mxu0 %v1303
  %1786 = vmatprep.subr.mxu0 0.0
  %1787 = vmatpush2.msra.mxu0 %v1300
  %1788 = vmatprep.mubr.f32.mxu0 %v1491
  %1789 = vmatmul.mubr.f32.gmra.mxu0 %v1490
  %v1790 = vpop.f32.mrf.mxu0
  %v1791 = vadd.f32 0.0, %v1790
  %v1792 = vpop.f32.mrf.mxu0
  %1793 = vdwg.mxu0
  %1794 = vmatprep.subr.mxu0 0.0
  %1795 = vmatpush1.msra.mxu0 %v1393
  %1796 = vmatprep.subr.mxu0 0.0
  %1797 = vmatpush1.msra.mxu0 %v1390
  %1798 = vmatprep.subr.mxu0 0.0
  %1799 = vmatpush1.msra.mxu0 %v1387
  %1800 = vmatprep.subr.mxu0 0.0
  %1801 = vmatpush1.msra.mxu0 %v1384
  %1802 = vmatprep.subr.mxu0 0.0
  %1803 = vmatpush1.msra.mxu0 %v1381
  %1804 = vmatprep.subr.mxu0 0.0
  %1805 = vmatpush1.msra.mxu0 %v1378
  %1806 = vmatprep.subr.mxu0 0.0
  %1807 = vmatpush1.msra.mxu0 %v1375
  %1808 = vmatprep.subr.mxu0 0.0
  %1809 = vmatpush1.msra.mxu0 %v1372
  %1810 = vmatprep.subr.mxu0 0.0
  %1811 = vmatpush1.msra.mxu0 %v1369
  %1812 = vmatprep.subr.mxu0 0.0
  %1813 = vmatpush1.msra.mxu0 %v1366
  %1814 = vmatprep.subr.mxu0 0.0
  %1815 = vmatpush1.msra.mxu0 %v1363
  %1816 = vmatprep.subr.mxu0 0.0
  %1817 = vmatpush1.msra.mxu0 %v1360
  %1818 = vmatprep.subr.mxu0 0.0
  %1819 = vmatpush1.msra.mxu0 %v1357
  %1820 = vmatprep.subr.mxu0 0.0
  %1821 = vmatpush1.msra.mxu0 %v1354
  %1822 = vmatprep.subr.mxu0 0.0
  %1823 = vmatpush1.msra.mxu0 %v1351
  %1824 = vmatprep.subr.mxu0 0.0
  %1825 = vmatpush1.msra.mxu0 %v1348
  %1826 = vmatprep.subr.mxu0 0.0
  %1827 = vmatpush2.msra.mxu0 %v1441
  %1828 = vmatprep.subr.mxu0 0.0
  %1829 = vmatpush2.msra.mxu0 %v1438
  %1830 = vmatprep.subr.mxu0 0.0
  %1831 = vmatpush2.msra.mxu0 %v1435
  %1832 = vmatprep.subr.mxu0 0.0
  %1833 = vmatpush2.msra.mxu0 %v1432
  %1834 = vmatprep.subr.mxu0 0.0
  %1835 = vmatpush2.msra.mxu0 %v1429
  %1836 = vmatprep.subr.mxu0 0.0
  %1837 = vmatpush2.msra.mxu0 %v1426
  %1838 = vmatprep.subr.mxu0 0.0
  %1839 = vmatpush2.msra.mxu0 %v1423
  %1840 = vmatprep.subr.mxu0 0.0
  %1841 = vmatpush2.msra.mxu0 %v1420
  %1842 = vmatprep.subr.mxu0 0.0
  %1843 = vmatpush2.msra.mxu0 %v1417
  %1844 = vmatprep.subr.mxu0 0.0
  %1845 = vmatpush2.msra.mxu0 %v1414
  %1846 = vmatprep.subr.mxu0 0.0
  %1847 = vmatpush2.msra.mxu0 %v1411
  %1848 = vmatprep.subr.mxu0 0.0
  %1849 = vmatpush2.msra.mxu0 %v1408
  %1850 = vmatprep.subr.mxu0 0.0
  %1851 = vmatpush2.msra.mxu0 %v1405
  %1852 = vmatprep.subr.mxu0 0.0
  %1853 = vmatpush2.msra.mxu0 %v1402
  %1854 = vmatprep.subr.mxu0 0.0
  %1855 = vmatpush2.msra.mxu0 %v1399
  %1856 = vmatprep.subr.mxu0 0.0
  %1857 = vmatpush2.msra.mxu0 %v1396
  %1858 = vmatprep.mubr.f32.mxu0 %v1493
  %1859 = vmatmul.mubr.f32.gmra.mxu0 %v1492
  %v1860 = vpop.f32.mrf.mxu0
  %v1861 = vadd.f32 %v1791, %v1860
  %v1862 = vpop.f32.mrf.mxu0
  %1863 = vdwg.mxu0
  %1864 = vmatprep.subr.mxu0 0.0
  %1865 = vmatpush1.msra.mxu0 0.0
  %1866 = vmatprep.subr.mxu0 0.0
  %1867 = vmatpush1.msra.mxu0 0.0
  %1868 = vmatprep.subr.mxu0 0.0
  %1869 = vmatpush1.msra.mxu0 0.0
  %1870 = vmatprep.subr.mxu0 0.0
  %1871 = vmatpush1.msra.mxu0 0.0
  %1872 = vmatprep.subr.mxu0 0.0
  %1873 = vmatpush1.msra.mxu0 0.0
  %1874 = vmatprep.subr.mxu0 0.0
  %1875 = vmatpush1.msra.mxu0 %v1509
  %1876 = vmatprep.subr.mxu0 0.0
  %1877 = vmatpush1.msra.mxu0 %v1471
  %1878 = vmatprep.subr.mxu0 0.0
  %1879 = vmatpush1.msra.mxu0 %v1468
  %1880 = vmatprep.subr.mxu0 0.0
  %1881 = vmatpush1.msra.mxu0 %v1465
  %1882 = vmatprep.subr.mxu0 0.0
  %1883 = vmatpush1.msra.mxu0 %v1462
  %1884 = vmatprep.subr.mxu0 0.0
  %1885 = vmatpush1.msra.mxu0 %v1459
  %1886 = vmatprep.subr.mxu0 0.0
  %1887 = vmatpush1.msra.mxu0 %v1456
  %1888 = vmatprep.subr.mxu0 0.0
  %1889 = vmatpush1.msra.mxu0 %v1453
  %1890 = vmatprep.subr.mxu0 0.0
  %1891 = vmatpush1.msra.mxu0 %v1450
  %1892 = vmatprep.subr.mxu0 0.0
  %1893 = vmatpush1.msra.mxu0 %v1447
  %1894 = vmatprep.subr.mxu0 0.0
  %1895 = vmatpush1.msra.mxu0 %v1444
  %1896 = vmatprep.subr.mxu0 0.0
  %1897 = vmatpush2.msra.mxu0 0.0
  %1898 = vmatprep.subr.mxu0 0.0
  %1899 = vmatpush2.msra.mxu0 0.0
  %1900 = vmatprep.subr.mxu0 0.0
  %1901 = vmatpush2.msra.mxu0 0.0
  %1902 = vmatprep.subr.mxu0 0.0
  %1903 = vmatpush2.msra.mxu0 0.0
  %1904 = vmatprep.subr.mxu0 0.0
  %1905 = vmatpush2.msra.mxu0 0.0
  %1906 = vmatprep.subr.mxu0 0.0
  %1907 = vmatpush2.msra.mxu0 0.0
  %1908 = vmatprep.subr.mxu0 0.0
  %1909 = vmatpush2.msra.mxu0 0.0
  %1910 = vmatprep.subr.mxu0 0.0
  %1911 = vmatpush2.msra.mxu0 0.0
  %1912 = vmatprep.subr.mxu0 0.0
  %1913 = vmatpush2.msra.mxu0 0.0
  %1914 = vmatprep.subr.mxu0 0.0
  %1915 = vmatpush2.msra.mxu0 0.0
  %1916 = vmatprep.subr.mxu0 0.0
  %1917 = vmatpush2.msra.mxu0 0.0
  %1918 = vmatprep.subr.mxu0 0.0
  %1919 = vmatpush2.msra.mxu0 0.0
  %1920 = vmatprep.subr.mxu0 0.0
  %1921 = vmatpush2.msra.mxu0 0.0
  %1922 = vmatprep.subr.mxu0 0.0
  %1923 = vmatpush2.msra.mxu0 0.0
  %1924 = vmatprep.subr.mxu0 0.0
  %1925 = vmatpush2.msra.mxu0 0.0
  %1926 = vmatprep.subr.mxu0 0.0
  %1927 = vmatpush2.msra.mxu0 0.0
  %1928 = vmatprep.mubr.f32.mxu0 0.0
  %1929 = vmatmul.mubr.f32.gmra.mxu0 %v1499
  %v1930 = vpop.f32.mrf.mxu0
  %v1931 = vadd.f32 %v1861, %v1930
  %v1932 = vpop.f32.mrf.mxu0
  %1933 = vdwg.mxu0
  %v1934 = vld [vmem:[%s5] sm:$0xff]
  %1936 = vset.pattern.permute.xlu0 0
  %1937 = vperm.xlu0 %1936, %v1934
  %v1938 = vpop.permute.xlu0 %1937
  %v1940 = vlaneseq
  %v1941 = vshrl.u32 %v1940, 7
  %v1942 = vsub.s32 0, %v1941
  %v1943 = vrot.slane %v1720, %v1942
  %v1944 = vlaneseq
  %v1945 = vshrl.u32 %v1944, 7
  %v1946 = vsub.s32 0, %v1945
  %v1947 = vrot.slane %v1722, %v1946
  %v1948 = vlaneseq
  %v1949 = vshrl.u32 %v1948, 7
  %v1950 = vsub.s32 0, %v1949
  %v1951 = vrot.slane %v1931, %v1950
  %v1952 = vmul.f32 %v1938, %v1943
  %v1953 = vmul.f32 %v1938, %v1947
  %v1954 = vmul.f32 %v1938, %v1951
  %v1955 = vadd.f32 %v1952, 0.0
  %v1956 = vadd.f32 %v1953, 0.0
  %v1957 = vadd.f32 %v1954, 0.0
  %1958 = vset.pattern.permute.xlu0 1
  %1959 = vperm.xlu0 %1958, %v1934
  %v1960 = vpop.permute.xlu0 %1959
  %v1962 = vlaneseq
  %v1963 = vshrl.u32 %v1962, 7
  %v1964 = vsub.s32 1, %v1963
  %v1965 = vrot.slane %v1720, %v1964
  %v1966 = vlaneseq
  %v1967 = vshrl.u32 %v1966, 7
  %v1968 = vsub.s32 1, %v1967
  %v1969 = vrot.slane %v1722, %v1968
  %v1970 = vlaneseq
  %v1971 = vshrl.u32 %v1970, 7
  %v1972 = vsub.s32 1, %v1971
  %v1973 = vrot.slane %v1931, %v1972
  %v1974 = vmul.f32 %v1960, %v1965
  %v1975 = vmul.f32 %v1960, %v1969
  %v1976 = vmul.f32 %v1960, %v1973
  %v1977 = vadd.f32 %v1955, %v1974
  %v1978 = vadd.f32 %v1956, %v1975
  %v1979 = vadd.f32 %v1957, %v1976
  %1980 = vset.pattern.permute.xlu0 2
  %1981 = vperm.xlu0 %1980, %v1934
  %v1982 = vpop.permute.xlu0 %1981
  %v1984 = vlaneseq
  %v1985 = vshrl.u32 %v1984, 7
  %v1986 = vsub.s32 2, %v1985
  %v1987 = vrot.slane %v1720, %v1986
  %v1988 = vlaneseq
  %v1989 = vshrl.u32 %v1988, 7
  %v1990 = vsub.s32 2, %v1989
  %v1991 = vrot.slane %v1722, %v1990
  %v1992 = vlaneseq
  %v1993 = vshrl.u32 %v1992, 7
  %v1994 = vsub.s32 2, %v1993
  %v1995 = vrot.slane %v1931, %v1994
  %v1996 = vmul.f32 %v1982, %v1987
  %v1997 = vmul.f32 %v1982, %v1991
  %v1998 = vmul.f32 %v1982, %v1995
  %v1999 = vadd.f32 %v1977, %v1996
  %v2000 = vadd.f32 %v1978, %v1997
  %v2001 = vadd.f32 %v1979, %v1998
  %2002 = vset.pattern.permute.xlu0 3
  %2003 = vperm.xlu0 %2002, %v1934
  %v2004 = vpop.permute.xlu0 %2003
  %v2006 = vlaneseq
  %v2007 = vshrl.u32 %v2006, 7
  %v2008 = vsub.s32 3, %v2007
  %v2009 = vrot.slane %v1720, %v2008
  %v2010 = vlaneseq
  %v2011 = vshrl.u32 %v2010, 7
  %v2012 = vsub.s32 3, %v2011
  %v2013 = vrot.slane %v1722, %v2012
  %v2014 = vlaneseq
  %v2015 = vshrl.u32 %v2014, 7
  %v2016 = vsub.s32 3, %v2015
  %v2017 = vrot.slane %v1931, %v2016
  %v2018 = vmul.f32 %v2004, %v2009
  %v2019 = vmul.f32 %v2004, %v2013
  %v2020 = vmul.f32 %v2004, %v2017
  %v2021 = vadd.f32 %v1999, %v2018
  %v2022 = vadd.f32 %v2000, %v2019
  %v2023 = vadd.f32 %v2001, %v2020
  %s2024 = scalar_lea.vmem %s5, 8
  %v2025 = vld [vmem:[%s2024] sm:$0xff]
  %2027 = vset.pattern.permute.xlu0 0
  %2028 = vperm.xlu0 %2027, %v2025
  %v2029 = vpop.permute.xlu0 %2028
  %v2031 = vmul.f32 %v2029, %v1943
  %v2032 = vmul.f32 %v2029, %v1947
  %v2033 = vmul.f32 %v2029, %v1951
  %2037 = vrot.lane.b32.xlu0 %v2031, 127
  %v2038 = vpop.permute.xlu0 %2037
  %2039 = vrot.lane.b32.xlu0 %v2032, 127
  %v2040 = vpop.permute.xlu0 %2039
  %2041 = vrot.lane.b32.xlu0 %v2033, 127
  %v2042 = vpop.permute.xlu0 %2041
  %v2043 = vsel %vm144, %v2038, %v2040
  %v2044 = vsel %vm144, %v2040, %v2042
  %v2048 = vadd.f32 %v2021, %v2043
  %v2049 = vadd.f32 %v2022, %v2044
  %v2050 = vadd.f32 %v2023, %v2042
  %2051 = vset.pattern.permute.xlu0 1
  %2052 = vperm.xlu0 %2051, %v2025
  %v2053 = vpop.permute.xlu0 %2052
  %v2055 = vmul.f32 %v2053, %v1965
  %v2056 = vmul.f32 %v2053, %v1969
  %v2057 = vmul.f32 %v2053, %v1973
  %2061 = vrot.lane.b32.xlu0 %v2055, 127
  %v2062 = vpop.permute.xlu0 %2061
  %2063 = vrot.lane.b32.xlu0 %v2056, 127
  %v2064 = vpop.permute.xlu0 %2063
  %2065 = vrot.lane.b32.xlu0 %v2057, 127
  %v2066 = vpop.permute.xlu0 %2065
  %v2067 = vsel %vm144, %v2062, %v2064
  %v2068 = vsel %vm144, %v2064, %v2066
  %v2072 = vadd.f32 %v2048, %v2067
  %v2073 = vadd.f32 %v2049, %v2068
  %v2074 = vadd.f32 %v2050, %v2066
  %2075 = vset.pattern.permute.xlu0 2
  %2076 = vperm.xlu0 %2075, %v2025
  %v2077 = vpop.permute.xlu0 %2076
  %v2079 = vmul.f32 %v2077, %v1987
  %v2080 = vmul.f32 %v2077, %v1991
  %v2081 = vmul.f32 %v2077, %v1995
  %2085 = vrot.lane.b32.xlu0 %v2079, 127
  %v2086 = vpop.permute.xlu0 %2085
  %2087 = vrot.lane.b32.xlu0 %v2080, 127
  %v2088 = vpop.permute.xlu0 %2087
  %2089 = vrot.lane.b32.xlu0 %v2081, 127
  %v2090 = vpop.permute.xlu0 %2089
  %v2091 = vsel %vm144, %v2086, %v2088
  %v2092 = vsel %vm144, %v2088, %v2090
  %v2096 = vadd.f32 %v2072, %v2091
  %v2097 = vadd.f32 %v2073, %v2092
  %v2098 = vadd.f32 %v2074, %v2090
  %2099 = vset.pattern.permute.xlu0 3
  %2100 = vperm.xlu0 %2099, %v2025
  %v2101 = vpop.permute.xlu0 %2100
  %v2103 = vmul.f32 %v2101, %v2009
  %v2104 = vmul.f32 %v2101, %v2013
  %v2105 = vmul.f32 %v2101, %v2017
  %2109 = vrot.lane.b32.xlu0 %v2103, 127
  %v2110 = vpop.permute.xlu0 %2109
  %2111 = vrot.lane.b32.xlu0 %v2104, 127
  %v2112 = vpop.permute.xlu0 %2111
  %2113 = vrot.lane.b32.xlu0 %v2105, 127
  %v2114 = vpop.permute.xlu0 %2113
  %v2115 = vsel %vm144, %v2110, %v2112
  %v2116 = vsel %vm144, %v2112, %v2114
  %v2120 = vadd.f32 %v2096, %v2115
  %v2121 = vadd.f32 %v2097, %v2116
  %v2122 = vadd.f32 %v2098, %v2114
  %s2123 = scalar_lea.vmem %s5, 16
  %v2124 = vld [vmem:[%s2123] sm:$0xff]
  %2126 = vset.pattern.permute.xlu0 0
  %2127 = vperm.xlu0 %2126, %v2124
  %v2128 = vpop.permute.xlu0 %2127
  %v2130 = vmul.f32 %v2128, %v1943
  %v2131 = vmul.f32 %v2128, %v1947
  %v2132 = vmul.f32 %v2128, %v1951
  %2136 = vrot.lane.b32.xlu0 %v2130, 126
  %v2137 = vpop.permute.xlu0 %2136
  %2138 = vrot.lane.b32.xlu0 %v2131, 126
  %v2139 = vpop.permute.xlu0 %2138
  %2140 = vrot.lane.b32.xlu0 %v2132, 126
  %v2141 = vpop.permute.xlu0 %2140
  %v2142 = vsel %vm186, %v2137, %v2139
  %v2143 = vsel %vm186, %v2139, %v2141
  %v2147 = vadd.f32 %v2120, %v2142
  %v2148 = vadd.f32 %v2121, %v2143
  %v2149 = vadd.f32 %v2122, %v2141
  %2150 = vset.pattern.permute.xlu0 1
  %2151 = vperm.xlu0 %2150, %v2124
  %v2152 = vpop.permute.xlu0 %2151
  %v2154 = vmul.f32 %v2152, %v1965
  %v2155 = vmul.f32 %v2152, %v1969
  %v2156 = vmul.f32 %v2152, %v1973
  %2160 = vrot.lane.b32.xlu0 %v2154, 126
  %v2161 = vpop.permute.xlu0 %2160
  %2162 = vrot.lane.b32.xlu0 %v2155, 126
  %v2163 = vpop.permute.xlu0 %2162
  %2164 = vrot.lane.b32.xlu0 %v2156, 126
  %v2165 = vpop.permute.xlu0 %2164
  %v2166 = vsel %vm186, %v2161, %v2163
  %v2167 = vsel %vm186, %v2163, %v2165
  %v2171 = vadd.f32 %v2147, %v2166
  %v2172 = vadd.f32 %v2148, %v2167
  %v2173 = vadd.f32 %v2149, %v2165
  %2174 = vset.pattern.permute.xlu0 2
  %2175 = vperm.xlu0 %2174, %v2124
  %v2176 = vpop.permute.xlu0 %2175
  %v2178 = vmul.f32 %v2176, %v1987
  %v2179 = vmul.f32 %v2176, %v1991
  %v2180 = vmul.f32 %v2176, %v1995
  %2184 = vrot.lane.b32.xlu0 %v2178, 126
  %v2185 = vpop.permute.xlu0 %2184
  %2186 = vrot.lane.b32.xlu0 %v2179, 126
  %v2187 = vpop.permute.xlu0 %2186
  %2188 = vrot.lane.b32.xlu0 %v2180, 126
  %v2189 = vpop.permute.xlu0 %2188
  %v2190 = vsel %vm186, %v2185, %v2187
  %v2191 = vsel %vm186, %v2187, %v2189
  %v2195 = vadd.f32 %v2171, %v2190
  %v2196 = vadd.f32 %v2172, %v2191
  %v2197 = vadd.f32 %v2173, %v2189
  %2198 = vset.pattern.permute.xlu0 3
  %2199 = vperm.xlu0 %2198, %v2124
  %v2200 = vpop.permute.xlu0 %2199
  %v2202 = vmul.f32 %v2200, %v2009
  %v2203 = vmul.f32 %v2200, %v2013
  %v2204 = vmul.f32 %v2200, %v2017
  %2208 = vrot.lane.b32.xlu0 %v2202, 126
  %v2209 = vpop.permute.xlu0 %2208
  %2210 = vrot.lane.b32.xlu0 %v2203, 126
  %v2211 = vpop.permute.xlu0 %2210
  %2212 = vrot.lane.b32.xlu0 %v2204, 126
  %v2213 = vpop.permute.xlu0 %2212
  %v2214 = vsel %vm186, %v2209, %v2211
  %v2215 = vsel %vm186, %v2211, %v2213
  %v2219 = vadd.f32 %v2195, %v2214
  %v2220 = vadd.f32 %v2196, %v2215
  %v2221 = vadd.f32 %v2197, %v2213
  %v2222 = vld [vmem:[%s6] sm:$0xff]
  %2224 = vset.pattern.permute.xlu0 0
  %2225 = vperm.xlu0 %2224, %v2222
  %v2226 = vpop.permute.xlu0 %2225
  %v2228 = vadd.f32 %v2219, %v2226
  %v2229 = vadd.f32 %v2220, %v2226
  %v2230 = vadd.f32 %v2221, %v2226
  %v2231 = vmax.f32 %v2228, 0.0
  %v2232 = vmax.f32 %v2229, 0.0
  %v2233 = vmax.f32 %v2230, 0.0
  %v2234 = vld [vmem:[%s7] sm:$0xff]
  %2236 = vset.pattern.permute.xlu0 0
  %2237 = vperm.xlu0 %2236, %v2234
  %v2238 = vpop.permute.xlu0 %2237
  %v2240 = vlaneseq
  %v2241 = vshrl.u32 %v2240, 7
  %v2242 = vsub.s32 0, %v2241
  %v2243 = vrot.slane %v2231, %v2242
  %v2244 = vlaneseq
  %v2245 = vshrl.u32 %v2244, 7
  %v2246 = vsub.s32 0, %v2245
  %v2247 = vrot.slane %v2232, %v2246
  %v2248 = vlaneseq
  %v2249 = vshrl.u32 %v2248, 7
  %v2250 = vsub.s32 0, %v2249
  %v2251 = vrot.slane %v2233, %v2250
  %v2252 = vmul.f32 %v2238, %v2243
  %v2253 = vmul.f32 %v2238, %v2247
  %v2254 = vmul.f32 %v2238, %v2251
  %v2255 = vadd.f32 %v2252, 0.0
  %v2256 = vadd.f32 %v2253, 0.0
  %v2257 = vadd.f32 %v2254, 0.0
  %2258 = vset.pattern.permute.xlu0 1
  %2259 = vperm.xlu0 %2258, %v2234
  %v2260 = vpop.permute.xlu0 %2259
  %v2262 = vlaneseq
  %v2263 = vshrl.u32 %v2262, 7
  %v2264 = vsub.s32 1, %v2263
  %v2265 = vrot.slane %v2231, %v2264
  %v2266 = vlaneseq
  %v2267 = vshrl.u32 %v2266, 7
  %v2268 = vsub.s32 1, %v2267
  %v2269 = vrot.slane %v2232, %v2268
  %v2270 = vlaneseq
  %v2271 = vshrl.u32 %v2270, 7
  %v2272 = vsub.s32 1, %v2271
  %v2273 = vrot.slane %v2233, %v2272
  %v2274 = vmul.f32 %v2260, %v2265
  %v2275 = vmul.f32 %v2260, %v2269
  %v2276 = vmul.f32 %v2260, %v2273
  %v2277 = vadd.f32 %v2255, %v2274
  %v2278 = vadd.f32 %v2256, %v2275
  %v2279 = vadd.f32 %v2257, %v2276
  %2280 = vset.pattern.permute.xlu0 2
  %2281 = vperm.xlu0 %2280, %v2234
  %v2282 = vpop.permute.xlu0 %2281
  %v2284 = vlaneseq
  %v2285 = vshrl.u32 %v2284, 7
  %v2286 = vsub.s32 2, %v2285
  %v2287 = vrot.slane %v2231, %v2286
  %v2288 = vlaneseq
  %v2289 = vshrl.u32 %v2288, 7
  %v2290 = vsub.s32 2, %v2289
  %v2291 = vrot.slane %v2232, %v2290
  %v2292 = vlaneseq
  %v2293 = vshrl.u32 %v2292, 7
  %v2294 = vsub.s32 2, %v2293
  %v2295 = vrot.slane %v2233, %v2294
  %v2296 = vmul.f32 %v2282, %v2287
  %v2297 = vmul.f32 %v2282, %v2291
  %v2298 = vmul.f32 %v2282, %v2295
  %v2299 = vadd.f32 %v2277, %v2296
  %v2300 = vadd.f32 %v2278, %v2297
  %v2301 = vadd.f32 %v2279, %v2298
  %2302 = vset.pattern.permute.xlu0 3
  %2303 = vperm.xlu0 %2302, %v2234
  %v2304 = vpop.permute.xlu0 %2303
  %v2306 = vlaneseq
  %v2307 = vshrl.u32 %v2306, 7
  %v2308 = vsub.s32 3, %v2307
  %v2309 = vrot.slane %v2231, %v2308
  %v2310 = vlaneseq
  %v2311 = vshrl.u32 %v2310, 7
  %v2312 = vsub.s32 3, %v2311
  %v2313 = vrot.slane %v2232, %v2312
  %v2314 = vlaneseq
  %v2315 = vshrl.u32 %v2314, 7
  %v2316 = vsub.s32 3, %v2315
  %v2317 = vrot.slane %v2233, %v2316
  %v2318 = vmul.f32 %v2304, %v2309
  %v2319 = vmul.f32 %v2304, %v2313
  %v2320 = vmul.f32 %v2304, %v2317
  %v2321 = vadd.f32 %v2299, %v2318
  %v2322 = vadd.f32 %v2300, %v2319
  %v2323 = vadd.f32 %v2301, %v2320
  %2324 = vset.pattern.permute.xlu0 4
  %2325 = vperm.xlu0 %2324, %v2234
  %v2326 = vpop.permute.xlu0 %2325
  %v2328 = vlaneseq
  %v2329 = vshrl.u32 %v2328, 7
  %v2330 = vsub.s32 4, %v2329
  %v2331 = vrot.slane %v2231, %v2330
  %v2332 = vlaneseq
  %v2333 = vshrl.u32 %v2332, 7
  %v2334 = vsub.s32 4, %v2333
  %v2335 = vrot.slane %v2232, %v2334
  %v2336 = vlaneseq
  %v2337 = vshrl.u32 %v2336, 7
  %v2338 = vsub.s32 4, %v2337
  %v2339 = vrot.slane %v2233, %v2338
  %v2340 = vmul.f32 %v2326, %v2331
  %v2341 = vmul.f32 %v2326, %v2335
  %v2342 = vmul.f32 %v2326, %v2339
  %v2343 = vadd.f32 %v2321, %v2340
  %v2344 = vadd.f32 %v2322, %v2341
  %v2345 = vadd.f32 %v2323, %v2342
  %2346 = vset.pattern.permute.xlu0 5
  %2347 = vperm.xlu0 %2346, %v2234
  %v2348 = vpop.permute.xlu0 %2347
  %v2350 = vlaneseq
  %v2351 = vshrl.u32 %v2350, 7
  %v2352 = vsub.s32 5, %v2351
  %v2353 = vrot.slane %v2231, %v2352
  %v2354 = vlaneseq
  %v2355 = vshrl.u32 %v2354, 7
  %v2356 = vsub.s32 5, %v2355
  %v2357 = vrot.slane %v2232, %v2356
  %v2358 = vlaneseq
  %v2359 = vshrl.u32 %v2358, 7
  %v2360 = vsub.s32 5, %v2359
  %v2361 = vrot.slane %v2233, %v2360
  %v2362 = vmul.f32 %v2348, %v2353
  %v2363 = vmul.f32 %v2348, %v2357
  %v2364 = vmul.f32 %v2348, %v2361
  %v2365 = vadd.f32 %v2343, %v2362
  %v2366 = vadd.f32 %v2344, %v2363
  %v2367 = vadd.f32 %v2345, %v2364
  %2368 = vset.pattern.permute.xlu0 6
  %2369 = vperm.xlu0 %2368, %v2234
  %v2370 = vpop.permute.xlu0 %2369
  %v2372 = vlaneseq
  %v2373 = vshrl.u32 %v2372, 7
  %v2374 = vsub.s32 6, %v2373
  %v2375 = vrot.slane %v2231, %v2374
  %v2376 = vlaneseq
  %v2377 = vshrl.u32 %v2376, 7
  %v2378 = vsub.s32 6, %v2377
  %v2379 = vrot.slane %v2232, %v2378
  %v2380 = vlaneseq
  %v2381 = vshrl.u32 %v2380, 7
  %v2382 = vsub.s32 6, %v2381
  %v2383 = vrot.slane %v2233, %v2382
  %v2384 = vmul.f32 %v2370, %v2375
  %v2385 = vmul.f32 %v2370, %v2379
  %v2386 = vmul.f32 %v2370, %v2383
  %v2387 = vadd.f32 %v2365, %v2384
  %v2388 = vadd.f32 %v2366, %v2385
  %v2389 = vadd.f32 %v2367, %v2386
  %2390 = vset.pattern.permute.xlu0 7
  %2391 = vperm.xlu0 %2390, %v2234
  %v2392 = vpop.permute.xlu0 %2391
  %v2394 = vlaneseq
  %v2395 = vshrl.u32 %v2394, 7
  %v2396 = vsub.s32 7, %v2395
  %v2397 = vrot.slane %v2231, %v2396
  %v2398 = vlaneseq
  %v2399 = vshrl.u32 %v2398, 7
  %v2400 = vsub.s32 7, %v2399
  %v2401 = vrot.slane %v2232, %v2400
  %v2402 = vlaneseq
  %v2403 = vshrl.u32 %v2402, 7
  %v2404 = vsub.s32 7, %v2403
  %v2405 = vrot.slane %v2233, %v2404
  %v2406 = vmul.f32 %v2392, %v2397
  %v2407 = vmul.f32 %v2392, %v2401
  %v2408 = vmul.f32 %v2392, %v2405
  %v2409 = vadd.f32 %v2387, %v2406
  %v2410 = vadd.f32 %v2388, %v2407
  %v2411 = vadd.f32 %v2389, %v2408
  %s2412 = scalar_lea.vmem %s7, 8
  %v2413 = vld [vmem:[%s2412] sm:$0xff]
  %2415 = vset.pattern.permute.xlu0 0
  %2416 = vperm.xlu0 %2415, %v2413
  %v2417 = vpop.permute.xlu0 %2416
  %v2419 = vmul.f32 %v2417, %v2243
  %v2420 = vmul.f32 %v2417, %v2247
  %v2421 = vmul.f32 %v2417, %v2251
  %2425 = vrot.lane.b32.xlu0 %v2419, 127
  %v2426 = vpop.permute.xlu0 %2425
  %2427 = vrot.lane.b32.xlu0 %v2420, 127
  %v2428 = vpop.permute.xlu0 %2427
  %2429 = vrot.lane.b32.xlu0 %v2421, 127
  %v2430 = vpop.permute.xlu0 %2429
  %v2431 = vsel %vm144, %v2426, %v2428
  %v2432 = vsel %vm144, %v2428, %v2430
  %v2436 = vadd.f32 %v2409, %v2431
  %v2437 = vadd.f32 %v2410, %v2432
  %v2438 = vadd.f32 %v2411, %v2430
  %2439 = vset.pattern.permute.xlu0 1
  %2440 = vperm.xlu0 %2439, %v2413
  %v2441 = vpop.permute.xlu0 %2440
  %v2443 = vmul.f32 %v2441, %v2265
  %v2444 = vmul.f32 %v2441, %v2269
  %v2445 = vmul.f32 %v2441, %v2273
  %2449 = vrot.lane.b32.xlu0 %v2443, 127
  %v2450 = vpop.permute.xlu0 %2449
  %2451 = vrot.lane.b32.xlu0 %v2444, 127
  %v2452 = vpop.permute.xlu0 %2451
  %2453 = vrot.lane.b32.xlu0 %v2445, 127
  %v2454 = vpop.permute.xlu0 %2453
  %v2455 = vsel %vm144, %v2450, %v2452
  %v2456 = vsel %vm144, %v2452, %v2454
  %v2460 = vadd.f32 %v2436, %v2455
  %v2461 = vadd.f32 %v2437, %v2456
  %v2462 = vadd.f32 %v2438, %v2454
  %2463 = vset.pattern.permute.xlu0 2
  %2464 = vperm.xlu0 %2463, %v2413
  %v2465 = vpop.permute.xlu0 %2464
  %v2467 = vmul.f32 %v2465, %v2287
  %v2468 = vmul.f32 %v2465, %v2291
  %v2469 = vmul.f32 %v2465, %v2295
  %2473 = vrot.lane.b32.xlu0 %v2467, 127
  %v2474 = vpop.permute.xlu0 %2473
  %2475 = vrot.lane.b32.xlu0 %v2468, 127
  %v2476 = vpop.permute.xlu0 %2475
  %2477 = vrot.lane.b32.xlu0 %v2469, 127
  %v2478 = vpop.permute.xlu0 %2477
  %v2479 = vsel %vm144, %v2474, %v2476
  %v2480 = vsel %vm144, %v2476, %v2478
  %v2484 = vadd.f32 %v2460, %v2479
  %v2485 = vadd.f32 %v2461, %v2480
  %v2486 = vadd.f32 %v2462, %v2478
  %2487 = vset.pattern.permute.xlu0 3
  %2488 = vperm.xlu0 %2487, %v2413
  %v2489 = vpop.permute.xlu0 %2488
  %v2491 = vmul.f32 %v2489, %v2309
  %v2492 = vmul.f32 %v2489, %v2313
  %v2493 = vmul.f32 %v2489, %v2317
  %2497 = vrot.lane.b32.xlu0 %v2491, 127
  %v2498 = vpop.permute.xlu0 %2497
  %2499 = vrot.lane.b32.xlu0 %v2492, 127
  %v2500 = vpop.permute.xlu0 %2499
  %2501 = vrot.lane.b32.xlu0 %v2493, 127
  %v2502 = vpop.permute.xlu0 %2501
  %v2503 = vsel %vm144, %v2498, %v2500
  %v2504 = vsel %vm144, %v2500, %v2502
  %v2508 = vadd.f32 %v2484, %v2503
  %v2509 = vadd.f32 %v2485, %v2504
  %v2510 = vadd.f32 %v2486, %v2502
  %2511 = vset.pattern.permute.xlu0 4
  %2512 = vperm.xlu0 %2511, %v2413
  %v2513 = vpop.permute.xlu0 %2512
  %v2515 = vmul.f32 %v2513, %v2331
  %v2516 = vmul.f32 %v2513, %v2335
  %v2517 = vmul.f32 %v2513, %v2339
  %2521 = vrot.lane.b32.xlu0 %v2515, 127
  %v2522 = vpop.permute.xlu0 %2521
  %2523 = vrot.lane.b32.xlu0 %v2516, 127
  %v2524 = vpop.permute.xlu0 %2523
  %2525 = vrot.lane.b32.xlu0 %v2517, 127
  %v2526 = vpop.permute.xlu0 %2525
  %v2527 = vsel %vm144, %v2522, %v2524
  %v2528 = vsel %vm144, %v2524, %v2526
  %v2532 = vadd.f32 %v2508, %v2527
  %v2533 = vadd.f32 %v2509, %v2528
  %v2534 = vadd.f32 %v2510, %v2526
  %2535 = vset.pattern.permute.xlu0 5
  %2536 = vperm.xlu0 %2535, %v2413
  %v2537 = vpop.permute.xlu0 %2536
  %v2539 = vmul.f32 %v2537, %v2353
  %v2540 = vmul.f32 %v2537, %v2357
  %v2541 = vmul.f32 %v2537, %v2361
  %2545 = vrot.lane.b32.xlu0 %v2539, 127
  %v2546 = vpop.permute.xlu0 %2545
  %2547 = vrot.lane.b32.xlu0 %v2540, 127
  %v2548 = vpop.permute.xlu0 %2547
  %2549 = vrot.lane.b32.xlu0 %v2541, 127
  %v2550 = vpop.permute.xlu0 %2549
  %v2551 = vsel %vm144, %v2546, %v2548
  %v2552 = vsel %vm144, %v2548, %v2550
  %v2556 = vadd.f32 %v2532, %v2551
  %v2557 = vadd.f32 %v2533, %v2552
  %v2558 = vadd.f32 %v2534, %v2550
  %2559 = vset.pattern.permute.xlu0 6
  %2560 = vperm.xlu0 %2559, %v2413
  %v2561 = vpop.permute.xlu0 %2560
  %v2563 = vmul.f32 %v2561, %v2375
  %v2564 = vmul.f32 %v2561, %v2379
  %v2565 = vmul.f32 %v2561, %v2383
  %2569 = vrot.lane.b32.xlu0 %v2563, 127
  %v2570 = vpop.permute.xlu0 %2569
  %2571 = vrot.lane.b32.xlu0 %v2564, 127
  %v2572 = vpop.permute.xlu0 %2571
  %2573 = vrot.lane.b32.xlu0 %v2565, 127
  %v2574 = vpop.permute.xlu0 %2573
  %v2575 = vsel %vm144, %v2570, %v2572
  %v2576 = vsel %vm144, %v2572, %v2574
  %v2580 = vadd.f32 %v2556, %v2575
  %v2581 = vadd.f32 %v2557, %v2576
  %v2582 = vadd.f32 %v2558, %v2574
  %2583 = vset.pattern.permute.xlu0 7
  %2584 = vperm.xlu0 %2583, %v2413
  %v2585 = vpop.permute.xlu0 %2584
  %v2587 = vmul.f32 %v2585, %v2397
  %v2588 = vmul.f32 %v2585, %v2401
  %v2589 = vmul.f32 %v2585, %v2405
  %2593 = vrot.lane.b32.xlu0 %v2587, 127
  %v2594 = vpop.permute.xlu0 %2593
  %2595 = vrot.lane.b32.xlu0 %v2588, 127
  %v2596 = vpop.permute.xlu0 %2595
  %2597 = vrot.lane.b32.xlu0 %v2589, 127
  %v2598 = vpop.permute.xlu0 %2597
  %v2599 = vsel %vm144, %v2594, %v2596
  %v2600 = vsel %vm144, %v2596, %v2598
  %v2604 = vadd.f32 %v2580, %v2599
  %v2605 = vadd.f32 %v2581, %v2600
  %v2606 = vadd.f32 %v2582, %v2598
  %s2607 = scalar_lea.vmem %s7, 16
  %v2608 = vld [vmem:[%s2607] sm:$0xff]
  %2610 = vset.pattern.permute.xlu0 0
  %2611 = vperm.xlu0 %2610, %v2608
  %v2612 = vpop.permute.xlu0 %2611
  %v2614 = vmul.f32 %v2612, %v2243
  %v2615 = vmul.f32 %v2612, %v2247
  %v2616 = vmul.f32 %v2612, %v2251
  %2620 = vrot.lane.b32.xlu0 %v2614, 126
  %v2621 = vpop.permute.xlu0 %2620
  %2622 = vrot.lane.b32.xlu0 %v2615, 126
  %v2623 = vpop.permute.xlu0 %2622
  %2624 = vrot.lane.b32.xlu0 %v2616, 126
  %v2625 = vpop.permute.xlu0 %2624
  %v2626 = vsel %vm186, %v2621, %v2623
  %v2627 = vsel %vm186, %v2623, %v2625
  %v2631 = vadd.f32 %v2604, %v2626
  %v2632 = vadd.f32 %v2605, %v2627
  %v2633 = vadd.f32 %v2606, %v2625
  %2634 = vset.pattern.permute.xlu0 1
  %2635 = vperm.xlu0 %2634, %v2608
  %v2636 = vpop.permute.xlu0 %2635
  %v2638 = vmul.f32 %v2636, %v2265
  %v2639 = vmul.f32 %v2636, %v2269
  %v2640 = vmul.f32 %v2636, %v2273
  %2644 = vrot.lane.b32.xlu0 %v2638, 126
  %v2645 = vpop.permute.xlu0 %2644
  %2646 = vrot.lane.b32.xlu0 %v2639, 126
  %v2647 = vpop.permute.xlu0 %2646
  %2648 = vrot.lane.b32.xlu0 %v2640, 126
  %v2649 = vpop.permute.xlu0 %2648
  %v2650 = vsel %vm186, %v2645, %v2647
  %v2651 = vsel %vm186, %v2647, %v2649
  %v2655 = vadd.f32 %v2631, %v2650
  %v2656 = vadd.f32 %v2632, %v2651
  %v2657 = vadd.f32 %v2633, %v2649
  %2658 = vset.pattern.permute.xlu0 2
  %2659 = vperm.xlu0 %2658, %v2608
  %v2660 = vpop.permute.xlu0 %2659
  %v2662 = vmul.f32 %v2660, %v2287
  %v2663 = vmul.f32 %v2660, %v2291
  %v2664 = vmul.f32 %v2660, %v2295
  %2668 = vrot.lane.b32.xlu0 %v2662, 126
  %v2669 = vpop.permute.xlu0 %2668
  %2670 = vrot.lane.b32.xlu0 %v2663, 126
  %v2671 = vpop.permute.xlu0 %2670
  %2672 = vrot.lane.b32.xlu0 %v2664, 126
  %v2673 = vpop.permute.xlu0 %2672
  %v2674 = vsel %vm186, %v2669, %v2671
  %v2675 = vsel %vm186, %v2671, %v2673
  %v2679 = vadd.f32 %v2655, %v2674
  %v2680 = vadd.f32 %v2656, %v2675
  %v2681 = vadd.f32 %v2657, %v2673
  %2682 = vset.pattern.permute.xlu0 3
  %2683 = vperm.xlu0 %2682, %v2608
  %v2684 = vpop.permute.xlu0 %2683
  %v2686 = vmul.f32 %v2684, %v2309
  %v2687 = vmul.f32 %v2684, %v2313
  %v2688 = vmul.f32 %v2684, %v2317
  %2692 = vrot.lane.b32.xlu0 %v2686, 126
  %v2693 = vpop.permute.xlu0 %2692
  %2694 = vrot.lane.b32.xlu0 %v2687, 126
  %v2695 = vpop.permute.xlu0 %2694
  %2696 = vrot.lane.b32.xlu0 %v2688, 126
  %v2697 = vpop.permute.xlu0 %2696
  %v2698 = vsel %vm186, %v2693, %v2695
  %v2699 = vsel %vm186, %v2695, %v2697
  %v2703 = vadd.f32 %v2679, %v2698
  %v2704 = vadd.f32 %v2680, %v2699
  %v2705 = vadd.f32 %v2681, %v2697
  %2706 = vset.pattern.permute.xlu0 4
  %2707 = vperm.xlu0 %2706, %v2608
  %v2708 = vpop.permute.xlu0 %2707
  %v2710 = vmul.f32 %v2708, %v2331
  %v2711 = vmul.f32 %v2708, %v2335
  %v2712 = vmul.f32 %v2708, %v2339
  %2716 = vrot.lane.b32.xlu0 %v2710, 126
  %v2717 = vpop.permute.xlu0 %2716
  %2718 = vrot.lane.b32.xlu0 %v2711, 126
  %v2719 = vpop.permute.xlu0 %2718
  %2720 = vrot.lane.b32.xlu0 %v2712, 126
  %v2721 = vpop.permute.xlu0 %2720
  %v2722 = vsel %vm186, %v2717, %v2719
  %v2723 = vsel %vm186, %v2719, %v2721
  %v2727 = vadd.f32 %v2703, %v2722
  %v2728 = vadd.f32 %v2704, %v2723
  %v2729 = vadd.f32 %v2705, %v2721
  %2730 = vset.pattern.permute.xlu0 5
  %2731 = vperm.xlu0 %2730, %v2608
  %v2732 = vpop.permute.xlu0 %2731
  %v2734 = vmul.f32 %v2732, %v2353
  %v2735 = vmul.f32 %v2732, %v2357
  %v2736 = vmul.f32 %v2732, %v2361
  %2740 = vrot.lane.b32.xlu0 %v2734, 126
  %v2741 = vpop.permute.xlu0 %2740
  %2742 = vrot.lane.b32.xlu0 %v2735, 126
  %v2743 = vpop.permute.xlu0 %2742
  %2744 = vrot.lane.b32.xlu0 %v2736, 126
  %v2745 = vpop.permute.xlu0 %2744
  %v2746 = vsel %vm186, %v2741, %v2743
  %v2747 = vsel %vm186, %v2743, %v2745
  %v2751 = vadd.f32 %v2727, %v2746
  %v2752 = vadd.f32 %v2728, %v2747
  %v2753 = vadd.f32 %v2729, %v2745
  %2754 = vset.pattern.permute.xlu0 6
  %2755 = vperm.xlu0 %2754, %v2608
  %v2756 = vpop.permute.xlu0 %2755
  %v2758 = vmul.f32 %v2756, %v2375
  %v2759 = vmul.f32 %v2756, %v2379
  %v2760 = vmul.f32 %v2756, %v2383
  %2764 = vrot.lane.b32.xlu0 %v2758, 126
  %v2765 = vpop.permute.xlu0 %2764
  %2766 = vrot.lane.b32.xlu0 %v2759, 126
  %v2767 = vpop.permute.xlu0 %2766
  %2768 = vrot.lane.b32.xlu0 %v2760, 126
  %v2769 = vpop.permute.xlu0 %2768
  %v2770 = vsel %vm186, %v2765, %v2767
  %v2771 = vsel %vm186, %v2767, %v2769
  %v2775 = vadd.f32 %v2751, %v2770
  %v2776 = vadd.f32 %v2752, %v2771
  %v2777 = vadd.f32 %v2753, %v2769
  %2778 = vset.pattern.permute.xlu0 7
  %2779 = vperm.xlu0 %2778, %v2608
  %v2780 = vpop.permute.xlu0 %2779
  %v2782 = vmul.f32 %v2780, %v2397
  %v2783 = vmul.f32 %v2780, %v2401
  %v2784 = vmul.f32 %v2780, %v2405
  %2788 = vrot.lane.b32.xlu0 %v2782, 126
  %v2789 = vpop.permute.xlu0 %2788
  %2790 = vrot.lane.b32.xlu0 %v2783, 126
  %v2791 = vpop.permute.xlu0 %2790
  %2792 = vrot.lane.b32.xlu0 %v2784, 126
  %v2793 = vpop.permute.xlu0 %2792
  %v2794 = vsel %vm186, %v2789, %v2791
  %v2795 = vsel %vm186, %v2791, %v2793
  %v2799 = vadd.f32 %v2775, %v2794
  %v2800 = vadd.f32 %v2776, %v2795
  %v2801 = vadd.f32 %v2777, %v2793
  %v2802 = vld [vmem:[%s8] sm:$0xff]
  %2804 = vset.pattern.permute.xlu0 0
  %2805 = vperm.xlu0 %2804, %v2802
  %v2806 = vpop.permute.xlu0 %2805
  %v2808 = vadd.f32 %v2799, %v2806
  %v2809 = vadd.f32 %v2800, %v2806
  %v2810 = vadd.f32 %v2801, %v2806
  %v2811 = vmax.f32 %v2808, 0.0
  %v2812 = vmax.f32 %v2809, 0.0
  %v2813 = vmax.f32 %v2810, 0.0
  %v2814 = vlaneseq
  %v2815 = vshrl.u32 %v2814, 7
  %v2816 = vsub.s32 4, %v2815
  %v2817 = vrot.slane %v1720, %v2816
  %v2818 = vlaneseq
  %v2819 = vshrl.u32 %v2818, 7
  %v2820 = vsub.s32 4, %v2819
  %v2821 = vrot.slane %v1722, %v2820
  %v2822 = vlaneseq
  %v2823 = vshrl.u32 %v2822, 7
  %v2824 = vsub.s32 4, %v2823
  %v2825 = vrot.slane %v1931, %v2824
  %v2826 = vmul.f32 %v1938, %v2817
  %v2827 = vmul.f32 %v1938, %v2821
  %v2828 = vmul.f32 %v1938, %v2825
  %v2829 = vadd.f32 %v2826, 0.0
  %v2830 = vadd.f32 %v2827, 0.0
  %v2831 = vadd.f32 %v2828, 0.0
  %v2832 = vlaneseq
  %v2833 = vshrl.u32 %v2832, 7
  %v2834 = vsub.s32 5, %v2833
  %v2835 = vrot.slane %v1720, %v2834
  %v2836 = vlaneseq
  %v2837 = vshrl.u32 %v2836, 7
  %v2838 = vsub.s32 5, %v2837
  %v2839 = vrot.slane %v1722, %v2838
  %v2840 = vlaneseq
  %v2841 = vshrl.u32 %v2840, 7
  %v2842 = vsub.s32 5, %v2841
  %v2843 = vrot.slane %v1931, %v2842
  %v2844 = vmul.f32 %v1960, %v2835
  %v2845 = vmul.f32 %v1960, %v2839
  %v2846 = vmul.f32 %v1960, %v2843
  %v2847 = vadd.f32 %v2829, %v2844
  %v2848 = vadd.f32 %v2830, %v2845
  %v2849 = vadd.f32 %v2831, %v2846
  %v2850 = vlaneseq
  %v2851 = vshrl.u32 %v2850, 7
  %v2852 = vsub.s32 6, %v2851
  %v2853 = vrot.slane %v1720, %v2852
  %v2854 = vlaneseq
  %v2855 = vshrl.u32 %v2854, 7
  %v2856 = vsub.s32 6, %v2855
  %v2857 = vrot.slane %v1722, %v2856
  %v2858 = vlaneseq
  %v2859 = vshrl.u32 %v2858, 7
  %v2860 = vsub.s32 6, %v2859
  %v2861 = vrot.slane %v1931, %v2860
  %v2862 = vmul.f32 %v1982, %v2853
  %v2863 = vmul.f32 %v1982, %v2857
  %v2864 = vmul.f32 %v1982, %v2861
  %v2865 = vadd.f32 %v2847, %v2862
  %v2866 = vadd.f32 %v2848, %v2863
  %v2867 = vadd.f32 %v2849, %v2864
  %v2868 = vlaneseq
  %v2869 = vshrl.u32 %v2868, 7
  %v2870 = vsub.s32 7, %v2869
  %v2871 = vrot.slane %v1720, %v2870
  %v2872 = vlaneseq
  %v2873 = vshrl.u32 %v2872, 7
  %v2874 = vsub.s32 7, %v2873
  %v2875 = vrot.slane %v1722, %v2874
  %v2876 = vlaneseq
  %v2877 = vshrl.u32 %v2876, 7
  %v2878 = vsub.s32 7, %v2877
  %v2879 = vrot.slane %v1931, %v2878
  %v2880 = vmul.f32 %v2004, %v2871
  %v2881 = vmul.f32 %v2004, %v2875
  %v2882 = vmul.f32 %v2004, %v2879
  %v2883 = vadd.f32 %v2865, %v2880
  %v2884 = vadd.f32 %v2866, %v2881
  %v2885 = vadd.f32 %v2867, %v2882
  %v2886 = vmul.f32 %v2029, %v2817
  %v2887 = vmul.f32 %v2029, %v2821
  %v2888 = vmul.f32 %v2029, %v2825
  %2892 = vrot.lane.b32.xlu0 %v2886, 127
  %v2893 = vpop.permute.xlu0 %2892
  %2894 = vrot.lane.b32.xlu0 %v2887, 127
  %v2895 = vpop.permute.xlu0 %2894
  %2896 = vrot.lane.b32.xlu0 %v2888, 127
  %v2897 = vpop.permute.xlu0 %2896
  %v2898 = vsel %vm144, %v2893, %v2895
  %v2899 = vsel %vm144, %v2895, %v2897
  %v2903 = vadd.f32 %v2883, %v2898
  %v2904 = vadd.f32 %v2884, %v2899
  %v2905 = vadd.f32 %v2885, %v2897
  %v2906 = vmul.f32 %v2053, %v2835
  %v2907 = vmul.f32 %v2053, %v2839
  %v2908 = vmul.f32 %v2053, %v2843
  %2912 = vrot.lane.b32.xlu0 %v2906, 127
  %v2913 = vpop.permute.xlu0 %2912
  %2914 = vrot.lane.b32.xlu0 %v2907, 127
  %v2915 = vpop.permute.xlu0 %2914
  %2916 = vrot.lane.b32.xlu0 %v2908, 127
  %v2917 = vpop.permute.xlu0 %2916
  %v2918 = vsel %vm144, %v2913, %v2915
  %v2919 = vsel %vm144, %v2915, %v2917
  %v2923 = vadd.f32 %v2903, %v2918
  %v2924 = vadd.f32 %v2904, %v2919
  %v2925 = vadd.f32 %v2905, %v2917
  %v2926 = vmul.f32 %v2077, %v2853
  %v2927 = vmul.f32 %v2077, %v2857
  %v2928 = vmul.f32 %v2077, %v2861
  %2932 = vrot.lane.b32.xlu0 %v2926, 127
  %v2933 = vpop.permute.xlu0 %2932
  %2934 = vrot.lane.b32.xlu0 %v2927, 127
  %v2935 = vpop.permute.xlu0 %2934
  %2936 = vrot.lane.b32.xlu0 %v2928, 127
  %v2937 = vpop.permute.xlu0 %2936
  %v2938 = vsel %vm144, %v2933, %v2935
  %v2939 = vsel %vm144, %v2935, %v2937
  %v2943 = vadd.f32 %v2923, %v2938
  %v2944 = vadd.f32 %v2924, %v2939
  %v2945 = vadd.f32 %v2925, %v2937
  %v2946 = vmul.f32 %v2101, %v2871
  %v2947 = vmul.f32 %v2101, %v2875
  %v2948 = vmul.f32 %v2101, %v2879
  %2952 = vrot.lane.b32.xlu0 %v2946, 127
  %v2953 = vpop.permute.xlu0 %2952
  %2954 = vrot.lane.b32.xlu0 %v2947, 127
  %v2955 = vpop.permute.xlu0 %2954
  %2956 = vrot.lane.b32.xlu0 %v2948, 127
  %v2957 = vpop.permute.xlu0 %2956
  %v2958 = vsel %vm144, %v2953, %v2955
  %v2959 = vsel %vm144, %v2955, %v2957
  %v2963 = vadd.f32 %v2943, %v2958
  %v2964 = vadd.f32 %v2944, %v2959
  %v2965 = vadd.f32 %v2945, %v2957
  %v2966 = vmul.f32 %v2128, %v2817
  %v2967 = vmul.f32 %v2128, %v2821
  %v2968 = vmul.f32 %v2128, %v2825
  %2972 = vrot.lane.b32.xlu0 %v2966, 126
  %v2973 = vpop.permute.xlu0 %2972
  %2974 = vrot.lane.b32.xlu0 %v2967, 126
  %v2975 = vpop.permute.xlu0 %2974
  %2976 = vrot.lane.b32.xlu0 %v2968, 126
  %v2977 = vpop.permute.xlu0 %2976
  %v2978 = vsel %vm186, %v2973, %v2975
  %v2979 = vsel %vm186, %v2975, %v2977
  %v2983 = vadd.f32 %v2963, %v2978
  %v2984 = vadd.f32 %v2964, %v2979
  %v2985 = vadd.f32 %v2965, %v2977
  %v2986 = vmul.f32 %v2152, %v2835
  %v2987 = vmul.f32 %v2152, %v2839
  %v2988 = vmul.f32 %v2152, %v2843
  %2992 = vrot.lane.b32.xlu0 %v2986, 126
  %v2993 = vpop.permute.xlu0 %2992
  %2994 = vrot.lane.b32.xlu0 %v2987, 126
  %v2995 = vpop.permute.xlu0 %2994
  %2996 = vrot.lane.b32.xlu0 %v2988, 126
  %v2997 = vpop.permute.xlu0 %2996
  %v2998 = vsel %vm186, %v2993, %v2995
  %v2999 = vsel %vm186, %v2995, %v2997
  %v3003 = vadd.f32 %v2983, %v2998
  %v3004 = vadd.f32 %v2984, %v2999
  %v3005 = vadd.f32 %v2985, %v2997
  %v3006 = vmul.f32 %v2176, %v2853
  %v3007 = vmul.f32 %v2176, %v2857
  %v3008 = vmul.f32 %v2176, %v2861
  %3012 = vrot.lane.b32.xlu0 %v3006, 126
  %v3013 = vpop.permute.xlu0 %3012
  %3014 = vrot.lane.b32.xlu0 %v3007, 126
  %v3015 = vpop.permute.xlu0 %3014
  %3016 = vrot.lane.b32.xlu0 %v3008, 126
  %v3017 = vpop.permute.xlu0 %3016
  %v3018 = vsel %vm186, %v3013, %v3015
  %v3019 = vsel %vm186, %v3015, %v3017
  %v3023 = vadd.f32 %v3003, %v3018
  %v3024 = vadd.f32 %v3004, %v3019
  %v3025 = vadd.f32 %v3005, %v3017
  %v3026 = vmul.f32 %v2200, %v2871
  %v3027 = vmul.f32 %v2200, %v2875
  %v3028 = vmul.f32 %v2200, %v2879
  %3032 = vrot.lane.b32.xlu0 %v3026, 126
  %v3033 = vpop.permute.xlu0 %3032
  %3034 = vrot.lane.b32.xlu0 %v3027, 126
  %v3035 = vpop.permute.xlu0 %3034
  %3036 = vrot.lane.b32.xlu0 %v3028, 126
  %v3037 = vpop.permute.xlu0 %3036
  %v3038 = vsel %vm186, %v3033, %v3035
  %v3039 = vsel %vm186, %v3035, %v3037
  %v3043 = vadd.f32 %v3023, %v3038
  %v3044 = vadd.f32 %v3024, %v3039
  %v3045 = vadd.f32 %v3025, %v3037
  %v3046 = vadd.f32 %v3043, %v2226
  %v3047 = vadd.f32 %v3044, %v2226
  %v3048 = vadd.f32 %v3045, %v2226
  %v3049 = vmax.f32 %v3046, 0.0
  %v3050 = vmax.f32 %v3047, 0.0
  %v3051 = vmax.f32 %v3048, 0.0
  %v3052 = vlaneseq
  %v3053 = vshrl.u32 %v3052, 7
  %v3054 = vsub.s32 0, %v3053
  %v3055 = vrot.slane %v3049, %v3054
  %v3056 = vlaneseq
  %v3057 = vshrl.u32 %v3056, 7
  %v3058 = vsub.s32 0, %v3057
  %v3059 = vrot.slane %v3050, %v3058
  %v3060 = vlaneseq
  %v3061 = vshrl.u32 %v3060, 7
  %v3062 = vsub.s32 0, %v3061
  %v3063 = vrot.slane %v3051, %v3062
  %v3064 = vmul.f32 %v2238, %v3055
  %v3065 = vmul.f32 %v2238, %v3059
  %v3066 = vmul.f32 %v2238, %v3063
  %v3067 = vadd.f32 %v3064, 0.0
  %v3068 = vadd.f32 %v3065, 0.0
  %v3069 = vadd.f32 %v3066, 0.0
  %v3070 = vlaneseq
  %v3071 = vshrl.u32 %v3070, 7
  %v3072 = vsub.s32 1, %v3071
  %v3073 = vrot.slane %v3049, %v3072
  %v3074 = vlaneseq
  %v3075 = vshrl.u32 %v3074, 7
  %v3076 = vsub.s32 1, %v3075
  %v3077 = vrot.slane %v3050, %v3076
  %v3078 = vlaneseq
  %v3079 = vshrl.u32 %v3078, 7
  %v3080 = vsub.s32 1, %v3079
  %v3081 = vrot.slane %v3051, %v3080
  %v3082 = vmul.f32 %v2260, %v3073
  %v3083 = vmul.f32 %v2260, %v3077
  %v3084 = vmul.f32 %v2260, %v3081
  %v3085 = vadd.f32 %v3067, %v3082
  %v3086 = vadd.f32 %v3068, %v3083
  %v3087 = vadd.f32 %v3069, %v3084
  %v3088 = vlaneseq
  %v3089 = vshrl.u32 %v3088, 7
  %v3090 = vsub.s32 2, %v3089
  %v3091 = vrot.slane %v3049, %v3090
  %v3092 = vlaneseq
  %v3093 = vshrl.u32 %v3092, 7
  %v3094 = vsub.s32 2, %v3093
  %v3095 = vrot.slane %v3050, %v3094
  %v3096 = vlaneseq
  %v3097 = vshrl.u32 %v3096, 7
  %v3098 = vsub.s32 2, %v3097
  %v3099 = vrot.slane %v3051, %v3098
  %v3100 = vmul.f32 %v2282, %v3091
  %v3101 = vmul.f32 %v2282, %v3095
  %v3102 = vmul.f32 %v2282, %v3099
  %v3103 = vadd.f32 %v3085, %v3100
  %v3104 = vadd.f32 %v3086, %v3101
  %v3105 = vadd.f32 %v3087, %v3102
  %v3106 = vlaneseq
  %v3107 = vshrl.u32 %v3106, 7
  %v3108 = vsub.s32 3, %v3107
  %v3109 = vrot.slane %v3049, %v3108
  %v3110 = vlaneseq
  %v3111 = vshrl.u32 %v3110, 7
  %v3112 = vsub.s32 3, %v3111
  %v3113 = vrot.slane %v3050, %v3112
  %v3114 = vlaneseq
  %v3115 = vshrl.u32 %v3114, 7
  %v3116 = vsub.s32 3, %v3115
  %v3117 = vrot.slane %v3051, %v3116
  %v3118 = vmul.f32 %v2304, %v3109
  %v3119 = vmul.f32 %v2304, %v3113
  %v3120 = vmul.f32 %v2304, %v3117
  %v3121 = vadd.f32 %v3103, %v3118
  %v3122 = vadd.f32 %v3104, %v3119
  %v3123 = vadd.f32 %v3105, %v3120
  %v3124 = vlaneseq
  %v3125 = vshrl.u32 %v3124, 7
  %v3126 = vsub.s32 4, %v3125
  %v3127 = vrot.slane %v3049, %v3126
  %v3128 = vlaneseq
  %v3129 = vshrl.u32 %v3128, 7
  %v3130 = vsub.s32 4, %v3129
  %v3131 = vrot.slane %v3050, %v3130
  %v3132 = vlaneseq
  %v3133 = vshrl.u32 %v3132, 7
  %v3134 = vsub.s32 4, %v3133
  %v3135 = vrot.slane %v3051, %v3134
  %v3136 = vmul.f32 %v2326, %v3127
  %v3137 = vmul.f32 %v2326, %v3131
  %v3138 = vmul.f32 %v2326, %v3135
  %v3139 = vadd.f32 %v3121, %v3136
  %v3140 = vadd.f32 %v3122, %v3137
  %v3141 = vadd.f32 %v3123, %v3138
  %v3142 = vlaneseq
  %v3143 = vshrl.u32 %v3142, 7
  %v3144 = vsub.s32 5, %v3143
  %v3145 = vrot.slane %v3049, %v3144
  %v3146 = vlaneseq
  %v3147 = vshrl.u32 %v3146, 7
  %v3148 = vsub.s32 5, %v3147
  %v3149 = vrot.slane %v3050, %v3148
  %v3150 = vlaneseq
  %v3151 = vshrl.u32 %v3150, 7
  %v3152 = vsub.s32 5, %v3151
  %v3153 = vrot.slane %v3051, %v3152
  %v3154 = vmul.f32 %v2348, %v3145
  %v3155 = vmul.f32 %v2348, %v3149
  %v3156 = vmul.f32 %v2348, %v3153
  %v3157 = vadd.f32 %v3139, %v3154
  %v3158 = vadd.f32 %v3140, %v3155
  %v3159 = vadd.f32 %v3141, %v3156
  %v3160 = vlaneseq
  %v3161 = vshrl.u32 %v3160, 7
  %v3162 = vsub.s32 6, %v3161
  %v3163 = vrot.slane %v3049, %v3162
  %v3164 = vlaneseq
  %v3165 = vshrl.u32 %v3164, 7
  %v3166 = vsub.s32 6, %v3165
  %v3167 = vrot.slane %v3050, %v3166
  %v3168 = vlaneseq
  %v3169 = vshrl.u32 %v3168, 7
  %v3170 = vsub.s32 6, %v3169
  %v3171 = vrot.slane %v3051, %v3170
  %v3172 = vmul.f32 %v2370, %v3163
  %v3173 = vmul.f32 %v2370, %v3167
  %v3174 = vmul.f32 %v2370, %v3171
  %v3175 = vadd.f32 %v3157, %v3172
  %v3176 = vadd.f32 %v3158, %v3173
  %v3177 = vadd.f32 %v3159, %v3174
  %v3178 = vlaneseq
  %v3179 = vshrl.u32 %v3178, 7
  %v3180 = vsub.s32 7, %v3179
  %v3181 = vrot.slane %v3049, %v3180
  %v3182 = vlaneseq
  %v3183 = vshrl.u32 %v3182, 7
  %v3184 = vsub.s32 7, %v3183
  %v3185 = vrot.slane %v3050, %v3184
  %v3186 = vlaneseq
  %v3187 = vshrl.u32 %v3186, 7
  %v3188 = vsub.s32 7, %v3187
  %v3189 = vrot.slane %v3051, %v3188
  %v3190 = vmul.f32 %v2392, %v3181
  %v3191 = vmul.f32 %v2392, %v3185
  %v3192 = vmul.f32 %v2392, %v3189
  %v3193 = vadd.f32 %v3175, %v3190
  %v3194 = vadd.f32 %v3176, %v3191
  %v3195 = vadd.f32 %v3177, %v3192
  %v3196 = vmul.f32 %v2417, %v3055
  %v3197 = vmul.f32 %v2417, %v3059
  %v3198 = vmul.f32 %v2417, %v3063
  %3202 = vrot.lane.b32.xlu0 %v3196, 127
  %v3203 = vpop.permute.xlu0 %3202
  %3204 = vrot.lane.b32.xlu0 %v3197, 127
  %v3205 = vpop.permute.xlu0 %3204
  %3206 = vrot.lane.b32.xlu0 %v3198, 127
  %v3207 = vpop.permute.xlu0 %3206
  %v3208 = vsel %vm144, %v3203, %v3205
  %v3209 = vsel %vm144, %v3205, %v3207
  %v3213 = vadd.f32 %v3193, %v3208
  %v3214 = vadd.f32 %v3194, %v3209
  %v3215 = vadd.f32 %v3195, %v3207
  %v3216 = vmul.f32 %v2441, %v3073
  %v3217 = vmul.f32 %v2441, %v3077
  %v3218 = vmul.f32 %v2441, %v3081
  %3222 = vrot.lane.b32.xlu0 %v3216, 127
  %v3223 = vpop.permute.xlu0 %3222
  %3224 = vrot.lane.b32.xlu0 %v3217, 127
  %v3225 = vpop.permute.xlu0 %3224
  %3226 = vrot.lane.b32.xlu0 %v3218, 127
  %v3227 = vpop.permute.xlu0 %3226
  %v3228 = vsel %vm144, %v3223, %v3225
  %v3229 = vsel %vm144, %v3225, %v3227
  %v3233 = vadd.f32 %v3213, %v3228
  %v3234 = vadd.f32 %v3214, %v3229
  %v3235 = vadd.f32 %v3215, %v3227
  %v3236 = vmul.f32 %v2465, %v3091
  %v3237 = vmul.f32 %v2465, %v3095
  %v3238 = vmul.f32 %v2465, %v3099
  %3242 = vrot.lane.b32.xlu0 %v3236, 127
  %v3243 = vpop.permute.xlu0 %3242
  %3244 = vrot.lane.b32.xlu0 %v3237, 127
  %v3245 = vpop.permute.xlu0 %3244
  %3246 = vrot.lane.b32.xlu0 %v3238, 127
  %v3247 = vpop.permute.xlu0 %3246
  %v3248 = vsel %vm144, %v3243, %v3245
  %v3249 = vsel %vm144, %v3245, %v3247
  %v3253 = vadd.f32 %v3233, %v3248
  %v3254 = vadd.f32 %v3234, %v3249
  %v3255 = vadd.f32 %v3235, %v3247
  %v3256 = vmul.f32 %v2489, %v3109
  %v3257 = vmul.f32 %v2489, %v3113
  %v3258 = vmul.f32 %v2489, %v3117
  %3262 = vrot.lane.b32.xlu0 %v3256, 127
  %v3263 = vpop.permute.xlu0 %3262
  %3264 = vrot.lane.b32.xlu0 %v3257, 127
  %v3265 = vpop.permute.xlu0 %3264
  %3266 = vrot.lane.b32.xlu0 %v3258, 127
  %v3267 = vpop.permute.xlu0 %3266
  %v3268 = vsel %vm144, %v3263, %v3265
  %v3269 = vsel %vm144, %v3265, %v3267
  %v3273 = vadd.f32 %v3253, %v3268
  %v3274 = vadd.f32 %v3254, %v3269
  %v3275 = vadd.f32 %v3255, %v3267
  %v3276 = vmul.f32 %v2513, %v3127
  %v3277 = vmul.f32 %v2513, %v3131
  %v3278 = vmul.f32 %v2513, %v3135
  %3282 = vrot.lane.b32.xlu0 %v3276, 127
  %v3283 = vpop.permute.xlu0 %3282
  %3284 = vrot.lane.b32.xlu0 %v3277, 127
  %v3285 = vpop.permute.xlu0 %3284
  %3286 = vrot.lane.b32.xlu0 %v3278, 127
  %v3287 = vpop.permute.xlu0 %3286
  %v3288 = vsel %vm144, %v3283, %v3285
  %v3289 = vsel %vm144, %v3285, %v3287
  %v3293 = vadd.f32 %v3273, %v3288
  %v3294 = vadd.f32 %v3274, %v3289
  %v3295 = vadd.f32 %v3275, %v3287
  %v3296 = vmul.f32 %v2537, %v3145
  %v3297 = vmul.f32 %v2537, %v3149
  %v3298 = vmul.f32 %v2537, %v3153
  %3302 = vrot.lane.b32.xlu0 %v3296, 127
  %v3303 = vpop.permute.xlu0 %3302
  %3304 = vrot.lane.b32.xlu0 %v3297, 127
  %v3305 = vpop.permute.xlu0 %3304
  %3306 = vrot.lane.b32.xlu0 %v3298, 127
  %v3307 = vpop.permute.xlu0 %3306
  %v3308 = vsel %vm144, %v3303, %v3305
  %v3309 = vsel %vm144, %v3305, %v3307
  %v3313 = vadd.f32 %v3293, %v3308
  %v3314 = vadd.f32 %v3294, %v3309
  %v3315 = vadd.f32 %v3295, %v3307
  %v3316 = vmul.f32 %v2561, %v3163
  %v3317 = vmul.f32 %v2561, %v3167
  %v3318 = vmul.f32 %v2561, %v3171
  %3322 = vrot.lane.b32.xlu0 %v3316, 127
  %v3323 = vpop.permute.xlu0 %3322
  %3324 = vrot.lane.b32.xlu0 %v3317, 127
  %v3325 = vpop.permute.xlu0 %3324
  %3326 = vrot.lane.b32.xlu0 %v3318, 127
  %v3327 = vpop.permute.xlu0 %3326
  %v3328 = vsel %vm144, %v3323, %v3325
  %v3329 = vsel %vm144, %v3325, %v3327
  %v3333 = vadd.f32 %v3313, %v3328
  %v3334 = vadd.f32 %v3314, %v3329
  %v3335 = vadd.f32 %v3315, %v3327
  %v3336 = vmul.f32 %v2585, %v3181
  %v3337 = vmul.f32 %v2585, %v3185
  %v3338 = vmul.f32 %v2585, %v3189
  %3342 = vrot.lane.b32.xlu0 %v3336, 127
  %v3343 = vpop.permute.xlu0 %3342
  %3344 = vrot.lane.b32.xlu0 %v3337, 127
  %v3345 = vpop.permute.xlu0 %3344
  %3346 = vrot.lane.b32.xlu0 %v3338, 127
  %v3347 = vpop.permute.xlu0 %3346
  %v3348 = vsel %vm144, %v3343, %v3345
  %v3349 = vsel %vm144, %v3345, %v3347
  %v3353 = vadd.f32 %v3333, %v3348
  %v3354 = vadd.f32 %v3334, %v3349
  %v3355 = vadd.f32 %v3335, %v3347
  %v3356 = vmul.f32 %v2612, %v3055
  %v3357 = vmul.f32 %v2612, %v3059
  %v3358 = vmul.f32 %v2612, %v3063
  %3362 = vrot.lane.b32.xlu0 %v3356, 126
  %v3363 = vpop.permute.xlu0 %3362
  %3364 = vrot.lane.b32.xlu0 %v3357, 126
  %v3365 = vpop.permute.xlu0 %3364
  %3366 = vrot.lane.b32.xlu0 %v3358, 126
  %v3367 = vpop.permute.xlu0 %3366
  %v3368 = vsel %vm186, %v3363, %v3365
  %v3369 = vsel %vm186, %v3365, %v3367
  %v3373 = vadd.f32 %v3353, %v3368
  %v3374 = vadd.f32 %v3354, %v3369
  %v3375 = vadd.f32 %v3355, %v3367
  %v3376 = vmul.f32 %v2636, %v3073
  %v3377 = vmul.f32 %v2636, %v3077
  %v3378 = vmul.f32 %v2636, %v3081
  %3382 = vrot.lane.b32.xlu0 %v3376, 126
  %v3383 = vpop.permute.xlu0 %3382
  %3384 = vrot.lane.b32.xlu0 %v3377, 126
  %v3385 = vpop.permute.xlu0 %3384
  %3386 = vrot.lane.b32.xlu0 %v3378, 126
  %v3387 = vpop.permute.xlu0 %3386
  %v3388 = vsel %vm186, %v3383, %v3385
  %v3389 = vsel %vm186, %v3385, %v3387
  %v3393 = vadd.f32 %v3373, %v3388
  %v3394 = vadd.f32 %v3374, %v3389
  %v3395 = vadd.f32 %v3375, %v3387
  %v3396 = vmul.f32 %v2660, %v3091
  %v3397 = vmul.f32 %v2660, %v3095
  %v3398 = vmul.f32 %v2660, %v3099
  %3402 = vrot.lane.b32.xlu0 %v3396, 126
  %v3403 = vpop.permute.xlu0 %3402
  %3404 = vrot.lane.b32.xlu0 %v3397, 126
  %v3405 = vpop.permute.xlu0 %3404
  %3406 = vrot.lane.b32.xlu0 %v3398, 126
  %v3407 = vpop.permute.xlu0 %3406
  %v3408 = vsel %vm186, %v3403, %v3405
  %v3409 = vsel %vm186, %v3405, %v3407
  %v3413 = vadd.f32 %v3393, %v3408
  %v3414 = vadd.f32 %v3394, %v3409
  %v3415 = vadd.f32 %v3395, %v3407
  %v3416 = vmul.f32 %v2684, %v3109
  %v3417 = vmul.f32 %v2684, %v3113
  %v3418 = vmul.f32 %v2684, %v3117
  %3422 = vrot.lane.b32.xlu0 %v3416, 126
  %v3423 = vpop.permute.xlu0 %3422
  %3424 = vrot.lane.b32.xlu0 %v3417, 126
  %v3425 = vpop.permute.xlu0 %3424
  %3426 = vrot.lane.b32.xlu0 %v3418, 126
  %v3427 = vpop.permute.xlu0 %3426
  %v3428 = vsel %vm186, %v3423, %v3425
  %v3429 = vsel %vm186, %v3425, %v3427
  %v3433 = vadd.f32 %v3413, %v3428
  %v3434 = vadd.f32 %v3414, %v3429
  %v3435 = vadd.f32 %v3415, %v3427
  %v3436 = vmul.f32 %v2708, %v3127
  %v3437 = vmul.f32 %v2708, %v3131
  %v3438 = vmul.f32 %v2708, %v3135
  %3442 = vrot.lane.b32.xlu0 %v3436, 126
  %v3443 = vpop.permute.xlu0 %3442
  %3444 = vrot.lane.b32.xlu0 %v3437, 126
  %v3445 = vpop.permute.xlu0 %3444
  %3446 = vrot.lane.b32.xlu0 %v3438, 126
  %v3447 = vpop.permute.xlu0 %3446
  %v3448 = vsel %vm186, %v3443, %v3445
  %v3449 = vsel %vm186, %v3445, %v3447
  %v3453 = vadd.f32 %v3433, %v3448
  %v3454 = vadd.f32 %v3434, %v3449
  %v3455 = vadd.f32 %v3435, %v3447
  %v3456 = vmul.f32 %v2732, %v3145
  %v3457 = vmul.f32 %v2732, %v3149
  %v3458 = vmul.f32 %v2732, %v3153
  %3462 = vrot.lane.b32.xlu0 %v3456, 126
  %v3463 = vpop.permute.xlu0 %3462
  %3464 = vrot.lane.b32.xlu0 %v3457, 126
  %v3465 = vpop.permute.xlu0 %3464
  %3466 = vrot.lane.b32.xlu0 %v3458, 126
  %v3467 = vpop.permute.xlu0 %3466
  %v3468 = vsel %vm186, %v3463, %v3465
  %v3469 = vsel %vm186, %v3465, %v3467
  %v3473 = vadd.f32 %v3453, %v3468
  %v3474 = vadd.f32 %v3454, %v3469
  %v3475 = vadd.f32 %v3455, %v3467
  %v3476 = vmul.f32 %v2756, %v3163
  %v3477 = vmul.f32 %v2756, %v3167
  %v3478 = vmul.f32 %v2756, %v3171
  %3482 = vrot.lane.b32.xlu0 %v3476, 126
  %v3483 = vpop.permute.xlu0 %3482
  %3484 = vrot.lane.b32.xlu0 %v3477, 126
  %v3485 = vpop.permute.xlu0 %3484
  %3486 = vrot.lane.b32.xlu0 %v3478, 126
  %v3487 = vpop.permute.xlu0 %3486
  %v3488 = vsel %vm186, %v3483, %v3485
  %v3489 = vsel %vm186, %v3485, %v3487
  %v3493 = vadd.f32 %v3473, %v3488
  %v3494 = vadd.f32 %v3474, %v3489
  %v3495 = vadd.f32 %v3475, %v3487
  %v3496 = vmul.f32 %v2780, %v3181
  %v3497 = vmul.f32 %v2780, %v3185
  %v3498 = vmul.f32 %v2780, %v3189
  %3502 = vrot.lane.b32.xlu0 %v3496, 126
  %v3503 = vpop.permute.xlu0 %3502
  %3504 = vrot.lane.b32.xlu0 %v3497, 126
  %v3505 = vpop.permute.xlu0 %3504
  %3506 = vrot.lane.b32.xlu0 %v3498, 126
  %v3507 = vpop.permute.xlu0 %3506
  %v3508 = vsel %vm186, %v3503, %v3505
  %v3509 = vsel %vm186, %v3505, %v3507
  %v3513 = vadd.f32 %v3493, %v3508
  %v3514 = vadd.f32 %v3494, %v3509
  %v3515 = vadd.f32 %v3495, %v3507
  %v3516 = vadd.f32 %v3513, %v2806
  %v3517 = vadd.f32 %v3514, %v2806
  %v3518 = vadd.f32 %v3515, %v2806
  %v3519 = vmax.f32 %v3516, 0.0
  %v3520 = vmax.f32 %v3517, 0.0
  %v3521 = vmax.f32 %v3518, 0.0
  %3528 = vrot.lane.b32.xlu0 %v2811, 1
  %v3529 = vpop.permute.xlu0 %3528
  %3530 = vrot.lane.b32.xlu0 %v2812, 1
  %v3531 = vpop.permute.xlu0 %3530
  %3532 = vrot.lane.b32.xlu0 %v2813, 1
  %v3533 = vpop.permute.xlu0 %3532
  %3534 = vrot.lane.b32.xlu0 %v3519, 1
  %v3535 = vpop.permute.xlu0 %3534
  %3536 = vrot.lane.b32.xlu0 %v3520, 1
  %v3537 = vpop.permute.xlu0 %3536
  %3538 = vrot.lane.b32.xlu0 %v3521, 1
  %v3539 = vpop.permute.xlu0 %3538
  %v3540 = vsel %vm1235, %v3529, %v3531
  %v3541 = vsel %vm1235, %v3531, %v3533
  %v3542 = vsel %vm1235, %v3535, %v3537
  %v3543 = vsel %vm1235, %v3537, %v3539
  %v3550 = vmax.f32 %v2811, %v3529
  %v3551 = vmax.f32 %v2812, %v3540
  %v3552 = vmax.f32 %v2813, %v3541
  %v3553 = vmax.f32 %v3519, %v3535
  %v3554 = vmax.f32 %v3520, %v3542
  %v3555 = vmax.f32 %v3521, %v3543
  %v3556 = vld [vmem:[%s16] sm:$0xff]
  %v3557 = vld [vmem:[%s16 + $0x8] sm:$0xff]
  %v3558 = vld [vmem:[%s16 + $0x10] sm:$0xff]
  %v3559 = vld [vmem:[%s16 + $0x18] sm:$0xff]
  %v3560 = vld [vmem:[%s16 + $0x20] sm:$0xff]
  %v3561 = vld [vmem:[%s16 + $0x28] sm:$0xff]
  %v3562 = vld [vmem:[%s16 + $0x30] sm:$0xff]
  %v3563 = vld [vmem:[%s16 + $0x38] sm:$0xff]
  %v3564 = vld [vmem:[%s16 + $0x40] sm:$0xff]
  %v3565 = vld [vmem:[%s16 + $0x48] sm:$0xff]
  %v3566 = vld [vmem:[%s16 + $0x50] sm:$0xff]
  %v3567 = vld [vmem:[%s16 + $0x58] sm:$0xff]
  %v3568 = vld [vmem:[%s16 + $0x60] sm:$0xff]
  %v3569 = vld [vmem:[%s16 + $0x68] sm:$0xff]
  %v3570 = vld [vmem:[%s16 + $0x70] sm:$0xff]
  %v3571 = vld [vmem:[%s16 + $0x78] sm:$0xff]
  %v3572 = vld [vmem:[%s16 + $0x80] sm:$0xff]
  %v3573 = vld [vmem:[%s16 + $0x88] sm:$0xff]
  %v3574 = vld [vmem:[%s16 + $0x90] sm:$0xff]
  %v3575 = vld [vmem:[%s16 + $0x98] sm:$0xff]
  %v3576 = vld [vmem:[%s16 + $0xa0] sm:$0xff]
  %v3577 = vld [vmem:[%s16 + $0xa8] sm:$0xff]
  %v3578 = vld [vmem:[%s16 + $0xb0] sm:$0xff]
  %v3579 = vld [vmem:[%s16 + $0xb8] sm:$0xff]
  %v3580 = vld [vmem:[%s16 + $0xc0] sm:$0xff]
  %v3581 = vld [vmem:[%s16 + $0xc8] sm:$0xff]
  %v3582 = vld [vmem:[%s16 + $0xd0] sm:$0xff]
  %v3583 = vld [vmem:[%s16 + $0xd8] sm:$0xff]
  %v3584 = vld [vmem:[%s16 + $0xe0] sm:$0xff]
  %v3585 = vld [vmem:[%s16 + $0xe8] sm:$0xff]
  %v3586 = vld [vmem:[%s16 + $0xf0] sm:$0xff]
  %v3587 = vld [vmem:[%s16 + $0xf8] sm:$0xff]
  %v3588 = vld [vmem:[%s16 + $0x100] sm:$0xff]
  %v3589 = vld [vmem:[%s16 + $0x108] sm:$0xff]
  %v3590 = vld [vmem:[%s16 + $0x110] sm:$0xff]
  %v3591 = vld [vmem:[%s16 + $0x118] sm:$0xff]
  %v3592 = vld [vmem:[%s16 + $0x120] sm:$0xff]
  %v3593 = vld [vmem:[%s16 + $0x128] sm:$0xff]
  %v3594 = vld [vmem:[%s16 + $0x130] sm:$0xff]
  %v3595 = vld [vmem:[%s16 + $0x138] sm:$0xff]
  %v3596 = vld [vmem:[%s16 + $0x140] sm:$0xff]
  %v3597 = vld [vmem:[%s16 + $0x148] sm:$0xff]
  %v3598 = vld [vmem:[%s16 + $0x150] sm:$0xff]
  %v3599 = vld [vmem:[%s16 + $0x158] sm:$0xff]
  %v3600 = vld [vmem:[%s16 + $0x160] sm:$0xff]
  %v3601 = vld [vmem:[%s16 + $0x168] sm:$0xff]
  %v3602 = vld [vmem:[%s16 + $0x170] sm:$0xff]
  %v3603 = vld [vmem:[%s16 + $0x178] sm:$0xff]
  %v3604 = vld [vmem:[%s16 + $0x180] sm:$0xff]
  %v3605 = vld [vmem:[%s16 + $0x188] sm:$0xff]
  %v3606 = vld [vmem:[%s16 + $0x190] sm:$0xff]
  %v3607 = vld [vmem:[%s16 + $0x198] sm:$0xff]
  %v3608 = vld [vmem:[%s16 + $0x1a0] sm:$0xff]
  %v3609 = vld [vmem:[%s16 + $0x1a8] sm:$0xff]
  %v3610 = vld [vmem:[%s16 + $0x1b0] sm:$0xff]
  %v3611 = vld [vmem:[%s16 + $0x1b8] sm:$0xff]
  %v3612 = vld [vmem:[%s16 + $0x1c0] sm:$0xff]
  %v3613 = vld [vmem:[%s16 + $0x1c8] sm:$0xff]
  %v3614 = vld [vmem:[%s16 + $0x1d0] sm:$0xff]
  %v3615 = vld [vmem:[%s16 + $0x1d8] sm:$0xff]
  %v3616 = vld [vmem:[%s16 + $0x1e0] sm:$0xff]
  %v3617 = vld [vmem:[%s16 + $0x1e8] sm:$0xff]
  %v3618 = vld [vmem:[%s16 + $0x1f0] sm:$0xff]
  %v3619 = vld [vmem:[%s16 + $0x1f8] sm:$0xff]
  %v3620 = vld [vmem:[%s16 + $0x200] sm:$0xff]
  %v3621 = vld [vmem:[%s16 + $0x208] sm:$0xff]
  %v3622 = vld [vmem:[%s16 + $0x210] sm:$0xff]
  %v3623 = vld [vmem:[%s16 + $0x218] sm:$0xff]
  %v3624 = vld [vmem:[%s16 + $0x220] sm:$0xff]
  %v3625 = vld [vmem:[%s16 + $0x228] sm:$0xff]
  %v3626 = vld [vmem:[%s16 + $0x230] sm:$0xff]
  %v3627 = vld [vmem:[%s16 + $0x238] sm:$0xff]
  %v3628 = vld [vmem:[%s16 + $0x240] sm:$0x1f]
  %v3629 = vld [vmem:[%s16 + $0x248] sm:$0x1f]
  %3636 = vrot.lane.b32.xlu0 %v3550, 127
  %v3637 = vpop.permute.xlu0 %3636
  %3638 = vrot.lane.b32.xlu0 %v3551, 127
  %v3639 = vpop.permute.xlu0 %3638
  %3640 = vrot.lane.b32.xlu0 %v3552, 127
  %v3641 = vpop.permute.xlu0 %3640
  %3642 = vrot.lane.b32.xlu0 %v3553, 127
  %v3643 = vpop.permute.xlu0 %3642
  %3644 = vrot.lane.b32.xlu0 %v3554, 127
  %v3645 = vpop.permute.xlu0 %3644
  %3646 = vrot.lane.b32.xlu0 %v3555, 127
  %v3647 = vpop.permute.xlu0 %3646
  %v3648 = vsel %vm144, %v3637, %v3639
  %v3649 = vsel %vm144, %v3639, %v3641
  %v3650 = vsel %vm144, %v3643, %v3645
  %v3651 = vsel %vm144, %v3645, %v3647
  %vm3656 = vcmask 302080
  %v3657 = vsel %vm3656, %v3641, 0
  %v3659 = vsel %vm3656, %v3647, 0
  %vm3661 = vcmask 1044480
  %v3663 = vsel %vm3661, %v3628, 0
  %v3666 = vsel %vm3661, %v3629, 0
  %3668 = vmatprep.subr.mxu0 %v3587
  %3669 = vmatpush1.msra.mxu0 %v3586
  %3670 = vmatprep.subr.mxu0 %v3585
  %3671 = vmatpush1.msra.mxu0 %v3584
  %3672 = vmatprep.subr.mxu0 %v3583
  %3673 = vmatpush1.msra.mxu0 %v3582
  %3674 = vmatprep.subr.mxu0 %v3581
  %3675 = vmatpush1.msra.mxu0 %v3580
  %3676 = vmatprep.subr.mxu0 %v3579
  %3677 = vmatpush1.msra.mxu0 %v3578
  %3678 = vmatprep.subr.mxu0 %v3577
  %3679 = vmatpush1.msra.mxu0 %v3576
  %3680 = vmatprep.subr.mxu0 %v3575
  %3681 = vmatpush1.msra.mxu0 %v3574
  %3682 = vmatprep.subr.mxu0 %v3573
  %3683 = vmatpush1.msra.mxu0 %v3572
  %3684 = vmatprep.subr.mxu0 %v3571
  %3685 = vmatpush1.msra.mxu0 %v3570
  %3686 = vmatprep.subr.mxu0 %v3569
  %3687 = vmatpush1.msra.mxu0 %v3568
  %3688 = vmatprep.subr.mxu0 %v3567
  %3689 = vmatpush1.msra.mxu0 %v3566
  %3690 = vmatprep.subr.mxu0 %v3565
  %3691 = vmatpush1.msra.mxu0 %v3564
  %3692 = vmatprep.subr.mxu0 %v3563
  %3693 = vmatpush1.msra.mxu0 %v3562
  %3694 = vmatprep.subr.mxu0 %v3561
  %3695 = vmatpush1.msra.mxu0 %v3560
  %3696 = vmatprep.subr.mxu0 %v3559
  %3697 = vmatpush1.msra.mxu0 %v3558
  %3698 = vmatprep.subr.mxu0 %v3557
  %3699 = vmatpush1.msra.mxu0 %v3556
  %3700 = vmatprep.subr.mxu0 %v3619
  %3701 = vmatpush2.msra.mxu0 %v3618
  %3702 = vmatprep.subr.mxu0 %v3617
  %3703 = vmatpush2.msra.mxu0 %v3616
  %3704 = vmatprep.subr.mxu0 %v3615
  %3705 = vmatpush2.msra.mxu0 %v3614
  %3706 = vmatprep.subr.mxu0 %v3613
  %3707 = vmatpush2.msra.mxu0 %v3612
  %3708 = vmatprep.subr.mxu0 %v3611
  %3709 = vmatpush2.msra.mxu0 %v3610
  %3710 = vmatprep.subr.mxu0 %v3609
  %3711 = vmatpush2.msra.mxu0 %v3608
  %3712 = vmatprep.subr.mxu0 %v3607
  %3713 = vmatpush2.msra.mxu0 %v3606
  %3714 = vmatprep.subr.mxu0 %v3605
  %3715 = vmatpush2.msra.mxu0 %v3604
  %3716 = vmatprep.subr.mxu0 %v3603
  %3717 = vmatpush2.msra.mxu0 %v3602
  %3718 = vmatprep.subr.mxu0 %v3601
  %3719 = vmatpush2.msra.mxu0 %v3600
  %3720 = vmatprep.subr.mxu0 %v3599
  %3721 = vmatpush2.msra.mxu0 %v3598
  %3722 = vmatprep.subr.mxu0 %v3597
  %3723 = vmatpush2.msra.mxu0 %v3596
  %3724 = vmatprep.subr.mxu0 %v3595
  %3725 = vmatpush2.msra.mxu0 %v3594
  %3726 = vmatprep.subr.mxu0 %v3593
  %3727 = vmatpush2.msra.mxu0 %v3592
  %3728 = vmatprep.subr.mxu0 %v3591
  %3729 = vmatpush2.msra.mxu0 %v3590
  %3730 = vmatprep.subr.mxu0 %v3589
  %3731 = vmatpush2.msra.mxu0 %v3588
  %3732 = vmatprep.mubr.f32.mxu0 %v3649
  %3733 = vmatmul.mubr.f32.gmra.mxu0 %v3648
  %v3734 = vpop.f32.mrf.mxu0
  %v3735 = vadd.f32 0.0, %v3734
  %v3736 = vpop.f32.mrf.mxu0
  %v3737 = vadd.f32 0.0, %v3736
  %3738 = vmatprep.mubr.f32.mxu0 %v3651
  %3739 = vmatmul.mubr.f32.gmra.mxu0 %v3650
  %v3740 = vpop.f32.mrf.mxu0
  %v3741 = vadd.f32 0.0, %v3740
  %v3742 = vpop.f32.mrf.mxu0
  %v3743 = vadd.f32 0.0, %v3742
  %3744 = vdwg.mxu0
  %3745 = vmatprep.subr.mxu0 0.0
  %3746 = vmatpush1.msra.mxu0 0.0
  %3747 = vmatprep.subr.mxu0 0.0
  %3748 = vmatpush1.msra.mxu0 0.0
  %3749 = vmatprep.subr.mxu0 0.0
  %3750 = vmatpush1.msra.mxu0 0.0
  %3751 = vmatprep.subr.mxu0 0.0
  %3752 = vmatpush1.msra.mxu0 0.0
  %3753 = vmatprep.subr.mxu0 0.0
  %3754 = vmatpush1.msra.mxu0 0.0
  %3755 = vmatprep.subr.mxu0 0.0
  %3756 = vmatpush1.msra.mxu0 0.0
  %3757 = vmatprep.subr.mxu0 0.0
  %3758 = vmatpush1.msra.mxu0 0.0
  %3759 = vmatprep.subr.mxu0 0.0
  %3760 = vmatpush1.msra.mxu0 0.0
  %3761 = vmatprep.subr.mxu0 0.0
  %3762 = vmatpush1.msra.mxu0 0.0
  %3763 = vmatprep.subr.mxu0 0.0
  %3764 = vmatpush1.msra.mxu0 0.0
  %3765 = vmatprep.subr.mxu0 0.0
  %3766 = vmatpush1.msra.mxu0 0.0
  %3767 = vmatprep.subr.mxu0 %v3666
  %3768 = vmatpush1.msra.mxu0 %v3663
  %3769 = vmatprep.subr.mxu0 %v3627
  %3770 = vmatpush1.msra.mxu0 %v3626
  %3771 = vmatprep.subr.mxu0 %v3625
  %3772 = vmatpush1.msra.mxu0 %v3624
  %3773 = vmatprep.subr.mxu0 %v3623
  %3774 = vmatpush1.msra.mxu0 %v3622
  %3775 = vmatprep.subr.mxu0 %v3621
  %3776 = vmatpush1.msra.mxu0 %v3620
  %3777 = vmatprep.subr.mxu0 0.0
  %3778 = vmatpush2.msra.mxu0 0.0
  %3779 = vmatprep.subr.mxu0 0.0
  %3780 = vmatpush2.msra.mxu0 0.0
  %3781 = vmatprep.subr.mxu0 0.0
  %3782 = vmatpush2.msra.mxu0 0.0
  %3783 = vmatprep.subr.mxu0 0.0
  %3784 = vmatpush2.msra.mxu0 0.0
  %3785 = vmatprep.subr.mxu0 0.0
  %3786 = vmatpush2.msra.mxu0 0.0
  %3787 = vmatprep.subr.mxu0 0.0
  %3788 = vmatpush2.msra.mxu0 0.0
  %3789 = vmatprep.subr.mxu0 0.0
  %3790 = vmatpush2.msra.mxu0 0.0
  %3791 = vmatprep.subr.mxu0 0.0
  %3792 = vmatpush2.msra.mxu0 0.0
  %3793 = vmatprep.subr.mxu0 0.0
  %3794 = vmatpush2.msra.mxu0 0.0
  %3795 = vmatprep.subr.mxu0 0.0
  %3796 = vmatpush2.msra.mxu0 0.0
  %3797 = vmatprep.subr.mxu0 0.0
  %3798 = vmatpush2.msra.mxu0 0.0
  %3799 = vmatprep.subr.mxu0 0.0
  %3800 = vmatpush2.msra.mxu0 0.0
  %3801 = vmatprep.subr.mxu0 0.0
  %3802 = vmatpush2.msra.mxu0 0.0
  %3803 = vmatprep.subr.mxu0 0.0
  %3804 = vmatpush2.msra.mxu0 0.0
  %3805 = vmatprep.subr.mxu0 0.0
  %3806 = vmatpush2.msra.mxu0 0.0
  %3807 = vmatprep.subr.mxu0 0.0
  %3808 = vmatpush2.msra.mxu0 0.0
  %3809 = vmatprep.mubr.f32.mxu0 0.0
  %3810 = vmatmul.mubr.f32.gmra.mxu0 %v3657
  %v3811 = vpop.f32.mrf.mxu0
  %v3812 = vadd.f32 %v3735, %v3811
  %v3813 = vpop.f32.mrf.mxu0
  %v3814 = vadd.f32 %v3737, %v3813
  %3815 = vmatprep.mubr.f32.mxu0 0.0
  %3816 = vmatmul.mubr.f32.gmra.mxu0 %v3659
  %v3817 = vpop.f32.mrf.mxu0
  %v3818 = vadd.f32 %v3741, %v3817
  %v3819 = vpop.f32.mrf.mxu0
  %v3820 = vadd.f32 %v3743, %v3819
  %3821 = vdwg.mxu0
  %v3822 = vld [vmem:[%s9] sm:$0xff]
  %v3823 = vld [vmem:[%s9 + $0x8] sm:$0xff]
  %3825 = vset.pattern.permute.xlu0 0
  %3826 = vperm.xlu0 %3825, %v3822
  %v3827 = vpop.permute.xlu0 %3826
  %3830 = vset.pattern.permute.xlu0 0
  %3831 = vperm.xlu0 %3830, %v3823
  %v3832 = vpop.permute.xlu0 %3831
  %v3834 = vlaneseq
  %v3835 = vshrl.u32 %v3834, 7
  %v3836 = vsub.s32 0, %v3835
  %v3837 = vrot.slane %v3812, %v3836
  %v3838 = vlaneseq
  %v3839 = vshrl.u32 %v3838, 7
  %v3840 = vsub.s32 0, %v3839
  %v3841 = vrot.slane %v3814, %v3840
  %v3842 = vmul.f32 %v3827, %v3837
  %v3843 = vmul.f32 %v3827, %v3841
  %v3844 = vmul.f32 %v3832, %v3837
  %v3845 = vmul.f32 %v3832, %v3841
  %v3846 = vadd.f32 %v3842, 0.0
  %v3847 = vadd.f32 %v3843, 0.0
  %v3848 = vadd.f32 %v3844, 0.0
  %v3849 = vadd.f32 %v3845, 0.0
  %3850 = vset.pattern.permute.xlu0 1
  %3851 = vperm.xlu0 %3850, %v3822
  %v3852 = vpop.permute.xlu0 %3851
  %3854 = vset.pattern.permute.xlu0 1
  %3855 = vperm.xlu0 %3854, %v3823
  %v3856 = vpop.permute.xlu0 %3855
  %v3858 = vlaneseq
  %v3859 = vshrl.u32 %v3858, 7
  %v3860 = vsub.s32 1, %v3859
  %v3861 = vrot.slane %v3812, %v3860
  %v3862 = vlaneseq
  %v3863 = vshrl.u32 %v3862, 7
  %v3864 = vsub.s32 1, %v3863
  %v3865 = vrot.slane %v3814, %v3864
  %v3866 = vmul.f32 %v3852, %v3861
  %v3867 = vmul.f32 %v3852, %v3865
  %v3868 = vmul.f32 %v3856, %v3861
  %v3869 = vmul.f32 %v3856, %v3865
  %v3870 = vadd.f32 %v3846, %v3866
  %v3871 = vadd.f32 %v3847, %v3867
  %v3872 = vadd.f32 %v3848, %v3868
  %v3873 = vadd.f32 %v3849, %v3869
  %3874 = vset.pattern.permute.xlu0 2
  %3875 = vperm.xlu0 %3874, %v3822
  %v3876 = vpop.permute.xlu0 %3875
  %3878 = vset.pattern.permute.xlu0 2
  %3879 = vperm.xlu0 %3878, %v3823
  %v3880 = vpop.permute.xlu0 %3879
  %v3882 = vlaneseq
  %v3883 = vshrl.u32 %v3882, 7
  %v3884 = vsub.s32 2, %v3883
  %v3885 = vrot.slane %v3812, %v3884
  %v3886 = vlaneseq
  %v3887 = vshrl.u32 %v3886, 7
  %v3888 = vsub.s32 2, %v3887
  %v3889 = vrot.slane %v3814, %v3888
  %v3890 = vmul.f32 %v3876, %v3885
  %v3891 = vmul.f32 %v3876, %v3889
  %v3892 = vmul.f32 %v3880, %v3885
  %v3893 = vmul.f32 %v3880, %v3889
  %v3894 = vadd.f32 %v3870, %v3890
  %v3895 = vadd.f32 %v3871, %v3891
  %v3896 = vadd.f32 %v3872, %v3892
  %v3897 = vadd.f32 %v3873, %v3893
  %3898 = vset.pattern.permute.xlu0 3
  %3899 = vperm.xlu0 %3898, %v3822
  %v3900 = vpop.permute.xlu0 %3899
  %3902 = vset.pattern.permute.xlu0 3
  %3903 = vperm.xlu0 %3902, %v3823
  %v3904 = vpop.permute.xlu0 %3903
  %v3906 = vlaneseq
  %v3907 = vshrl.u32 %v3906, 7
  %v3908 = vsub.s32 3, %v3907
  %v3909 = vrot.slane %v3812, %v3908
  %v3910 = vlaneseq
  %v3911 = vshrl.u32 %v3910, 7
  %v3912 = vsub.s32 3, %v3911
  %v3913 = vrot.slane %v3814, %v3912
  %v3914 = vmul.f32 %v3900, %v3909
  %v3915 = vmul.f32 %v3900, %v3913
  %v3916 = vmul.f32 %v3904, %v3909
  %v3917 = vmul.f32 %v3904, %v3913
  %v3918 = vadd.f32 %v3894, %v3914
  %v3919 = vadd.f32 %v3895, %v3915
  %v3920 = vadd.f32 %v3896, %v3916
  %v3921 = vadd.f32 %v3897, %v3917
  %3922 = vset.pattern.permute.xlu0 4
  %3923 = vperm.xlu0 %3922, %v3822
  %v3924 = vpop.permute.xlu0 %3923
  %3926 = vset.pattern.permute.xlu0 4
  %3927 = vperm.xlu0 %3926, %v3823
  %v3928 = vpop.permute.xlu0 %3927
  %v3930 = vlaneseq
  %v3931 = vshrl.u32 %v3930, 7
  %v3932 = vsub.s32 4, %v3931
  %v3933 = vrot.slane %v3812, %v3932
  %v3934 = vlaneseq
  %v3935 = vshrl.u32 %v3934, 7
  %v3936 = vsub.s32 4, %v3935
  %v3937 = vrot.slane %v3814, %v3936
  %v3938 = vmul.f32 %v3924, %v3933
  %v3939 = vmul.f32 %v3924, %v3937
  %v3940 = vmul.f32 %v3928, %v3933
  %v3941 = vmul.f32 %v3928, %v3937
  %v3942 = vadd.f32 %v3918, %v3938
  %v3943 = vadd.f32 %v3919, %v3939
  %v3944 = vadd.f32 %v3920, %v3940
  %v3945 = vadd.f32 %v3921, %v3941
  %3946 = vset.pattern.permute.xlu0 5
  %3947 = vperm.xlu0 %3946, %v3822
  %v3948 = vpop.permute.xlu0 %3947
  %3950 = vset.pattern.permute.xlu0 5
  %3951 = vperm.xlu0 %3950, %v3823
  %v3952 = vpop.permute.xlu0 %3951
  %v3954 = vlaneseq
  %v3955 = vshrl.u32 %v3954, 7
  %v3956 = vsub.s32 5, %v3955
  %v3957 = vrot.slane %v3812, %v3956
  %v3958 = vlaneseq
  %v3959 = vshrl.u32 %v3958, 7
  %v3960 = vsub.s32 5, %v3959
  %v3961 = vrot.slane %v3814, %v3960
  %v3962 = vmul.f32 %v3948, %v3957
  %v3963 = vmul.f32 %v3948, %v3961
  %v3964 = vmul.f32 %v3952, %v3957
  %v3965 = vmul.f32 %v3952, %v3961
  %v3966 = vadd.f32 %v3942, %v3962
  %v3967 = vadd.f32 %v3943, %v3963
  %v3968 = vadd.f32 %v3944, %v3964
  %v3969 = vadd.f32 %v3945, %v3965
  %3970 = vset.pattern.permute.xlu0 6
  %3971 = vperm.xlu0 %3970, %v3822
  %v3972 = vpop.permute.xlu0 %3971
  %3974 = vset.pattern.permute.xlu0 6
  %3975 = vperm.xlu0 %3974, %v3823
  %v3976 = vpop.permute.xlu0 %3975
  %v3978 = vlaneseq
  %v3979 = vshrl.u32 %v3978, 7
  %v3980 = vsub.s32 6, %v3979
  %v3981 = vrot.slane %v3812, %v3980
  %v3982 = vlaneseq
  %v3983 = vshrl.u32 %v3982, 7
  %v3984 = vsub.s32 6, %v3983
  %v3985 = vrot.slane %v3814, %v3984
  %v3986 = vmul.f32 %v3972, %v3981
  %v3987 = vmul.f32 %v3972, %v3985
  %v3988 = vmul.f32 %v3976, %v3981
  %v3989 = vmul.f32 %v3976, %v3985
  %v3990 = vadd.f32 %v3966, %v3986
  %v3991 = vadd.f32 %v3967, %v3987
  %v3992 = vadd.f32 %v3968, %v3988
  %v3993 = vadd.f32 %v3969, %v3989
  %3994 = vset.pattern.permute.xlu0 7
  %3995 = vperm.xlu0 %3994, %v3822
  %v3996 = vpop.permute.xlu0 %3995
  %3998 = vset.pattern.permute.xlu0 7
  %3999 = vperm.xlu0 %3998, %v3823
  %v4000 = vpop.permute.xlu0 %3999
  %v4002 = vlaneseq
  %v4003 = vshrl.u32 %v4002, 7
  %v4004 = vsub.s32 7, %v4003
  %v4005 = vrot.slane %v3812, %v4004
  %v4006 = vlaneseq
  %v4007 = vshrl.u32 %v4006, 7
  %v4008 = vsub.s32 7, %v4007
  %v4009 = vrot.slane %v3814, %v4008
  %v4010 = vmul.f32 %v3996, %v4005
  %v4011 = vmul.f32 %v3996, %v4009
  %v4012 = vmul.f32 %v4000, %v4005
  %v4013 = vmul.f32 %v4000, %v4009
  %v4014 = vadd.f32 %v3990, %v4010
  %v4015 = vadd.f32 %v3991, %v4011
  %v4016 = vadd.f32 %v3992, %v4012
  %v4017 = vadd.f32 %v3993, %v4013
  %s4018 = scalar_lea.vmem %s9, 16
  %v4019 = vld [vmem:[%s4018] sm:$0xff]
  %v4020 = vld [vmem:[%s4018 + $0x8] sm:$0xff]
  %4022 = vset.pattern.permute.xlu0 0
  %4023 = vperm.xlu0 %4022, %v4019
  %v4024 = vpop.permute.xlu0 %4023
  %4027 = vset.pattern.permute.xlu0 0
  %4028 = vperm.xlu0 %4027, %v4020
  %v4029 = vpop.permute.xlu0 %4028
  %v4031 = vmul.f32 %v4024, %v3837
  %v4032 = vmul.f32 %v4024, %v3841
  %v4033 = vmul.f32 %v4029, %v3837
  %v4034 = vmul.f32 %v4029, %v3841
  %4039 = vrot.lane.b32.xlu0 %v4031, 127
  %v4040 = vpop.permute.xlu0 %4039
  %4041 = vrot.lane.b32.xlu0 %v4032, 127
  %v4042 = vpop.permute.xlu0 %4041
  %4043 = vrot.lane.b32.xlu0 %v4033, 127
  %v4044 = vpop.permute.xlu0 %4043
  %4045 = vrot.lane.b32.xlu0 %v4034, 127
  %v4046 = vpop.permute.xlu0 %4045
  %v4047 = vsel %vm144, %v4040, %v4042
  %v4048 = vsel %vm144, %v4044, %v4046
  %v4053 = vadd.f32 %v4014, %v4047
  %v4054 = vadd.f32 %v4015, %v4042
  %v4055 = vadd.f32 %v4016, %v4048
  %v4056 = vadd.f32 %v4017, %v4046
  %4057 = vset.pattern.permute.xlu0 1
  %4058 = vperm.xlu0 %4057, %v4019
  %v4059 = vpop.permute.xlu0 %4058
  %4061 = vset.pattern.permute.xlu0 1
  %4062 = vperm.xlu0 %4061, %v4020
  %v4063 = vpop.permute.xlu0 %4062
  %v4065 = vmul.f32 %v4059, %v3861
  %v4066 = vmul.f32 %v4059, %v3865
  %v4067 = vmul.f32 %v4063, %v3861
  %v4068 = vmul.f32 %v4063, %v3865
  %4073 = vrot.lane.b32.xlu0 %v4065, 127
  %v4074 = vpop.permute.xlu0 %4073
  %4075 = vrot.lane.b32.xlu0 %v4066, 127
  %v4076 = vpop.permute.xlu0 %4075
  %4077 = vrot.lane.b32.xlu0 %v4067, 127
  %v4078 = vpop.permute.xlu0 %4077
  %4079 = vrot.lane.b32.xlu0 %v4068, 127
  %v4080 = vpop.permute.xlu0 %4079
  %v4081 = vsel %vm144, %v4074, %v4076
  %v4082 = vsel %vm144, %v4078, %v4080
  %v4087 = vadd.f32 %v4053, %v4081
  %v4088 = vadd.f32 %v4054, %v4076
  %v4089 = vadd.f32 %v4055, %v4082
  %v4090 = vadd.f32 %v4056, %v4080
  %4091 = vset.pattern.permute.xlu0 2
  %4092 = vperm.xlu0 %4091, %v4019
  %v4093 = vpop.permute.xlu0 %4092
  %4095 = vset.pattern.permute.xlu0 2
  %4096 = vperm.xlu0 %4095, %v4020
  %v4097 = vpop.permute.xlu0 %4096
  %v4099 = vmul.f32 %v4093, %v3885
  %v4100 = vmul.f32 %v4093, %v3889
  %v4101 = vmul.f32 %v4097, %v3885
  %v4102 = vmul.f32 %v4097, %v3889
  %4107 = vrot.lane.b32.xlu0 %v4099, 127
  %v4108 = vpop.permute.xlu0 %4107
  %4109 = vrot.lane.b32.xlu0 %v4100, 127
  %v4110 = vpop.permute.xlu0 %4109
  %4111 = vrot.lane.b32.xlu0 %v4101, 127
  %v4112 = vpop.permute.xlu0 %4111
  %4113 = vrot.lane.b32.xlu0 %v4102, 127
  %v4114 = vpop.permute.xlu0 %4113
  %v4115 = vsel %vm144, %v4108, %v4110
  %v4116 = vsel %vm144, %v4112, %v4114
  %v4121 = vadd.f32 %v4087, %v4115
  %v4122 = vadd.f32 %v4088, %v4110
  %v4123 = vadd.f32 %v4089, %v4116
  %v4124 = vadd.f32 %v4090, %v4114
  %4125 = vset.pattern.permute.xlu0 3
  %4126 = vperm.xlu0 %4125, %v4019
  %v4127 = vpop.permute.xlu0 %4126
  %4129 = vset.pattern.permute.xlu0 3
  %4130 = vperm.xlu0 %4129, %v4020
  %v4131 = vpop.permute.xlu0 %4130
  %v4133 = vmul.f32 %v4127, %v3909
  %v4134 = vmul.f32 %v4127, %v3913
  %v4135 = vmul.f32 %v4131, %v3909
  %v4136 = vmul.f32 %v4131, %v3913
  %4141 = vrot.lane.b32.xlu0 %v4133, 127
  %v4142 = vpop.permute.xlu0 %4141
  %4143 = vrot.lane.b32.xlu0 %v4134, 127
  %v4144 = vpop.permute.xlu0 %4143
  %4145 = vrot.lane.b32.xlu0 %v4135, 127
  %v4146 = vpop.permute.xlu0 %4145
  %4147 = vrot.lane.b32.xlu0 %v4136, 127
  %v4148 = vpop.permute.xlu0 %4147
  %v4149 = vsel %vm144, %v4142, %v4144
  %v4150 = vsel %vm144, %v4146, %v4148
  %v4155 = vadd.f32 %v4121, %v4149
  %v4156 = vadd.f32 %v4122, %v4144
  %v4157 = vadd.f32 %v4123, %v4150
  %v4158 = vadd.f32 %v4124, %v4148
  %4159 = vset.pattern.permute.xlu0 4
  %4160 = vperm.xlu0 %4159, %v4019
  %v4161 = vpop.permute.xlu0 %4160
  %4163 = vset.pattern.permute.xlu0 4
  %4164 = vperm.xlu0 %4163, %v4020
  %v4165 = vpop.permute.xlu0 %4164
  %v4167 = vmul.f32 %v4161, %v3933
  %v4168 = vmul.f32 %v4161, %v3937
  %v4169 = vmul.f32 %v4165, %v3933
  %v4170 = vmul.f32 %v4165, %v3937
  %4175 = vrot.lane.b32.xlu0 %v4167, 127
  %v4176 = vpop.permute.xlu0 %4175
  %4177 = vrot.lane.b32.xlu0 %v4168, 127
  %v4178 = vpop.permute.xlu0 %4177
  %4179 = vrot.lane.b32.xlu0 %v4169, 127
  %v4180 = vpop.permute.xlu0 %4179
  %4181 = vrot.lane.b32.xlu0 %v4170, 127
  %v4182 = vpop.permute.xlu0 %4181
  %v4183 = vsel %vm144, %v4176, %v4178
  %v4184 = vsel %vm144, %v4180, %v4182
  %v4189 = vadd.f32 %v4155, %v4183
  %v4190 = vadd.f32 %v4156, %v4178
  %v4191 = vadd.f32 %v4157, %v4184
  %v4192 = vadd.f32 %v4158, %v4182
  %4193 = vset.pattern.permute.xlu0 5
  %4194 = vperm.xlu0 %4193, %v4019
  %v4195 = vpop.permute.xlu0 %4194
  %4197 = vset.pattern.permute.xlu0 5
  %4198 = vperm.xlu0 %4197, %v4020
  %v4199 = vpop.permute.xlu0 %4198
  %v4201 = vmul.f32 %v4195, %v3957
  %v4202 = vmul.f32 %v4195, %v3961
  %v4203 = vmul.f32 %v4199, %v3957
  %v4204 = vmul.f32 %v4199, %v3961
  %4209 = vrot.lane.b32.xlu0 %v4201, 127
  %v4210 = vpop.permute.xlu0 %4209
  %4211 = vrot.lane.b32.xlu0 %v4202, 127
  %v4212 = vpop.permute.xlu0 %4211
  %4213 = vrot.lane.b32.xlu0 %v4203, 127
  %v4214 = vpop.permute.xlu0 %4213
  %4215 = vrot.lane.b32.xlu0 %v4204, 127
  %v4216 = vpop.permute.xlu0 %4215
  %v4217 = vsel %vm144, %v4210, %v4212
  %v4218 = vsel %vm144, %v4214, %v4216
  %v4223 = vadd.f32 %v4189, %v4217
  %v4224 = vadd.f32 %v4190, %v4212
  %v4225 = vadd.f32 %v4191, %v4218
  %v4226 = vadd.f32 %v4192, %v4216
  %4227 = vset.pattern.permute.xlu0 6
  %4228 = vperm.xlu0 %4227, %v4019
  %v4229 = vpop.permute.xlu0 %4228
  %4231 = vset.pattern.permute.xlu0 6
  %4232 = vperm.xlu0 %4231, %v4020
  %v4233 = vpop.permute.xlu0 %4232
  %v4235 = vmul.f32 %v4229, %v3981
  %v4236 = vmul.f32 %v4229, %v3985
  %v4237 = vmul.f32 %v4233, %v3981
  %v4238 = vmul.f32 %v4233, %v3985
  %4243 = vrot.lane.b32.xlu0 %v4235, 127
  %v4244 = vpop.permute.xlu0 %4243
  %4245 = vrot.lane.b32.xlu0 %v4236, 127
  %v4246 = vpop.permute.xlu0 %4245
  %4247 = vrot.lane.b32.xlu0 %v4237, 127
  %v4248 = vpop.permute.xlu0 %4247
  %4249 = vrot.lane.b32.xlu0 %v4238, 127
  %v4250 = vpop.permute.xlu0 %4249
  %v4251 = vsel %vm144, %v4244, %v4246
  %v4252 = vsel %vm144, %v4248, %v4250
  %v4257 = vadd.f32 %v4223, %v4251
  %v4258 = vadd.f32 %v4224, %v4246
  %v4259 = vadd.f32 %v4225, %v4252
  %v4260 = vadd.f32 %v4226, %v4250
  %4261 = vset.pattern.permute.xlu0 7
  %4262 = vperm.xlu0 %4261, %v4019
  %v4263 = vpop.permute.xlu0 %4262
  %4265 = vset.pattern.permute.xlu0 7
  %4266 = vperm.xlu0 %4265, %v4020
  %v4267 = vpop.permute.xlu0 %4266
  %v4269 = vmul.f32 %v4263, %v4005
  %v4270 = vmul.f32 %v4263, %v4009
  %v4271 = vmul.f32 %v4267, %v4005
  %v4272 = vmul.f32 %v4267, %v4009
  %4277 = vrot.lane.b32.xlu0 %v4269, 127
  %v4278 = vpop.permute.xlu0 %4277
  %4279 = vrot.lane.b32.xlu0 %v4270, 127
  %v4280 = vpop.permute.xlu0 %4279
  %4281 = vrot.lane.b32.xlu0 %v4271, 127
  %v4282 = vpop.permute.xlu0 %4281
  %4283 = vrot.lane.b32.xlu0 %v4272, 127
  %v4284 = vpop.permute.xlu0 %4283
  %v4285 = vsel %vm144, %v4278, %v4280
  %v4286 = vsel %vm144, %v4282, %v4284
  %v4291 = vadd.f32 %v4257, %v4285
  %v4292 = vadd.f32 %v4258, %v4280
  %v4293 = vadd.f32 %v4259, %v4286
  %v4294 = vadd.f32 %v4260, %v4284
  %s4295 = scalar_lea.vmem %s9, 32
  %v4296 = vld [vmem:[%s4295] sm:$0xff]
  %v4297 = vld [vmem:[%s4295 + $0x8] sm:$0xff]
  %4299 = vset.pattern.permute.xlu0 0
  %4300 = vperm.xlu0 %4299, %v4296
  %v4301 = vpop.permute.xlu0 %4300
  %4304 = vset.pattern.permute.xlu0 0
  %4305 = vperm.xlu0 %4304, %v4297
  %v4306 = vpop.permute.xlu0 %4305
  %v4308 = vmul.f32 %v4301, %v3837
  %v4309 = vmul.f32 %v4301, %v3841
  %v4310 = vmul.f32 %v4306, %v3837
  %v4311 = vmul.f32 %v4306, %v3841
  %4316 = vrot.lane.b32.xlu0 %v4308, 126
  %v4317 = vpop.permute.xlu0 %4316
  %4318 = vrot.lane.b32.xlu0 %v4309, 126
  %v4319 = vpop.permute.xlu0 %4318
  %4320 = vrot.lane.b32.xlu0 %v4310, 126
  %v4321 = vpop.permute.xlu0 %4320
  %4322 = vrot.lane.b32.xlu0 %v4311, 126
  %v4323 = vpop.permute.xlu0 %4322
  %v4324 = vsel %vm186, %v4317, %v4319
  %v4325 = vsel %vm186, %v4321, %v4323
  %v4330 = vadd.f32 %v4291, %v4324
  %v4331 = vadd.f32 %v4292, %v4319
  %v4332 = vadd.f32 %v4293, %v4325
  %v4333 = vadd.f32 %v4294, %v4323
  %4334 = vset.pattern.permute.xlu0 1
  %4335 = vperm.xlu0 %4334, %v4296
  %v4336 = vpop.permute.xlu0 %4335
  %4338 = vset.pattern.permute.xlu0 1
  %4339 = vperm.xlu0 %4338, %v4297
  %v4340 = vpop.permute.xlu0 %4339
  %v4342 = vmul.f32 %v4336, %v3861
  %v4343 = vmul.f32 %v4336, %v3865
  %v4344 = vmul.f32 %v4340, %v3861
  %v4345 = vmul.f32 %v4340, %v3865
  %4350 = vrot.lane.b32.xlu0 %v4342, 126
  %v4351 = vpop.permute.xlu0 %4350
  %4352 = vrot.lane.b32.xlu0 %v4343, 126
  %v4353 = vpop.permute.xlu0 %4352
  %4354 = vrot.lane.b32.xlu0 %v4344, 126
  %v4355 = vpop.permute.xlu0 %4354
  %4356 = vrot.lane.b32.xlu0 %v4345, 126
  %v4357 = vpop.permute.xlu0 %4356
  %v4358 = vsel %vm186, %v4351, %v4353
  %v4359 = vsel %vm186, %v4355, %v4357
  %v4364 = vadd.f32 %v4330, %v4358
  %v4365 = vadd.f32 %v4331, %v4353
  %v4366 = vadd.f32 %v4332, %v4359
  %v4367 = vadd.f32 %v4333, %v4357
  %4368 = vset.pattern.permute.xlu0 2
  %4369 = vperm.xlu0 %4368, %v4296
  %v4370 = vpop.permute.xlu0 %4369
  %4372 = vset.pattern.permute.xlu0 2
  %4373 = vperm.xlu0 %4372, %v4297
  %v4374 = vpop.permute.xlu0 %4373
  %v4376 = vmul.f32 %v4370, %v3885
  %v4377 = vmul.f32 %v4370, %v3889
  %v4378 = vmul.f32 %v4374, %v3885
  %v4379 = vmul.f32 %v4374, %v3889
  %4384 = vrot.lane.b32.xlu0 %v4376, 126
  %v4385 = vpop.permute.xlu0 %4384
  %4386 = vrot.lane.b32.xlu0 %v4377, 126
  %v4387 = vpop.permute.xlu0 %4386
  %4388 = vrot.lane.b32.xlu0 %v4378, 126
  %v4389 = vpop.permute.xlu0 %4388
  %4390 = vrot.lane.b32.xlu0 %v4379, 126
  %v4391 = vpop.permute.xlu0 %4390
  %v4392 = vsel %vm186, %v4385, %v4387
  %v4393 = vsel %vm186, %v4389, %v4391
  %v4398 = vadd.f32 %v4364, %v4392
  %v4399 = vadd.f32 %v4365, %v4387
  %v4400 = vadd.f32 %v4366, %v4393
  %v4401 = vadd.f32 %v4367, %v4391
  %4402 = vset.pattern.permute.xlu0 3
  %4403 = vperm.xlu0 %4402, %v4296
  %v4404 = vpop.permute.xlu0 %4403
  %4406 = vset.pattern.permute.xlu0 3
  %4407 = vperm.xlu0 %4406, %v4297
  %v4408 = vpop.permute.xlu0 %4407
  %v4410 = vmul.f32 %v4404, %v3909
  %v4411 = vmul.f32 %v4404, %v3913
  %v4412 = vmul.f32 %v4408, %v3909
  %v4413 = vmul.f32 %v4408, %v3913
  %4418 = vrot.lane.b32.xlu0 %v4410, 126
  %v4419 = vpop.permute.xlu0 %4418
  %4420 = vrot.lane.b32.xlu0 %v4411, 126
  %v4421 = vpop.permute.xlu0 %4420
  %4422 = vrot.lane.b32.xlu0 %v4412, 126
  %v4423 = vpop.permute.xlu0 %4422
  %4424 = vrot.lane.b32.xlu0 %v4413, 126
  %v4425 = vpop.permute.xlu0 %4424
  %v4426 = vsel %vm186, %v4419, %v4421
  %v4427 = vsel %vm186, %v4423, %v4425
  %v4432 = vadd.f32 %v4398, %v4426
  %v4433 = vadd.f32 %v4399, %v4421
  %v4434 = vadd.f32 %v4400, %v4427
  %v4435 = vadd.f32 %v4401, %v4425
  %4436 = vset.pattern.permute.xlu0 4
  %4437 = vperm.xlu0 %4436, %v4296
  %v4438 = vpop.permute.xlu0 %4437
  %4440 = vset.pattern.permute.xlu0 4
  %4441 = vperm.xlu0 %4440, %v4297
  %v4442 = vpop.permute.xlu0 %4441
  %v4444 = vmul.f32 %v4438, %v3933
  %v4445 = vmul.f32 %v4438, %v3937
  %v4446 = vmul.f32 %v4442, %v3933
  %v4447 = vmul.f32 %v4442, %v3937
  %4452 = vrot.lane.b32.xlu0 %v4444, 126
  %v4453 = vpop.permute.xlu0 %4452
  %4454 = vrot.lane.b32.xlu0 %v4445, 126
  %v4455 = vpop.permute.xlu0 %4454
  %4456 = vrot.lane.b32.xlu0 %v4446, 126
  %v4457 = vpop.permute.xlu0 %4456
  %4458 = vrot.lane.b32.xlu0 %v4447, 126
  %v4459 = vpop.permute.xlu0 %4458
  %v4460 = vsel %vm186, %v4453, %v4455
  %v4461 = vsel %vm186, %v4457, %v4459
  %v4466 = vadd.f32 %v4432, %v4460
  %v4467 = vadd.f32 %v4433, %v4455
  %v4468 = vadd.f32 %v4434, %v4461
  %v4469 = vadd.f32 %v4435, %v4459
  %4470 = vset.pattern.permute.xlu0 5
  %4471 = vperm.xlu0 %4470, %v4296
  %v4472 = vpop.permute.xlu0 %4471
  %4474 = vset.pattern.permute.xlu0 5
  %4475 = vperm.xlu0 %4474, %v4297
  %v4476 = vpop.permute.xlu0 %4475
  %v4478 = vmul.f32 %v4472, %v3957
  %v4479 = vmul.f32 %v4472, %v3961
  %v4480 = vmul.f32 %v4476, %v3957
  %v4481 = vmul.f32 %v4476, %v3961
  %4486 = vrot.lane.b32.xlu0 %v4478, 126
  %v4487 = vpop.permute.xlu0 %4486
  %4488 = vrot.lane.b32.xlu0 %v4479, 126
  %v4489 = vpop.permute.xlu0 %4488
  %4490 = vrot.lane.b32.xlu0 %v4480, 126
  %v4491 = vpop.permute.xlu0 %4490
  %4492 = vrot.lane.b32.xlu0 %v4481, 126
  %v4493 = vpop.permute.xlu0 %4492
  %v4494 = vsel %vm186, %v4487, %v4489
  %v4495 = vsel %vm186, %v4491, %v4493
  %v4500 = vadd.f32 %v4466, %v4494
  %v4501 = vadd.f32 %v4467, %v4489
  %v4502 = vadd.f32 %v4468, %v4495
  %v4503 = vadd.f32 %v4469, %v4493
  %4504 = vset.pattern.permute.xlu0 6
  %4505 = vperm.xlu0 %4504, %v4296
  %v4506 = vpop.permute.xlu0 %4505
  %4508 = vset.pattern.permute.xlu0 6
  %4509 = vperm.xlu0 %4508, %v4297
  %v4510 = vpop.permute.xlu0 %4509
  %v4512 = vmul.f32 %v4506, %v3981
  %v4513 = vmul.f32 %v4506, %v3985
  %v4514 = vmul.f32 %v4510, %v3981
  %v4515 = vmul.f32 %v4510, %v3985
  %4520 = vrot.lane.b32.xlu0 %v4512, 126
  %v4521 = vpop.permute.xlu0 %4520
  %4522 = vrot.lane.b32.xlu0 %v4513, 126
  %v4523 = vpop.permute.xlu0 %4522
  %4524 = vrot.lane.b32.xlu0 %v4514, 126
  %v4525 = vpop.permute.xlu0 %4524
  %4526 = vrot.lane.b32.xlu0 %v4515, 126
  %v4527 = vpop.permute.xlu0 %4526
  %v4528 = vsel %vm186, %v4521, %v4523
  %v4529 = vsel %vm186, %v4525, %v4527
  %v4534 = vadd.f32 %v4500, %v4528
  %v4535 = vadd.f32 %v4501, %v4523
  %v4536 = vadd.f32 %v4502, %v4529
  %v4537 = vadd.f32 %v4503, %v4527
  %4538 = vset.pattern.permute.xlu0 7
  %4539 = vperm.xlu0 %4538, %v4296
  %v4540 = vpop.permute.xlu0 %4539
  %4542 = vset.pattern.permute.xlu0 7
  %4543 = vperm.xlu0 %4542, %v4297
  %v4544 = vpop.permute.xlu0 %4543
  %v4546 = vmul.f32 %v4540, %v4005
  %v4547 = vmul.f32 %v4540, %v4009
  %v4548 = vmul.f32 %v4544, %v4005
  %v4549 = vmul.f32 %v4544, %v4009
  %4554 = vrot.lane.b32.xlu0 %v4546, 126
  %v4555 = vpop.permute.xlu0 %4554
  %4556 = vrot.lane.b32.xlu0 %v4547, 126
  %v4557 = vpop.permute.xlu0 %4556
  %4558 = vrot.lane.b32.xlu0 %v4548, 126
  %v4559 = vpop.permute.xlu0 %4558
  %4560 = vrot.lane.b32.xlu0 %v4549, 126
  %v4561 = vpop.permute.xlu0 %4560
  %v4562 = vsel %vm186, %v4555, %v4557
  %v4563 = vsel %vm186, %v4559, %v4561
  %v4568 = vadd.f32 %v4534, %v4562
  %v4569 = vadd.f32 %v4535, %v4557
  %v4570 = vadd.f32 %v4536, %v4563
  %v4571 = vadd.f32 %v4537, %v4561
  %v4572 = vld [vmem:[%s10] sm:$0xff]
  %v4573 = vld [vmem:[%s10 + $0x8] sm:$0xff]
  %4575 = vset.pattern.permute.xlu0 0
  %4576 = vperm.xlu0 %4575, %v4572
  %v4577 = vpop.permute.xlu0 %4576
  %4580 = vset.pattern.permute.xlu0 0
  %4581 = vperm.xlu0 %4580, %v4573
  %v4582 = vpop.permute.xlu0 %4581
  %v4584 = vadd.f32 %v4568, %v4577
  %v4585 = vadd.f32 %v4569, %v4577
  %v4586 = vadd.f32 %v4570, %v4582
  %v4587 = vadd.f32 %v4571, %v4582
  %v4588 = vmax.f32 %v4584, 0.0
  %v4589 = vmax.f32 %v4585, 0.0
  %v4590 = vmax.f32 %v4586, 0.0
  %v4591 = vmax.f32 %v4587, 0.0
  %v4592 = vlaneseq
  %v4593 = vshrl.u32 %v4592, 7
  %v4594 = vsub.s32 0, %v4593
  %v4595 = vrot.slane %v3818, %v4594
  %v4596 = vlaneseq
  %v4597 = vshrl.u32 %v4596, 7
  %v4598 = vsub.s32 0, %v4597
  %v4599 = vrot.slane %v3820, %v4598
  %v4600 = vmul.f32 %v3827, %v4595
  %v4601 = vmul.f32 %v3827, %v4599
  %v4602 = vmul.f32 %v3832, %v4595
  %v4603 = vmul.f32 %v3832, %v4599
  %v4604 = vadd.f32 %v4600, 0.0
  %v4605 = vadd.f32 %v4601, 0.0
  %v4606 = vadd.f32 %v4602, 0.0
  %v4607 = vadd.f32 %v4603, 0.0
  %v4608 = vlaneseq
  %v4609 = vshrl.u32 %v4608, 7
  %v4610 = vsub.s32 1, %v4609
  %v4611 = vrot.slane %v3818, %v4610
  %v4612 = vlaneseq
  %v4613 = vshrl.u32 %v4612, 7
  %v4614 = vsub.s32 1, %v4613
  %v4615 = vrot.slane %v3820, %v4614
  %v4616 = vmul.f32 %v3852, %v4611
  %v4617 = vmul.f32 %v3852, %v4615
  %v4618 = vmul.f32 %v3856, %v4611
  %v4619 = vmul.f32 %v3856, %v4615
  %v4620 = vadd.f32 %v4604, %v4616
  %v4621 = vadd.f32 %v4605, %v4617
  %v4622 = vadd.f32 %v4606, %v4618
  %v4623 = vadd.f32 %v4607, %v4619
  %v4624 = vlaneseq
  %v4625 = vshrl.u32 %v4624, 7
  %v4626 = vsub.s32 2, %v4625
  %v4627 = vrot.slane %v3818, %v4626
  %v4628 = vlaneseq
  %v4629 = vshrl.u32 %v4628, 7
  %v4630 = vsub.s32 2, %v4629
  %v4631 = vrot.slane %v3820, %v4630
  %v4632 = vmul.f32 %v3876, %v4627
  %v4633 = vmul.f32 %v3876, %v4631
  %v4634 = vmul.f32 %v3880, %v4627
  %v4635 = vmul.f32 %v3880, %v4631
  %v4636 = vadd.f32 %v4620, %v4632
  %v4637 = vadd.f32 %v4621, %v4633
  %v4638 = vadd.f32 %v4622, %v4634
  %v4639 = vadd.f32 %v4623, %v4635
  %v4640 = vlaneseq
  %v4641 = vshrl.u32 %v4640, 7
  %v4642 = vsub.s32 3, %v4641
  %v4643 = vrot.slane %v3818, %v4642
  %v4644 = vlaneseq
  %v4645 = vshrl.u32 %v4644, 7
  %v4646 = vsub.s32 3, %v4645
  %v4647 = vrot.slane %v3820, %v4646
  %v4648 = vmul.f32 %v3900, %v4643
  %v4649 = vmul.f32 %v3900, %v4647
  %v4650 = vmul.f32 %v3904, %v4643
  %v4651 = vmul.f32 %v3904, %v4647
  %v4652 = vadd.f32 %v4636, %v4648
  %v4653 = vadd.f32 %v4637, %v4649
  %v4654 = vadd.f32 %v4638, %v4650
  %v4655 = vadd.f32 %v4639, %v4651
  %v4656 = vlaneseq
  %v4657 = vshrl.u32 %v4656, 7
  %v4658 = vsub.s32 4, %v4657
  %v4659 = vrot.slane %v3818, %v4658
  %v4660 = vlaneseq
  %v4661 = vshrl.u32 %v4660, 7
  %v4662 = vsub.s32 4, %v4661
  %v4663 = vrot.slane %v3820, %v4662
  %v4664 = vmul.f32 %v3924, %v4659
  %v4665 = vmul.f32 %v3924, %v4663
  %v4666 = vmul.f32 %v3928, %v4659
  %v4667 = vmul.f32 %v3928, %v4663
  %v4668 = vadd.f32 %v4652, %v4664
  %v4669 = vadd.f32 %v4653, %v4665
  %v4670 = vadd.f32 %v4654, %v4666
  %v4671 = vadd.f32 %v4655, %v4667
  %v4672 = vlaneseq
  %v4673 = vshrl.u32 %v4672, 7
  %v4674 = vsub.s32 5, %v4673
  %v4675 = vrot.slane %v3818, %v4674
  %v4676 = vlaneseq
  %v4677 = vshrl.u32 %v4676, 7
  %v4678 = vsub.s32 5, %v4677
  %v4679 = vrot.slane %v3820, %v4678
  %v4680 = vmul.f32 %v3948, %v4675
  %v4681 = vmul.f32 %v3948, %v4679
  %v4682 = vmul.f32 %v3952, %v4675
  %v4683 = vmul.f32 %v3952, %v4679
  %v4684 = vadd.f32 %v4668, %v4680
  %v4685 = vadd.f32 %v4669, %v4681
  %v4686 = vadd.f32 %v4670, %v4682
  %v4687 = vadd.f32 %v4671, %v4683
  %v4688 = vlaneseq
  %v4689 = vshrl.u32 %v4688, 7
  %v4690 = vsub.s32 6, %v4689
  %v4691 = vrot.slane %v3818, %v4690
  %v4692 = vlaneseq
  %v4693 = vshrl.u32 %v4692, 7
  %v4694 = vsub.s32 6, %v4693
  %v4695 = vrot.slane %v3820, %v4694
  %v4696 = vmul.f32 %v3972, %v4691
  %v4697 = vmul.f32 %v3972, %v4695
  %v4698 = vmul.f32 %v3976, %v4691
  %v4699 = vmul.f32 %v3976, %v4695
  %v4700 = vadd.f32 %v4684, %v4696
  %v4701 = vadd.f32 %v4685, %v4697
  %v4702 = vadd.f32 %v4686, %v4698
  %v4703 = vadd.f32 %v4687, %v4699
  %v4704 = vlaneseq
  %v4705 = vshrl.u32 %v4704, 7
  %v4706 = vsub.s32 7, %v4705
  %v4707 = vrot.slane %v3818, %v4706
  %v4708 = vlaneseq
  %v4709 = vshrl.u32 %v4708, 7
  %v4710 = vsub.s32 7, %v4709
  %v4711 = vrot.slane %v3820, %v4710
  %v4712 = vmul.f32 %v3996, %v4707
  %v4713 = vmul.f32 %v3996, %v4711
  %v4714 = vmul.f32 %v4000, %v4707
  %v4715 = vmul.f32 %v4000, %v4711
  %v4716 = vadd.f32 %v4700, %v4712
  %v4717 = vadd.f32 %v4701, %v4713
  %v4718 = vadd.f32 %v4702, %v4714
  %v4719 = vadd.f32 %v4703, %v4715
  %v4720 = vmul.f32 %v4024, %v4595
  %v4721 = vmul.f32 %v4024, %v4599
  %v4722 = vmul.f32 %v4029, %v4595
  %v4723 = vmul.f32 %v4029, %v4599
  %4728 = vrot.lane.b32.xlu0 %v4720, 127
  %v4729 = vpop.permute.xlu0 %4728
  %4730 = vrot.lane.b32.xlu0 %v4721, 127
  %v4731 = vpop.permute.xlu0 %4730
  %4732 = vrot.lane.b32.xlu0 %v4722, 127
  %v4733 = vpop.permute.xlu0 %4732
  %4734 = vrot.lane.b32.xlu0 %v4723, 127
  %v4735 = vpop.permute.xlu0 %4734
  %v4736 = vsel %vm144, %v4729, %v4731
  %v4737 = vsel %vm144, %v4733, %v4735
  %v4742 = vadd.f32 %v4716, %v4736
  %v4743 = vadd.f32 %v4717, %v4731
  %v4744 = vadd.f32 %v4718, %v4737
  %v4745 = vadd.f32 %v4719, %v4735
  %v4746 = vmul.f32 %v4059, %v4611
  %v4747 = vmul.f32 %v4059, %v4615
  %v4748 = vmul.f32 %v4063, %v4611
  %v4749 = vmul.f32 %v4063, %v4615
  %4754 = vrot.lane.b32.xlu0 %v4746, 127
  %v4755 = vpop.permute.xlu0 %4754
  %4756 = vrot.lane.b32.xlu0 %v4747, 127
  %v4757 = vpop.permute.xlu0 %4756
  %4758 = vrot.lane.b32.xlu0 %v4748, 127
  %v4759 = vpop.permute.xlu0 %4758
  %4760 = vrot.lane.b32.xlu0 %v4749, 127
  %v4761 = vpop.permute.xlu0 %4760
  %v4762 = vsel %vm144, %v4755, %v4757
  %v4763 = vsel %vm144, %v4759, %v4761
  %v4768 = vadd.f32 %v4742, %v4762
  %v4769 = vadd.f32 %v4743, %v4757
  %v4770 = vadd.f32 %v4744, %v4763
  %v4771 = vadd.f32 %v4745, %v4761
  %v4772 = vmul.f32 %v4093, %v4627
  %v4773 = vmul.f32 %v4093, %v4631
  %v4774 = vmul.f32 %v4097, %v4627
  %v4775 = vmul.f32 %v4097, %v4631
  %4780 = vrot.lane.b32.xlu0 %v4772, 127
  %v4781 = vpop.permute.xlu0 %4780
  %4782 = vrot.lane.b32.xlu0 %v4773, 127
  %v4783 = vpop.permute.xlu0 %4782
  %4784 = vrot.lane.b32.xlu0 %v4774, 127
  %v4785 = vpop.permute.xlu0 %4784
  %4786 = vrot.lane.b32.xlu0 %v4775, 127
  %v4787 = vpop.permute.xlu0 %4786
  %v4788 = vsel %vm144, %v4781, %v4783
  %v4789 = vsel %vm144, %v4785, %v4787
  %v4794 = vadd.f32 %v4768, %v4788
  %v4795 = vadd.f32 %v4769, %v4783
  %v4796 = vadd.f32 %v4770, %v4789
  %v4797 = vadd.f32 %v4771, %v4787
  %v4798 = vmul.f32 %v4127, %v4643
  %v4799 = vmul.f32 %v4127, %v4647
  %v4800 = vmul.f32 %v4131, %v4643
  %v4801 = vmul.f32 %v4131, %v4647
  %4806 = vrot.lane.b32.xlu0 %v4798, 127
  %v4807 = vpop.permute.xlu0 %4806
  %4808 = vrot.lane.b32.xlu0 %v4799, 127
  %v4809 = vpop.permute.xlu0 %4808
  %4810 = vrot.lane.b32.xlu0 %v4800, 127
  %v4811 = vpop.permute.xlu0 %4810
  %4812 = vrot.lane.b32.xlu0 %v4801, 127
  %v4813 = vpop.permute.xlu0 %4812
  %v4814 = vsel %vm144, %v4807, %v4809
  %v4815 = vsel %vm144, %v4811, %v4813
  %v4820 = vadd.f32 %v4794, %v4814
  %v4821 = vadd.f32 %v4795, %v4809
  %v4822 = vadd.f32 %v4796, %v4815
  %v4823 = vadd.f32 %v4797, %v4813
  %v4824 = vmul.f32 %v4161, %v4659
  %v4825 = vmul.f32 %v4161, %v4663
  %v4826 = vmul.f32 %v4165, %v4659
  %v4827 = vmul.f32 %v4165, %v4663
  %4832 = vrot.lane.b32.xlu0 %v4824, 127
  %v4833 = vpop.permute.xlu0 %4832
  %4834 = vrot.lane.b32.xlu0 %v4825, 127
  %v4835 = vpop.permute.xlu0 %4834
  %4836 = vrot.lane.b32.xlu0 %v4826, 127
  %v4837 = vpop.permute.xlu0 %4836
  %4838 = vrot.lane.b32.xlu0 %v4827, 127
  %v4839 = vpop.permute.xlu0 %4838
  %v4840 = vsel %vm144, %v4833, %v4835
  %v4841 = vsel %vm144, %v4837, %v4839
  %v4846 = vadd.f32 %v4820, %v4840
  %v4847 = vadd.f32 %v4821, %v4835
  %v4848 = vadd.f32 %v4822, %v4841
  %v4849 = vadd.f32 %v4823, %v4839
  %v4850 = vmul.f32 %v4195, %v4675
  %v4851 = vmul.f32 %v4195, %v4679
  %v4852 = vmul.f32 %v4199, %v4675
  %v4853 = vmul.f32 %v4199, %v4679
  %4858 = vrot.lane.b32.xlu0 %v4850, 127
  %v4859 = vpop.permute.xlu0 %4858
  %4860 = vrot.lane.b32.xlu0 %v4851, 127
  %v4861 = vpop.permute.xlu0 %4860
  %4862 = vrot.lane.b32.xlu0 %v4852, 127
  %v4863 = vpop.permute.xlu0 %4862
  %4864 = vrot.lane.b32.xlu0 %v4853, 127
  %v4865 = vpop.permute.xlu0 %4864
  %v4866 = vsel %vm144, %v4859, %v4861
  %v4867 = vsel %vm144, %v4863, %v4865
  %v4872 = vadd.f32 %v4846, %v4866
  %v4873 = vadd.f32 %v4847, %v4861
  %v4874 = vadd.f32 %v4848, %v4867
  %v4875 = vadd.f32 %v4849, %v4865
  %v4876 = vmul.f32 %v4229, %v4691
  %v4877 = vmul.f32 %v4229, %v4695
  %v4878 = vmul.f32 %v4233, %v4691
  %v4879 = vmul.f32 %v4233, %v4695
  %4884 = vrot.lane.b32.xlu0 %v4876, 127
  %v4885 = vpop.permute.xlu0 %4884
  %4886 = vrot.lane.b32.xlu0 %v4877, 127
  %v4887 = vpop.permute.xlu0 %4886
  %4888 = vrot.lane.b32.xlu0 %v4878, 127
  %v4889 = vpop.permute.xlu0 %4888
  %4890 = vrot.lane.b32.xlu0 %v4879, 127
  %v4891 = vpop.permute.xlu0 %4890
  %v4892 = vsel %vm144, %v4885, %v4887
  %v4893 = vsel %vm144, %v4889, %v4891
  %v4898 = vadd.f32 %v4872, %v4892
  %v4899 = vadd.f32 %v4873, %v4887
  %v4900 = vadd.f32 %v4874, %v4893
  %v4901 = vadd.f32 %v4875, %v4891
  %v4902 = vmul.f32 %v4263, %v4707
  %v4903 = vmul.f32 %v4263, %v4711
  %v4904 = vmul.f32 %v4267, %v4707
  %v4905 = vmul.f32 %v4267, %v4711
  %4910 = vrot.lane.b32.xlu0 %v4902, 127
  %v4911 = vpop.permute.xlu0 %4910
  %4912 = vrot.lane.b32.xlu0 %v4903, 127
  %v4913 = vpop.permute.xlu0 %4912
  %4914 = vrot.lane.b32.xlu0 %v4904, 127
  %v4915 = vpop.permute.xlu0 %4914
  %4916 = vrot.lane.b32.xlu0 %v4905, 127
  %v4917 = vpop.permute.xlu0 %4916
  %v4918 = vsel %vm144, %v4911, %v4913
  %v4919 = vsel %vm144, %v4915, %v4917
  %v4924 = vadd.f32 %v4898, %v4918
  %v4925 = vadd.f32 %v4899, %v4913
  %v4926 = vadd.f32 %v4900, %v4919
  %v4927 = vadd.f32 %v4901, %v4917
  %v4928 = vmul.f32 %v4301, %v4595
  %v4929 = vmul.f32 %v4301, %v4599
  %v4930 = vmul.f32 %v4306, %v4595
  %v4931 = vmul.f32 %v4306, %v4599
  %4936 = vrot.lane.b32.xlu0 %v4928, 126
  %v4937 = vpop.permute.xlu0 %4936
  %4938 = vrot.lane.b32.xlu0 %v4929, 126
  %v4939 = vpop.permute.xlu0 %4938
  %4940 = vrot.lane.b32.xlu0 %v4930, 126
  %v4941 = vpop.permute.xlu0 %4940
  %4942 = vrot.lane.b32.xlu0 %v4931, 126
  %v4943 = vpop.permute.xlu0 %4942
  %v4944 = vsel %vm186, %v4937, %v4939
  %v4945 = vsel %vm186, %v4941, %v4943
  %v4950 = vadd.f32 %v4924, %v4944
  %v4951 = vadd.f32 %v4925, %v4939
  %v4952 = vadd.f32 %v4926, %v4945
  %v4953 = vadd.f32 %v4927, %v4943
  %v4954 = vmul.f32 %v4336, %v4611
  %v4955 = vmul.f32 %v4336, %v4615
  %v4956 = vmul.f32 %v4340, %v4611
  %v4957 = vmul.f32 %v4340, %v4615
  %4962 = vrot.lane.b32.xlu0 %v4954, 126
  %v4963 = vpop.permute.xlu0 %4962
  %4964 = vrot.lane.b32.xlu0 %v4955, 126
  %v4965 = vpop.permute.xlu0 %4964
  %4966 = vrot.lane.b32.xlu0 %v4956, 126
  %v4967 = vpop.permute.xlu0 %4966
  %4968 = vrot.lane.b32.xlu0 %v4957, 126
  %v4969 = vpop.permute.xlu0 %4968
  %v4970 = vsel %vm186, %v4963, %v4965
  %v4971 = vsel %vm186, %v4967, %v4969
  %v4976 = vadd.f32 %v4950, %v4970
  %v4977 = vadd.f32 %v4951, %v4965
  %v4978 = vadd.f32 %v4952, %v4971
  %v4979 = vadd.f32 %v4953, %v4969
  %v4980 = vmul.f32 %v4370, %v4627
  %v4981 = vmul.f32 %v4370, %v4631
  %v4982 = vmul.f32 %v4374, %v4627
  %v4983 = vmul.f32 %v4374, %v4631
  %4988 = vrot.lane.b32.xlu0 %v4980, 126
  %v4989 = vpop.permute.xlu0 %4988
  %4990 = vrot.lane.b32.xlu0 %v4981, 126
  %v4991 = vpop.permute.xlu0 %4990
  %4992 = vrot.lane.b32.xlu0 %v4982, 126
  %v4993 = vpop.permute.xlu0 %4992
  %4994 = vrot.lane.b32.xlu0 %v4983, 126
  %v4995 = vpop.permute.xlu0 %4994
  %v4996 = vsel %vm186, %v4989, %v4991
  %v4997 = vsel %vm186, %v4993, %v4995
  %v5002 = vadd.f32 %v4976, %v4996
  %v5003 = vadd.f32 %v4977, %v4991
  %v5004 = vadd.f32 %v4978, %v4997
  %v5005 = vadd.f32 %v4979, %v4995
  %v5006 = vmul.f32 %v4404, %v4643
  %v5007 = vmul.f32 %v4404, %v4647
  %v5008 = vmul.f32 %v4408, %v4643
  %v5009 = vmul.f32 %v4408, %v4647
  %5014 = vrot.lane.b32.xlu0 %v5006, 126
  %v5015 = vpop.permute.xlu0 %5014
  %5016 = vrot.lane.b32.xlu0 %v5007, 126
  %v5017 = vpop.permute.xlu0 %5016
  %5018 = vrot.lane.b32.xlu0 %v5008, 126
  %v5019 = vpop.permute.xlu0 %5018
  %5020 = vrot.lane.b32.xlu0 %v5009, 126
  %v5021 = vpop.permute.xlu0 %5020
  %v5022 = vsel %vm186, %v5015, %v5017
  %v5023 = vsel %vm186, %v5019, %v5021
  %v5028 = vadd.f32 %v5002, %v5022
  %v5029 = vadd.f32 %v5003, %v5017
  %v5030 = vadd.f32 %v5004, %v5023
  %v5031 = vadd.f32 %v5005, %v5021
  %v5032 = vmul.f32 %v4438, %v4659
  %v5033 = vmul.f32 %v4438, %v4663
  %v5034 = vmul.f32 %v4442, %v4659
  %v5035 = vmul.f32 %v4442, %v4663
  %5040 = vrot.lane.b32.xlu0 %v5032, 126
  %v5041 = vpop.permute.xlu0 %5040
  %5042 = vrot.lane.b32.xlu0 %v5033, 126
  %v5043 = vpop.permute.xlu0 %5042
  %5044 = vrot.lane.b32.xlu0 %v5034, 126
  %v5045 = vpop.permute.xlu0 %5044
  %5046 = vrot.lane.b32.xlu0 %v5035, 126
  %v5047 = vpop.permute.xlu0 %5046
  %v5048 = vsel %vm186, %v5041, %v5043
  %v5049 = vsel %vm186, %v5045, %v5047
  %v5054 = vadd.f32 %v5028, %v5048
  %v5055 = vadd.f32 %v5029, %v5043
  %v5056 = vadd.f32 %v5030, %v5049
  %v5057 = vadd.f32 %v5031, %v5047
  %v5058 = vmul.f32 %v4472, %v4675
  %v5059 = vmul.f32 %v4472, %v4679
  %v5060 = vmul.f32 %v4476, %v4675
  %v5061 = vmul.f32 %v4476, %v4679
  %5066 = vrot.lane.b32.xlu0 %v5058, 126
  %v5067 = vpop.permute.xlu0 %5066
  %5068 = vrot.lane.b32.xlu0 %v5059, 126
  %v5069 = vpop.permute.xlu0 %5068
  %5070 = vrot.lane.b32.xlu0 %v5060, 126
  %v5071 = vpop.permute.xlu0 %5070
  %5072 = vrot.lane.b32.xlu0 %v5061, 126
  %v5073 = vpop.permute.xlu0 %5072
  %v5074 = vsel %vm186, %v5067, %v5069
  %v5075 = vsel %vm186, %v5071, %v5073
  %v5080 = vadd.f32 %v5054, %v5074
  %v5081 = vadd.f32 %v5055, %v5069
  %v5082 = vadd.f32 %v5056, %v5075
  %v5083 = vadd.f32 %v5057, %v5073
  %v5084 = vmul.f32 %v4506, %v4691
  %v5085 = vmul.f32 %v4506, %v4695
  %v5086 = vmul.f32 %v4510, %v4691
  %v5087 = vmul.f32 %v4510, %v4695
  %5092 = vrot.lane.b32.xlu0 %v5084, 126
  %v5093 = vpop.permute.xlu0 %5092
  %5094 = vrot.lane.b32.xlu0 %v5085, 126
  %v5095 = vpop.permute.xlu0 %5094
  %5096 = vrot.lane.b32.xlu0 %v5086, 126
  %v5097 = vpop.permute.xlu0 %5096
  %5098 = vrot.lane.b32.xlu0 %v5087, 126
  %v5099 = vpop.permute.xlu0 %5098
  %v5100 = vsel %vm186, %v5093, %v5095
  %v5101 = vsel %vm186, %v5097, %v5099
  %v5106 = vadd.f32 %v5080, %v5100
  %v5107 = vadd.f32 %v5081, %v5095
  %v5108 = vadd.f32 %v5082, %v5101
  %v5109 = vadd.f32 %v5083, %v5099
  %v5110 = vmul.f32 %v4540, %v4707
  %v5111 = vmul.f32 %v4540, %v4711
  %v5112 = vmul.f32 %v4544, %v4707
  %v5113 = vmul.f32 %v4544, %v4711
  %5118 = vrot.lane.b32.xlu0 %v5110, 126
  %v5119 = vpop.permute.xlu0 %5118
  %5120 = vrot.lane.b32.xlu0 %v5111, 126
  %v5121 = vpop.permute.xlu0 %5120
  %5122 = vrot.lane.b32.xlu0 %v5112, 126
  %v5123 = vpop.permute.xlu0 %5122
  %5124 = vrot.lane.b32.xlu0 %v5113, 126
  %v5125 = vpop.permute.xlu0 %5124
  %v5126 = vsel %vm186, %v5119, %v5121
  %v5127 = vsel %vm186, %v5123, %v5125
  %v5132 = vadd.f32 %v5106, %v5126
  %v5133 = vadd.f32 %v5107, %v5121
  %v5134 = vadd.f32 %v5108, %v5127
  %v5135 = vadd.f32 %v5109, %v5125
  %v5136 = vadd.f32 %v5132, %v4577
  %v5137 = vadd.f32 %v5133, %v4577
  %v5138 = vadd.f32 %v5134, %v4582
  %v5139 = vadd.f32 %v5135, %v4582
  %v5140 = vmax.f32 %v5136, 0.0
  %v5141 = vmax.f32 %v5137, 0.0
  %v5142 = vmax.f32 %v5138, 0.0
  %v5143 = vmax.f32 %v5139, 0.0
  %5152 = vrot.lane.b32.xlu0 %v4588, 1
  %v5153 = vpop.permute.xlu0 %5152
  %5154 = vrot.lane.b32.xlu0 %v4589, 1
  %v5155 = vpop.permute.xlu0 %5154
  %5156 = vrot.lane.b32.xlu0 %v4590, 1
  %v5157 = vpop.permute.xlu0 %5156
  %5158 = vrot.lane.b32.xlu0 %v4591, 1
  %v5159 = vpop.permute.xlu0 %5158
  %5160 = vrot.lane.b32.xlu0 %v5140, 1
  %v5161 = vpop.permute.xlu0 %5160
  %5162 = vrot.lane.b32.xlu0 %v5141, 1
  %v5163 = vpop.permute.xlu0 %5162
  %5164 = vrot.lane.b32.xlu0 %v5142, 1
  %v5165 = vpop.permute.xlu0 %5164
  %5166 = vrot.lane.b32.xlu0 %v5143, 1
  %v5167 = vpop.permute.xlu0 %5166
  %v5168 = vsel %vm1235, %v5153, %v5155
  %v5169 = vsel %vm1235, %v5157, %v5159
  %v5170 = vsel %vm1235, %v5161, %v5163
  %v5171 = vsel %vm1235, %v5165, %v5167
  %v5180 = vmax.f32 %v4588, %v5153
  %v5181 = vmax.f32 %v4589, %v5168
  %v5182 = vmax.f32 %v4590, %v5157
  %v5183 = vmax.f32 %v4591, %v5169
  %v5184 = vmax.f32 %v5140, %v5161
  %v5185 = vmax.f32 %v5141, %v5170
  %v5186 = vmax.f32 %v5142, %v5165
  %v5187 = vmax.f32 %v5143, %v5171
  %v5188 = vmax.f32 %v4588, 0.0
  %v5189 = vmax.f32 %v4590, 0.0
  %v5190 = vmax.f32 %v5140, 0.0
  %v5191 = vmax.f32 %v5142, 0.0
  %v5192 = vsel %vm1235, %v5188, %v5180
  %v5193 = vsel %vm1235, %v5189, %v5182
  %v5194 = vsel %vm1235, %v5190, %v5184
  %v5195 = vsel %vm1235, %v5191, %v5186
  %v5196 = vld [vmem:[%s17] sm:$0xff]
  %v5197 = vld [vmem:[%s17 + $0x8] sm:$0xff]
  %v5198 = vld [vmem:[%s17 + $0x10] sm:$0xff]
  %v5199 = vld [vmem:[%s17 + $0x18] sm:$0xff]
  %v5200 = vld [vmem:[%s17 + $0x20] sm:$0xff]
  %v5201 = vld [vmem:[%s17 + $0x28] sm:$0xff]
  %v5202 = vld [vmem:[%s17 + $0x30] sm:$0xff]
  %v5203 = vld [vmem:[%s17 + $0x38] sm:$0xff]
  %v5204 = vld [vmem:[%s17 + $0x40] sm:$0xff]
  %v5205 = vld [vmem:[%s17 + $0x48] sm:$0xff]
  %v5206 = vld [vmem:[%s17 + $0x50] sm:$0xff]
  %v5207 = vld [vmem:[%s17 + $0x58] sm:$0xff]
  %v5208 = vld [vmem:[%s17 + $0x60] sm:$0xff]
  %v5209 = vld [vmem:[%s17 + $0x68] sm:$0xff]
  %v5210 = vld [vmem:[%s17 + $0x70] sm:$0xff]
  %v5211 = vld [vmem:[%s17 + $0x78] sm:$0xff]
  %v5212 = vld [vmem:[%s17 + $0x80] sm:$0xff]
  %v5213 = vld [vmem:[%s17 + $0x88] sm:$0xff]
  %v5214 = vld [vmem:[%s17 + $0x90] sm:$0x1]
  %vm5215 = vcmask 138240
  %v5217 = vsel %vm5215, %v5181, 0
  %v5220 = vsel %vm5215, %v5183, 0
  %v5223 = vsel %vm5215, %v5185, 0
  %v5226 = vsel %vm5215, %v5187, 0
  %vm5228 = vcmask 1040384
  %v5230 = vsel %vm5228, %v5214, 0
  %5232 = vmatprep.subr.mxu0 0.0
  %5233 = vmatpush1.msra.mxu0 %v5211
  %5234 = vmatprep.subr.mxu0 0.0
  %5235 = vmatpush1.msra.mxu0 %v5210
  %5236 = vmatprep.subr.mxu0 0.0
  %5237 = vmatpush1.msra.mxu0 %v5209
  %5238 = vmatprep.subr.mxu0 0.0
  %5239 = vmatpush1.msra.mxu0 %v5208
  %5240 = vmatprep.subr.mxu0 0.0
  %5241 = vmatpush1.msra.mxu0 %v5207
  %5242 = vmatprep.subr.mxu0 0.0
  %5243 = vmatpush1.msra.mxu0 %v5206
  %5244 = vmatprep.subr.mxu0 0.0
  %5245 = vmatpush1.msra.mxu0 %v5205
  %5246 = vmatprep.subr.mxu0 0.0
  %5247 = vmatpush1.msra.mxu0 %v5204
  %5248 = vmatprep.subr.mxu0 0.0
  %5249 = vmatpush1.msra.mxu0 %v5203
  %5250 = vmatprep.subr.mxu0 0.0
  %5251 = vmatpush1.msra.mxu0 %v5202
  %5252 = vmatprep.subr.mxu0 0.0
  %5253 = vmatpush1.msra.mxu0 %v5201
  %5254 = vmatprep.subr.mxu0 0.0
  %5255 = vmatpush1.msra.mxu0 %v5200
  %5256 = vmatprep.subr.mxu0 0.0
  %5257 = vmatpush1.msra.mxu0 %v5199
  %5258 = vmatprep.subr.mxu0 0.0
  %5259 = vmatpush1.msra.mxu0 %v5198
  %5260 = vmatprep.subr.mxu0 0.0
  %5261 = vmatpush1.msra.mxu0 %v5197
  %5262 = vmatprep.subr.mxu0 0.0
  %5263 = vmatpush1.msra.mxu0 %v5196
  %5264 = vmatprep.subr.mxu0 0.0
  %5265 = vmatpush2.msra.mxu0 0.0
  %5266 = vmatprep.subr.mxu0 0.0
  %5267 = vmatpush2.msra.mxu0 0.0
  %5268 = vmatprep.subr.mxu0 0.0
  %5269 = vmatpush2.msra.mxu0 0.0
  %5270 = vmatprep.subr.mxu0 0.0
  %5271 = vmatpush2.msra.mxu0 0.0
  %5272 = vmatprep.subr.mxu0 0.0
  %5273 = vmatpush2.msra.mxu0 0.0
  %5274 = vmatprep.subr.mxu0 0.0
  %5275 = vmatpush2.msra.mxu0 0.0
  %5276 = vmatprep.subr.mxu0 0.0
  %5277 = vmatpush2.msra.mxu0 0.0
  %5278 = vmatprep.subr.mxu0 0.0
  %5279 = vmatpush2.msra.mxu0 0.0
  %5280 = vmatprep.subr.mxu0 0.0
  %5281 = vmatpush2.msra.mxu0 0.0
  %5282 = vmatprep.subr.mxu0 0.0
  %5283 = vmatpush2.msra.mxu0 0.0
  %5284 = vmatprep.subr.mxu0 0.0
  %5285 = vmatpush2.msra.mxu0 0.0
  %5286 = vmatprep.subr.mxu0 0.0
  %5287 = vmatpush2.msra.mxu0 0.0
  %5288 = vmatprep.subr.mxu0 0.0
  %5289 = vmatpush2.msra.mxu0 0.0
  %5290 = vmatprep.subr.mxu0 0.0
  %5291 = vmatpush2.msra.mxu0 %v5230
  %5292 = vmatprep.subr.mxu0 0.0
  %5293 = vmatpush2.msra.mxu0 %v5213
  %5294 = vmatprep.subr.mxu0 0.0
  %5295 = vmatpush2.msra.mxu0 %v5212
  %5296 = vmatprep.mubr.f32.mxu0 %v5217
  %5297 = vmatmul.mubr.f32.gmra.mxu0 %v5192
  %v5298 = vpop.f32.mrf.mxu0
  %v5299 = vadd.f32 0.0, %v5298
  %v5300 = vpop.f32.mrf.mxu0
  %5301 = vmatprep.mubr.f32.mxu0 %v5220
  %5302 = vmatmul.mubr.f32.gmra.mxu0 %v5193
  %v5303 = vpop.f32.mrf.mxu0
  %v5304 = vadd.f32 0.0, %v5303
  %v5305 = vpop.f32.mrf.mxu0
  %5306 = vmatprep.mubr.f32.mxu0 %v5223
  %5307 = vmatmul.mubr.f32.gmra.mxu0 %v5194
  %v5308 = vpop.f32.mrf.mxu0
  %v5309 = vadd.f32 0.0, %v5308
  %v5310 = vpop.f32.mrf.mxu0
  %5311 = vmatprep.mubr.f32.mxu0 %v5226
  %5312 = vmatmul.mubr.f32.gmra.mxu0 %v5195
  %v5313 = vpop.f32.mrf.mxu0
  %v5314 = vadd.f32 0.0, %v5313
  %v5315 = vpop.f32.mrf.mxu0
  %5316 = vdwg.mxu0
  %v5317 = vld [vmem:[%s11] sm:$0xff]
  %v5318 = vld [vmem:[%s11 + $0x8] sm:$0xff]
  %v5319 = vld [vmem:[%s11 + $0x10] sm:$0xff]
  %v5320 = vld [vmem:[%s11 + $0x18] sm:$0xff]
  %s5321 = scalar_lea.vmem %s11, 32
  %v5322 = vld [vmem:[%s5321] sm:$0xff]
  %v5323 = vld [vmem:[%s5321 + $0x8] sm:$0xff]
  %v5324 = vld [vmem:[%s5321 + $0x10] sm:$0xff]
  %v5325 = vld [vmem:[%s5321 + $0x18] sm:$0xff]
  %5328 = vrot.lane.b32.xlu0 %v5299, 127
  %v5329 = vpop.permute.xlu0 %5328
  %5330 = vrot.lane.b32.xlu0 %v5304, 127
  %v5331 = vpop.permute.xlu0 %5330
  %vm5334 = vcmask 130048
  %v5336 = vsel %vm5334, %v5322, 0
  %v5339 = vsel %vm5334, %v5323, 0
  %v5342 = vsel %vm5334, %v5324, 0
  %v5345 = vsel %vm5334, %v5325, 0
  %5347 = vmatprep.subr.mxu0 0.0
  %5348 = vmatpush1.msra.mxu0 0.0
  %5349 = vmatprep.subr.mxu0 0.0
  %5350 = vmatpush1.msra.mxu0 0.0
  %5351 = vmatprep.subr.mxu0 0.0
  %5352 = vmatpush1.msra.mxu0 0.0
  %5353 = vmatprep.subr.mxu0 0.0
  %5354 = vmatpush1.msra.mxu0 0.0
  %5355 = vmatprep.subr.mxu0 0.0
  %5356 = vmatpush1.msra.mxu0 0.0
  %5357 = vmatprep.subr.mxu0 0.0
  %5358 = vmatpush1.msra.mxu0 0.0
  %5359 = vmatprep.subr.mxu0 0.0
  %5360 = vmatpush1.msra.mxu0 0.0
  %5361 = vmatprep.subr.mxu0 0.0
  %5362 = vmatpush1.msra.mxu0 0.0
  %5363 = vmatprep.subr.mxu0 0.0
  %5364 = vmatpush1.msra.mxu0 0.0
  %5365 = vmatprep.subr.mxu0 0.0
  %5366 = vmatpush1.msra.mxu0 0.0
  %5367 = vmatprep.subr.mxu0 0.0
  %5368 = vmatpush1.msra.mxu0 0.0
  %5369 = vmatprep.subr.mxu0 0.0
  %5370 = vmatpush1.msra.mxu0 0.0
  %5371 = vmatprep.subr.mxu0 0.0
  %5372 = vmatpush1.msra.mxu0 0.0
  %5373 = vmatprep.subr.mxu0 0.0
  %5374 = vmatpush1.msra.mxu0 0.0
  %5375 = vmatprep.subr.mxu0 0.0
  %5376 = vmatpush1.msra.mxu0 %v5331
  %5377 = vmatprep.subr.mxu0 0.0
  %5378 = vmatpush1.msra.mxu0 %v5329
  %5379 = vmatprep.subr.mxu0 0.0
  %5380 = vmatpush2.msra.mxu0 0.0
  %5381 = vmatprep.subr.mxu0 0.0
  %5382 = vmatpush2.msra.mxu0 0.0
  %5383 = vmatprep.subr.mxu0 0.0
  %5384 = vmatpush2.msra.mxu0 0.0
  %5385 = vmatprep.subr.mxu0 0.0
  %5386 = vmatpush2.msra.mxu0 0.0
  %5387 = vmatprep.subr.mxu0 0.0
  %5388 = vmatpush2.msra.mxu0 0.0
  %5389 = vmatprep.subr.mxu0 0.0
  %5390 = vmatpush2.msra.mxu0 0.0
  %5391 = vmatprep.subr.mxu0 0.0
  %5392 = vmatpush2.msra.mxu0 0.0
  %5393 = vmatprep.subr.mxu0 0.0
  %5394 = vmatpush2.msra.mxu0 0.0
  %5395 = vmatprep.subr.mxu0 0.0
  %5396 = vmatpush2.msra.mxu0 0.0
  %5397 = vmatprep.subr.mxu0 0.0
  %5398 = vmatpush2.msra.mxu0 0.0
  %5399 = vmatprep.subr.mxu0 0.0
  %5400 = vmatpush2.msra.mxu0 0.0
  %5401 = vmatprep.subr.mxu0 0.0
  %5402 = vmatpush2.msra.mxu0 0.0
  %5403 = vmatprep.subr.mxu0 0.0
  %5404 = vmatpush2.msra.mxu0 0.0
  %5405 = vmatprep.subr.mxu0 0.0
  %5406 = vmatpush2.msra.mxu0 0.0
  %5407 = vmatprep.subr.mxu0 0.0
  %5408 = vmatpush2.msra.mxu0 0.0
  %5409 = vmatprep.subr.mxu0 0.0
  %5410 = vmatpush2.msra.mxu0 0.0
  %5411 = vmatprep.mubr.f32.mxu0 0.0
  %5412 = vmatmul.mubr.f32.gmra.mxu0 %v5336
  %v5413 = vpop.f32.mrf.mxu0
  %v5414 = vadd.f32 0.0, %v5413
  %v5415 = vpop.f32.mrf.mxu0
  %5416 = vmatprep.mubr.f32.mxu0 0.0
  %5417 = vmatmul.mubr.f32.gmra.mxu0 %v5339
  %v5418 = vpop.f32.mrf.mxu0
  %v5419 = vadd.f32 0.0, %v5418
  %v5420 = vpop.f32.mrf.mxu0
  %5421 = vmatprep.mubr.f32.mxu0 0.0
  %5422 = vmatmul.mubr.f32.gmra.mxu0 %v5342
  %v5423 = vpop.f32.mrf.mxu0
  %v5424 = vadd.f32 0.0, %v5423
  %v5425 = vpop.f32.mrf.mxu0
  %5426 = vmatprep.mubr.f32.mxu0 0.0
  %5427 = vmatmul.mubr.f32.gmra.mxu0 %v5345
  %v5428 = vpop.f32.mrf.mxu0
  %v5429 = vadd.f32 0.0, %v5428
  %v5430 = vpop.f32.mrf.mxu0
  %5431 = vdwg.mxu0
  %v5433 = vsel %vm5334, %v5317, 0
  %v5436 = vsel %vm5334, %v5318, 0
  %v5439 = vsel %vm5334, %v5319, 0
  %v5442 = vsel %vm5334, %v5320, 0
  %5444 = vmatprep.subr.mxu0 0.0
  %5445 = vmatpush1.msra.mxu0 0.0
  %5446 = vmatprep.subr.mxu0 0.0
  %5447 = vmatpush1.msra.mxu0 0.0
  %5448 = vmatprep.subr.mxu0 0.0
  %5449 = vmatpush1.msra.mxu0 0.0
  %5450 = vmatprep.subr.mxu0 0.0
  %5451 = vmatpush1.msra.mxu0 0.0
  %5452 = vmatprep.subr.mxu0 0.0
  %5453 = vmatpush1.msra.mxu0 0.0
  %5454 = vmatprep.subr.mxu0 0.0
  %5455 = vmatpush1.msra.mxu0 0.0
  %5456 = vmatprep.subr.mxu0 0.0
  %5457 = vmatpush1.msra.mxu0 0.0
  %5458 = vmatprep.subr.mxu0 0.0
  %5459 = vmatpush1.msra.mxu0 0.0
  %5460 = vmatprep.subr.mxu0 0.0
  %5461 = vmatpush1.msra.mxu0 0.0
  %5462 = vmatprep.subr.mxu0 0.0
  %5463 = vmatpush1.msra.mxu0 0.0
  %5464 = vmatprep.subr.mxu0 0.0
  %5465 = vmatpush1.msra.mxu0 0.0
  %5466 = vmatprep.subr.mxu0 0.0
  %5467 = vmatpush1.msra.mxu0 0.0
  %5468 = vmatprep.subr.mxu0 0.0
  %5469 = vmatpush1.msra.mxu0 0.0
  %5470 = vmatprep.subr.mxu0 0.0
  %5471 = vmatpush1.msra.mxu0 0.0
  %5472 = vmatprep.subr.mxu0 0.0
  %5473 = vmatpush1.msra.mxu0 %v5304
  %5474 = vmatprep.subr.mxu0 0.0
  %5475 = vmatpush1.msra.mxu0 %v5299
  %5476 = vmatprep.subr.mxu0 0.0
  %5477 = vmatpush2.msra.mxu0 0.0
  %5478 = vmatprep.subr.mxu0 0.0
  %5479 = vmatpush2.msra.mxu0 0.0
  %5480 = vmatprep.subr.mxu0 0.0
  %5481 = vmatpush2.msra.mxu0 0.0
  %5482 = vmatprep.subr.mxu0 0.0
  %5483 = vmatpush2.msra.mxu0 0.0
  %5484 = vmatprep.subr.mxu0 0.0
  %5485 = vmatpush2.msra.mxu0 0.0
  %5486 = vmatprep.subr.mxu0 0.0
  %5487 = vmatpush2.msra.mxu0 0.0
  %5488 = vmatprep.subr.mxu0 0.0
  %5489 = vmatpush2.msra.mxu0 0.0
  %5490 = vmatprep.subr.mxu0 0.0
  %5491 = vmatpush2.msra.mxu0 0.0
  %5492 = vmatprep.subr.mxu0 0.0
  %5493 = vmatpush2.msra.mxu0 0.0
  %5494 = vmatprep.subr.mxu0 0.0
  %5495 = vmatpush2.msra.mxu0 0.0
  %5496 = vmatprep.subr.mxu0 0.0
  %5497 = vmatpush2.msra.mxu0 0.0
  %5498 = vmatprep.subr.mxu0 0.0
  %5499 = vmatpush2.msra.mxu0 0.0
  %5500 = vmatprep.subr.mxu0 0.0
  %5501 = vmatpush2.msra.mxu0 0.0
  %5502 = vmatprep.subr.mxu0 0.0
  %5503 = vmatpush2.msra.mxu0 0.0
  %5504 = vmatprep.subr.mxu0 0.0
  %5505 = vmatpush2.msra.mxu0 0.0
  %5506 = vmatprep.subr.mxu0 0.0
  %5507 = vmatpush2.msra.mxu0 0.0
  %5508 = vmatprep.mubr.f32.mxu0 0.0
  %5509 = vmatmul.mubr.f32.gmra.mxu0 %v5433
  %v5510 = vpop.f32.mrf.mxu0
  %v5511 = vadd.f32 %v5414, %v5510
  %v5512 = vpop.f32.mrf.mxu0
  %5513 = vmatprep.mubr.f32.mxu0 0.0
  %5514 = vmatmul.mubr.f32.gmra.mxu0 %v5436
  %v5515 = vpop.f32.mrf.mxu0
  %v5516 = vadd.f32 %v5419, %v5515
  %v5517 = vpop.f32.mrf.mxu0
  %5518 = vmatprep.mubr.f32.mxu0 0.0
  %5519 = vmatmul.mubr.f32.gmra.mxu0 %v5439
  %v5520 = vpop.f32.mrf.mxu0
  %v5521 = vadd.f32 %v5424, %v5520
  %v5522 = vpop.f32.mrf.mxu0
  %5523 = vmatprep.mubr.f32.mxu0 0.0
  %5524 = vmatmul.mubr.f32.gmra.mxu0 %v5442
  %v5525 = vpop.f32.mrf.mxu0
  %v5526 = vadd.f32 %v5429, %v5525
  %v5527 = vpop.f32.mrf.mxu0
  %5528 = vdwg.mxu0
  %s5529 = scalar_lea.vmem %s11, 64
  %v5530 = vld [vmem:[%s5529] sm:$0xff]
  %v5531 = vld [vmem:[%s5529 + $0x8] sm:$0xff]
  %v5532 = vld [vmem:[%s5529 + $0x10] sm:$0xff]
  %v5533 = vld [vmem:[%s5529 + $0x18] sm:$0xff]
  %5534 = vrot.lane.b32.xlu0 %v5299, 126
  %v5535 = vpop.permute.xlu0 %5534
  %5536 = vrot.lane.b32.xlu0 %v5304, 126
  %v5537 = vpop.permute.xlu0 %5536
  %v5541 = vsel %vm5334, %v5530, 0
  %v5544 = vsel %vm5334, %v5531, 0
  %v5547 = vsel %vm5334, %v5532, 0
  %v5550 = vsel %vm5334, %v5533, 0
  %5552 = vmatprep.subr.mxu0 0.0
  %5553 = vmatpush1.msra.mxu0 0.0
  %5554 = vmatprep.subr.mxu0 0.0
  %5555 = vmatpush1.msra.mxu0 0.0
  %5556 = vmatprep.subr.mxu0 0.0
  %5557 = vmatpush1.msra.mxu0 0.0
  %5558 = vmatprep.subr.mxu0 0.0
  %5559 = vmatpush1.msra.mxu0 0.0
  %5560 = vmatprep.subr.mxu0 0.0
  %5561 = vmatpush1.msra.mxu0 0.0
  %5562 = vmatprep.subr.mxu0 0.0
  %5563 = vmatpush1.msra.mxu0 0.0
  %5564 = vmatprep.subr.mxu0 0.0
  %5565 = vmatpush1.msra.mxu0 0.0
  %5566 = vmatprep.subr.mxu0 0.0
  %5567 = vmatpush1.msra.mxu0 0.0
  %5568 = vmatprep.subr.mxu0 0.0
  %5569 = vmatpush1.msra.mxu0 0.0
  %5570 = vmatprep.subr.mxu0 0.0
  %5571 = vmatpush1.msra.mxu0 0.0
  %5572 = vmatprep.subr.mxu0 0.0
  %5573 = vmatpush1.msra.mxu0 0.0
  %5574 = vmatprep.subr.mxu0 0.0
  %5575 = vmatpush1.msra.mxu0 0.0
  %5576 = vmatprep.subr.mxu0 0.0
  %5577 = vmatpush1.msra.mxu0 0.0
  %5578 = vmatprep.subr.mxu0 0.0
  %5579 = vmatpush1.msra.mxu0 0.0
  %5580 = vmatprep.subr.mxu0 0.0
  %5581 = vmatpush1.msra.mxu0 %v5537
  %5582 = vmatprep.subr.mxu0 0.0
  %5583 = vmatpush1.msra.mxu0 %v5535
  %5584 = vmatprep.subr.mxu0 0.0
  %5585 = vmatpush2.msra.mxu0 0.0
  %5586 = vmatprep.subr.mxu0 0.0
  %5587 = vmatpush2.msra.mxu0 0.0
  %5588 = vmatprep.subr.mxu0 0.0
  %5589 = vmatpush2.msra.mxu0 0.0
  %5590 = vmatprep.subr.mxu0 0.0
  %5591 = vmatpush2.msra.mxu0 0.0
  %5592 = vmatprep.subr.mxu0 0.0
  %5593 = vmatpush2.msra.mxu0 0.0
  %5594 = vmatprep.subr.mxu0 0.0
  %5595 = vmatpush2.msra.mxu0 0.0
  %5596 = vmatprep.subr.mxu0 0.0
  %5597 = vmatpush2.msra.mxu0 0.0
  %5598 = vmatprep.subr.mxu0 0.0
  %5599 = vmatpush2.msra.mxu0 0.0
  %5600 = vmatprep.subr.mxu0 0.0
  %5601 = vmatpush2.msra.mxu0 0.0
  %5602 = vmatprep.subr.mxu0 0.0
  %5603 = vmatpush2.msra.mxu0 0.0
  %5604 = vmatprep.subr.mxu0 0.0
  %5605 = vmatpush2.msra.mxu0 0.0
  %5606 = vmatprep.subr.mxu0 0.0
  %5607 = vmatpush2.msra.mxu0 0.0
  %5608 = vmatprep.subr.mxu0 0.0
  %5609 = vmatpush2.msra.mxu0 0.0
  %5610 = vmatprep.subr.mxu0 0.0
  %5611 = vmatpush2.msra.mxu0 0.0
  %5612 = vmatprep.subr.mxu0 0.0
  %5613 = vmatpush2.msra.mxu0 0.0
  %5614 = vmatprep.subr.mxu0 0.0
  %5615 = vmatpush2.msra.mxu0 0.0
  %5616 = vmatprep.mubr.f32.mxu0 0.0
  %5617 = vmatmul.mubr.f32.gmra.mxu0 %v5541
  %v5618 = vpop.f32.mrf.mxu0
  %v5619 = vadd.f32 0.0, %v5618
  %v5620 = vpop.f32.mrf.mxu0
  %5621 = vmatprep.mubr.f32.mxu0 0.0
  %5622 = vmatmul.mubr.f32.gmra.mxu0 %v5544
  %v5623 = vpop.f32.mrf.mxu0
  %v5624 = vadd.f32 0.0, %v5623
  %v5625 = vpop.f32.mrf.mxu0
  %5626 = vmatprep.mubr.f32.mxu0 0.0
  %5627 = vmatmul.mubr.f32.gmra.mxu0 %v5547
  %v5628 = vpop.f32.mrf.mxu0
  %v5629 = vadd.f32 0.0, %v5628
  %v5630 = vpop.f32.mrf.mxu0
  %5631 = vmatprep.mubr.f32.mxu0 0.0
  %5632 = vmatmul.mubr.f32.gmra.mxu0 %v5550
  %v5633 = vpop.f32.mrf.mxu0
  %v5634 = vadd.f32 0.0, %v5633
  %v5635 = vpop.f32.mrf.mxu0
  %5636 = vdwg.mxu0
  %v5637 = vadd.f32 %v5511, %v5619
  %v5638 = vadd.f32 %v5516, %v5624
  %v5639 = vadd.f32 %v5521, %v5629
  %v5640 = vadd.f32 %v5526, %v5634
  %v5641 = vld [vmem:[%s12] sm:$0xff]
  %v5642 = vld [vmem:[%s12 + $0x8] sm:$0xff]
  %v5643 = vld [vmem:[%s12 + $0x10] sm:$0xff]
  %v5644 = vld [vmem:[%s12 + $0x18] sm:$0xff]
  %5646 = vset.pattern.permute.xlu0 0
  %5647 = vperm.xlu0 %5646, %v5641
  %v5648 = vpop.permute.xlu0 %5647
  %5651 = vset.pattern.permute.xlu0 0
  %5652 = vperm.xlu0 %5651, %v5642
  %v5653 = vpop.permute.xlu0 %5652
  %5656 = vset.pattern.permute.xlu0 0
  %5657 = vperm.xlu0 %5656, %v5643
  %v5658 = vpop.permute.xlu0 %5657
  %5661 = vset.pattern.permute.xlu0 0
  %5662 = vperm.xlu0 %5661, %v5644
  %v5663 = vpop.permute.xlu0 %5662
  %v5665 = vadd.f32 %v5637, %v5648
  %v5666 = vadd.f32 %v5638, %v5653
  %v5667 = vadd.f32 %v5639, %v5658
  %v5668 = vadd.f32 %v5640, %v5663
  %v5669 = vmax.f32 %v5665, 0.0
  %v5670 = vmax.f32 %v5666, 0.0
  %v5671 = vmax.f32 %v5667, 0.0
  %v5672 = vmax.f32 %v5668, 0.0
  %5675 = vrot.lane.b32.xlu0 %v5309, 127
  %v5676 = vpop.permute.xlu0 %5675
  %5677 = vrot.lane.b32.xlu0 %v5314, 127
  %v5678 = vpop.permute.xlu0 %5677
  %5681 = vmatprep.subr.mxu0 0.0
  %5682 = vmatpush1.msra.mxu0 0.0
  %5683 = vmatprep.subr.mxu0 0.0
  %5684 = vmatpush1.msra.mxu0 0.0
  %5685 = vmatprep.subr.mxu0 0.0
  %5686 = vmatpush1.msra.mxu0 0.0
  %5687 = vmatprep.subr.mxu0 0.0
  %5688 = vmatpush1.msra.mxu0 0.0
  %5689 = vmatprep.subr.mxu0 0.0
  %5690 = vmatpush1.msra.mxu0 0.0
  %5691 = vmatprep.subr.mxu0 0.0
  %5692 = vmatpush1.msra.mxu0 0.0
  %5693 = vmatprep.subr.mxu0 0.0
  %5694 = vmatpush1.msra.mxu0 0.0
  %5695 = vmatprep.subr.mxu0 0.0
  %5696 = vmatpush1.msra.mxu0 0.0
  %5697 = vmatprep.subr.mxu0 0.0
  %5698 = vmatpush1.msra.mxu0 0.0
  %5699 = vmatprep.subr.mxu0 0.0
  %5700 = vmatpush1.msra.mxu0 0.0
  %5701 = vmatprep.subr.mxu0 0.0
  %5702 = vmatpush1.msra.mxu0 0.0
  %5703 = vmatprep.subr.mxu0 0.0
  %5704 = vmatpush1.msra.mxu0 0.0
  %5705 = vmatprep.subr.mxu0 0.0
  %5706 = vmatpush1.msra.mxu0 0.0
  %5707 = vmatprep.subr.mxu0 0.0
  %5708 = vmatpush1.msra.mxu0 0.0
  %5709 = vmatprep.subr.mxu0 0.0
  %5710 = vmatpush1.msra.mxu0 %v5678
  %5711 = vmatprep.subr.mxu0 0.0
  %5712 = vmatpush1.msra.mxu0 %v5676
  %5713 = vmatprep.subr.mxu0 0.0
  %5714 = vmatpush2.msra.mxu0 0.0
  %5715 = vmatprep.subr.mxu0 0.0
  %5716 = vmatpush2.msra.mxu0 0.0
  %5717 = vmatprep.subr.mxu0 0.0
  %5718 = vmatpush2.msra.mxu0 0.0
  %5719 = vmatprep.subr.mxu0 0.0
  %5720 = vmatpush2.msra.mxu0 0.0
  %5721 = vmatprep.subr.mxu0 0.0
  %5722 = vmatpush2.msra.mxu0 0.0
  %5723 = vmatprep.subr.mxu0 0.0
  %5724 = vmatpush2.msra.mxu0 0.0
  %5725 = vmatprep.subr.mxu0 0.0
  %5726 = vmatpush2.msra.mxu0 0.0
  %5727 = vmatprep.subr.mxu0 0.0
  %5728 = vmatpush2.msra.mxu0 0.0
  %5729 = vmatprep.subr.mxu0 0.0
  %5730 = vmatpush2.msra.mxu0 0.0
  %5731 = vmatprep.subr.mxu0 0.0
  %5732 = vmatpush2.msra.mxu0 0.0
  %5733 = vmatprep.subr.mxu0 0.0
  %5734 = vmatpush2.msra.mxu0 0.0
  %5735 = vmatprep.subr.mxu0 0.0
  %5736 = vmatpush2.msra.mxu0 0.0
  %5737 = vmatprep.subr.mxu0 0.0
  %5738 = vmatpush2.msra.mxu0 0.0
  %5739 = vmatprep.subr.mxu0 0.0
  %5740 = vmatpush2.msra.mxu0 0.0
  %5741 = vmatprep.subr.mxu0 0.0
  %5742 = vmatpush2.msra.mxu0 0.0
  %5743 = vmatprep.subr.mxu0 0.0
  %5744 = vmatpush2.msra.mxu0 0.0
  %5745 = vmatprep.mubr.f32.mxu0 0.0
  %5746 = vmatmul.mubr.f32.gmra.mxu0 %v5336
  %v5747 = vpop.f32.mrf.mxu0
  %v5748 = vadd.f32 0.0, %v5747
  %v5749 = vpop.f32.mrf.mxu0
  %5750 = vmatprep.mubr.f32.mxu0 0.0
  %5751 = vmatmul.mubr.f32.gmra.mxu0 %v5339
  %v5752 = vpop.f32.mrf.mxu0
  %v5753 = vadd.f32 0.0, %v5752
  %v5754 = vpop.f32.mrf.mxu0
  %5755 = vmatprep.mubr.f32.mxu0 0.0
  %5756 = vmatmul.mubr.f32.gmra.mxu0 %v5342
  %v5757 = vpop.f32.mrf.mxu0
  %v5758 = vadd.f32 0.0, %v5757
  %v5759 = vpop.f32.mrf.mxu0
  %5760 = vmatprep.mubr.f32.mxu0 0.0
  %5761 = vmatmul.mubr.f32.gmra.mxu0 %v5345
  %v5762 = vpop.f32.mrf.mxu0
  %v5763 = vadd.f32 0.0, %v5762
  %v5764 = vpop.f32.mrf.mxu0
  %5765 = vdwg.mxu0
  %5766 = vmatprep.subr.mxu0 0.0
  %5767 = vmatpush1.msra.mxu0 0.0
  %5768 = vmatprep.subr.mxu0 0.0
  %5769 = vmatpush1.msra.mxu0 0.0
  %5770 = vmatprep.subr.mxu0 0.0
  %5771 = vmatpush1.msra.mxu0 0.0
  %5772 = vmatprep.subr.mxu0 0.0
  %5773 = vmatpush1.msra.mxu0 0.0
  %5774 = vmatprep.subr.mxu0 0.0
  %5775 = vmatpush1.msra.mxu0 0.0
  %5776 = vmatprep.subr.mxu0 0.0
  %5777 = vmatpush1.msra.mxu0 0.0
  %5778 = vmatprep.subr.mxu0 0.0
  %5779 = vmatpush1.msra.mxu0 0.0
  %5780 = vmatprep.subr.mxu0 0.0
  %5781 = vmatpush1.msra.mxu0 0.0
  %5782 = vmatprep.subr.mxu0 0.0
  %5783 = vmatpush1.msra.mxu0 0.0
  %5784 = vmatprep.subr.mxu0 0.0
  %5785 = vmatpush1.msra.mxu0 0.0
  %5786 = vmatprep.subr.mxu0 0.0
  %5787 = vmatpush1.msra.mxu0 0.0
  %5788 = vmatprep.subr.mxu0 0.0
  %5789 = vmatpush1.msra.mxu0 0.0
  %5790 = vmatprep.subr.mxu0 0.0
  %5791 = vmatpush1.msra.mxu0 0.0
  %5792 = vmatprep.subr.mxu0 0.0
  %5793 = vmatpush1.msra.mxu0 0.0
  %5794 = vmatprep.subr.mxu0 0.0
  %5795 = vmatpush1.msra.mxu0 %v5314
  %5796 = vmatprep.subr.mxu0 0.0
  %5797 = vmatpush1.msra.mxu0 %v5309
  %5798 = vmatprep.subr.mxu0 0.0
  %5799 = vmatpush2.msra.mxu0 0.0
  %5800 = vmatprep.subr.mxu0 0.0
  %5801 = vmatpush2.msra.mxu0 0.0
  %5802 = vmatprep.subr.mxu0 0.0
  %5803 = vmatpush2.msra.mxu0 0.0
  %5804 = vmatprep.subr.mxu0 0.0
  %5805 = vmatpush2.msra.mxu0 0.0
  %5806 = vmatprep.subr.mxu0 0.0
  %5807 = vmatpush2.msra.mxu0 0.0
  %5808 = vmatprep.subr.mxu0 0.0
  %5809 = vmatpush2.msra.mxu0 0.0
  %5810 = vmatprep.subr.mxu0 0.0
  %5811 = vmatpush2.msra.mxu0 0.0
  %5812 = vmatprep.subr.mxu0 0.0
  %5813 = vmatpush2.msra.mxu0 0.0
  %5814 = vmatprep.subr.mxu0 0.0
  %5815 = vmatpush2.msra.mxu0 0.0
  %5816 = vmatprep.subr.mxu0 0.0
  %5817 = vmatpush2.msra.mxu0 0.0
  %5818 = vmatprep.subr.mxu0 0.0
  %5819 = vmatpush2.msra.mxu0 0.0
  %5820 = vmatprep.subr.mxu0 0.0
  %5821 = vmatpush2.msra.mxu0 0.0
  %5822 = vmatprep.subr.mxu0 0.0
  %5823 = vmatpush2.msra.mxu0 0.0
  %5824 = vmatprep.subr.mxu0 0.0
  %5825 = vmatpush2.msra.mxu0 0.0
  %5826 = vmatprep.subr.mxu0 0.0
  %5827 = vmatpush2.msra.mxu0 0.0
  %5828 = vmatprep.subr.mxu0 0.0
  %5829 = vmatpush2.msra.mxu0 0.0
  %5830 = vmatprep.mubr.f32.mxu0 0.0
  %5831 = vmatmul.mubr.f32.gmra.mxu0 %v5433
  %v5832 = vpop.f32.mrf.mxu0
  %v5833 = vadd.f32 %v5748, %v5832
  %v5834 = vpop.f32.mrf.mxu0
  %5835 = vmatprep.mubr.f32.mxu0 0.0
  %5836 = vmatmul.mubr.f32.gmra.mxu0 %v5436
  %v5837 = vpop.f32.mrf.mxu0
  %v5838 = vadd.f32 %v5753, %v5837
  %v5839 = vpop.f32.mrf.mxu0
  %5840 = vmatprep.mubr.f32.mxu0 0.0
  %5841 = vmatmul.mubr.f32.gmra.mxu0 %v5439
  %v5842 = vpop.f32.mrf.mxu0
  %v5843 = vadd.f32 %v5758, %v5842
  %v5844 = vpop.f32.mrf.mxu0
  %5845 = vmatprep.mubr.f32.mxu0 0.0
  %5846 = vmatmul.mubr.f32.gmra.mxu0 %v5442
  %v5847 = vpop.f32.mrf.mxu0
  %v5848 = vadd.f32 %v5763, %v5847
  %v5849 = vpop.f32.mrf.mxu0
  %5850 = vdwg.mxu0
  %5851 = vrot.lane.b32.xlu0 %v5309, 126
  %v5852 = vpop.permute.xlu0 %5851
  %5853 = vrot.lane.b32.xlu0 %v5314, 126
  %v5854 = vpop.permute.xlu0 %5853
  %5857 = vmatprep.subr.mxu0 0.0
  %5858 = vmatpush1.msra.mxu0 0.0
  %5859 = vmatprep.subr.mxu0 0.0
  %5860 = vmatpush1.msra.mxu0 0.0
  %5861 = vmatprep.subr.mxu0 0.0
  %5862 = vmatpush1.msra.mxu0 0.0
  %5863 = vmatprep.subr.mxu0 0.0
  %5864 = vmatpush1.msra.mxu0 0.0
  %5865 = vmatprep.subr.mxu0 0.0
  %5866 = vmatpush1.msra.mxu0 0.0
  %5867 = vmatprep.subr.mxu0 0.0
  %5868 = vmatpush1.msra.mxu0 0.0
  %5869 = vmatprep.subr.mxu0 0.0
  %5870 = vmatpush1.msra.mxu0 0.0
  %5871 = vmatprep.subr.mxu0 0.0
  %5872 = vmatpush1.msra.mxu0 0.0
  %5873 = vmatprep.subr.mxu0 0.0
  %5874 = vmatpush1.msra.mxu0 0.0
  %5875 = vmatprep.subr.mxu0 0.0
  %5876 = vmatpush1.msra.mxu0 0.0
  %5877 = vmatprep.subr.mxu0 0.0
  %5878 = vmatpush1.msra.mxu0 0.0
  %5879 = vmatprep.subr.mxu0 0.0
  %5880 = vmatpush1.msra.mxu0 0.0
  %5881 = vmatprep.subr.mxu0 0.0
  %5882 = vmatpush1.msra.mxu0 0.0
  %5883 = vmatprep.subr.mxu0 0.0
  %5884 = vmatpush1.msra.mxu0 0.0
  %5885 = vmatprep.subr.mxu0 0.0
  %5886 = vmatpush1.msra.mxu0 %v5854
  %5887 = vmatprep.subr.mxu0 0.0
  %5888 = vmatpush1.msra.mxu0 %v5852
  %5889 = vmatprep.subr.mxu0 0.0
  %5890 = vmatpush2.msra.mxu0 0.0
  %5891 = vmatprep.subr.mxu0 0.0
  %5892 = vmatpush2.msra.mxu0 0.0
  %5893 = vmatprep.subr.mxu0 0.0
  %5894 = vmatpush2.msra.mxu0 0.0
  %5895 = vmatprep.subr.mxu0 0.0
  %5896 = vmatpush2.msra.mxu0 0.0
  %5897 = vmatprep.subr.mxu0 0.0
  %5898 = vmatpush2.msra.mxu0 0.0
  %5899 = vmatprep.subr.mxu0 0.0
  %5900 = vmatpush2.msra.mxu0 0.0
  %5901 = vmatprep.subr.mxu0 0.0
  %5902 = vmatpush2.msra.mxu0 0.0
  %5903 = vmatprep.subr.mxu0 0.0
  %5904 = vmatpush2.msra.mxu0 0.0
  %5905 = vmatprep.subr.mxu0 0.0
  %5906 = vmatpush2.msra.mxu0 0.0
  %5907 = vmatprep.subr.mxu0 0.0
  %5908 = vmatpush2.msra.mxu0 0.0
  %5909 = vmatprep.subr.mxu0 0.0
  %5910 = vmatpush2.msra.mxu0 0.0
  %5911 = vmatprep.subr.mxu0 0.0
  %5912 = vmatpush2.msra.mxu0 0.0
  %5913 = vmatprep.subr.mxu0 0.0
  %5914 = vmatpush2.msra.mxu0 0.0
  %5915 = vmatprep.subr.mxu0 0.0
  %5916 = vmatpush2.msra.mxu0 0.0
  %5917 = vmatprep.subr.mxu0 0.0
  %5918 = vmatpush2.msra.mxu0 0.0
  %5919 = vmatprep.subr.mxu0 0.0
  %5920 = vmatpush2.msra.mxu0 0.0
  %5921 = vmatprep.mubr.f32.mxu0 0.0
  %5922 = vmatmul.mubr.f32.gmra.mxu0 %v5541
  %v5923 = vpop.f32.mrf.mxu0
  %v5924 = vadd.f32 0.0, %v5923
  %v5925 = vpop.f32.mrf.mxu0
  %5926 = vmatprep.mubr.f32.mxu0 0.0
  %5927 = vmatmul.mubr.f32.gmra.mxu0 %v5544
  %v5928 = vpop.f32.mrf.mxu0
  %v5929 = vadd.f32 0.0, %v5928
  %v5930 = vpop.f32.mrf.mxu0
  %5931 = vmatprep.mubr.f32.mxu0 0.0
  %5932 = vmatmul.mubr.f32.gmra.mxu0 %v5547
  %v5933 = vpop.f32.mrf.mxu0
  %v5934 = vadd.f32 0.0, %v5933
  %v5935 = vpop.f32.mrf.mxu0
  %5936 = vmatprep.mubr.f32.mxu0 0.0
  %5937 = vmatmul.mubr.f32.gmra.mxu0 %v5550
  %v5938 = vpop.f32.mrf.mxu0
  %v5939 = vadd.f32 0.0, %v5938
  %v5940 = vpop.f32.mrf.mxu0
  %5941 = vdwg.mxu0
  %v5942 = vadd.f32 %v5833, %v5924
  %v5943 = vadd.f32 %v5838, %v5929
  %v5944 = vadd.f32 %v5843, %v5934
  %v5945 = vadd.f32 %v5848, %v5939
  %v5946 = vadd.f32 %v5942, %v5648
  %v5947 = vadd.f32 %v5943, %v5653
  %v5948 = vadd.f32 %v5944, %v5658
  %v5949 = vadd.f32 %v5945, %v5663
  %v5950 = vmax.f32 %v5946, 0.0
  %v5951 = vmax.f32 %v5947, 0.0
  %v5952 = vmax.f32 %v5948, 0.0
  %v5953 = vmax.f32 %v5949, 0.0
  %5962 = vrot.lane.b32.xlu0 %v5669, 1
  %v5963 = vpop.permute.xlu0 %5962
  %5964 = vrot.lane.b32.xlu0 %v5670, 1
  %v5965 = vpop.permute.xlu0 %5964
  %5966 = vrot.lane.b32.xlu0 %v5671, 1
  %v5967 = vpop.permute.xlu0 %5966
  %5968 = vrot.lane.b32.xlu0 %v5672, 1
  %v5969 = vpop.permute.xlu0 %5968
  %5970 = vrot.lane.b32.xlu0 %v5950, 1
  %v5971 = vpop.permute.xlu0 %5970
  %5972 = vrot.lane.b32.xlu0 %v5951, 1
  %v5973 = vpop.permute.xlu0 %5972
  %5974 = vrot.lane.b32.xlu0 %v5952, 1
  %v5975 = vpop.permute.xlu0 %5974
  %5976 = vrot.lane.b32.xlu0 %v5953, 1
  %v5977 = vpop.permute.xlu0 %5976
  %v5986 = vmax.f32 %v5669, %v5963
  %v5987 = vmax.f32 %v5670, %v5965
  %v5988 = vmax.f32 %v5671, %v5967
  %v5989 = vmax.f32 %v5672, %v5969
  %v5990 = vmax.f32 %v5950, %v5971
  %v5991 = vmax.f32 %v5951, %v5973
  %v5992 = vmax.f32 %v5952, %v5975
  %v5993 = vmax.f32 %v5953, %v5977
  %v5994 = vmax.f32 %v5669, 0.0
  %v5995 = vmax.f32 %v5670, 0.0
  %v5996 = vmax.f32 %v5671, 0.0
  %v5997 = vmax.f32 %v5672, 0.0
  %v5998 = vmax.f32 %v5950, 0.0
  %v5999 = vmax.f32 %v5951, 0.0
  %v6000 = vmax.f32 %v5952, 0.0
  %v6001 = vmax.f32 %v5953, 0.0
  %v6002 = vsel %vm1235, %v5994, %v5986
  %v6003 = vsel %vm1235, %v5995, %v5987
  %v6004 = vsel %vm1235, %v5996, %v5988
  %v6005 = vsel %vm1235, %v5997, %v5989
  %v6006 = vsel %vm1235, %v5998, %v5990
  %v6007 = vsel %vm1235, %v5999, %v5991
  %v6008 = vsel %vm1235, %v6000, %v5992
  %v6009 = vsel %vm1235, %v6001, %v5993
  %v6010 = vld [vmem:[%s18] sm:$0xff]
  %v6011 = vld [vmem:[%s18 + $0x8] sm:$0xff]
  %v6012 = vld [vmem:[%s18 + $0x10] sm:$0xff]
  %v6013 = vld [vmem:[%s18 + $0x18] sm:$0xff]
  %v6014 = vld [vmem:[%s18 + $0x20] sm:$0xff]
  %v6015 = vld [vmem:[%s18 + $0x28] sm:$0xff]
  %v6016 = vld [vmem:[%s18 + $0x30] sm:$0xff]
  %v6017 = vld [vmem:[%s18 + $0x38] sm:$0xff]
  %v6018 = vld [vmem:[%s18 + $0x40] sm:$0x7f]
  %vm6019 = vcmask 580608
  %v6021 = vsel %vm6019, %v6002, 0
  %v6024 = vsel %vm6019, %v6003, 0
  %v6027 = vsel %vm6019, %v6004, 0
  %v6030 = vsel %vm6019, %v6005, 0
  %v6033 = vsel %vm6019, %v6006, 0
  %v6036 = vsel %vm6019, %v6007, 0
  %v6039 = vsel %vm6019, %v6008, 0
  %v6042 = vsel %vm6019, %v6009, 0
  %vm6044 = vcmask 1046528
  %v6046 = vsel %vm6044, %v6018, 0
  %6048 = vmatprep.subr.mxu0 0.0
  %6049 = vmatpush1.msra.mxu0 0.0
  %6050 = vmatprep.subr.mxu0 0.0
  %6051 = vmatpush1.msra.mxu0 0.0
  %6052 = vmatprep.subr.mxu0 0.0
  %6053 = vmatpush1.msra.mxu0 0.0
  %6054 = vmatprep.subr.mxu0 0.0
  %6055 = vmatpush1.msra.mxu0 0.0
  %6056 = vmatprep.subr.mxu0 0.0
  %6057 = vmatpush1.msra.mxu0 0.0
  %6058 = vmatprep.subr.mxu0 0.0
  %6059 = vmatpush1.msra.mxu0 0.0
  %6060 = vmatprep.subr.mxu0 0.0
  %6061 = vmatpush1.msra.mxu0 0.0
  %6062 = vmatprep.subr.mxu0 0.0
  %6063 = vmatpush1.msra.mxu0 %v6046
  %6064 = vmatprep.subr.mxu0 0.0
  %6065 = vmatpush1.msra.mxu0 %v6017
  %6066 = vmatprep.subr.mxu0 0.0
  %6067 = vmatpush1.msra.mxu0 %v6016
  %6068 = vmatprep.subr.mxu0 0.0
  %6069 = vmatpush1.msra.mxu0 %v6015
  %6070 = vmatprep.subr.mxu0 0.0
  %6071 = vmatpush1.msra.mxu0 %v6014
  %6072 = vmatprep.subr.mxu0 0.0
  %6073 = vmatpush1.msra.mxu0 %v6013
  %6074 = vmatprep.subr.mxu0 0.0
  %6075 = vmatpush1.msra.mxu0 %v6012
  %6076 = vmatprep.subr.mxu0 0.0
  %6077 = vmatpush1.msra.mxu0 %v6011
  %6078 = vmatprep.subr.mxu0 0.0
  %6079 = vmatpush1.msra.mxu0 %v6010
  %6080 = vmatprep.subr.mxu0 0.0
  %6081 = vmatpush2.msra.mxu0 0.0
  %6082 = vmatprep.subr.mxu0 0.0
  %6083 = vmatpush2.msra.mxu0 0.0
  %6084 = vmatprep.subr.mxu0 0.0
  %6085 = vmatpush2.msra.mxu0 0.0
  %6086 = vmatprep.subr.mxu0 0.0
  %6087 = vmatpush2.msra.mxu0 0.0
  %6088 = vmatprep.subr.mxu0 0.0
  %6089 = vmatpush2.msra.mxu0 0.0
  %6090 = vmatprep.subr.mxu0 0.0
  %6091 = vmatpush2.msra.mxu0 0.0
  %6092 = vmatprep.subr.mxu0 0.0
  %6093 = vmatpush2.msra.mxu0 0.0
  %6094 = vmatprep.subr.mxu0 0.0
  %6095 = vmatpush2.msra.mxu0 0.0
  %6096 = vmatprep.subr.mxu0 0.0
  %6097 = vmatpush2.msra.mxu0 0.0
  %6098 = vmatprep.subr.mxu0 0.0
  %6099 = vmatpush2.msra.mxu0 0.0
  %6100 = vmatprep.subr.mxu0 0.0
  %6101 = vmatpush2.msra.mxu0 0.0
  %6102 = vmatprep.subr.mxu0 0.0
  %6103 = vmatpush2.msra.mxu0 0.0
  %6104 = vmatprep.subr.mxu0 0.0
  %6105 = vmatpush2.msra.mxu0 0.0
  %6106 = vmatprep.subr.mxu0 0.0
  %6107 = vmatpush2.msra.mxu0 0.0
  %6108 = vmatprep.subr.mxu0 0.0
  %6109 = vmatpush2.msra.mxu0 0.0
  %6110 = vmatprep.subr.mxu0 0.0
  %6111 = vmatpush2.msra.mxu0 0.0
  %6112 = vmatprep.mubr.f32.mxu0 0.0
  %6113 = vmatmul.mubr.f32.gmra.mxu0 %v6021
  %v6114 = vpop.f32.mrf.mxu0
  %v6115 = vadd.f32 0.0, %v6114
  %v6116 = vpop.f32.mrf.mxu0
  %6117 = vmatprep.mubr.f32.mxu0 0.0
  %6118 = vmatmul.mubr.f32.gmra.mxu0 %v6024
  %v6119 = vpop.f32.mrf.mxu0
  %v6120 = vadd.f32 0.0, %v6119
  %v6121 = vpop.f32.mrf.mxu0
  %6122 = vmatprep.mubr.f32.mxu0 0.0
  %6123 = vmatmul.mubr.f32.gmra.mxu0 %v6027
  %v6124 = vpop.f32.mrf.mxu0
  %v6125 = vadd.f32 0.0, %v6124
  %v6126 = vpop.f32.mrf.mxu0
  %6127 = vmatprep.mubr.f32.mxu0 0.0
  %6128 = vmatmul.mubr.f32.gmra.mxu0 %v6030
  %v6129 = vpop.f32.mrf.mxu0
  %v6130 = vadd.f32 0.0, %v6129
  %v6131 = vpop.f32.mrf.mxu0
  %6132 = vmatprep.mubr.f32.mxu0 0.0
  %6133 = vmatmul.mubr.f32.gmra.mxu0 %v6033
  %v6134 = vpop.f32.mrf.mxu0
  %v6135 = vadd.f32 0.0, %v6134
  %v6136 = vpop.f32.mrf.mxu0
  %6137 = vmatprep.mubr.f32.mxu0 0.0
  %6138 = vmatmul.mubr.f32.gmra.mxu0 %v6036
  %v6139 = vpop.f32.mrf.mxu0
  %v6140 = vadd.f32 0.0, %v6139
  %v6141 = vpop.f32.mrf.mxu0
  %6142 = vmatprep.mubr.f32.mxu0 0.0
  %6143 = vmatmul.mubr.f32.gmra.mxu0 %v6039
  %v6144 = vpop.f32.mrf.mxu0
  %v6145 = vadd.f32 0.0, %v6144
  %v6146 = vpop.f32.mrf.mxu0
  %6147 = vmatprep.mubr.f32.mxu0 0.0
  %6148 = vmatmul.mubr.f32.gmra.mxu0 %v6042
  %v6149 = vpop.f32.mrf.mxu0
  %v6150 = vadd.f32 0.0, %v6149
  %v6151 = vpop.f32.mrf.mxu0
  %6152 = vdwg.mxu0
  %v6153 = vld [vmem:[%s13] sm:$0xff]
  %v6154 = vld [vmem:[%s13 + $0x8] sm:$0xff]
  %v6155 = vld [vmem:[%s13 + $0x10] sm:$0xff]
  %v6156 = vld [vmem:[%s13 + $0x18] sm:$0xff]
  %v6157 = vld [vmem:[%s13 + $0x20] sm:$0xff]
  %v6158 = vld [vmem:[%s13 + $0x28] sm:$0xff]
  %v6159 = vld [vmem:[%s13 + $0x30] sm:$0xff]
  %v6160 = vld [vmem:[%s13 + $0x38] sm:$0xff]
  %s6161 = scalar_lea.vmem %s13, 64
  %v6162 = vld [vmem:[%s6161] sm:$0xff]
  %v6163 = vld [vmem:[%s6161 + $0x8] sm:$0xff]
  %v6164 = vld [vmem:[%s6161 + $0x10] sm:$0xff]
  %v6165 = vld [vmem:[%s6161 + $0x18] sm:$0xff]
  %v6166 = vld [vmem:[%s6161 + $0x20] sm:$0xff]
  %v6167 = vld [vmem:[%s6161 + $0x28] sm:$0xff]
  %v6168 = vld [vmem:[%s6161 + $0x30] sm:$0xff]
  %v6169 = vld [vmem:[%s6161 + $0x38] sm:$0xff]
  %6174 = vrot.lane.b32.xlu0 %v6115, 127
  %v6175 = vpop.permute.xlu0 %6174
  %6176 = vrot.lane.b32.xlu0 %v6120, 127
  %v6177 = vpop.permute.xlu0 %6176
  %6178 = vrot.lane.b32.xlu0 %v6125, 127
  %v6179 = vpop.permute.xlu0 %6178
  %6180 = vrot.lane.b32.xlu0 %v6130, 127
  %v6181 = vpop.permute.xlu0 %6180
  %vm6186 = vcmask 261120
  %v6188 = vsel %vm6186, %v6162, 0
  %v6191 = vsel %vm6186, %v6163, 0
  %v6194 = vsel %vm6186, %v6164, 0
  %v6197 = vsel %vm6186, %v6165, 0
  %v6200 = vsel %vm6186, %v6166, 0
  %v6203 = vsel %vm6186, %v6167, 0
  %v6206 = vsel %vm6186, %v6168, 0
  %v6209 = vsel %vm6186, %v6169, 0
  %6211 = vmatprep.subr.mxu0 0.0
  %6212 = vmatpush1.msra.mxu0 0.0
  %6213 = vmatprep.subr.mxu0 0.0
  %6214 = vmatpush1.msra.mxu0 0.0
  %6215 = vmatprep.subr.mxu0 0.0
  %6216 = vmatpush1.msra.mxu0 0.0
  %6217 = vmatprep.subr.mxu0 0.0
  %6218 = vmatpush1.msra.mxu0 0.0
  %6219 = vmatprep.subr.mxu0 0.0
  %6220 = vmatpush1.msra.mxu0 0.0
  %6221 = vmatprep.subr.mxu0 0.0
  %6222 = vmatpush1.msra.mxu0 0.0
  %6223 = vmatprep.subr.mxu0 0.0
  %6224 = vmatpush1.msra.mxu0 0.0
  %6225 = vmatprep.subr.mxu0 0.0
  %6226 = vmatpush1.msra.mxu0 0.0
  %6227 = vmatprep.subr.mxu0 0.0
  %6228 = vmatpush1.msra.mxu0 0.0
  %6229 = vmatprep.subr.mxu0 0.0
  %6230 = vmatpush1.msra.mxu0 0.0
  %6231 = vmatprep.subr.mxu0 0.0
  %6232 = vmatpush1.msra.mxu0 0.0
  %6233 = vmatprep.subr.mxu0 0.0
  %6234 = vmatpush1.msra.mxu0 0.0
  %6235 = vmatprep.subr.mxu0 0.0
  %6236 = vmatpush1.msra.mxu0 %v6181
  %6237 = vmatprep.subr.mxu0 0.0
  %6238 = vmatpush1.msra.mxu0 %v6179
  %6239 = vmatprep.subr.mxu0 0.0
  %6240 = vmatpush1.msra.mxu0 %v6177
  %6241 = vmatprep.subr.mxu0 0.0
  %6242 = vmatpush1.msra.mxu0 %v6175
  %6243 = vmatprep.subr.mxu0 0.0
  %6244 = vmatpush2.msra.mxu0 0.0
  %6245 = vmatprep.subr.mxu0 0.0
  %6246 = vmatpush2.msra.mxu0 0.0
  %6247 = vmatprep.subr.mxu0 0.0
  %6248 = vmatpush2.msra.mxu0 0.0
  %6249 = vmatprep.subr.mxu0 0.0
  %6250 = vmatpush2.msra.mxu0 0.0
  %6251 = vmatprep.subr.mxu0 0.0
  %6252 = vmatpush2.msra.mxu0 0.0
  %6253 = vmatprep.subr.mxu0 0.0
  %6254 = vmatpush2.msra.mxu0 0.0
  %6255 = vmatprep.subr.mxu0 0.0
  %6256 = vmatpush2.msra.mxu0 0.0
  %6257 = vmatprep.subr.mxu0 0.0
  %6258 = vmatpush2.msra.mxu0 0.0
  %6259 = vmatprep.subr.mxu0 0.0
  %6260 = vmatpush2.msra.mxu0 0.0
  %6261 = vmatprep.subr.mxu0 0.0
  %6262 = vmatpush2.msra.mxu0 0.0
  %6263 = vmatprep.subr.mxu0 0.0
  %6264 = vmatpush2.msra.mxu0 0.0
  %6265 = vmatprep.subr.mxu0 0.0
  %6266 = vmatpush2.msra.mxu0 0.0
  %6267 = vmatprep.subr.mxu0 0.0
  %6268 = vmatpush2.msra.mxu0 0.0
  %6269 = vmatprep.subr.mxu0 0.0
  %6270 = vmatpush2.msra.mxu0 0.0
  %6271 = vmatprep.subr.mxu0 0.0
  %6272 = vmatpush2.msra.mxu0 0.0
  %6273 = vmatprep.subr.mxu0 0.0
  %6274 = vmatpush2.msra.mxu0 0.0
  %6275 = vmatprep.mubr.f32.mxu0 0.0
  %6276 = vmatmul.mubr.f32.gmra.mxu0 %v6188
  %v6277 = vpop.f32.mrf.mxu0
  %v6278 = vadd.f32 0.0, %v6277
  %v6279 = vpop.f32.mrf.mxu0
  %6280 = vmatprep.mubr.f32.mxu0 0.0
  %6281 = vmatmul.mubr.f32.gmra.mxu0 %v6191
  %v6282 = vpop.f32.mrf.mxu0
  %v6283 = vadd.f32 0.0, %v6282
  %v6284 = vpop.f32.mrf.mxu0
  %6285 = vmatprep.mubr.f32.mxu0 0.0
  %6286 = vmatmul.mubr.f32.gmra.mxu0 %v6194
  %v6287 = vpop.f32.mrf.mxu0
  %v6288 = vadd.f32 0.0, %v6287
  %v6289 = vpop.f32.mrf.mxu0
  %6290 = vmatprep.mubr.f32.mxu0 0.0
  %6291 = vmatmul.mubr.f32.gmra.mxu0 %v6197
  %v6292 = vpop.f32.mrf.mxu0
  %v6293 = vadd.f32 0.0, %v6292
  %v6294 = vpop.f32.mrf.mxu0
  %6295 = vmatprep.mubr.f32.mxu0 0.0
  %6296 = vmatmul.mubr.f32.gmra.mxu0 %v6200
  %v6297 = vpop.f32.mrf.mxu0
  %v6298 = vadd.f32 0.0, %v6297
  %v6299 = vpop.f32.mrf.mxu0
  %6300 = vmatprep.mubr.f32.mxu0 0.0
  %6301 = vmatmul.mubr.f32.gmra.mxu0 %v6203
  %v6302 = vpop.f32.mrf.mxu0
  %v6303 = vadd.f32 0.0, %v6302
  %v6304 = vpop.f32.mrf.mxu0
  %6305 = vmatprep.mubr.f32.mxu0 0.0
  %6306 = vmatmul.mubr.f32.gmra.mxu0 %v6206
  %v6307 = vpop.f32.mrf.mxu0
  %v6308 = vadd.f32 0.0, %v6307
  %v6309 = vpop.f32.mrf.mxu0
  %6310 = vmatprep.mubr.f32.mxu0 0.0
  %6311 = vmatmul.mubr.f32.gmra.mxu0 %v6209
  %v6312 = vpop.f32.mrf.mxu0
  %v6313 = vadd.f32 0.0, %v6312
  %v6314 = vpop.f32.mrf.mxu0
  %6315 = vdwg.mxu0
  %v6317 = vsel %vm6186, %v6153, 0
  %v6320 = vsel %vm6186, %v6154, 0
  %v6323 = vsel %vm6186, %v6155, 0
  %v6326 = vsel %vm6186, %v6156, 0
  %v6329 = vsel %vm6186, %v6157, 0
  %v6332 = vsel %vm6186, %v6158, 0
  %v6335 = vsel %vm6186, %v6159, 0
  %v6338 = vsel %vm6186, %v6160, 0
  %6340 = vmatprep.subr.mxu0 0.0
  %6341 = vmatpush1.msra.mxu0 0.0
  %6342 = vmatprep.subr.mxu0 0.0
  %6343 = vmatpush1.msra.mxu0 0.0
  %6344 = vmatprep.subr.mxu0 0.0
  %6345 = vmatpush1.msra.mxu0 0.0
  %6346 = vmatprep.subr.mxu0 0.0
  %6347 = vmatpush1.msra.mxu0 0.0
  %6348 = vmatprep.subr.mxu0 0.0
  %6349 = vmatpush1.msra.mxu0 0.0
  %6350 = vmatprep.subr.mxu0 0.0
  %6351 = vmatpush1.msra.mxu0 0.0
  %6352 = vmatprep.subr.mxu0 0.0
  %6353 = vmatpush1.msra.mxu0 0.0
  %6354 = vmatprep.subr.mxu0 0.0
  %6355 = vmatpush1.msra.mxu0 0.0
  %6356 = vmatprep.subr.mxu0 0.0
  %6357 = vmatpush1.msra.mxu0 0.0
  %6358 = vmatprep.subr.mxu0 0.0
  %6359 = vmatpush1.msra.mxu0 0.0
  %6360 = vmatprep.subr.mxu0 0.0
  %6361 = vmatpush1.msra.mxu0 0.0
  %6362 = vmatprep.subr.mxu0 0.0
  %6363 = vmatpush1.msra.mxu0 0.0
  %6364 = vmatprep.subr.mxu0 0.0
  %6365 = vmatpush1.msra.mxu0 %v6130
  %6366 = vmatprep.subr.mxu0 0.0
  %6367 = vmatpush1.msra.mxu0 %v6125
  %6368 = vmatprep.subr.mxu0 0.0
  %6369 = vmatpush1.msra.mxu0 %v6120
  %6370 = vmatprep.subr.mxu0 0.0
  %6371 = vmatpush1.msra.mxu0 %v6115
  %6372 = vmatprep.subr.mxu0 0.0
  %6373 = vmatpush2.msra.mxu0 0.0
  %6374 = vmatprep.subr.mxu0 0.0
  %6375 = vmatpush2.msra.mxu0 0.0
  %6376 = vmatprep.subr.mxu0 0.0
  %6377 = vmatpush2.msra.mxu0 0.0
  %6378 = vmatprep.subr.mxu0 0.0
  %6379 = vmatpush2.msra.mxu0 0.0
  %6380 = vmatprep.subr.mxu0 0.0
  %6381 = vmatpush2.msra.mxu0 0.0
  %6382 = vmatprep.subr.mxu0 0.0
  %6383 = vmatpush2.msra.mxu0 0.0
  %6384 = vmatprep.subr.mxu0 0.0
  %6385 = vmatpush2.msra.mxu0 0.0
  %6386 = vmatprep.subr.mxu0 0.0
  %6387 = vmatpush2.msra.mxu0 0.0
  %6388 = vmatprep.subr.mxu0 0.0
  %6389 = vmatpush2.msra.mxu0 0.0
  %6390 = vmatprep.subr.mxu0 0.0
  %6391 = vmatpush2.msra.mxu0 0.0
  %6392 = vmatprep.subr.mxu0 0.0
  %6393 = vmatpush2.msra.mxu0 0.0
  %6394 = vmatprep.subr.mxu0 0.0
  %6395 = vmatpush2.msra.mxu0 0.0
  %6396 = vmatprep.subr.mxu0 0.0
  %6397 = vmatpush2.msra.mxu0 0.0
  %6398 = vmatprep.subr.mxu0 0.0
  %6399 = vmatpush2.msra.mxu0 0.0
  %6400 = vmatprep.subr.mxu0 0.0
  %6401 = vmatpush2.msra.mxu0 0.0
  %6402 = vmatprep.subr.mxu0 0.0
  %6403 = vmatpush2.msra.mxu0 0.0
  %6404 = vmatprep.mubr.f32.mxu0 0.0
  %6405 = vmatmul.mubr.f32.gmra.mxu0 %v6317
  %v6406 = vpop.f32.mrf.mxu0
  %v6407 = vadd.f32 %v6278, %v6406
  %v6408 = vpop.f32.mrf.mxu0
  %6409 = vmatprep.mubr.f32.mxu0 0.0
  %6410 = vmatmul.mubr.f32.gmra.mxu0 %v6320
  %v6411 = vpop.f32.mrf.mxu0
  %v6412 = vadd.f32 %v6283, %v6411
  %v6413 = vpop.f32.mrf.mxu0
  %6414 = vmatprep.mubr.f32.mxu0 0.0
  %6415 = vmatmul.mubr.f32.gmra.mxu0 %v6323
  %v6416 = vpop.f32.mrf.mxu0
  %v6417 = vadd.f32 %v6288, %v6416
  %v6418 = vpop.f32.mrf.mxu0
  %6419 = vmatprep.mubr.f32.mxu0 0.0
  %6420 = vmatmul.mubr.f32.gmra.mxu0 %v6326
  %v6421 = vpop.f32.mrf.mxu0
  %v6422 = vadd.f32 %v6293, %v6421
  %v6423 = vpop.f32.mrf.mxu0
  %6424 = vmatprep.mubr.f32.mxu0 0.0
  %6425 = vmatmul.mubr.f32.gmra.mxu0 %v6329
  %v6426 = vpop.f32.mrf.mxu0
  %v6427 = vadd.f32 %v6298, %v6426
  %v6428 = vpop.f32.mrf.mxu0
  %6429 = vmatprep.mubr.f32.mxu0 0.0
  %6430 = vmatmul.mubr.f32.gmra.mxu0 %v6332
  %v6431 = vpop.f32.mrf.mxu0
  %v6432 = vadd.f32 %v6303, %v6431
  %v6433 = vpop.f32.mrf.mxu0
  %6434 = vmatprep.mubr.f32.mxu0 0.0
  %6435 = vmatmul.mubr.f32.gmra.mxu0 %v6335
  %v6436 = vpop.f32.mrf.mxu0
  %v6437 = vadd.f32 %v6308, %v6436
  %v6438 = vpop.f32.mrf.mxu0
  %6439 = vmatprep.mubr.f32.mxu0 0.0
  %6440 = vmatmul.mubr.f32.gmra.mxu0 %v6338
  %v6441 = vpop.f32.mrf.mxu0
  %v6442 = vadd.f32 %v6313, %v6441
  %v6443 = vpop.f32.mrf.mxu0
  %6444 = vdwg.mxu0
  %s6445 = scalar_lea.vmem %s13, 128
  %v6446 = vld [vmem:[%s6445] sm:$0xff]
  %v6447 = vld [vmem:[%s6445 + $0x8] sm:$0xff]
  %v6448 = vld [vmem:[%s6445 + $0x10] sm:$0xff]
  %v6449 = vld [vmem:[%s6445 + $0x18] sm:$0xff]
  %v6450 = vld [vmem:[%s6445 + $0x20] sm:$0xff]
  %v6451 = vld [vmem:[%s6445 + $0x28] sm:$0xff]
  %v6452 = vld [vmem:[%s6445 + $0x30] sm:$0xff]
  %v6453 = vld [vmem:[%s6445 + $0x38] sm:$0xff]
  %6454 = vrot.lane.b32.xlu0 %v6115, 126
  %v6455 = vpop.permute.xlu0 %6454
  %6456 = vrot.lane.b32.xlu0 %v6120, 126
  %v6457 = vpop.permute.xlu0 %6456
  %6458 = vrot.lane.b32.xlu0 %v6125, 126
  %v6459 = vpop.permute.xlu0 %6458
  %6460 = vrot.lane.b32.xlu0 %v6130, 126
  %v6461 = vpop.permute.xlu0 %6460
  %v6467 = vsel %vm6186, %v6446, 0
  %v6470 = vsel %vm6186, %v6447, 0
  %v6473 = vsel %vm6186, %v6448, 0
  %v6476 = vsel %vm6186, %v6449, 0
  %v6479 = vsel %vm6186, %v6450, 0
  %v6482 = vsel %vm6186, %v6451, 0
  %v6485 = vsel %vm6186, %v6452, 0
  %v6488 = vsel %vm6186, %v6453, 0
  %6490 = vmatprep.subr.mxu0 0.0
  %6491 = vmatpush1.msra.mxu0 0.0
  %6492 = vmatprep.subr.mxu0 0.0
  %6493 = vmatpush1.msra.mxu0 0.0
  %6494 = vmatprep.subr.mxu0 0.0
  %6495 = vmatpush1.msra.mxu0 0.0
  %6496 = vmatprep.subr.mxu0 0.0
  %6497 = vmatpush1.msra.mxu0 0.0
  %6498 = vmatprep.subr.mxu0 0.0
  %6499 = vmatpush1.msra.mxu0 0.0
  %6500 = vmatprep.subr.mxu0 0.0
  %6501 = vmatpush1.msra.mxu0 0.0
  %6502 = vmatprep.subr.mxu0 0.0
  %6503 = vmatpush1.msra.mxu0 0.0
  %6504 = vmatprep.subr.mxu0 0.0
  %6505 = vmatpush1.msra.mxu0 0.0
  %6506 = vmatprep.subr.mxu0 0.0
  %6507 = vmatpush1.msra.mxu0 0.0
  %6508 = vmatprep.subr.mxu0 0.0
  %6509 = vmatpush1.msra.mxu0 0.0
  %6510 = vmatprep.subr.mxu0 0.0
  %6511 = vmatpush1.msra.mxu0 0.0
  %6512 = vmatprep.subr.mxu0 0.0
  %6513 = vmatpush1.msra.mxu0 0.0
  %6514 = vmatprep.subr.mxu0 0.0
  %6515 = vmatpush1.msra.mxu0 %v6461
  %6516 = vmatprep.subr.mxu0 0.0
  %6517 = vmatpush1.msra.mxu0 %v6459
  %6518 = vmatprep.subr.mxu0 0.0
  %6519 = vmatpush1.msra.mxu0 %v6457
  %6520 = vmatprep.subr.mxu0 0.0
  %6521 = vmatpush1.msra.mxu0 %v6455
  %6522 = vmatprep.subr.mxu0 0.0
  %6523 = vmatpush2.msra.mxu0 0.0
  %6524 = vmatprep.subr.mxu0 0.0
  %6525 = vmatpush2.msra.mxu0 0.0
  %6526 = vmatprep.subr.mxu0 0.0
  %6527 = vmatpush2.msra.mxu0 0.0
  %6528 = vmatprep.subr.mxu0 0.0
  %6529 = vmatpush2.msra.mxu0 0.0
  %6530 = vmatprep.subr.mxu0 0.0
  %6531 = vmatpush2.msra.mxu0 0.0
  %6532 = vmatprep.subr.mxu0 0.0
  %6533 = vmatpush2.msra.mxu0 0.0
  %6534 = vmatprep.subr.mxu0 0.0
  %6535 = vmatpush2.msra.mxu0 0.0
  %6536 = vmatprep.subr.mxu0 0.0
  %6537 = vmatpush2.msra.mxu0 0.0
  %6538 = vmatprep.subr.mxu0 0.0
  %6539 = vmatpush2.msra.mxu0 0.0
  %6540 = vmatprep.subr.mxu0 0.0
  %6541 = vmatpush2.msra.mxu0 0.0
  %6542 = vmatprep.subr.mxu0 0.0
  %6543 = vmatpush2.msra.mxu0 0.0
  %6544 = vmatprep.subr.mxu0 0.0
  %6545 = vmatpush2.msra.mxu0 0.0
  %6546 = vmatprep.subr.mxu0 0.0
  %6547 = vmatpush2.msra.mxu0 0.0
  %6548 = vmatprep.subr.mxu0 0.0
  %6549 = vmatpush2.msra.mxu0 0.0
  %6550 = vmatprep.subr.mxu0 0.0
  %6551 = vmatpush2.msra.mxu0 0.0
  %6552 = vmatprep.subr.mxu0 0.0
  %6553 = vmatpush2.msra.mxu0 0.0
  %6554 = vmatprep.mubr.f32.mxu0 0.0
  %6555 = vmatmul.mubr.f32.gmra.mxu0 %v6467
  %v6556 = vpop.f32.mrf.mxu0
  %v6557 = vadd.f32 0.0, %v6556
  %v6558 = vpop.f32.mrf.mxu0
  %6559 = vmatprep.mubr.f32.mxu0 0.0
  %6560 = vmatmul.mubr.f32.gmra.mxu0 %v6470
  %v6561 = vpop.f32.mrf.mxu0
  %v6562 = vadd.f32 0.0, %v6561
  %v6563 = vpop.f32.mrf.mxu0
  %6564 = vmatprep.mubr.f32.mxu0 0.0
  %6565 = vmatmul.mubr.f32.gmra.mxu0 %v6473
  %v6566 = vpop.f32.mrf.mxu0
  %v6567 = vadd.f32 0.0, %v6566
  %v6568 = vpop.f32.mrf.mxu0
  %6569 = vmatprep.mubr.f32.mxu0 0.0
  %6570 = vmatmul.mubr.f32.gmra.mxu0 %v6476
  %v6571 = vpop.f32.mrf.mxu0
  %v6572 = vadd.f32 0.0, %v6571
  %v6573 = vpop.f32.mrf.mxu0
  %6574 = vmatprep.mubr.f32.mxu0 0.0
  %6575 = vmatmul.mubr.f32.gmra.mxu0 %v6479
  %v6576 = vpop.f32.mrf.mxu0
  %v6577 = vadd.f32 0.0, %v6576
  %v6578 = vpop.f32.mrf.mxu0
  %6579 = vmatprep.mubr.f32.mxu0 0.0
  %6580 = vmatmul.mubr.f32.gmra.mxu0 %v6482
  %v6581 = vpop.f32.mrf.mxu0
  %v6582 = vadd.f32 0.0, %v6581
  %v6583 = vpop.f32.mrf.mxu0
  %6584 = vmatprep.mubr.f32.mxu0 0.0
  %6585 = vmatmul.mubr.f32.gmra.mxu0 %v6485
  %v6586 = vpop.f32.mrf.mxu0
  %v6587 = vadd.f32 0.0, %v6586
  %v6588 = vpop.f32.mrf.mxu0
  %6589 = vmatprep.mubr.f32.mxu0 0.0
  %6590 = vmatmul.mubr.f32.gmra.mxu0 %v6488
  %v6591 = vpop.f32.mrf.mxu0
  %v6592 = vadd.f32 0.0, %v6591
  %v6593 = vpop.f32.mrf.mxu0
  %6594 = vdwg.mxu0
  %v6595 = vadd.f32 %v6407, %v6557
  %v6596 = vadd.f32 %v6412, %v6562
  %v6597 = vadd.f32 %v6417, %v6567
  %v6598 = vadd.f32 %v6422, %v6572
  %v6599 = vadd.f32 %v6427, %v6577
  %v6600 = vadd.f32 %v6432, %v6582
  %v6601 = vadd.f32 %v6437, %v6587
  %v6602 = vadd.f32 %v6442, %v6592
  %v6603 = vld [vmem:[%s14] sm:$0xff]
  %v6604 = vld [vmem:[%s14 + $0x8] sm:$0xff]
  %v6605 = vld [vmem:[%s14 + $0x10] sm:$0xff]
  %v6606 = vld [vmem:[%s14 + $0x18] sm:$0xff]
  %v6607 = vld [vmem:[%s14 + $0x20] sm:$0xff]
  %v6608 = vld [vmem:[%s14 + $0x28] sm:$0xff]
  %v6609 = vld [vmem:[%s14 + $0x30] sm:$0xff]
  %v6610 = vld [vmem:[%s14 + $0x38] sm:$0xff]
  %6612 = vset.pattern.permute.xlu0 0
  %6613 = vperm.xlu0 %6612, %v6603
  %v6614 = vpop.permute.xlu0 %6613
  %6617 = vset.pattern.permute.xlu0 0
  %6618 = vperm.xlu0 %6617, %v6604
  %v6619 = vpop.permute.xlu0 %6618
  %6622 = vset.pattern.permute.xlu0 0
  %6623 = vperm.xlu0 %6622, %v6605
  %v6624 = vpop.permute.xlu0 %6623
  %6627 = vset.pattern.permute.xlu0 0
  %6628 = vperm.xlu0 %6627, %v6606
  %v6629 = vpop.permute.xlu0 %6628
  %6632 = vset.pattern.permute.xlu0 0
  %6633 = vperm.xlu0 %6632, %v6607
  %v6634 = vpop.permute.xlu0 %6633
  %6637 = vset.pattern.permute.xlu0 0
  %6638 = vperm.xlu0 %6637, %v6608
  %v6639 = vpop.permute.xlu0 %6638
  %6642 = vset.pattern.permute.xlu0 0
  %6643 = vperm.xlu0 %6642, %v6609
  %v6644 = vpop.permute.xlu0 %6643
  %6647 = vset.pattern.permute.xlu0 0
  %6648 = vperm.xlu0 %6647, %v6610
  %v6649 = vpop.permute.xlu0 %6648
  %v6651 = vadd.f32 %v6595, %v6614
  %v6652 = vadd.f32 %v6596, %v6619
  %v6653 = vadd.f32 %v6597, %v6624
  %v6654 = vadd.f32 %v6598, %v6629
  %v6655 = vadd.f32 %v6599, %v6634
  %v6656 = vadd.f32 %v6600, %v6639
  %v6657 = vadd.f32 %v6601, %v6644
  %v6658 = vadd.f32 %v6602, %v6649
  %v6659 = vmax.f32 %v6651, 0.0
  %v6660 = vmax.f32 %v6652, 0.0
  %v6661 = vmax.f32 %v6653, 0.0
  %v6662 = vmax.f32 %v6654, 0.0
  %v6663 = vmax.f32 %v6655, 0.0
  %v6664 = vmax.f32 %v6656, 0.0
  %v6665 = vmax.f32 %v6657, 0.0
  %v6666 = vmax.f32 %v6658, 0.0
  %vm6667 = vcmask 236544
  %v6668 = vsel %vm6667, %v6659, 0.0
  %6669 = vadd.xlane.f32.xlu0 %v6668
  %v6670 = vpop.xlane.xlu0 %6669
  %v6671 = vsel %vm6667, %v6660, 0.0
  %6672 = vadd.xlane.f32.xlu0 %v6671
  %v6673 = vpop.xlane.xlu0 %6672
  %v6674 = vsel %vm6667, %v6661, 0.0
  %6675 = vadd.xlane.f32.xlu0 %v6674
  %v6676 = vpop.xlane.xlu0 %6675
  %v6677 = vsel %vm6667, %v6662, 0.0
  %6678 = vadd.xlane.f32.xlu0 %v6677
  %v6679 = vpop.xlane.xlu0 %6678
  %v6680 = vsel %vm6667, %v6663, 0.0
  %6681 = vadd.xlane.f32.xlu0 %v6680
  %v6682 = vpop.xlane.xlu0 %6681
  %v6683 = vsel %vm6667, %v6664, 0.0
  %6684 = vadd.xlane.f32.xlu0 %v6683
  %v6685 = vpop.xlane.xlu0 %6684
  %v6686 = vsel %vm6667, %v6665, 0.0
  %6687 = vadd.xlane.f32.xlu0 %v6686
  %v6688 = vpop.xlane.xlu0 %6687
  %v6689 = vsel %vm6667, %v6666, 0.0
  %6690 = vadd.xlane.f32.xlu0 %v6689
  %v6691 = vpop.xlane.xlu0 %6690
  %v6692 = vmul.f32 %v6670, 0.033333335
  %v6693 = vmul.f32 %v6673, 0.033333335
  %v6694 = vmul.f32 %v6676, 0.033333335
  %v6695 = vmul.f32 %v6679, 0.033333335
  %v6696 = vmul.f32 %v6682, 0.033333335
  %v6697 = vmul.f32 %v6685, 0.033333335
  %v6698 = vmul.f32 %v6688, 0.033333335
  %v6699 = vmul.f32 %v6691, 0.033333335
  %6704 = vrot.lane.b32.xlu0 %v6135, 127
  %v6705 = vpop.permute.xlu0 %6704
  %6706 = vrot.lane.b32.xlu0 %v6140, 127
  %v6707 = vpop.permute.xlu0 %6706
  %6708 = vrot.lane.b32.xlu0 %v6145, 127
  %v6709 = vpop.permute.xlu0 %6708
  %6710 = vrot.lane.b32.xlu0 %v6150, 127
  %v6711 = vpop.permute.xlu0 %6710
  %6716 = vmatprep.subr.mxu0 0.0
  %6717 = vmatpush1.msra.mxu0 0.0
  %6718 = vmatprep.subr.mxu0 0.0
  %6719 = vmatpush1.msra.mxu0 0.0
  %6720 = vmatprep.subr.mxu0 0.0
  %6721 = vmatpush1.msra.mxu0 0.0
  %6722 = vmatprep.subr.mxu0 0.0
  %6723 = vmatpush1.msra.mxu0 0.0
  %6724 = vmatprep.subr.mxu0 0.0
  %6725 = vmatpush1.msra.mxu0 0.0
  %6726 = vmatprep.subr.mxu0 0.0
  %6727 = vmatpush1.msra.mxu0 0.0
  %6728 = vmatprep.subr.mxu0 0.0
  %6729 = vmatpush1.msra.mxu0 0.0
  %6730 = vmatprep.subr.mxu0 0.0
  %6731 = vmatpush1.msra.mxu0 0.0
  %6732 = vmatprep.subr.mxu0 0.0
  %6733 = vmatpush1.msra.mxu0 0.0
  %6734 = vmatprep.subr.mxu0 0.0
  %6735 = vmatpush1.msra.mxu0 0.0
  %6736 = vmatprep.subr.mxu0 0.0
  %6737 = vmatpush1.msra.mxu0 0.0
  %6738 = vmatprep.subr.mxu0 0.0
  %6739 = vmatpush1.msra.mxu0 0.0
  %6740 = vmatprep.subr.mxu0 0.0
  %6741 = vmatpush1.msra.mxu0 %v6711
  %6742 = vmatprep.subr.mxu0 0.0
  %6743 = vmatpush1.msra.mxu0 %v6709
  %6744 = vmatprep.subr.mxu0 0.0
  %6745 = vmatpush1.msra.mxu0 %v6707
  %6746 = vmatprep.subr.mxu0 0.0
  %6747 = vmatpush1.msra.mxu0 %v6705
  %6748 = vmatprep.subr.mxu0 0.0
  %6749 = vmatpush2.msra.mxu0 0.0
  %6750 = vmatprep.subr.mxu0 0.0
  %6751 = vmatpush2.msra.mxu0 0.0
  %6752 = vmatprep.subr.mxu0 0.0
  %6753 = vmatpush2.msra.mxu0 0.0
  %6754 = vmatprep.subr.mxu0 0.0
  %6755 = vmatpush2.msra.mxu0 0.0
  %6756 = vmatprep.subr.mxu0 0.0
  %6757 = vmatpush2.msra.mxu0 0.0
  %6758 = vmatprep.subr.mxu0 0.0
  %6759 = vmatpush2.msra.mxu0 0.0
  %6760 = vmatprep.subr.mxu0 0.0
  %6761 = vmatpush2.msra.mxu0 0.0
  %6762 = vmatprep.subr.mxu0 0.0
  %6763 = vmatpush2.msra.mxu0 0.0
  %6764 = vmatprep.subr.mxu0 0.0
  %6765 = vmatpush2.msra.mxu0 0.0
  %6766 = vmatprep.subr.mxu0 0.0
  %6767 = vmatpush2.msra.mxu0 0.0
  %6768 = vmatprep.subr.mxu0 0.0
  %6769 = vmatpush2.msra.mxu0 0.0
  %6770 = vmatprep.subr.mxu0 0.0
  %6771 = vmatpush2.msra.mxu0 0.0
  %6772 = vmatprep.subr.mxu0 0.0
  %6773 = vmatpush2.msra.mxu0 0.0
  %6774 = vmatprep.subr.mxu0 0.0
  %6775 = vmatpush2.msra.mxu0 0.0
  %6776 = vmatprep.subr.mxu0 0.0
  %6777 = vmatpush2.msra.mxu0 0.0
  %6778 = vmatprep.subr.mxu0 0.0
  %6779 = vmatpush2.msra.mxu0 0.0
  %6780 = vmatprep.mubr.f32.mxu0 0.0
  %6781 = vmatmul.mubr.f32.gmra.mxu0 %v6188
  %v6782 = vpop.f32.mrf.mxu0
  %v6783 = vadd.f32 0.0, %v6782
  %v6784 = vpop.f32.mrf.mxu0
  %6785 = vmatprep.mubr.f32.mxu0 0.0
  %6786 = vmatmul.mubr.f32.gmra.mxu0 %v6191
  %v6787 = vpop.f32.mrf.mxu0
  %v6788 = vadd.f32 0.0, %v6787
  %v6789 = vpop.f32.mrf.mxu0
  %6790 = vmatprep.mubr.f32.mxu0 0.0
  %6791 = vmatmul.mubr.f32.gmra.mxu0 %v6194
  %v6792 = vpop.f32.mrf.mxu0
  %v6793 = vadd.f32 0.0, %v6792
  %v6794 = vpop.f32.mrf.mxu0
  %6795 = vmatprep.mubr.f32.mxu0 0.0
  %6796 = vmatmul.mubr.f32.gmra.mxu0 %v6197
  %v6797 = vpop.f32.mrf.mxu0
  %v6798 = vadd.f32 0.0, %v6797
  %v6799 = vpop.f32.mrf.mxu0
  %6800 = vmatprep.mubr.f32.mxu0 0.0
  %6801 = vmatmul.mubr.f32.gmra.mxu0 %v6200
  %v6802 = vpop.f32.mrf.mxu0
  %v6803 = vadd.f32 0.0, %v6802
  %v6804 = vpop.f32.mrf.mxu0
  %6805 = vmatprep.mubr.f32.mxu0 0.0
  %6806 = vmatmul.mubr.f32.gmra.mxu0 %v6203
  %v6807 = vpop.f32.mrf.mxu0
  %v6808 = vadd.f32 0.0, %v6807
  %v6809 = vpop.f32.mrf.mxu0
  %6810 = vmatprep.mubr.f32.mxu0 0.0
  %6811 = vmatmul.mubr.f32.gmra.mxu0 %v6206
  %v6812 = vpop.f32.mrf.mxu0
  %v6813 = vadd.f32 0.0, %v6812
  %v6814 = vpop.f32.mrf.mxu0
  %6815 = vmatprep.mubr.f32.mxu0 0.0
  %6816 = vmatmul.mubr.f32.gmra.mxu0 %v6209
  %v6817 = vpop.f32.mrf.mxu0
  %v6818 = vadd.f32 0.0, %v6817
  %v6819 = vpop.f32.mrf.mxu0
  %6820 = vdwg.mxu0
  %6821 = vmatprep.subr.mxu0 0.0
  %6822 = vmatpush1.msra.mxu0 0.0
  %6823 = vmatprep.subr.mxu0 0.0
  %6824 = vmatpush1.msra.mxu0 0.0
  %6825 = vmatprep.subr.mxu0 0.0
  %6826 = vmatpush1.msra.mxu0 0.0
  %6827 = vmatprep.subr.mxu0 0.0
  %6828 = vmatpush1.msra.mxu0 0.0
  %6829 = vmatprep.subr.mxu0 0.0
  %6830 = vmatpush1.msra.mxu0 0.0
  %6831 = vmatprep.subr.mxu0 0.0
  %6832 = vmatpush1.msra.mxu0 0.0
  %6833 = vmatprep.subr.mxu0 0.0
  %6834 = vmatpush1.msra.mxu0 0.0
  %6835 = vmatprep.subr.mxu0 0.0
  %6836 = vmatpush1.msra.mxu0 0.0
  %6837 = vmatprep.subr.mxu0 0.0
  %6838 = vmatpush1.msra.mxu0 0.0
  %6839 = vmatprep.subr.mxu0 0.0
  %6840 = vmatpush1.msra.mxu0 0.0
  %6841 = vmatprep.subr.mxu0 0.0
  %6842 = vmatpush1.msra.mxu0 0.0
  %6843 = vmatprep.subr.mxu0 0.0
  %6844 = vmatpush1.msra.mxu0 0.0
  %6845 = vmatprep.subr.mxu0 0.0
  %6846 = vmatpush1.msra.mxu0 %v6150
  %6847 = vmatprep.subr.mxu0 0.0
  %6848 = vmatpush1.msra.mxu0 %v6145
  %6849 = vmatprep.subr.mxu0 0.0
  %6850 = vmatpush1.msra.mxu0 %v6140
  %6851 = vmatprep.subr.mxu0 0.0
  %6852 = vmatpush1.msra.mxu0 %v6135
  %6853 = vmatprep.subr.mxu0 0.0
  %6854 = vmatpush2.msra.mxu0 0.0
  %6855 = vmatprep.subr.mxu0 0.0
  %6856 = vmatpush2.msra.mxu0 0.0
  %6857 = vmatprep.subr.mxu0 0.0
  %6858 = vmatpush2.msra.mxu0 0.0
  %6859 = vmatprep.subr.mxu0 0.0
  %6860 = vmatpush2.msra.mxu0 0.0
  %6861 = vmatprep.subr.mxu0 0.0
  %6862 = vmatpush2.msra.mxu0 0.0
  %6863 = vmatprep.subr.mxu0 0.0
  %6864 = vmatpush2.msra.mxu0 0.0
  %6865 = vmatprep.subr.mxu0 0.0
  %6866 = vmatpush2.msra.mxu0 0.0
  %6867 = vmatprep.subr.mxu0 0.0
  %6868 = vmatpush2.msra.mxu0 0.0
  %6869 = vmatprep.subr.mxu0 0.0
  %6870 = vmatpush2.msra.mxu0 0.0
  %6871 = vmatprep.subr.mxu0 0.0
  %6872 = vmatpush2.msra.mxu0 0.0
  %6873 = vmatprep.subr.mxu0 0.0
  %6874 = vmatpush2.msra.mxu0 0.0
  %6875 = vmatprep.subr.mxu0 0.0
  %6876 = vmatpush2.msra.mxu0 0.0
  %6877 = vmatprep.subr.mxu0 0.0
  %6878 = vmatpush2.msra.mxu0 0.0
  %6879 = vmatprep.subr.mxu0 0.0
  %6880 = vmatpush2.msra.mxu0 0.0
  %6881 = vmatprep.subr.mxu0 0.0
  %6882 = vmatpush2.msra.mxu0 0.0
  %6883 = vmatprep.subr.mxu0 0.0
  %6884 = vmatpush2.msra.mxu0 0.0
  %6885 = vmatprep.mubr.f32.mxu0 0.0
  %6886 = vmatmul.mubr.f32.gmra.mxu0 %v6317
  %v6887 = vpop.f32.mrf.mxu0
  %v6888 = vadd.f32 %v6783, %v6887
  %v6889 = vpop.f32.mrf.mxu0
  %6890 = vmatprep.mubr.f32.mxu0 0.0
  %6891 = vmatmul.mubr.f32.gmra.mxu0 %v6320
  %v6892 = vpop.f32.mrf.mxu0
  %v6893 = vadd.f32 %v6788, %v6892
  %v6894 = vpop.f32.mrf.mxu0
  %6895 = vmatprep.mubr.f32.mxu0 0.0
  %6896 = vmatmul.mubr.f32.gmra.mxu0 %v6323
  %v6897 = vpop.f32.mrf.mxu0
  %v6898 = vadd.f32 %v6793, %v6897
  %v6899 = vpop.f32.mrf.mxu0
  %6900 = vmatprep.mubr.f32.mxu0 0.0
  %6901 = vmatmul.mubr.f32.gmra.mxu0 %v6326
  %v6902 = vpop.f32.mrf.mxu0
  %v6903 = vadd.f32 %v6798, %v6902
  %v6904 = vpop.f32.mrf.mxu0
  %6905 = vmatprep.mubr.f32.mxu0 0.0
  %6906 = vmatmul.mubr.f32.gmra.mxu0 %v6329
  %v6907 = vpop.f32.mrf.mxu0
  %v6908 = vadd.f32 %v6803, %v6907
  %v6909 = vpop.f32.mrf.mxu0
  %6910 = vmatprep.mubr.f32.mxu0 0.0
  %6911 = vmatmul.mubr.f32.gmra.mxu0 %v6332
  %v6912 = vpop.f32.mrf.mxu0
  %v6913 = vadd.f32 %v6808, %v6912
  %v6914 = vpop.f32.mrf.mxu0
  %6915 = vmatprep.mubr.f32.mxu0 0.0
  %6916 = vmatmul.mubr.f32.gmra.mxu0 %v6335
  %v6917 = vpop.f32.mrf.mxu0
  %v6918 = vadd.f32 %v6813, %v6917
  %v6919 = vpop.f32.mrf.mxu0
  %6920 = vmatprep.mubr.f32.mxu0 0.0
  %6921 = vmatmul.mubr.f32.gmra.mxu0 %v6338
  %v6922 = vpop.f32.mrf.mxu0
  %v6923 = vadd.f32 %v6818, %v6922
  %v6924 = vpop.f32.mrf.mxu0
  %6925 = vdwg.mxu0
  %6926 = vrot.lane.b32.xlu0 %v6135, 126
  %v6927 = vpop.permute.xlu0 %6926
  %6928 = vrot.lane.b32.xlu0 %v6140, 126
  %v6929 = vpop.permute.xlu0 %6928
  %6930 = vrot.lane.b32.xlu0 %v6145, 126
  %v6931 = vpop.permute.xlu0 %6930
  %6932 = vrot.lane.b32.xlu0 %v6150, 126
  %v6933 = vpop.permute.xlu0 %6932
  %6938 = vmatprep.subr.mxu0 0.0
  %6939 = vmatpush1.msra.mxu0 0.0
  %6940 = vmatprep.subr.mxu0 0.0
  %6941 = vmatpush1.msra.mxu0 0.0
  %6942 = vmatprep.subr.mxu0 0.0
  %6943 = vmatpush1.msra.mxu0 0.0
  %6944 = vmatprep.subr.mxu0 0.0
  %6945 = vmatpush1.msra.mxu0 0.0
  %6946 = vmatprep.subr.mxu0 0.0
  %6947 = vmatpush1.msra.mxu0 0.0
  %6948 = vmatprep.subr.mxu0 0.0
  %6949 = vmatpush1.msra.mxu0 0.0
  %6950 = vmatprep.subr.mxu0 0.0
  %6951 = vmatpush1.msra.mxu0 0.0
  %6952 = vmatprep.subr.mxu0 0.0
  %6953 = vmatpush1.msra.mxu0 0.0
  %6954 = vmatprep.subr.mxu0 0.0
  %6955 = vmatpush1.msra.mxu0 0.0
  %6956 = vmatprep.subr.mxu0 0.0
  %6957 = vmatpush1.msra.mxu0 0.0
  %6958 = vmatprep.subr.mxu0 0.0
  %6959 = vmatpush1.msra.mxu0 0.0
  %6960 = vmatprep.subr.mxu0 0.0
  %6961 = vmatpush1.msra.mxu0 0.0
  %6962 = vmatprep.subr.mxu0 0.0
  %6963 = vmatpush1.msra.mxu0 %v6933
  %6964 = vmatprep.subr.mxu0 0.0
  %6965 = vmatpush1.msra.mxu0 %v6931
  %6966 = vmatprep.subr.mxu0 0.0
  %6967 = vmatpush1.msra.mxu0 %v6929
  %6968 = vmatprep.subr.mxu0 0.0
  %6969 = vmatpush1.msra.mxu0 %v6927
  %6970 = vmatprep.subr.mxu0 0.0
  %6971 = vmatpush2.msra.mxu0 0.0
  %6972 = vmatprep.subr.mxu0 0.0
  %6973 = vmatpush2.msra.mxu0 0.0
  %6974 = vmatprep.subr.mxu0 0.0
  %6975 = vmatpush2.msra.mxu0 0.0
  %6976 = vmatprep.subr.mxu0 0.0
  %6977 = vmatpush2.msra.mxu0 0.0
  %6978 = vmatprep.subr.mxu0 0.0
  %6979 = vmatpush2.msra.mxu0 0.0
  %6980 = vmatprep.subr.mxu0 0.0
  %6981 = vmatpush2.msra.mxu0 0.0
  %6982 = vmatprep.subr.mxu0 0.0
  %6983 = vmatpush2.msra.mxu0 0.0
  %6984 = vmatprep.subr.mxu0 0.0
  %6985 = vmatpush2.msra.mxu0 0.0
  %6986 = vmatprep.subr.mxu0 0.0
  %6987 = vmatpush2.msra.mxu0 0.0
  %6988 = vmatprep.subr.mxu0 0.0
  %6989 = vmatpush2.msra.mxu0 0.0
  %6990 = vmatprep.subr.mxu0 0.0
  %6991 = vmatpush2.msra.mxu0 0.0
  %6992 = vmatprep.subr.mxu0 0.0
  %6993 = vmatpush2.msra.mxu0 0.0
  %6994 = vmatprep.subr.mxu0 0.0
  %6995 = vmatpush2.msra.mxu0 0.0
  %6996 = vmatprep.subr.mxu0 0.0
  %6997 = vmatpush2.msra.mxu0 0.0
  %6998 = vmatprep.subr.mxu0 0.0
  %6999 = vmatpush2.msra.mxu0 0.0
  %7000 = vmatprep.subr.mxu0 0.0
  %7001 = vmatpush2.msra.mxu0 0.0
  %7002 = vmatprep.mubr.f32.mxu0 0.0
  %7003 = vmatmul.mubr.f32.gmra.mxu0 %v6467
  %v7004 = vpop.f32.mrf.mxu0
  %v7005 = vadd.f32 0.0, %v7004
  %v7006 = vpop.f32.mrf.mxu0
  %7007 = vmatprep.mubr.f32.mxu0 0.0
  %7008 = vmatmul.mubr.f32.gmra.mxu0 %v6470
  %v7009 = vpop.f32.mrf.mxu0
  %v7010 = vadd.f32 0.0, %v7009
  %v7011 = vpop.f32.mrf.mxu0
  %7012 = vmatprep.mubr.f32.mxu0 0.0
  %7013 = vmatmul.mubr.f32.gmra.mxu0 %v6473
  %v7014 = vpop.f32.mrf.mxu0
  %v7015 = vadd.f32 0.0, %v7014
  %v7016 = vpop.f32.mrf.mxu0
  %7017 = vmatprep.mubr.f32.mxu0 0.0
  %7018 = vmatmul.mubr.f32.gmra.mxu0 %v6476
  %v7019 = vpop.f32.mrf.mxu0
  %v7020 = vadd.f32 0.0, %v7019
  %v7021 = vpop.f32.mrf.mxu0
  %7022 = vmatprep.mubr.f32.mxu0 0.0
  %7023 = vmatmul.mubr.f32.gmra.mxu0 %v6479
  %v7024 = vpop.f32.mrf.mxu0
  %v7025 = vadd.f32 0.0, %v7024
  %v7026 = vpop.f32.mrf.mxu0
  %7027 = vmatprep.mubr.f32.mxu0 0.0
  %7028 = vmatmul.mubr.f32.gmra.mxu0 %v6482
  %v7029 = vpop.f32.mrf.mxu0
  %v7030 = vadd.f32 0.0, %v7029
  %v7031 = vpop.f32.mrf.mxu0
  %7032 = vmatprep.mubr.f32.mxu0 0.0
  %7033 = vmatmul.mubr.f32.gmra.mxu0 %v6485
  %v7034 = vpop.f32.mrf.mxu0
  %v7035 = vadd.f32 0.0, %v7034
  %v7036 = vpop.f32.mrf.mxu0
  %7037 = vmatprep.mubr.f32.mxu0 0.0
  %7038 = vmatmul.mubr.f32.gmra.mxu0 %v6488
  %v7039 = vpop.f32.mrf.mxu0
  %v7040 = vadd.f32 0.0, %v7039
  %v7041 = vpop.f32.mrf.mxu0
  %7042 = vdwg.mxu0
  %v7043 = vadd.f32 %v6888, %v7005
  %v7044 = vadd.f32 %v6893, %v7010
  %v7045 = vadd.f32 %v6898, %v7015
  %v7046 = vadd.f32 %v6903, %v7020
  %v7047 = vadd.f32 %v6908, %v7025
  %v7048 = vadd.f32 %v6913, %v7030
  %v7049 = vadd.f32 %v6918, %v7035
  %v7050 = vadd.f32 %v6923, %v7040
  %v7051 = vadd.f32 %v7043, %v6614
  %v7052 = vadd.f32 %v7044, %v6619
  %v7053 = vadd.f32 %v7045, %v6624
  %v7054 = vadd.f32 %v7046, %v6629
  %v7055 = vadd.f32 %v7047, %v6634
  %v7056 = vadd.f32 %v7048, %v6639
  %v7057 = vadd.f32 %v7049, %v6644
  %v7058 = vadd.f32 %v7050, %v6649
  %v7059 = vmax.f32 %v7051, 0.0
  %v7060 = vmax.f32 %v7052, 0.0
  %v7061 = vmax.f32 %v7053, 0.0
  %v7062 = vmax.f32 %v7054, 0.0
  %v7063 = vmax.f32 %v7055, 0.0
  %v7064 = vmax.f32 %v7056, 0.0
  %v7065 = vmax.f32 %v7057, 0.0
  %v7066 = vmax.f32 %v7058, 0.0
  %v7067 = vsel %vm6667, %v7059, 0.0
  %7068 = vadd.xlane.f32.xlu0 %v7067
  %v7069 = vpop.xlane.xlu0 %7068
  %v7070 = vsel %vm6667, %v7060, 0.0
  %7071 = vadd.xlane.f32.xlu0 %v7070
  %v7072 = vpop.xlane.xlu0 %7071
  %v7073 = vsel %vm6667, %v7061, 0.0
  %7074 = vadd.xlane.f32.xlu0 %v7073
  %v7075 = vpop.xlane.xlu0 %7074
  %v7076 = vsel %vm6667, %v7062, 0.0
  %7077 = vadd.xlane.f32.xlu0 %v7076
  %v7078 = vpop.xlane.xlu0 %7077
  %v7079 = vsel %vm6667, %v7063, 0.0
  %7080 = vadd.xlane.f32.xlu0 %v7079
  %v7081 = vpop.xlane.xlu0 %7080
  %v7082 = vsel %vm6667, %v7064, 0.0
  %7083 = vadd.xlane.f32.xlu0 %v7082
  %v7084 = vpop.xlane.xlu0 %7083
  %v7085 = vsel %vm6667, %v7065, 0.0
  %7086 = vadd.xlane.f32.xlu0 %v7085
  %v7087 = vpop.xlane.xlu0 %7086
  %v7088 = vsel %vm6667, %v7066, 0.0
  %7089 = vadd.xlane.f32.xlu0 %v7088
  %v7090 = vpop.xlane.xlu0 %7089
  %v7091 = vmul.f32 %v7069, 0.033333335
  %v7092 = vmul.f32 %v7072, 0.033333335
  %v7093 = vmul.f32 %v7075, 0.033333335
  %v7094 = vmul.f32 %v7078, 0.033333335
  %v7095 = vmul.f32 %v7081, 0.033333335
  %v7096 = vmul.f32 %v7084, 0.033333335
  %v7097 = vmul.f32 %v7087, 0.033333335
  %v7098 = vmul.f32 %v7090, 0.033333335
  %v7099 = vsel %vm1235, %v6692, %v7091
  %v7100 = vsel %vm1235, %v6693, %v7092
  %v7101 = vsel %vm1235, %v6694, %v7093
  %v7102 = vsel %vm1235, %v6695, %v7094
  %v7103 = vsel %vm1235, %v6696, %v7095
  %v7104 = vsel %vm1235, %v6697, %v7096
  %v7105 = vsel %vm1235, %v6698, %v7097
  %v7106 = vsel %vm1235, %v6699, %v7098
  %v7107 = vld [vmem:[%s19] sm:$0xff]
  %v7108 = vld [vmem:[%s19 + $0x8] sm:$0xff]
  %v7109 = vld [vmem:[%s19 + $0x10] sm:$0xff]
  %v7110 = vld [vmem:[%s19 + $0x18] sm:$0xff]
  %v7111 = vld [vmem:[%s20] sm:$0xff]
  %v7112 = vld [vmem:[%s20 + $0x8] sm:$0xff]
  %v7113 = vld [vmem:[%s20 + $0x10] sm:$0xff]
  %v7114 = vld [vmem:[%s20 + $0x18] sm:$0xff]
  %7116 = vset.pattern.permute.xlu0 0
  %7117 = vperm.xlu0 %7116, %v7111
  %v7118 = vpop.permute.xlu0 %7117
  %7121 = vset.pattern.permute.xlu0 0
  %7122 = vperm.xlu0 %7121, %v7112
  %v7123 = vpop.permute.xlu0 %7122
  %7126 = vset.pattern.permute.xlu0 0
  %7127 = vperm.xlu0 %7126, %v7113
  %v7128 = vpop.permute.xlu0 %7127
  %7131 = vset.pattern.permute.xlu0 0
  %7132 = vperm.xlu0 %7131, %v7114
  %v7133 = vpop.permute.xlu0 %7132
  %vm7135 = vcmask 523264
  %v7137 = vsel %vm7135, %v7107, 0
  %v7140 = vsel %vm7135, %v7108, 0
  %v7143 = vsel %vm7135, %v7109, 0
  %v7146 = vsel %vm7135, %v7110, 0
  %7148 = vmatprep.subr.mxu0 0.0
  %7149 = vmatpush1.msra.mxu0 0.0
  %7150 = vmatprep.subr.mxu0 0.0
  %7151 = vmatpush1.msra.mxu0 0.0
  %7152 = vmatprep.subr.mxu0 0.0
  %7153 = vmatpush1.msra.mxu0 0.0
  %7154 = vmatprep.subr.mxu0 0.0
  %7155 = vmatpush1.msra.mxu0 0.0
  %7156 = vmatprep.subr.mxu0 0.0
  %7157 = vmatpush1.msra.mxu0 0.0
  %7158 = vmatprep.subr.mxu0 0.0
  %7159 = vmatpush1.msra.mxu0 0.0
  %7160 = vmatprep.subr.mxu0 0.0
  %7161 = vmatpush1.msra.mxu0 0.0
  %7162 = vmatprep.subr.mxu0 0.0
  %7163 = vmatpush1.msra.mxu0 0.0
  %7164 = vmatprep.subr.mxu0 0.0
  %7165 = vmatpush1.msra.mxu0 %v7106
  %7166 = vmatprep.subr.mxu0 0.0
  %7167 = vmatpush1.msra.mxu0 %v7105
  %7168 = vmatprep.subr.mxu0 0.0
  %7169 = vmatpush1.msra.mxu0 %v7104
  %7170 = vmatprep.subr.mxu0 0.0
  %7171 = vmatpush1.msra.mxu0 %v7103
  %7172 = vmatprep.subr.mxu0 0.0
  %7173 = vmatpush1.msra.mxu0 %v7102
  %7174 = vmatprep.subr.mxu0 0.0
  %7175 = vmatpush1.msra.mxu0 %v7101
  %7176 = vmatprep.subr.mxu0 0.0
  %7177 = vmatpush1.msra.mxu0 %v7100
  %7178 = vmatprep.subr.mxu0 0.0
  %7179 = vmatpush1.msra.mxu0 %v7099
  %7180 = vmatprep.subr.mxu0 0.0
  %7181 = vmatpush2.msra.mxu0 0.0
  %7182 = vmatprep.subr.mxu0 0.0
  %7183 = vmatpush2.msra.mxu0 0.0
  %7184 = vmatprep.subr.mxu0 0.0
  %7185 = vmatpush2.msra.mxu0 0.0
  %7186 = vmatprep.subr.mxu0 0.0
  %7187 = vmatpush2.msra.mxu0 0.0
  %7188 = vmatprep.subr.mxu0 0.0
  %7189 = vmatpush2.msra.mxu0 0.0
  %7190 = vmatprep.subr.mxu0 0.0
  %7191 = vmatpush2.msra.mxu0 0.0
  %7192 = vmatprep.subr.mxu0 0.0
  %7193 = vmatpush2.msra.mxu0 0.0
  %7194 = vmatprep.subr.mxu0 0.0
  %7195 = vmatpush2.msra.mxu0 0.0
  %7196 = vmatprep.subr.mxu0 0.0
  %7197 = vmatpush2.msra.mxu0 0.0
  %7198 = vmatprep.subr.mxu0 0.0
  %7199 = vmatpush2.msra.mxu0 0.0
  %7200 = vmatprep.subr.mxu0 0.0
  %7201 = vmatpush2.msra.mxu0 0.0
  %7202 = vmatprep.subr.mxu0 0.0
  %7203 = vmatpush2.msra.mxu0 0.0
  %7204 = vmatprep.subr.mxu0 0.0
  %7205 = vmatpush2.msra.mxu0 0.0
  %7206 = vmatprep.subr.mxu0 0.0
  %7207 = vmatpush2.msra.mxu0 0.0
  %7208 = vmatprep.subr.mxu0 0.0
  %7209 = vmatpush2.msra.mxu0 0.0
  %7210 = vmatprep.subr.mxu0 0.0
  %7211 = vmatpush2.msra.mxu0 0.0
  %7212 = vmatprep.mubr.f32.mxu0 0.0
  %7213 = vmatmul.mubr.f32.gmra.mxu0 %v7137
  %v7214 = vpop.f32.mrf.mxu0
  %v7215 = vadd.f32 %v7118, %v7214
  %v7216 = vpop.f32.mrf.mxu0
  %7217 = vmatprep.mubr.f32.mxu0 0.0
  %7218 = vmatmul.mubr.f32.gmra.mxu0 %v7140
  %v7219 = vpop.f32.mrf.mxu0
  %v7220 = vadd.f32 %v7123, %v7219
  %v7221 = vpop.f32.mrf.mxu0
  %7222 = vmatprep.mubr.f32.mxu0 0.0
  %7223 = vmatmul.mubr.f32.gmra.mxu0 %v7143
  %v7224 = vpop.f32.mrf.mxu0
  %v7225 = vadd.f32 %v7128, %v7224
  %v7226 = vpop.f32.mrf.mxu0
  %7227 = vmatprep.mubr.f32.mxu0 0.0
  %7228 = vmatmul.mubr.f32.gmra.mxu0 %v7146
  %v7229 = vpop.f32.mrf.mxu0
  %v7230 = vadd.f32 %v7133, %v7229
  %v7231 = vpop.f32.mrf.mxu0
  %7232 = vdwg.mxu0
  %v7233 = vmax.f32 %v7215, 0.0
  %v7234 = vmax.f32 %v7220, 0.0
  %v7235 = vmax.f32 %v7225, 0.0
  %v7236 = vmax.f32 %v7230, 0.0
  %v7237 = vld [vmem:[%s21] sm:$0x7]
  %v7238 = vld [vmem:[%s22] sm:$0x7]
  %7240 = vset.pattern.permute.xlu0 0
  %7241 = vperm.xlu0 %7240, %v7238
  %v7242 = vpop.permute.xlu0 %7241
  %v7245 = vsel %vm6186, %v7237, 0
  %7247 = vmatprep.subr.mxu0 0.0
  %7248 = vmatpush1.msra.mxu0 0.0
  %7249 = vmatprep.subr.mxu0 0.0
  %7250 = vmatpush1.msra.mxu0 0.0
  %7251 = vmatprep.subr.mxu0 0.0
  %7252 = vmatpush1.msra.mxu0 0.0
  %7253 = vmatprep.subr.mxu0 0.0
  %7254 = vmatpush1.msra.mxu0 0.0
  %7255 = vmatprep.subr.mxu0 0.0
  %7256 = vmatpush1.msra.mxu0 0.0
  %7257 = vmatprep.subr.mxu0 0.0
  %7258 = vmatpush1.msra.mxu0 0.0
  %7259 = vmatprep.subr.mxu0 0.0
  %7260 = vmatpush1.msra.mxu0 0.0
  %7261 = vmatprep.subr.mxu0 0.0
  %7262 = vmatpush1.msra.mxu0 0.0
  %7263 = vmatprep.subr.mxu0 0.0
  %7264 = vmatpush1.msra.mxu0 0.0
  %7265 = vmatprep.subr.mxu0 0.0
  %7266 = vmatpush1.msra.mxu0 0.0
  %7267 = vmatprep.subr.mxu0 0.0
  %7268 = vmatpush1.msra.mxu0 0.0
  %7269 = vmatprep.subr.mxu0 0.0
  %7270 = vmatpush1.msra.mxu0 0.0
  %7271 = vmatprep.subr.mxu0 0.0
  %7272 = vmatpush1.msra.mxu0 %v7236
  %7273 = vmatprep.subr.mxu0 0.0
  %7274 = vmatpush1.msra.mxu0 %v7235
  %7275 = vmatprep.subr.mxu0 0.0
  %7276 = vmatpush1.msra.mxu0 %v7234
  %7277 = vmatprep.subr.mxu0 0.0
  %7278 = vmatpush1.msra.mxu0 %v7233
  %7279 = vmatprep.subr.mxu0 0.0
  %7280 = vmatpush2.msra.mxu0 0.0
  %7281 = vmatprep.subr.mxu0 0.0
  %7282 = vmatpush2.msra.mxu0 0.0
  %7283 = vmatprep.subr.mxu0 0.0
  %7284 = vmatpush2.msra.mxu0 0.0
  %7285 = vmatprep.subr.mxu0 0.0
  %7286 = vmatpush2.msra.mxu0 0.0
  %7287 = vmatprep.subr.mxu0 0.0
  %7288 = vmatpush2.msra.mxu0 0.0
  %7289 = vmatprep.subr.mxu0 0.0
  %7290 = vmatpush2.msra.mxu0 0.0
  %7291 = vmatprep.subr.mxu0 0.0
  %7292 = vmatpush2.msra.mxu0 0.0
  %7293 = vmatprep.subr.mxu0 0.0
  %7294 = vmatpush2.msra.mxu0 0.0
  %7295 = vmatprep.subr.mxu0 0.0
  %7296 = vmatpush2.msra.mxu0 0.0
  %7297 = vmatprep.subr.mxu0 0.0
  %7298 = vmatpush2.msra.mxu0 0.0
  %7299 = vmatprep.subr.mxu0 0.0
  %7300 = vmatpush2.msra.mxu0 0.0
  %7301 = vmatprep.subr.mxu0 0.0
  %7302 = vmatpush2.msra.mxu0 0.0
  %7303 = vmatprep.subr.mxu0 0.0
  %7304 = vmatpush2.msra.mxu0 0.0
  %7305 = vmatprep.subr.mxu0 0.0
  %7306 = vmatpush2.msra.mxu0 0.0
  %7307 = vmatprep.subr.mxu0 0.0
  %7308 = vmatpush2.msra.mxu0 0.0
  %7309 = vmatprep.subr.mxu0 0.0
  %7310 = vmatpush2.msra.mxu0 0.0
  %7311 = vmatprep.mubr.f32.mxu0 0.0
  %7312 = vmatmul.mubr.f32.gmra.mxu0 %v7245
  %v7313 = vpop.f32.mrf.mxu0
  %v7314 = vadd.f32 %v7242, %v7313
  %v7315 = vpop.f32.mrf.mxu0
  %7316 = vdwg.mxu0
  %vm7317 = vcmask 10240
  %7318 = vst.msk [vmem:[%s23] sm:$0x7] %vm7317, %v7314
  // Predicated region
  $region94: #{forward.1} parent=0 // pred_check
    _
  $region95: #{forward.1} parent=0 // pred_check_branch
    %7320 = sbr.rel (0) target = $region97
  $region96: #{forward.1} parent=0 // pred_region
    _
  $region97: #{forward.1} parent=0 // pred_fallthru
    _
  // Predicated region
  $region98: #{forward.1} parent=0 // pred_check
    _
  $region99: #{forward.1} parent=0 // pred_check_branch
    %7322 = sbr.rel (0) target = $region101
  $region100: #{forward.1} parent=0 // pred_region
    _
  $region101: #{forward.1} parent=0 // pred_fallthru
    _

</llo_original>
